<compile_context>
chip_gen: v7x
topology: tpu7x:2x2x1
jax: 0.10.0
libtpu: 0.0.40
codegen_flags: <defaults>
</compile_context>

<pallas_src>
import functools
import math

import jax
import jax.numpy as jnp
from jax.experimental import pallas as pl
from jax.experimental.pallas import tpu as pltpu


# ----------------------------------------------------------------------------
# Pallas kernels
# ----------------------------------------------------------------------------
def _mha_ln_kernel(qb_ref, qp_ref, kvb_ref, kp_ref,
                   wq_ref, bq_ref, wk_ref, bk_ref, wv_ref, bv_ref,
                   wo_ref, bo_ref, g_ref, beta_ref, o_ref,
                   *, heads, scale, eps, value_with_pos):
    """Fused multi-head attention block for one batch element.

    q_in = qb + q_pos ; k_in = kv + k_pos ; v_in = k_in (self-attn) or kv (cross-attn)
    out  = LayerNorm( MHA(q_in, k_in, v_in) + qb )
    Per-head weights: wq/wk/wv: (H, E, D), bq/bk/bv: (H, 1, D), wo: (H, D, E), bo: (1, E).
    """
    qb = qb_ref[0].astype(jnp.float32)                       # (Lq, E)  residual
    q_in = qb + qp_ref[0].astype(jnp.float32)                # (Lq, E)
    kv = kvb_ref[0].astype(jnp.float32)                      # (Lkv, E)
    k_in = kv + kp_ref[0].astype(jnp.float32)                # (Lkv, E)
    v_in = k_in if value_with_pos else kv                    # static choice

    Lq, E = q_in.shape
    acc = jnp.zeros((Lq, E), jnp.float32)                    # out-projection accumulator

    for h in range(heads):                                   # static, small H
        qh = jnp.dot(q_in, wq_ref[h], preferred_element_type=jnp.float32) + bq_ref[h]
        kh = jnp.dot(k_in, wk_ref[h], preferred_element_type=jnp.float32) + bk_ref[h]
        vh = jnp.dot(v_in, wv_ref[h], preferred_element_type=jnp.float32) + bv_ref[h]

        s = jax.lax.dot_general(qh, kh, (((1,), (1,)), ((), ())),
                                preferred_element_type=jnp.float32) * scale   # (Lq, Lkv)
        s = s - jnp.max(s, axis=-1, keepdims=True)
        p = jnp.exp(s)
        # divide -> EUP reciprocal + VPU multiply (EUP slot is otherwise idle here)
        p = p * pl.reciprocal(jnp.sum(p, axis=-1, keepdims=True), approx=True)

        oh = jnp.dot(p, vh, preferred_element_type=jnp.float32)               # (Lq, D)
        acc = acc + jnp.dot(oh, wo_ref[h], preferred_element_type=jnp.float32)  # (Lq, E)

    x = acc + bo_ref[...].astype(jnp.float32) + qb           # out-proj bias + residual
    mu = jnp.mean(x, axis=-1, keepdims=True)
    xc = x - mu
    var = jnp.mean(xc * xc, axis=-1, keepdims=True)
    y = xc * jax.lax.rsqrt(var + eps)
    o_ref[0] = (y * g_ref[...] + beta_ref[...]).astype(o_ref.dtype)


def _ffn_ln_kernel(x_ref, w1_ref, b1_ref, w2_ref, b2_ref, g_ref, beta_ref, o_ref, *, eps):
    """out = LayerNorm( x + Linear2(ReLU(Linear1(x))) ); hidden stays in VMEM."""
    x = x_ref[...].astype(jnp.float32)                                        # (tm, E)
    h = jnp.dot(x, w1_ref[...], preferred_element_type=jnp.float32) + b1_ref[...]
    h = jnp.maximum(h, 0.0)                                                   # (tm, 8E)
    ff = jnp.dot(h, w2_ref[...], preferred_element_type=jnp.float32) + b2_ref[...]
    y = x + ff
    mu = jnp.mean(y, axis=-1, keepdims=True)
    yc = y - mu
    var = jnp.mean(yc * yc, axis=-1, keepdims=True)
    o_ref[...] = ((yc * jax.lax.rsqrt(var + eps)) * g_ref[...] + beta_ref[...]).astype(o_ref.dtype)


def _ln_kernel(x_ref, g_ref, b_ref, o_ref, *, eps):
    x = x_ref[...].astype(jnp.float32)
    mu = jnp.mean(x, axis=-1, keepdims=True)
    xc = x - mu
    var = jnp.mean(xc * xc, axis=-1, keepdims=True)
    o_ref[...] = ((xc * jax.lax.rsqrt(var + eps)) * g_ref[...] + b_ref[...]).astype(o_ref.dtype)


# ----------------------------------------------------------------------------
# Wrappers (pallas_call plumbing)
# ----------------------------------------------------------------------------
def _row_tiling(n_rows):
    """Pick a row tile so there are >=2 'parallel' grid steps when cheaply possible."""
    if n_rows % 16 == 0:
        return n_rows // 2, 2
    return n_rows, 1


def mha_ln_block(x_q, pos_q, x_kv, pos_k, p_attn, p_ln, heads, value_with_pos, eps=1e-5):
    """Fused MHA + residual + LayerNorm. x_q:(B,Lq,E), x_kv:(B,Lkv,E)."""
    B, Lq, E = x_q.shape
    Lkv = x_kv.shape[1]
    D = E // heads
    scale = 1.0 / math.sqrt(D)

    def full(shape):
        return pl.BlockSpec(shape, lambda b, _n=len(shape): (0,) * _n)

    kernel = functools.partial(_mha_ln_kernel, heads=heads, scale=scale,
                               eps=eps, value_with_pos=value_with_pos)
    return pl.pallas_call(
        kernel,
        out_shape=jax.ShapeDtypeStruct((B, Lq, E), x_q.dtype),
        grid=(B,),
        in_specs=[
            pl.BlockSpec((1, Lq, E), lambda b: (b, 0, 0)),    # query base (residual)
            pl.BlockSpec((1, Lq, E), lambda b: (b, 0, 0)),    # query pos
            pl.BlockSpec((1, Lkv, E), lambda b: (b, 0, 0)),   # key/value base
            pl.BlockSpec((1, Lkv, E), lambda b: (b, 0, 0)),   # key pos
            full((heads, E, D)), full((heads, 1, D)),         # Wq, bq
            full((heads, E, D)), full((heads, 1, D)),         # Wk, bk
            full((heads, E, D)), full((heads, 1, D)),         # Wv, bv
            full((heads, D, E)), full((1, E)),                # Wo, bo
            full((1, E)), full((1, E)),                       # LN gamma, beta
        ],
        out_specs=pl.BlockSpec((1, Lq, E), lambda b: (b, 0, 0)),
        compiler_params=pltpu.CompilerParams(dimension_semantics=("parallel",)),
    )(x_q, pos_q, x_kv, pos_k,
      p_attn["wq"], p_attn["bq"], p_attn["wk"], p_attn["bk"],
      p_attn["wv"], p_attn["bv"], p_attn["wo"], p_attn["bo"],
      p_ln["g"], p_ln["b"])


def ffn_ln(x, p_ff1, p_ff2, p_ln, eps=1e-5):
    """Fused FFN + residual + LayerNorm on a flattened (N, E) activation."""
    N, E = x.shape
    Hd = p_ff1["w"].shape[1]
    tm, nt = _row_tiling(N)
    return pl.pallas_call(
        functools.partial(_ffn_ln_kernel, eps=eps),
        out_shape=jax.ShapeDtypeStruct((N, E), x.dtype),
        grid=(nt,),
        in_specs=[
            pl.BlockSpec((tm, E), lambda i: (i, 0)),
            pl.BlockSpec((E, Hd), lambda i: (0, 0)),
            pl.BlockSpec((1, Hd), lambda i: (0, 0)),
            pl.BlockSpec((Hd, E), lambda i: (0, 0)),
            pl.BlockSpec((1, E), lambda i: (0, 0)),
            pl.BlockSpec((1, E), lambda i: (0, 0)),
            pl.BlockSpec((1, E), lambda i: (0, 0)),
        ],
        out_specs=pl.BlockSpec((tm, E), lambda i: (i, 0)),
        compiler_params=pltpu.CompilerParams(dimension_semantics=("parallel",)),
    )(x, p_ff1["w"], p_ff1["b"], p_ff2["w"], p_ff2["b"], p_ln["g"], p_ln["b"])


def layernorm(x, g, b, eps=1e-5):
    """Plain LayerNorm over the last dim (no dummy zero add)."""
    N, E = x.shape
    tm, nt = _row_tiling(N)
    return pl.pallas_call(
        functools.partial(_ln_kernel, eps=eps),
        out_shape=jax.ShapeDtypeStruct((N, E), x.dtype),
        grid=(nt,),
        in_specs=[
            pl.BlockSpec((tm, E), lambda i: (i, 0)),
            pl.BlockSpec((1, E), lambda i: (0, 0)),
            pl.BlockSpec((1, E), lambda i: (0, 0)),
        ],
        out_specs=pl.BlockSpec((tm, E), lambda i: (i, 0)),
        compiler_params=pltpu.CompilerParams(dimension_semantics=("parallel",)),
    )(x, g, b)


# ----------------------------------------------------------------------------
# Model (only 3 fused pallas_calls per decoder layer + 1 final LayerNorm)
# ----------------------------------------------------------------------------
def decoder_block(p, query, memory, pos_q, pos_k, heads):
    # self-attention: q = k = v = query + pos_q ; residual = query ; fused LN
    out1 = mha_ln_block(query, pos_q, query, pos_q,
                        p["self_attn"], p["ln"], heads, value_with_pos=True)

    ep = p["enc"]
    # cross-attention: q = out1 + pos_q ; k = memory + pos_k ; v = memory ; residual = out1
    e1 = mha_ln_block(out1, pos_q, memory, pos_k,
                      ep["attn"], ep["ln1"], heads, value_with_pos=False)

    B, Lq, E = e1.shape
    out2 = ffn_ln(e1.reshape(B * Lq, E), ep["ff1"], ep["ff2"], ep["ln2"]).reshape(B, Lq, E)
    return out2


def transformer_decoder(params, query, memory, pos_q, pos_k, heads):
    out = query
    for lp in params["layers"]:
        out = decoder_block(lp, out, memory, pos_q, pos_k, heads)
    B, Lq, E = out.shape
    out = layernorm(out.reshape(B * Lq, E),
                    params["final_ln"]["g"], params["final_ln"]["b"]).reshape(B, Lq, E)
    return out


# ----------------------------------------------------------------------------
# Deterministic synthetic parameter initialization (per-head packed weights)
# ----------------------------------------------------------------------------
def init_params(key, n_layers, embed_dim, heads):
    E = embed_dim
    D = E // heads

    def dense(k, din, dout):
        k1, k2 = jax.random.split(k)
        return {"w": 0.02 * jax.random.normal(k1, (din, dout), jnp.float32),
                "b": 0.02 * jax.random.normal(k2, (1, dout), jnp.float32)}

    def mha_params(k):
        ks = jax.random.split(k, 8)

        def head_in(kw, kb):
            w = 0.02 * jax.random.normal(kw, (E, E), jnp.float32)
            b = 0.02 * jax.random.normal(kb, (E,), jnp.float32)
            # (E, E) -> (H, E, D): per-head input-projection slabs (done once, outside kernels)
            return w.reshape(E, heads, D).transpose(1, 0, 2), b.reshape(heads, 1, D)

        wq, bq = head_in(ks[0], ks[1])
        wk, bk = head_in(ks[2], ks[3])
        wv, bv = head_in(ks[4], ks[5])
        wo_full = 0.02 * jax.random.normal(ks[6], (E, E), jnp.float32)
        bo = 0.02 * jax.random.normal(ks[7], (1, E), jnp.float32)
        return {"wq": wq, "bq": bq, "wk": wk, "bk": bk, "wv": wv, "bv": bv,
                "wo": wo_full.reshape(heads, D, E), "bo": bo}

    def ln_params():
        return {"g": jnp.ones((1, E), jnp.float32), "b": jnp.zeros((1, E), jnp.float32)}

    layers = []
    for _ in range(n_layers):
        key, k1, k2, k3, k4 = jax.random.split(key, 5)
        layers.append({
            "self_attn": mha_params(k1),
            "ln": ln_params(),
            "enc": {
                "attn": mha_params(k2),
                "ln1": ln_params(),
                "ln2": ln_params(),
                "ff1": dense(k3, E, 8 * E),
                "ff2": dense(k4, 8 * E, E),
            },
        })
    return {"layers": layers, "final_ln": ln_params()}


# ----------------------------------------------------------------------------
if __name__ == "__main__":
    B, Lq, Lk, E, H, N_LAYERS = 2, 8, 16, 32, 4, 2

    key = jax.random.PRNGKey(0)
    kq, km, kpq, kpk, kp = jax.random.split(key, 5)
    query = jax.random.normal(kq, (B, Lq, E), jnp.float32)    # object queries
    memory = jax.random.normal(km, (B, Lk, E), jnp.float32)   # encoder memory
    pos_q = jax.random.normal(kpq, (B, Lq, E), jnp.float32)   # query pos embedding
    pos_k = jax.random.normal(kpk, (B, Lk, E), jnp.float32)   # key pos embedding

    params = init_params(kp, N_LAYERS, E, H)

    fwd = jax.jit(functools.partial(transformer_decoder, heads=H))
    out = fwd(params, query, memory, pos_q, pos_k)
    jax.block_until_ready(out)

    assert out.shape == (B, Lq, E), out.shape
    assert bool(jnp.all(jnp.isfinite(out)))
    print("KERNEL_OK")
</pallas_src>

<mosaic_0001>
module attributes {stable_mosaic.version = 11 : i64} {
  func.func @_mha_ln_kernel(%arg0: i32, %arg1: memref<1x8x32xf32, #tpu.memory_space<vmem>>, %arg2: memref<1x8x32xf32, #tpu.memory_space<vmem>>, %arg3: memref<1x16x32xf32, #tpu.memory_space<vmem>>, %arg4: memref<1x16x32xf32, #tpu.memory_space<vmem>>, %arg5: memref<4x32x8xf32, #tpu.memory_space<vmem>>, %arg6: memref<4x1x8xf32, #tpu.memory_space<vmem>>, %arg7: memref<4x32x8xf32, #tpu.memory_space<vmem>>, %arg8: memref<4x1x8xf32, #tpu.memory_space<vmem>>, %arg9: memref<4x32x8xf32, #tpu.memory_space<vmem>>, %arg10: memref<4x1x8xf32, #tpu.memory_space<vmem>>, %arg11: memref<4x8x32xf32, #tpu.memory_space<vmem>>, %arg12: memref<1x32xf32, #tpu.memory_space<vmem>>, %arg13: memref<1x32xf32, #tpu.memory_space<vmem>>, %arg14: memref<1x32xf32, #tpu.memory_space<vmem>>, %arg15: memref<1x8x32xf32, #tpu.memory_space<vmem>>) attributes {dimension_semantics = [#tpu.dimension_semantics<parallel>], iteration_bounds = array<i64: 2>, scalar_prefetch = 0 : i64, scratch_operands = 0 : i64, tpu.core_type = #tpu.core_type<tc>, window_params = [{transform_indices = @transform_0, window_bounds = array<i64: 1, 8, 32>}, {transform_indices = @transform_1, window_bounds = array<i64: 1, 8, 32>}, {transform_indices = @transform_2, window_bounds = array<i64: 1, 16, 32>}, {transform_indices = @transform_3, window_bounds = array<i64: 1, 16, 32>}, {pipeline_mode = #tpu.pipeline_mode<synchronous>, transform_indices = @transform_4, window_bounds = array<i64: 4, 32, 8>}, {pipeline_mode = #tpu.pipeline_mode<synchronous>, transform_indices = @transform_5, window_bounds = array<i64: 4, 1, 8>}, {pipeline_mode = #tpu.pipeline_mode<synchronous>, transform_indices = @transform_6, window_bounds = array<i64: 4, 32, 8>}, {pipeline_mode = #tpu.pipeline_mode<synchronous>, transform_indices = @transform_7, window_bounds = array<i64: 4, 1, 8>}, {pipeline_mode = #tpu.pipeline_mode<synchronous>, transform_indices = @transform_8, window_bounds = array<i64: 4, 32, 8>}, {pipeline_mode = #tpu.pipeline_mode<synchronous>, transform_indices = @transform_9, window_bounds = array<i64: 4, 1, 8>}, {pipeline_mode = #tpu.pipeline_mode<synchronous>, transform_indices = @transform_10, window_bounds = array<i64: 4, 8, 32>}, {pipeline_mode = #tpu.pipeline_mode<synchronous>, transform_indices = @transform_11, window_bounds = array<i64: 1, 32>}, {pipeline_mode = #tpu.pipeline_mode<synchronous>, transform_indices = @transform_12, window_bounds = array<i64: 1, 32>}, {pipeline_mode = #tpu.pipeline_mode<synchronous>, transform_indices = @transform_13, window_bounds = array<i64: 1, 32>}, {transform_indices = @transform_14, window_bounds = array<i64: 1, 8, 32>}]} {
    %c0 = arith.constant 0 : index
    %c0_0 = arith.constant 0 : index
    %c0_1 = arith.constant 0 : index
    %0 = vector.load %arg1[%c0, %c0_0, %c0_1] : memref<1x8x32xf32, #tpu.memory_space<vmem>>, vector<1x8x32xf32>
    %1 = vector.shape_cast %0 : vector<1x8x32xf32> to vector<8x32xf32>
    %c0_2 = arith.constant 0 : index
    %c0_3 = arith.constant 0 : index
    %c0_4 = arith.constant 0 : index
    %2 = vector.load %arg2[%c0_2, %c0_3, %c0_4] : memref<1x8x32xf32, #tpu.memory_space<vmem>>, vector<1x8x32xf32>
    %3 = vector.shape_cast %2 : vector<1x8x32xf32> to vector<8x32xf32>
    %4 = arith.addf %1, %3 : vector<8x32xf32>
    %c0_5 = arith.constant 0 : index
    %c0_6 = arith.constant 0 : index
    %c0_7 = arith.constant 0 : index
    %5 = vector.load %arg3[%c0_5, %c0_6, %c0_7] : memref<1x16x32xf32, #tpu.memory_space<vmem>>, vector<1x16x32xf32>
    %6 = vector.shape_cast %5 : vector<1x16x32xf32> to vector<16x32xf32>
    %c0_8 = arith.constant 0 : index
    %c0_9 = arith.constant 0 : index
    %c0_10 = arith.constant 0 : index
    %7 = vector.load %arg4[%c0_8, %c0_9, %c0_10] : memref<1x16x32xf32, #tpu.memory_space<vmem>>, vector<1x16x32xf32>
    %8 = vector.shape_cast %7 : vector<1x16x32xf32> to vector<16x32xf32>
    %9 = arith.addf %6, %8 : vector<16x32xf32>
    %cst = arith.constant 0.000000e+00 : f32
    %10 = vector.broadcast %cst : f32 to vector<8x32xf32>
    %c0_11 = arith.constant 0 : index
    %c0_12 = arith.constant 0 : index
    %c0_13 = arith.constant 0 : index
    %11 = vector.load %arg5[%c0_11, %c0_12, %c0_13] : memref<4x32x8xf32, #tpu.memory_space<vmem>>, vector<1x32x8xf32>
    %12 = vector.shape_cast %11 : vector<1x32x8xf32> to vector<32x8xf32>
    %cst_14 = arith.constant dense<0.000000e+00> : vector<8x8xf32>
    %13 = tpu.matmul %4, %12, %cst_14 {dimension_numbers = #tpu.dot_dimension_numbers<[1], [0], [0], [1], [0, 0, 1, 1], [], []>} : vector<8x32xf32>, vector<32x8xf32>, vector<8x8xf32> -> vector<8x8xf32>
    %c0_15 = arith.constant 0 : index
    %c0_16 = arith.constant 0 : index
    %c0_17 = arith.constant 0 : index
    %14 = vector.load %arg6[%c0_15, %c0_16, %c0_17] : memref<4x1x8xf32, #tpu.memory_space<vmem>>, vector<1x1x8xf32>
    %15 = vector.shape_cast %14 : vector<1x1x8xf32> to vector<1x8xf32>
    %16 = vector.broadcast %15 : vector<1x8xf32> to vector<8x8xf32>
    %17 = arith.addf %13, %16 : vector<8x8xf32>
    %c0_18 = arith.constant 0 : index
    %c0_19 = arith.constant 0 : index
    %c0_20 = arith.constant 0 : index
    %18 = vector.load %arg7[%c0_18, %c0_19, %c0_20] : memref<4x32x8xf32, #tpu.memory_space<vmem>>, vector<1x32x8xf32>
    %19 = vector.shape_cast %18 : vector<1x32x8xf32> to vector<32x8xf32>
    %cst_21 = arith.constant dense<0.000000e+00> : vector<16x8xf32>
    %20 = tpu.matmul %9, %19, %cst_21 {dimension_numbers = #tpu.dot_dimension_numbers<[1], [0], [0], [1], [0, 0, 1, 1], [], []>} : vector<16x32xf32>, vector<32x8xf32>, vector<16x8xf32> -> vector<16x8xf32>
    %c0_22 = arith.constant 0 : index
    %c0_23 = arith.constant 0 : index
    %c0_24 = arith.constant 0 : index
    %21 = vector.load %arg8[%c0_22, %c0_23, %c0_24] : memref<4x1x8xf32, #tpu.memory_space<vmem>>, vector<1x1x8xf32>
    %22 = vector.shape_cast %21 : vector<1x1x8xf32> to vector<1x8xf32>
    %23 = vector.broadcast %22 : vector<1x8xf32> to vector<16x8xf32>
    %24 = arith.addf %20, %23 : vector<16x8xf32>
    %c0_25 = arith.constant 0 : index
    %c0_26 = arith.constant 0 : index
    %c0_27 = arith.constant 0 : index
    %25 = vector.load %arg9[%c0_25, %c0_26, %c0_27] : memref<4x32x8xf32, #tpu.memory_space<vmem>>, vector<1x32x8xf32>
    %26 = vector.shape_cast %25 : vector<1x32x8xf32> to vector<32x8xf32>
    %cst_28 = arith.constant dense<0.000000e+00> : vector<16x8xf32>
    %27 = tpu.matmul %6, %26, %cst_28 {dimension_numbers = #tpu.dot_dimension_numbers<[1], [0], [0], [1], [0, 0, 1, 1], [], []>} : vector<16x32xf32>, vector<32x8xf32>, vector<16x8xf32> -> vector<16x8xf32>
    %c0_29 = arith.constant 0 : index
    %c0_30 = arith.constant 0 : index
    %c0_31 = arith.constant 0 : index
    %28 = vector.load %arg10[%c0_29, %c0_30, %c0_31] : memref<4x1x8xf32, #tpu.memory_space<vmem>>, vector<1x1x8xf32>
    %29 = vector.shape_cast %28 : vector<1x1x8xf32> to vector<1x8xf32>
    %30 = vector.broadcast %29 : vector<1x8xf32> to vector<16x8xf32>
    %31 = arith.addf %27, %30 : vector<16x8xf32>
    %cst_32 = arith.constant dense<0.000000e+00> : vector<8x16xf32>
    %32 = tpu.matmul %17, %24, %cst_32 {dimension_numbers = #tpu.dot_dimension_numbers<[1], [1], [0], [0], [0, 0, 1, 0], [], []>} : vector<8x8xf32>, vector<16x8xf32>, vector<8x16xf32> -> vector<8x16xf32>
    %cst_33 = arith.constant 0.353553385 : f32
    %33 = vector.broadcast %cst_33 : f32 to vector<8x16xf32>
    %34 = arith.mulf %32, %33 : vector<8x16xf32>
    %cst_34 = arith.constant dense<0xFF800000> : vector<8xf32>
    %35 = vector.multi_reduction <maximumf>, %34, %cst_34 [1] : vector<8x16xf32> to vector<8xf32>
    %36 = vector.shape_cast %35 : vector<8xf32> to vector<8x1xf32>
    %37 = vector.broadcast %36 : vector<8x1xf32> to vector<8x16xf32>
    %38 = arith.subf %34, %37 : vector<8x16xf32>
    %39 = math.exp %38 : vector<8x16xf32>
    %cst_35 = arith.constant dense<0.000000e+00> : vector<8xf32>
    %40 = vector.multi_reduction <add>, %39, %cst_35 [1] : vector<8x16xf32> to vector<8xf32>
    %41 = vector.shape_cast %40 : vector<8xf32> to vector<8x1xf32>
    %42 = tpu.reciprocal %41 {approx = true} : vector<8x1xf32> -> vector<8x1xf32>
    %43 = vector.broadcast %42 : vector<8x1xf32> to vector<8x16xf32>
    %44 = arith.mulf %39, %43 : vector<8x16xf32>
    %cst_36 = arith.constant dense<0.000000e+00> : vector<8x8xf32>
    %45 = tpu.matmul %44, %31, %cst_36 {dimension_numbers = #tpu.dot_dimension_numbers<[1], [0], [0], [1], [0, 0, 1, 1], [], []>} : vector<8x16xf32>, vector<16x8xf32>, vector<8x8xf32> -> vector<8x8xf32>
    %c0_37 = arith.constant 0 : index
    %c0_38 = arith.constant 0 : index
    %c0_39 = arith.constant 0 : index
    %46 = vector.load %arg11[%c0_37, %c0_38, %c0_39] : memref<4x8x32xf32, #tpu.memory_space<vmem>>, vector<1x8x32xf32>
    %47 = vector.shape_cast %46 : vector<1x8x32xf32> to vector<8x32xf32>
    %cst_40 = arith.constant dense<0.000000e+00> : vector<8x32xf32>
    %48 = tpu.matmul %45, %47, %cst_40 {dimension_numbers = #tpu.dot_dimension_numbers<[1], [0], [0], [1], [0, 0, 1, 1], [], []>} : vector<8x8xf32>, vector<8x32xf32>, vector<8x32xf32> -> vector<8x32xf32>
    %49 = arith.addf %10, %48 : vector<8x32xf32>
    %c1 = arith.constant 1 : index
    %c0_41 = arith.constant 0 : index
    %c0_42 = arith.constant 0 : index
    %50 = vector.load %arg5[%c1, %c0_41, %c0_42] : memref<4x32x8xf32, #tpu.memory_space<vmem>>, vector<1x32x8xf32>
    %51 = vector.shape_cast %50 : vector<1x32x8xf32> to vector<32x8xf32>
    %cst_43 = arith.constant dense<0.000000e+00> : vector<8x8xf32>
    %52 = tpu.matmul %4, %51, %cst_43 {dimension_numbers = #tpu.dot_dimension_numbers<[1], [0], [0], [1], [0, 0, 1, 1], [], []>} : vector<8x32xf32>, vector<32x8xf32>, vector<8x8xf32> -> vector<8x8xf32>
    %c1_44 = arith.constant 1 : index
    %c0_45 = arith.constant 0 : index
    %c0_46 = arith.constant 0 : index
    %53 = vector.load %arg6[%c1_44, %c0_45, %c0_46] : memref<4x1x8xf32, #tpu.memory_space<vmem>>, vector<1x1x8xf32>
    %54 = vector.shape_cast %53 : vector<1x1x8xf32> to vector<1x8xf32>
    %55 = vector.broadcast %54 : vector<1x8xf32> to vector<8x8xf32>
    %56 = arith.addf %52, %55 : vector<8x8xf32>
    %c1_47 = arith.constant 1 : index
    %c0_48 = arith.constant 0 : index
    %c0_49 = arith.constant 0 : index
    %57 = vector.load %arg7[%c1_47, %c0_48, %c0_49] : memref<4x32x8xf32, #tpu.memory_space<vmem>>, vector<1x32x8xf32>
    %58 = vector.shape_cast %57 : vector<1x32x8xf32> to vector<32x8xf32>
    %cst_50 = arith.constant dense<0.000000e+00> : vector<16x8xf32>
    %59 = tpu.matmul %9, %58, %cst_50 {dimension_numbers = #tpu.dot_dimension_numbers<[1], [0], [0], [1], [0, 0, 1, 1], [], []>} : vector<16x32xf32>, vector<32x8xf32>, vector<16x8xf32> -> vector<16x8xf32>
    %c1_51 = arith.constant 1 : index
    %c0_52 = arith.constant 0 : index
    %c0_53 = arith.constant 0 : index
    %60 = vector.load %arg8[%c1_51, %c0_52, %c0_53] : memref<4x1x8xf32, #tpu.memory_space<vmem>>, vector<1x1x8xf32>
    %61 = vector.shape_cast %60 : vector<1x1x8xf32> to vector<1x8xf32>
    %62 = vector.broadcast %61 : vector<1x8xf32> to vector<16x8xf32>
    %63 = arith.addf %59, %62 : vector<16x8xf32>
    %c1_54 = arith.constant 1 : index
    %c0_55 = arith.constant 0 : index
    %c0_56 = arith.constant 0 : index
    %64 = vector.load %arg9[%c1_54, %c0_55, %c0_56] : memref<4x32x8xf32, #tpu.memory_space<vmem>>, vector<1x32x8xf32>
    %65 = vector.shape_cast %64 : vector<1x32x8xf32> to vector<32x8xf32>
    %cst_57 = arith.constant dense<0.000000e+00> : vector<16x8xf32>
    %66 = tpu.matmul %6, %65, %cst_57 {dimension_numbers = #tpu.dot_dimension_numbers<[1], [0], [0], [1], [0, 0, 1, 1], [], []>} : vector<16x32xf32>, vector<32x8xf32>, vector<16x8xf32> -> vector<16x8xf32>
    %c1_58 = arith.constant 1 : index
    %c0_59 = arith.constant 0 : index
    %c0_60 = arith.constant 0 : index
    %67 = vector.load %arg10[%c1_58, %c0_59, %c0_60] : memref<4x1x8xf32, #tpu.memory_space<vmem>>, vector<1x1x8xf32>
    %68 = vector.shape_cast %67 : vector<1x1x8xf32> to vector<1x8xf32>
    %69 = vector.broadcast %68 : vector<1x8xf32> to vector<16x8xf32>
    %70 = arith.addf %66, %69 : vector<16x8xf32>
    %cst_61 = arith.constant dense<0.000000e+00> : vector<8x16xf32>
    %71 = tpu.matmul %56, %63, %cst_61 {dimension_numbers = #tpu.dot_dimension_numbers<[1], [1], [0], [0], [0, 0, 1, 0], [], []>} : vector<8x8xf32>, vector<16x8xf32>, vector<8x16xf32> -> vector<8x16xf32>
    %cst_62 = arith.constant 0.353553385 : f32
    %72 = vector.broadcast %cst_62 : f32 to vector<8x16xf32>
    %73 = arith.mulf %71, %72 : vector<8x16xf32>
    %cst_63 = arith.constant dense<0xFF800000> : vector<8xf32>
    %74 = vector.multi_reduction <maximumf>, %73, %cst_63 [1] : vector<8x16xf32> to vector<8xf32>
    %75 = vector.shape_cast %74 : vector<8xf32> to vector<8x1xf32>
    %76 = vector.broadcast %75 : vector<8x1xf32> to vector<8x16xf32>
    %77 = arith.subf %73, %76 : vector<8x16xf32>
    %78 = math.exp %77 : vector<8x16xf32>
    %cst_64 = arith.constant dense<0.000000e+00> : vector<8xf32>
    %79 = vector.multi_reduction <add>, %78, %cst_64 [1] : vector<8x16xf32> to vector<8xf32>
    %80 = vector.shape_cast %79 : vector<8xf32> to vector<8x1xf32>
    %81 = tpu.reciprocal %80 {approx = true} : vector<8x1xf32> -> vector<8x1xf32>
    %82 = vector.broadcast %81 : vector<8x1xf32> to vector<8x16xf32>
    %83 = arith.mulf %78, %82 : vector<8x16xf32>
    %cst_65 = arith.constant dense<0.000000e+00> : vector<8x8xf32>
    %84 = tpu.matmul %83, %70, %cst_65 {dimension_numbers = #tpu.dot_dimension_numbers<[1], [0], [0], [1], [0, 0, 1, 1], [], []>} : vector<8x16xf32>, vector<16x8xf32>, vector<8x8xf32> -> vector<8x8xf32>
    %c1_66 = arith.constant 1 : index
    %c0_67 = arith.constant 0 : index
    %c0_68 = arith.constant 0 : index
    %85 = vector.load %arg11[%c1_66, %c0_67, %c0_68] : memref<4x8x32xf32, #tpu.memory_space<vmem>>, vector<1x8x32xf32>
    %86 = vector.shape_cast %85 : vector<1x8x32xf32> to vector<8x32xf32>
    %cst_69 = arith.constant dense<0.000000e+00> : vector<8x32xf32>
    %87 = tpu.matmul %84, %86, %cst_69 {dimension_numbers = #tpu.dot_dimension_numbers<[1], [0], [0], [1], [0, 0, 1, 1], [], []>} : vector<8x8xf32>, vector<8x32xf32>, vector<8x32xf32> -> vector<8x32xf32>
    %88 = arith.addf %49, %87 : vector<8x32xf32>
    %c2 = arith.constant 2 : index
    %c0_70 = arith.constant 0 : index
    %c0_71 = arith.constant 0 : index
    %89 = vector.load %arg5[%c2, %c0_70, %c0_71] : memref<4x32x8xf32, #tpu.memory_space<vmem>>, vector<1x32x8xf32>
    %90 = vector.shape_cast %89 : vector<1x32x8xf32> to vector<32x8xf32>
    %cst_72 = arith.constant dense<0.000000e+00> : vector<8x8xf32>
    %91 = tpu.matmul %4, %90, %cst_72 {dimension_numbers = #tpu.dot_dimension_numbers<[1], [0], [0], [1], [0, 0, 1, 1], [], []>} : vector<8x32xf32>, vector<32x8xf32>, vector<8x8xf32> -> vector<8x8xf32>
    %c2_73 = arith.constant 2 : index
    %c0_74 = arith.constant 0 : index
    %c0_75 = arith.constant 0 : index
    %92 = vector.load %arg6[%c2_73, %c0_74, %c0_75] : memref<4x1x8xf32, #tpu.memory_space<vmem>>, vector<1x1x8xf32>
    %93 = vector.shape_cast %92 : vector<1x1x8xf32> to vector<1x8xf32>
    %94 = vector.broadcast %93 : vector<1x8xf32> to vector<8x8xf32>
    %95 = arith.addf %91, %94 : vector<8x8xf32>
    %c2_76 = arith.constant 2 : index
    %c0_77 = arith.constant 0 : index
    %c0_78 = arith.constant 0 : index
    %96 = vector.load %arg7[%c2_76, %c0_77, %c0_78] : memref<4x32x8xf32, #tpu.memory_space<vmem>>, vector<1x32x8xf32>
    %97 = vector.shape_cast %96 : vector<1x32x8xf32> to vector<32x8xf32>
    %cst_79 = arith.constant dense<0.000000e+00> : vector<16x8xf32>
    %98 = tpu.matmul %9, %97, %cst_79 {dimension_numbers = #tpu.dot_dimension_numbers<[1], [0], [0], [1], [0, 0, 1, 1], [], []>} : vector<16x32xf32>, vector<32x8xf32>, vector<16x8xf32> -> vector<16x8xf32>
    %c2_80 = arith.constant 2 : index
    %c0_81 = arith.constant 0 : index
    %c0_82 = arith.constant 0 : index
    %99 = vector.load %arg8[%c2_80, %c0_81, %c0_82] : memref<4x1x8xf32, #tpu.memory_space<vmem>>, vector<1x1x8xf32>
    %100 = vector.shape_cast %99 : vector<1x1x8xf32> to vector<1x8xf32>
    %101 = vector.broadcast %100 : vector<1x8xf32> to vector<16x8xf32>
    %102 = arith.addf %98, %101 : vector<16x8xf32>
    %c2_83 = arith.constant 2 : index
    %c0_84 = arith.constant 0 : index
    %c0_85 = arith.constant 0 : index
    %103 = vector.load %arg9[%c2_83, %c0_84, %c0_85] : memref<4x32x8xf32, #tpu.memory_space<vmem>>, vector<1x32x8xf32>
    %104 = vector.shape_cast %103 : vector<1x32x8xf32> to vector<32x8xf32>
    %cst_86 = arith.constant dense<0.000000e+00> : vector<16x8xf32>
    %105 = tpu.matmul %6, %104, %cst_86 {dimension_numbers = #tpu.dot_dimension_numbers<[1], [0], [0], [1], [0, 0, 1, 1], [], []>} : vector<16x32xf32>, vector<32x8xf32>, vector<16x8xf32> -> vector<16x8xf32>
    %c2_87 = arith.constant 2 : index
    %c0_88 = arith.constant 0 : index
    %c0_89 = arith.constant 0 : index
    %106 = vector.load %arg10[%c2_87, %c0_88, %c0_89] : memref<4x1x8xf32, #tpu.memory_space<vmem>>, vector<1x1x8xf32>
    %107 = vector.shape_cast %106 : vector<1x1x8xf32> to vector<1x8xf32>
    %108 = vector.broadcast %107 : vector<1x8xf32> to vector<16x8xf32>
    %109 = arith.addf %105, %108 : vector<16x8xf32>
    %cst_90 = arith.constant dense<0.000000e+00> : vector<8x16xf32>
    %110 = tpu.matmul %95, %102, %cst_90 {dimension_numbers = #tpu.dot_dimension_numbers<[1], [1], [0], [0], [0, 0, 1, 0], [], []>} : vector<8x8xf32>, vector<16x8xf32>, vector<8x16xf32> -> vector<8x16xf32>
    %cst_91 = arith.constant 0.353553385 : f32
    %111 = vector.broadcast %cst_91 : f32 to vector<8x16xf32>
    %112 = arith.mulf %110, %111 : vector<8x16xf32>
    %cst_92 = arith.constant dense<0xFF800000> : vector<8xf32>
    %113 = vector.multi_reduction <maximumf>, %112, %cst_92 [1] : vector<8x16xf32> to vector<8xf32>
    %114 = vector.shape_cast %113 : vector<8xf32> to vector<8x1xf32>
    %115 = vector.broadcast %114 : vector<8x1xf32> to vector<8x16xf32>
    %116 = arith.subf %112, %115 : vector<8x16xf32>
    %117 = math.exp %116 : vector<8x16xf32>
    %cst_93 = arith.constant dense<0.000000e+00> : vector<8xf32>
    %118 = vector.multi_reduction <add>, %117, %cst_93 [1] : vector<8x16xf32> to vector<8xf32>
    %119 = vector.shape_cast %118 : vector<8xf32> to vector<8x1xf32>
    %120 = tpu.reciprocal %119 {approx = true} : vector<8x1xf32> -> vector<8x1xf32>
    %121 = vector.broadcast %120 : vector<8x1xf32> to vector<8x16xf32>
    %122 = arith.mulf %117, %121 : vector<8x16xf32>
    %cst_94 = arith.constant dense<0.000000e+00> : vector<8x8xf32>
    %123 = tpu.matmul %122, %109, %cst_94 {dimension_numbers = #tpu.dot_dimension_numbers<[1], [0], [0], [1], [0, 0, 1, 1], [], []>} : vector<8x16xf32>, vector<16x8xf32>, vector<8x8xf32> -> vector<8x8xf32>
    %c2_95 = arith.constant 2 : index
    %c0_96 = arith.constant 0 : index
    %c0_97 = arith.constant 0 : index
    %124 = vector.load %arg11[%c2_95, %c0_96, %c0_97] : memref<4x8x32xf32, #tpu.memory_space<vmem>>, vector<1x8x32xf32>
    %125 = vector.shape_cast %124 : vector<1x8x32xf32> to vector<8x32xf32>
    %cst_98 = arith.constant dense<0.000000e+00> : vector<8x32xf32>
    %126 = tpu.matmul %123, %125, %cst_98 {dimension_numbers = #tpu.dot_dimension_numbers<[1], [0], [0], [1], [0, 0, 1, 1], [], []>} : vector<8x8xf32>, vector<8x32xf32>, vector<8x32xf32> -> vector<8x32xf32>
    %127 = arith.addf %88, %126 : vector<8x32xf32>
    %c3 = arith.constant 3 : index
    %c0_99 = arith.constant 0 : index
    %c0_100 = arith.constant 0 : index
    %128 = vector.load %arg5[%c3, %c0_99, %c0_100] : memref<4x32x8xf32, #tpu.memory_space<vmem>>, vector<1x32x8xf32>
    %129 = vector.shape_cast %128 : vector<1x32x8xf32> to vector<32x8xf32>
    %cst_101 = arith.constant dense<0.000000e+00> : vector<8x8xf32>
    %130 = tpu.matmul %4, %129, %cst_101 {dimension_numbers = #tpu.dot_dimension_numbers<[1], [0], [0], [1], [0, 0, 1, 1], [], []>} : vector<8x32xf32>, vector<32x8xf32>, vector<8x8xf32> -> vector<8x8xf32>
    %c3_102 = arith.constant 3 : index
    %c0_103 = arith.constant 0 : index
    %c0_104 = arith.constant 0 : index
    %131 = vector.load %arg6[%c3_102, %c0_103, %c0_104] : memref<4x1x8xf32, #tpu.memory_space<vmem>>, vector<1x1x8xf32>
    %132 = vector.shape_cast %131 : vector<1x1x8xf32> to vector<1x8xf32>
    %133 = vector.broadcast %132 : vector<1x8xf32> to vector<8x8xf32>
    %134 = arith.addf %130, %133 : vector<8x8xf32>
    %c3_105 = arith.constant 3 : index
    %c0_106 = arith.constant 0 : index
    %c0_107 = arith.constant 0 : index
    %135 = vector.load %arg7[%c3_105, %c0_106, %c0_107] : memref<4x32x8xf32, #tpu.memory_space<vmem>>, vector<1x32x8xf32>
    %136 = vector.shape_cast %135 : vector<1x32x8xf32> to vector<32x8xf32>
    %cst_108 = arith.constant dense<0.000000e+00> : vector<16x8xf32>
    %137 = tpu.matmul %9, %136, %cst_108 {dimension_numbers = #tpu.dot_dimension_numbers<[1], [0], [0], [1], [0, 0, 1, 1], [], []>} : vector<16x32xf32>, vector<32x8xf32>, vector<16x8xf32> -> vector<16x8xf32>
    %c3_109 = arith.constant 3 : index
    %c0_110 = arith.constant 0 : index
    %c0_111 = arith.constant 0 : index
    %138 = vector.load %arg8[%c3_109, %c0_110, %c0_111] : memref<4x1x8xf32, #tpu.memory_space<vmem>>, vector<1x1x8xf32>
    %139 = vector.shape_cast %138 : vector<1x1x8xf32> to vector<1x8xf32>
    %140 = vector.broadcast %139 : vector<1x8xf32> to vector<16x8xf32>
    %141 = arith.addf %137, %140 : vector<16x8xf32>
    %c3_112 = arith.constant 3 : index
    %c0_113 = arith.constant 0 : index
    %c0_114 = arith.constant 0 : index
    %142 = vector.load %arg9[%c3_112, %c0_113, %c0_114] : memref<4x32x8xf32, #tpu.memory_space<vmem>>, vector<1x32x8xf32>
    %143 = vector.shape_cast %142 : vector<1x32x8xf32> to vector<32x8xf32>
    %cst_115 = arith.constant dense<0.000000e+00> : vector<16x8xf32>
    %144 = tpu.matmul %6, %143, %cst_115 {dimension_numbers = #tpu.dot_dimension_numbers<[1], [0], [0], [1], [0, 0, 1, 1], [], []>} : vector<16x32xf32>, vector<32x8xf32>, vector<16x8xf32> -> vector<16x8xf32>
    %c3_116 = arith.constant 3 : index
    %c0_117 = arith.constant 0 : index
    %c0_118 = arith.constant 0 : index
    %145 = vector.load %arg10[%c3_116, %c0_117, %c0_118] : memref<4x1x8xf32, #tpu.memory_space<vmem>>, vector<1x1x8xf32>
    %146 = vector.shape_cast %145 : vector<1x1x8xf32> to vector<1x8xf32>
    %147 = vector.broadcast %146 : vector<1x8xf32> to vector<16x8xf32>
    %148 = arith.addf %144, %147 : vector<16x8xf32>
    %cst_119 = arith.constant dense<0.000000e+00> : vector<8x16xf32>
    %149 = tpu.matmul %134, %141, %cst_119 {dimension_numbers = #tpu.dot_dimension_numbers<[1], [1], [0], [0], [0, 0, 1, 0], [], []>} : vector<8x8xf32>, vector<16x8xf32>, vector<8x16xf32> -> vector<8x16xf32>
    %cst_120 = arith.constant 0.353553385 : f32
    %150 = vector.broadcast %cst_120 : f32 to vector<8x16xf32>
    %151 = arith.mulf %149, %150 : vector<8x16xf32>
    %cst_121 = arith.constant dense<0xFF800000> : vector<8xf32>
    %152 = vector.multi_reduction <maximumf>, %151, %cst_121 [1] : vector<8x16xf32> to vector<8xf32>
    %153 = vector.shape_cast %152 : vector<8xf32> to vector<8x1xf32>
    %154 = vector.broadcast %153 : vector<8x1xf32> to vector<8x16xf32>
    %155 = arith.subf %151, %154 : vector<8x16xf32>
    %156 = math.exp %155 : vector<8x16xf32>
    %cst_122 = arith.constant dense<0.000000e+00> : vector<8xf32>
    %157 = vector.multi_reduction <add>, %156, %cst_122 [1] : vector<8x16xf32> to vector<8xf32>
    %158 = vector.shape_cast %157 : vector<8xf32> to vector<8x1xf32>
    %159 = tpu.reciprocal %158 {approx = true} : vector<8x1xf32> -> vector<8x1xf32>
    %160 = vector.broadcast %159 : vector<8x1xf32> to vector<8x16xf32>
    %161 = arith.mulf %156, %160 : vector<8x16xf32>
    %cst_123 = arith.constant dense<0.000000e+00> : vector<8x8xf32>
    %162 = tpu.matmul %161, %148, %cst_123 {dimension_numbers = #tpu.dot_dimension_numbers<[1], [0], [0], [1], [0, 0, 1, 1], [], []>} : vector<8x16xf32>, vector<16x8xf32>, vector<8x8xf32> -> vector<8x8xf32>
    %c3_124 = arith.constant 3 : index
    %c0_125 = arith.constant 0 : index
    %c0_126 = arith.constant 0 : index
    %163 = vector.load %arg11[%c3_124, %c0_125, %c0_126] : memref<4x8x32xf32, #tpu.memory_space<vmem>>, vector<1x8x32xf32>
    %164 = vector.shape_cast %163 : vector<1x8x32xf32> to vector<8x32xf32>
    %cst_127 = arith.constant dense<0.000000e+00> : vector<8x32xf32>
    %165 = tpu.matmul %162, %164, %cst_127 {dimension_numbers = #tpu.dot_dimension_numbers<[1], [0], [0], [1], [0, 0, 1, 1], [], []>} : vector<8x8xf32>, vector<8x32xf32>, vector<8x32xf32> -> vector<8x32xf32>
    %166 = arith.addf %127, %165 : vector<8x32xf32>
    %c0_128 = arith.constant 0 : index
    %c0_129 = arith.constant 0 : index
    %167 = vector.load %arg12[%c0_128, %c0_129] : memref<1x32xf32, #tpu.memory_space<vmem>>, vector<1x32xf32>
    %168 = vector.broadcast %167 : vector<1x32xf32> to vector<8x32xf32>
    %169 = arith.addf %166, %168 : vector<8x32xf32>
    %170 = arith.addf %169, %1 : vector<8x32xf32>
    %cst_130 = arith.constant dense<0.000000e+00> : vector<8xf32>
    %171 = vector.multi_reduction <add>, %170, %cst_130 [1] : vector<8x32xf32> to vector<8xf32>
    %172 = vector.shape_cast %171 : vector<8xf32> to vector<8x1xf32>
    %cst_131 = arith.constant 3.200000e+01 : f32
    %173 = vector.broadcast %cst_131 : f32 to vector<8x1xf32>
    %174 = arith.divf %172, %173 : vector<8x1xf32>
    %175 = vector.broadcast %174 : vector<8x1xf32> to vector<8x32xf32>
    %176 = arith.subf %170, %175 : vector<8x32xf32>
    %177 = arith.mulf %176, %176 : vector<8x32xf32>
    %cst_132 = arith.constant dense<0.000000e+00> : vector<8xf32>
    %178 = vector.multi_reduction <add>, %177, %cst_132 [1] : vector<8x32xf32> to vector<8xf32>
    %179 = vector.shape_cast %178 : vector<8xf32> to vector<8x1xf32>
    %cst_133 = arith.constant 3.200000e+01 : f32
    %180 = vector.broadcast %cst_133 : f32 to vector<8x1xf32>
    %181 = arith.divf %179, %180 : vector<8x1xf32>
    %cst_134 = arith.constant 9.99999974E-6 : f32
    %182 = vector.broadcast %cst_134 : f32 to vector<8x1xf32>
    %183 = arith.addf %181, %182 : vector<8x1xf32>
    %184 = math.rsqrt %183 : vector<8x1xf32>
    %185 = vector.broadcast %184 : vector<8x1xf32> to vector<8x32xf32>
    %186 = arith.mulf %176, %185 : vector<8x32xf32>
    %c0_135 = arith.constant 0 : index
    %c0_136 = arith.constant 0 : index
    %187 = vector.load %arg13[%c0_135, %c0_136] : memref<1x32xf32, #tpu.memory_space<vmem>>, vector<1x32xf32>
    %188 = vector.broadcast %187 : vector<1x32xf32> to vector<8x32xf32>
    %189 = arith.mulf %186, %188 : vector<8x32xf32>
    %c0_137 = arith.constant 0 : index
    %c0_138 = arith.constant 0 : index
    %190 = vector.load %arg14[%c0_137, %c0_138] : memref<1x32xf32, #tpu.memory_space<vmem>>, vector<1x32xf32>
    %191 = vector.broadcast %190 : vector<1x32xf32> to vector<8x32xf32>
    %192 = arith.addf %189, %191 : vector<8x32xf32>
    %c0_139 = arith.constant 0 : index
    %c0_140 = arith.constant 0 : index
    %c0_141 = arith.constant 0 : index
    %193 = vector.load %arg15[%c0_139, %c0_140, %c0_141] : memref<1x8x32xf32, #tpu.memory_space<vmem>>, vector<1x8x32xf32>
    %194 = vector.shape_cast %193 : vector<1x8x32xf32> to vector<8x32xf32>
    %195 = vector.shape_cast %192 : vector<8x32xf32> to vector<1x8x32xf32>
    tpu.vector_store %arg15[%c0_139, %c0_140, %c0_141], %195 {strides = array<i32>} : memref<1x8x32xf32, #tpu.memory_space<vmem>>, vector<1x8x32xf32>,
    return
  }
  func.func @transform_0(%arg0: i32) -> (i32, i32, i32) {
    %c0_i32 = arith.constant 0 : i32
    %c0_i32_0 = arith.constant 0 : i32
    %c0_i32_1 = arith.constant 0 : i32
    return %arg0, %c0_i32, %c0_i32_0 : i32, i32, i32
  }
  func.func @transform_1(%arg0: i32) -> (i32, i32, i32) {
    %c0_i32 = arith.constant 0 : i32
    %c0_i32_0 = arith.constant 0 : i32
    %c0_i32_1 = arith.constant 0 : i32
    return %arg0, %c0_i32, %c0_i32_0 : i32, i32, i32
  }
  func.func @transform_2(%arg0: i32) -> (i32, i32, i32) {
    %c0_i32 = arith.constant 0 : i32
    %c0_i32_0 = arith.constant 0 : i32
    %c0_i32_1 = arith.constant 0 : i32
    return %arg0, %c0_i32, %c0_i32_0 : i32, i32, i32
  }
  func.func @transform_3(%arg0: i32) -> (i32, i32, i32) {
    %c0_i32 = arith.constant 0 : i32
    %c0_i32_0 = arith.constant 0 : i32
    %c0_i32_1 = arith.constant 0 : i32
    return %arg0, %c0_i32, %c0_i32_0 : i32, i32, i32
  }
  func.func @transform_4(%arg0: i32) -> (i32, i32, i32) {
    %c0_i32 = arith.constant 0 : i32
    %c0_i32_0 = arith.constant 0 : i32
    %c0_i32_1 = arith.constant 0 : i32
    %c0_i32_2 = arith.constant 0 : i32
    return %c0_i32, %c0_i32_0, %c0_i32_1 : i32, i32, i32
  }
  func.func @transform_5(%arg0: i32) -> (i32, i32, i32) {
    %c0_i32 = arith.constant 0 : i32
    %c0_i32_0 = arith.constant 0 : i32
    %c0_i32_1 = arith.constant 0 : i32
    %c0_i32_2 = arith.constant 0 : i32
    return %c0_i32, %c0_i32_0, %c0_i32_1 : i32, i32, i32
  }
  func.func @transform_6(%arg0: i32) -> (i32, i32, i32) {
    %c0_i32 = arith.constant 0 : i32
    %c0_i32_0 = arith.constant 0 : i32
    %c0_i32_1 = arith.constant 0 : i32
    %c0_i32_2 = arith.constant 0 : i32
    return %c0_i32, %c0_i32_0, %c0_i32_1 : i32, i32, i32
  }
  func.func @transform_7(%arg0: i32) -> (i32, i32, i32) {
    %c0_i32 = arith.constant 0 : i32
    %c0_i32_0 = arith.constant 0 : i32
    %c0_i32_1 = arith.constant 0 : i32
    %c0_i32_2 = arith.constant 0 : i32
    return %c0_i32, %c0_i32_0, %c0_i32_1 : i32, i32, i32
  }
  func.func @transform_8(%arg0: i32) -> (i32, i32, i32) {
    %c0_i32 = arith.constant 0 : i32
    %c0_i32_0 = arith.constant 0 : i32
    %c0_i32_1 = arith.constant 0 : i32
    %c0_i32_2 = arith.constant 0 : i32
    return %c0_i32, %c0_i32_0, %c0_i32_1 : i32, i32, i32
  }
  func.func @transform_9(%arg0: i32) -> (i32, i32, i32) {
    %c0_i32 = arith.constant 0 : i32
    %c0_i32_0 = arith.constant 0 : i32
    %c0_i32_1 = arith.constant 0 : i32
    %c0_i32_2 = arith.constant 0 : i32
    return %c0_i32, %c0_i32_0, %c0_i32_1 : i32, i32, i32
  }
  func.func @transform_10(%arg0: i32) -> (i32, i32, i32) {
    %c0_i32 = arith.constant 0 : i32
    %c0_i32_0 = arith.constant 0 : i32
    %c0_i32_1 = arith.constant 0 : i32
    %c0_i32_2 = arith.constant 0 : i32
    return %c0_i32, %c0_i32_0, %c0_i32_1 : i32, i32, i32
  }
  func.func @transform_11(%arg0: i32) -> (i32, i32) {
    %c0_i32 = arith.constant 0 : i32
    %c0_i32_0 = arith.constant 0 : i32
    %c0_i32_1 = arith.constant 0 : i32
    return %c0_i32, %c0_i32_0 : i32, i32
  }
  func.func @transform_12(%arg0: i32) -> (i32, i32) {
    %c0_i32 = arith.constant 0 : i32
    %c0_i32_0 = arith.constant 0 : i32
    %c0_i32_1 = arith.constant 0 : i32
    return %c0_i32, %c0_i32_0 : i32, i32
  }
  func.func @transform_13(%arg0: i32) -> (i32, i32) {
    %c0_i32 = arith.constant 0 : i32
    %c0_i32_0 = arith.constant 0 : i32
    %c0_i32_1 = arith.constant 0 : i32
    return %c0_i32, %c0_i32_0 : i32, i32
  }
  func.func @transform_14(%arg0: i32) -> (i32, i32, i32) {
    %c0_i32 = arith.constant 0 : i32
    %c0_i32_0 = arith.constant 0 : i32
    %c0_i32_1 = arith.constant 0 : i32
    return %arg0, %c0_i32, %c0_i32_0 : i32, i32, i32
  }
}

module attributes {stable_mosaic.version = 11 : i64} {
  func.func @_mha_ln_kernel(%arg0: i32, %arg1: memref<1x8x32xf32, #tpu.memory_space<vmem>>, %arg2: memref<1x8x32xf32, #tpu.memory_space<vmem>>, %arg3: memref<1x8x32xf32, #tpu.memory_space<vmem>>, %arg4: memref<1x8x32xf32, #tpu.memory_space<vmem>>, %arg5: memref<4x32x8xf32, #tpu.memory_space<vmem>>, %arg6: memref<4x1x8xf32, #tpu.memory_space<vmem>>, %arg7: memref<4x32x8xf32, #tpu.memory_space<vmem>>, %arg8: memref<4x1x8xf32, #tpu.memory_space<vmem>>, %arg9: memref<4x32x8xf32, #tpu.memory_space<vmem>>, %arg10: memref<4x1x8xf32, #tpu.memory_space<vmem>>, %arg11: memref<4x8x32xf32, #tpu.memory_space<vmem>>, %arg12: memref<1x32xf32, #tpu.memory_space<vmem>>, %arg13: memref<1x32xf32, #tpu.memory_space<vmem>>, %arg14: memref<1x32xf32, #tpu.memory_space<vmem>>, %arg15: memref<1x8x32xf32, #tpu.memory_space<vmem>>) attributes {dimension_semantics = [#tpu.dimension_semantics<parallel>], iteration_bounds = array<i64: 2>, scalar_prefetch = 0 : i64, scratch_operands = 0 : i64, tpu.core_type = #tpu.core_type<tc>, window_params = [{transform_indices = @transform_0, window_bounds = array<i64: 1, 8, 32>}, {transform_indices = @transform_1, window_bounds = array<i64: 1, 8, 32>}, {transform_indices = @transform_2, window_bounds = array<i64: 1, 8, 32>}, {transform_indices = @transform_3, window_bounds = array<i64: 1, 8, 32>}, {pipeline_mode = #tpu.pipeline_mode<synchronous>, transform_indices = @transform_4, window_bounds = array<i64: 4, 32, 8>}, {pipeline_mode = #tpu.pipeline_mode<synchronous>, transform_indices = @transform_5, window_bounds = array<i64: 4, 1, 8>}, {pipeline_mode = #tpu.pipeline_mode<synchronous>, transform_indices = @transform_6, window_bounds = array<i64: 4, 32, 8>}, {pipeline_mode = #tpu.pipeline_mode<synchronous>, transform_indices = @transform_7, window_bounds = array<i64: 4, 1, 8>}, {pipeline_mode = #tpu.pipeline_mode<synchronous>, transform_indices = @transform_8, window_bounds = array<i64: 4, 32, 8>}, {pipeline_mode = #tpu.pipeline_mode<synchronous>, transform_indices = @transform_9, window_bounds = array<i64: 4, 1, 8>}, {pipeline_mode = #tpu.pipeline_mode<synchronous>, transform_indices = @transform_10, window_bounds = array<i64: 4, 8, 32>}, {pipeline_mode = #tpu.pipeline_mode<synchronous>, transform_indices = @transform_11, window_bounds = array<i64: 1, 32>}, {pipeline_mode = #tpu.pipeline_mode<synchronous>, transform_indices = @transform_12, window_bounds = array<i64: 1, 32>}, {pipeline_mode = #tpu.pipeline_mode<synchronous>, transform_indices = @transform_13, window_bounds = array<i64: 1, 32>}, {transform_indices = @transform_14, window_bounds = array<i64: 1, 8, 32>}]} {
    %c0 = arith.constant 0 : index
    %c0_0 = arith.constant 0 : index
    %c0_1 = arith.constant 0 : index
    %0 = vector.load %arg1[%c0, %c0_0, %c0_1] : memref<1x8x32xf32, #tpu.memory_space<vmem>>, vector<1x8x32xf32>
    %1 = vector.shape_cast %0 : vector<1x8x32xf32> to vector<8x32xf32>
    %c0_2 = arith.constant 0 : index
    %c0_3 = arith.constant 0 : index
    %c0_4 = arith.constant 0 : index
    %2 = vector.load %arg2[%c0_2, %c0_3, %c0_4] : memref<1x8x32xf32, #tpu.memory_space<vmem>>, vector<1x8x32xf32>
    %3 = vector.shape_cast %2 : vector<1x8x32xf32> to vector<8x32xf32>
    %4 = arith.addf %1, %3 : vector<8x32xf32>
    %c0_5 = arith.constant 0 : index
    %c0_6 = arith.constant 0 : index
    %c0_7 = arith.constant 0 : index
    %5 = vector.load %arg3[%c0_5, %c0_6, %c0_7] : memref<1x8x32xf32, #tpu.memory_space<vmem>>, vector<1x8x32xf32>
    %6 = vector.shape_cast %5 : vector<1x8x32xf32> to vector<8x32xf32>
    %c0_8 = arith.constant 0 : index
    %c0_9 = arith.constant 0 : index
    %c0_10 = arith.constant 0 : index
    %7 = vector.load %arg4[%c0_8, %c0_9, %c0_10] : memref<1x8x32xf32, #tpu.memory_space<vmem>>, vector<1x8x32xf32>
    %8 = vector.shape_cast %7 : vector<1x8x32xf32> to vector<8x32xf32>
    %9 = arith.addf %6, %8 : vector<8x32xf32>
    %cst = arith.constant 0.000000e+00 : f32
    %10 = vector.broadcast %cst : f32 to vector<8x32xf32>
    %c0_11 = arith.constant 0 : index
    %c0_12 = arith.constant 0 : index
    %c0_13 = arith.constant 0 : index
    %11 = vector.load %arg5[%c0_11, %c0_12, %c0_13] : memref<4x32x8xf32, #tpu.memory_space<vmem>>, vector<1x32x8xf32>
    %12 = vector.shape_cast %11 : vector<1x32x8xf32> to vector<32x8xf32>
    %cst_14 = arith.constant dense<0.000000e+00> : vector<8x8xf32>
    %13 = tpu.matmul %4, %12, %cst_14 {dimension_numbers = #tpu.dot_dimension_numbers<[1], [0], [0], [1], [0, 0, 1, 1], [], []>} : vector<8x32xf32>, vector<32x8xf32>, vector<8x8xf32> -> vector<8x8xf32>
    %c0_15 = arith.constant 0 : index
    %c0_16 = arith.constant 0 : index
    %c0_17 = arith.constant 0 : index
    %14 = vector.load %arg6[%c0_15, %c0_16, %c0_17] : memref<4x1x8xf32, #tpu.memory_space<vmem>>, vector<1x1x8xf32>
    %15 = vector.shape_cast %14 : vector<1x1x8xf32> to vector<1x8xf32>
    %16 = vector.broadcast %15 : vector<1x8xf32> to vector<8x8xf32>
    %17 = arith.addf %13, %16 : vector<8x8xf32>
    %c0_18 = arith.constant 0 : index
    %c0_19 = arith.constant 0 : index
    %c0_20 = arith.constant 0 : index
    %18 = vector.load %arg7[%c0_18, %c0_19, %c0_20] : memref<4x32x8xf32, #tpu.memory_space<vmem>>, vector<1x32x8xf32>
    %19 = vector.shape_cast %18 : vector<1x32x8xf32> to vector<32x8xf32>
    %cst_21 = arith.constant dense<0.000000e+00> : vector<8x8xf32>
    %20 = tpu.matmul %9, %19, %cst_21 {dimension_numbers = #tpu.dot_dimension_numbers<[1], [0], [0], [1], [0, 0, 1, 1], [], []>} : vector<8x32xf32>, vector<32x8xf32>, vector<8x8xf32> -> vector<8x8xf32>
    %c0_22 = arith.constant 0 : index
    %c0_23 = arith.constant 0 : index
    %c0_24 = arith.constant 0 : index
    %21 = vector.load %arg8[%c0_22, %c0_23, %c0_24] : memref<4x1x8xf32, #tpu.memory_space<vmem>>, vector<1x1x8xf32>
    %22 = vector.shape_cast %21 : vector<1x1x8xf32> to vector<1x8xf32>
    %23 = vector.broadcast %22 : vector<1x8xf32> to vector<8x8xf32>
    %24 = arith.addf %20, %23 : vector<8x8xf32>
    %c0_25 = arith.constant 0 : index
    %c0_26 = arith.constant 0 : index
    %c0_27 = arith.constant 0 : index
    %25 = vector.load %arg9[%c0_25, %c0_26, %c0_27] : memref<4x32x8xf32, #tpu.memory_space<vmem>>, vector<1x32x8xf32>
    %26 = vector.shape_cast %25 : vector<1x32x8xf32> to vector<32x8xf32>
    %cst_28 = arith.constant dense<0.000000e+00> : vector<8x8xf32>
    %27 = tpu.matmul %9, %26, %cst_28 {dimension_numbers = #tpu.dot_dimension_numbers<[1], [0], [0], [1], [0, 0, 1, 1], [], []>} : vector<8x32xf32>, vector<32x8xf32>, vector<8x8xf32> -> vector<8x8xf32>
    %c0_29 = arith.constant 0 : index
    %c0_30 = arith.constant 0 : index
    %c0_31 = arith.constant 0 : index
    %28 = vector.load %arg10[%c0_29, %c0_30, %c0_31] : memref<4x1x8xf32, #tpu.memory_space<vmem>>, vector<1x1x8xf32>
    %29 = vector.shape_cast %28 : vector<1x1x8xf32> to vector<1x8xf32>
    %30 = vector.broadcast %29 : vector<1x8xf32> to vector<8x8xf32>
    %31 = arith.addf %27, %30 : vector<8x8xf32>
    %cst_32 = arith.constant dense<0.000000e+00> : vector<8x8xf32>
    %32 = tpu.matmul %17, %24, %cst_32 {dimension_numbers = #tpu.dot_dimension_numbers<[1], [1], [0], [0], [0, 0, 1, 0], [], []>} : vector<8x8xf32>, vector<8x8xf32>, vector<8x8xf32> -> vector<8x8xf32>
    %cst_33 = arith.constant 0.353553385 : f32
    %33 = vector.broadcast %cst_33 : f32 to vector<8x8xf32>
    %34 = arith.mulf %32, %33 : vector<8x8xf32>
    %cst_34 = arith.constant dense<0xFF800000> : vector<8xf32>
    %35 = vector.multi_reduction <maximumf>, %34, %cst_34 [1] : vector<8x8xf32> to vector<8xf32>
    %36 = vector.shape_cast %35 : vector<8xf32> to vector<8x1xf32>
    %37 = vector.broadcast %36 : vector<8x1xf32> to vector<8x8xf32>
    %38 = arith.subf %34, %37 : vector<8x8xf32>
    %39 = math.exp %38 : vector<8x8xf32>
    %cst_35 = arith.constant dense<0.000000e+00> : vector<8xf32>
    %40 = vector.multi_reduction <add>, %39, %cst_35 [1] : vector<8x8xf32> to vector<8xf32>
    %41 = vector.shape_cast %40 : vector<8xf32> to vector<8x1xf32>
    %42 = tpu.reciprocal %41 {approx = true} : vector<8x1xf32> -> vector<8x1xf32>
    %43 = vector.broadcast %42 : vector<8x1xf32> to vector<8x8xf32>
    %44 = arith.mulf %39, %43 : vector<8x8xf32>
    %cst_36 = arith.constant dense<0.000000e+00> : vector<8x8xf32>
    %45 = tpu.matmul %44, %31, %cst_36 {dimension_numbers = #tpu.dot_dimension_numbers<[1], [0], [0], [1], [0, 0, 1, 1], [], []>} : vector<8x8xf32>, vector<8x8xf32>, vector<8x8xf32> -> vector<8x8xf32>
    %c0_37 = arith.constant 0 : index
    %c0_38 = arith.constant 0 : index
    %c0_39 = arith.constant 0 : index
    %46 = vector.load %arg11[%c0_37, %c0_38, %c0_39] : memref<4x8x32xf32, #tpu.memory_space<vmem>>, vector<1x8x32xf32>
    %47 = vector.shape_cast %46 : vector<1x8x32xf32> to vector<8x32xf32>
    %cst_40 = arith.constant dense<0.000000e+00> : vector<8x32xf32>
    %48 = tpu.matmul %45, %47, %cst_40 {dimension_numbers = #tpu.dot_dimension_numbers<[1], [0], [0], [1], [0, 0, 1, 1], [], []>} : vector<8x8xf32>, vector<8x32xf32>, vector<8x32xf32> -> vector<8x32xf32>
    %49 = arith.addf %10, %48 : vector<8x32xf32>
    %c1 = arith.constant 1 : index
    %c0_41 = arith.constant 0 : index
    %c0_42 = arith.constant 0 : index
    %50 = vector.load %arg5[%c1, %c0_41, %c0_42] : memref<4x32x8xf32, #tpu.memory_space<vmem>>, vector<1x32x8xf32>
    %51 = vector.shape_cast %50 : vector<1x32x8xf32> to vector<32x8xf32>
    %cst_43 = arith.constant dense<0.000000e+00> : vector<8x8xf32>
    %52 = tpu.matmul %4, %51, %cst_43 {dimension_numbers = #tpu.dot_dimension_numbers<[1], [0], [0], [1], [0, 0, 1, 1], [], []>} : vector<8x32xf32>, vector<32x8xf32>, vector<8x8xf32> -> vector<8x8xf32>
    %c1_44 = arith.constant 1 : index
    %c0_45 = arith.constant 0 : index
    %c0_46 = arith.constant 0 : index
    %53 = vector.load %arg6[%c1_44, %c0_45, %c0_46] : memref<4x1x8xf32, #tpu.memory_space<vmem>>, vector<1x1x8xf32>
    %54 = vector.shape_cast %53 : vector<1x1x8xf32> to vector<1x8xf32>
    %55 = vector.broadcast %54 : vector<1x8xf32> to vector<8x8xf32>
    %56 = arith.addf %52, %55 : vector<8x8xf32>
    %c1_47 = arith.constant 1 : index
    %c0_48 = arith.constant 0 : index
    %c0_49 = arith.constant 0 : index
    %57 = vector.load %arg7[%c1_47, %c0_48, %c0_49] : memref<4x32x8xf32, #tpu.memory_space<vmem>>, vector<1x32x8xf32>
    %58 = vector.shape_cast %57 : vector<1x32x8xf32> to vector<32x8xf32>
    %cst_50 = arith.constant dense<0.000000e+00> : vector<8x8xf32>
    %59 = tpu.matmul %9, %58, %cst_50 {dimension_numbers = #tpu.dot_dimension_numbers<[1], [0], [0], [1], [0, 0, 1, 1], [], []>} : vector<8x32xf32>, vector<32x8xf32>, vector<8x8xf32> -> vector<8x8xf32>
    %c1_51 = arith.constant 1 : index
    %c0_52 = arith.constant 0 : index
    %c0_53 = arith.constant 0 : index
    %60 = vector.load %arg8[%c1_51, %c0_52, %c0_53] : memref<4x1x8xf32, #tpu.memory_space<vmem>>, vector<1x1x8xf32>
    %61 = vector.shape_cast %60 : vector<1x1x8xf32> to vector<1x8xf32>
    %62 = vector.broadcast %61 : vector<1x8xf32> to vector<8x8xf32>
    %63 = arith.addf %59, %62 : vector<8x8xf32>
    %c1_54 = arith.constant 1 : index
    %c0_55 = arith.constant 0 : index
    %c0_56 = arith.constant 0 : index
    %64 = vector.load %arg9[%c1_54, %c0_55, %c0_56] : memref<4x32x8xf32, #tpu.memory_space<vmem>>, vector<1x32x8xf32>
    %65 = vector.shape_cast %64 : vector<1x32x8xf32> to vector<32x8xf32>
    %cst_57 = arith.constant dense<0.000000e+00> : vector<8x8xf32>
    %66 = tpu.matmul %9, %65, %cst_57 {dimension_numbers = #tpu.dot_dimension_numbers<[1], [0], [0], [1], [0, 0, 1, 1], [], []>} : vector<8x32xf32>, vector<32x8xf32>, vector<8x8xf32> -> vector<8x8xf32>
    %c1_58 = arith.constant 1 : index
    %c0_59 = arith.constant 0 : index
    %c0_60 = arith.constant 0 : index
    %67 = vector.load %arg10[%c1_58, %c0_59, %c0_60] : memref<4x1x8xf32, #tpu.memory_space<vmem>>, vector<1x1x8xf32>
    %68 = vector.shape_cast %67 : vector<1x1x8xf32> to vector<1x8xf32>
    %69 = vector.broadcast %68 : vector<1x8xf32> to vector<8x8xf32>
    %70 = arith.addf %66, %69 : vector<8x8xf32>
    %cst_61 = arith.constant dense<0.000000e+00> : vector<8x8xf32>
    %71 = tpu.matmul %56, %63, %cst_61 {dimension_numbers = #tpu.dot_dimension_numbers<[1], [1], [0], [0], [0, 0, 1, 0], [], []>} : vector<8x8xf32>, vector<8x8xf32>, vector<8x8xf32> -> vector<8x8xf32>
    %cst_62 = arith.constant 0.353553385 : f32
    %72 = vector.broadcast %cst_62 : f32 to vector<8x8xf32>
    %73 = arith.mulf %71, %72 : vector<8x8xf32>
    %cst_63 = arith.constant dense<0xFF800000> : vector<8xf32>
    %74 = vector.multi_reduction <maximumf>, %73, %cst_63 [1] : vector<8x8xf32> to vector<8xf32>
    %75 = vector.shape_cast %74 : vector<8xf32> to vector<8x1xf32>
    %76 = vector.broadcast %75 : vector<8x1xf32> to vector<8x8xf32>
    %77 = arith.subf %73, %76 : vector<8x8xf32>
    %78 = math.exp %77 : vector<8x8xf32>
    %cst_64 = arith.constant dense<0.000000e+00> : vector<8xf32>
    %79 = vector.multi_reduction <add>, %78, %cst_64 [1] : vector<8x8xf32> to vector<8xf32>
    %80 = vector.shape_cast %79 : vector<8xf32> to vector<8x1xf32>
    %81 = tpu.reciprocal %80 {approx = true} : vector<8x1xf32> -> vector<8x1xf32>
    %82 = vector.broadcast %81 : vector<8x1xf32> to vector<8x8xf32>
    %83 = arith.mulf %78, %82 : vector<8x8xf32>
    %cst_65 = arith.constant dense<0.000000e+00> : vector<8x8xf32>
    %84 = tpu.matmul %83, %70, %cst_65 {dimension_numbers = #tpu.dot_dimension_numbers<[1], [0], [0], [1], [0, 0, 1, 1], [], []>} : vector<8x8xf32>, vector<8x8xf32>, vector<8x8xf32> -> vector<8x8xf32>
    %c1_66 = arith.constant 1 : index
    %c0_67 = arith.constant 0 : index
    %c0_68 = arith.constant 0 : index
    %85 = vector.load %arg11[%c1_66, %c0_67, %c0_68] : memref<4x8x32xf32, #tpu.memory_space<vmem>>, vector<1x8x32xf32>
    %86 = vector.shape_cast %85 : vector<1x8x32xf32> to vector<8x32xf32>
    %cst_69 = arith.constant dense<0.000000e+00> : vector<8x32xf32>
    %87 = tpu.matmul %84, %86, %cst_69 {dimension_numbers = #tpu.dot_dimension_numbers<[1], [0], [0], [1], [0, 0, 1, 1], [], []>} : vector<8x8xf32>, vector<8x32xf32>, vector<8x32xf32> -> vector<8x32xf32>
    %88 = arith.addf %49, %87 : vector<8x32xf32>
    %c2 = arith.constant 2 : index
    %c0_70 = arith.constant 0 : index
    %c0_71 = arith.constant 0 : index
    %89 = vector.load %arg5[%c2, %c0_70, %c0_71] : memref<4x32x8xf32, #tpu.memory_space<vmem>>, vector<1x32x8xf32>
    %90 = vector.shape_cast %89 : vector<1x32x8xf32> to vector<32x8xf32>
    %cst_72 = arith.constant dense<0.000000e+00> : vector<8x8xf32>
    %91 = tpu.matmul %4, %90, %cst_72 {dimension_numbers = #tpu.dot_dimension_numbers<[1], [0], [0], [1], [0, 0, 1, 1], [], []>} : vector<8x32xf32>, vector<32x8xf32>, vector<8x8xf32> -> vector<8x8xf32>
    %c2_73 = arith.constant 2 : index
    %c0_74 = arith.constant 0 : index
    %c0_75 = arith.constant 0 : index
    %92 = vector.load %arg6[%c2_73, %c0_74, %c0_75] : memref<4x1x8xf32, #tpu.memory_space<vmem>>, vector<1x1x8xf32>
    %93 = vector.shape_cast %92 : vector<1x1x8xf32> to vector<1x8xf32>
    %94 = vector.broadcast %93 : vector<1x8xf32> to vector<8x8xf32>
    %95 = arith.addf %91, %94 : vector<8x8xf32>
    %c2_76 = arith.constant 2 : index
    %c0_77 = arith.constant 0 : index
    %c0_78 = arith.constant 0 : index
    %96 = vector.load %arg7[%c2_76, %c0_77, %c0_78] : memref<4x32x8xf32, #tpu.memory_space<vmem>>, vector<1x32x8xf32>
    %97 = vector.shape_cast %96 : vector<1x32x8xf32> to vector<32x8xf32>
    %cst_79 = arith.constant dense<0.000000e+00> : vector<8x8xf32>
    %98 = tpu.matmul %9, %97, %cst_79 {dimension_numbers = #tpu.dot_dimension_numbers<[1], [0], [0], [1], [0, 0, 1, 1], [], []>} : vector<8x32xf32>, vector<32x8xf32>, vector<8x8xf32> -> vector<8x8xf32>
    %c2_80 = arith.constant 2 : index
    %c0_81 = arith.constant 0 : index
    %c0_82 = arith.constant 0 : index
    %99 = vector.load %arg8[%c2_80, %c0_81, %c0_82] : memref<4x1x8xf32, #tpu.memory_space<vmem>>, vector<1x1x8xf32>
    %100 = vector.shape_cast %99 : vector<1x1x8xf32> to vector<1x8xf32>
    %101 = vector.broadcast %100 : vector<1x8xf32> to vector<8x8xf32>
    %102 = arith.addf %98, %101 : vector<8x8xf32>
    %c2_83 = arith.constant 2 : index
    %c0_84 = arith.constant 0 : index
    %c0_85 = arith.constant 0 : index
    %103 = vector.load %arg9[%c2_83, %c0_84, %c0_85] : memref<4x32x8xf32, #tpu.memory_space<vmem>>, vector<1x32x8xf32>
    %104 = vector.shape_cast %103 : vector<1x32x8xf32> to vector<32x8xf32>
    %cst_86 = arith.constant dense<0.000000e+00> : vector<8x8xf32>
    %105 = tpu.matmul %9, %104, %cst_86 {dimension_numbers = #tpu.dot_dimension_numbers<[1], [0], [0], [1], [0, 0, 1, 1], [], []>} : vector<8x32xf32>, vector<32x8xf32>, vector<8x8xf32> -> vector<8x8xf32>
    %c2_87 = arith.constant 2 : index
    %c0_88 = arith.constant 0 : index
    %c0_89 = arith.constant 0 : index
    %106 = vector.load %arg10[%c2_87, %c0_88, %c0_89] : memref<4x1x8xf32, #tpu.memory_space<vmem>>, vector<1x1x8xf32>
    %107 = vector.shape_cast %106 : vector<1x1x8xf32> to vector<1x8xf32>
    %108 = vector.broadcast %107 : vector<1x8xf32> to vector<8x8xf32>
    %109 = arith.addf %105, %108 : vector<8x8xf32>
    %cst_90 = arith.constant dense<0.000000e+00> : vector<8x8xf32>
    %110 = tpu.matmul %95, %102, %cst_90 {dimension_numbers = #tpu.dot_dimension_numbers<[1], [1], [0], [0], [0, 0, 1, 0], [], []>} : vector<8x8xf32>, vector<8x8xf32>, vector<8x8xf32> -> vector<8x8xf32>
    %cst_91 = arith.constant 0.353553385 : f32
    %111 = vector.broadcast %cst_91 : f32 to vector<8x8xf32>
    %112 = arith.mulf %110, %111 : vector<8x8xf32>
    %cst_92 = arith.constant dense<0xFF800000> : vector<8xf32>
    %113 = vector.multi_reduction <maximumf>, %112, %cst_92 [1] : vector<8x8xf32> to vector<8xf32>
    %114 = vector.shape_cast %113 : vector<8xf32> to vector<8x1xf32>
    %115 = vector.broadcast %114 : vector<8x1xf32> to vector<8x8xf32>
    %116 = arith.subf %112, %115 : vector<8x8xf32>
    %117 = math.exp %116 : vector<8x8xf32>
    %cst_93 = arith.constant dense<0.000000e+00> : vector<8xf32>
    %118 = vector.multi_reduction <add>, %117, %cst_93 [1] : vector<8x8xf32> to vector<8xf32>
    %119 = vector.shape_cast %118 : vector<8xf32> to vector<8x1xf32>
    %120 = tpu.reciprocal %119 {approx = true} : vector<8x1xf32> -> vector<8x1xf32>
    %121 = vector.broadcast %120 : vector<8x1xf32> to vector<8x8xf32>
    %122 = arith.mulf %117, %121 : vector<8x8xf32>
    %cst_94 = arith.constant dense<0.000000e+00> : vector<8x8xf32>
    %123 = tpu.matmul %122, %109, %cst_94 {dimension_numbers = #tpu.dot_dimension_numbers<[1], [0], [0], [1], [0, 0, 1, 1], [], []>} : vector<8x8xf32>, vector<8x8xf32>, vector<8x8xf32> -> vector<8x8xf32>
    %c2_95 = arith.constant 2 : index
    %c0_96 = arith.constant 0 : index
    %c0_97 = arith.constant 0 : index
    %124 = vector.load %arg11[%c2_95, %c0_96, %c0_97] : memref<4x8x32xf32, #tpu.memory_space<vmem>>, vector<1x8x32xf32>
    %125 = vector.shape_cast %124 : vector<1x8x32xf32> to vector<8x32xf32>
    %cst_98 = arith.constant dense<0.000000e+00> : vector<8x32xf32>
    %126 = tpu.matmul %123, %125, %cst_98 {dimension_numbers = #tpu.dot_dimension_numbers<[1], [0], [0], [1], [0, 0, 1, 1], [], []>} : vector<8x8xf32>, vector<8x32xf32>, vector<8x32xf32> -> vector<8x32xf32>
    %127 = arith.addf %88, %126 : vector<8x32xf32>
    %c3 = arith.constant 3 : index
    %c0_99 = arith.constant 0 : index
    %c0_100 = arith.constant 0 : index
    %128 = vector.load %arg5[%c3, %c0_99, %c0_100] : memref<4x32x8xf32, #tpu.memory_space<vmem>>, vector<1x32x8xf32>
    %129 = vector.shape_cast %128 : vector<1x32x8xf32> to vector<32x8xf32>
    %cst_101 = arith.constant dense<0.000000e+00> : vector<8x8xf32>
    %130 = tpu.matmul %4, %129, %cst_101 {dimension_numbers = #tpu.dot_dimension_numbers<[1], [0], [0], [1], [0, 0, 1, 1], [], []>} : vector<8x32xf32>, vector<32x8xf32>, vector<8x8xf32> -> vector<8x8xf32>
    %c3_102 = arith.constant 3 : index
    %c0_103 = arith.constant 0 : index
    %c0_104 = arith.constant 0 : index
    %131 = vector.load %arg6[%c3_102, %c0_103, %c0_104] : memref<4x1x8xf32, #tpu.memory_space<vmem>>, vector<1x1x8xf32>
    %132 = vector.shape_cast %131 : vector<1x1x8xf32> to vector<1x8xf32>
    %133 = vector.broadcast %132 : vector<1x8xf32> to vector<8x8xf32>
    %134 = arith.addf %130, %133 : vector<8x8xf32>
    %c3_105 = arith.constant 3 : index
    %c0_106 = arith.constant 0 : index
    %c0_107 = arith.constant 0 : index
    %135 = vector.load %arg7[%c3_105, %c0_106, %c0_107] : memref<4x32x8xf32, #tpu.memory_space<vmem>>, vector<1x32x8xf32>
    %136 = vector.shape_cast %135 : vector<1x32x8xf32> to vector<32x8xf32>
    %cst_108 = arith.constant dense<0.000000e+00> : vector<8x8xf32>
    %137 = tpu.matmul %9, %136, %cst_108 {dimension_numbers = #tpu.dot_dimension_numbers<[1], [0], [0], [1], [0, 0, 1, 1], [], []>} : vector<8x32xf32>, vector<32x8xf32>, vector<8x8xf32> -> vector<8x8xf32>
    %c3_109 = arith.constant 3 : index
    %c0_110 = arith.constant 0 : index
    %c0_111 = arith.constant 0 : index
    %138 = vector.load %arg8[%c3_109, %c0_110, %c0_111] : memref<4x1x8xf32, #tpu.memory_space<vmem>>, vector<1x1x8xf32>
    %139 = vector.shape_cast %138 : vector<1x1x8xf32> to vector<1x8xf32>
    %140 = vector.broadcast %139 : vector<1x8xf32> to vector<8x8xf32>
    %141 = arith.addf %137, %140 : vector<8x8xf32>
    %c3_112 = arith.constant 3 : index
    %c0_113 = arith.constant 0 : index
    %c0_114 = arith.constant 0 : index
    %142 = vector.load %arg9[%c3_112, %c0_113, %c0_114] : memref<4x32x8xf32, #tpu.memory_space<vmem>>, vector<1x32x8xf32>
    %143 = vector.shape_cast %142 : vector<1x32x8xf32> to vector<32x8xf32>
    %cst_115 = arith.constant dense<0.000000e+00> : vector<8x8xf32>
    %144 = tpu.matmul %9, %143, %cst_115 {dimension_numbers = #tpu.dot_dimension_numbers<[1], [0], [0], [1], [0, 0, 1, 1], [], []>} : vector<8x32xf32>, vector<32x8xf32>, vector<8x8xf32> -> vector<8x8xf32>
    %c3_116 = arith.constant 3 : index
    %c0_117 = arith.constant 0 : index
    %c0_118 = arith.constant 0 : index
    %145 = vector.load %arg10[%c3_116, %c0_117, %c0_118] : memref<4x1x8xf32, #tpu.memory_space<vmem>>, vector<1x1x8xf32>
    %146 = vector.shape_cast %145 : vector<1x1x8xf32> to vector<1x8xf32>
    %147 = vector.broadcast %146 : vector<1x8xf32> to vector<8x8xf32>
    %148 = arith.addf %144, %147 : vector<8x8xf32>
    %cst_119 = arith.constant dense<0.000000e+00> : vector<8x8xf32>
    %149 = tpu.matmul %134, %141, %cst_119 {dimension_numbers = #tpu.dot_dimension_numbers<[1], [1], [0], [0], [0, 0, 1, 0], [], []>} : vector<8x8xf32>, vector<8x8xf32>, vector<8x8xf32> -> vector<8x8xf32>
    %cst_120 = arith.constant 0.353553385 : f32
    %150 = vector.broadcast %cst_120 : f32 to vector<8x8xf32>
    %151 = arith.mulf %149, %150 : vector<8x8xf32>
    %cst_121 = arith.constant dense<0xFF800000> : vector<8xf32>
    %152 = vector.multi_reduction <maximumf>, %151, %cst_121 [1] : vector<8x8xf32> to vector<8xf32>
    %153 = vector.shape_cast %152 : vector<8xf32> to vector<8x1xf32>
    %154 = vector.broadcast %153 : vector<8x1xf32> to vector<8x8xf32>
    %155 = arith.subf %151, %154 : vector<8x8xf32>
    %156 = math.exp %155 : vector<8x8xf32>
    %cst_122 = arith.constant dense<0.000000e+00> : vector<8xf32>
    %157 = vector.multi_reduction <add>, %156, %cst_122 [1] : vector<8x8xf32> to vector<8xf32>
    %158 = vector.shape_cast %157 : vector<8xf32> to vector<8x1xf32>
    %159 = tpu.reciprocal %158 {approx = true} : vector<8x1xf32> -> vector<8x1xf32>
    %160 = vector.broadcast %159 : vector<8x1xf32> to vector<8x8xf32>
    %161 = arith.mulf %156, %160 : vector<8x8xf32>
    %cst_123 = arith.constant dense<0.000000e+00> : vector<8x8xf32>
    %162 = tpu.matmul %161, %148, %cst_123 {dimension_numbers = #tpu.dot_dimension_numbers<[1], [0], [0], [1], [0, 0, 1, 1], [], []>} : vector<8x8xf32>, vector<8x8xf32>, vector<8x8xf32> -> vector<8x8xf32>
    %c3_124 = arith.constant 3 : index
    %c0_125 = arith.constant 0 : index
    %c0_126 = arith.constant 0 : index
    %163 = vector.load %arg11[%c3_124, %c0_125, %c0_126] : memref<4x8x32xf32, #tpu.memory_space<vmem>>, vector<1x8x32xf32>
    %164 = vector.shape_cast %163 : vector<1x8x32xf32> to vector<8x32xf32>
    %cst_127 = arith.constant dense<0.000000e+00> : vector<8x32xf32>
    %165 = tpu.matmul %162, %164, %cst_127 {dimension_numbers = #tpu.dot_dimension_numbers<[1], [0], [0], [1], [0, 0, 1, 1], [], []>} : vector<8x8xf32>, vector<8x32xf32>, vector<8x32xf32> -> vector<8x32xf32>
    %166 = arith.addf %127, %165 : vector<8x32xf32>
    %c0_128 = arith.constant 0 : index
    %c0_129 = arith.constant 0 : index
    %167 = vector.load %arg12[%c0_128, %c0_129] : memref<1x32xf32, #tpu.memory_space<vmem>>, vector<1x32xf32>
    %168 = vector.broadcast %167 : vector<1x32xf32> to vector<8x32xf32>
    %169 = arith.addf %166, %168 : vector<8x32xf32>
    %170 = arith.addf %169, %1 : vector<8x32xf32>
    %cst_130 = arith.constant dense<0.000000e+00> : vector<8xf32>
    %171 = vector.multi_reduction <add>, %170, %cst_130 [1] : vector<8x32xf32> to vector<8xf32>
    %172 = vector.shape_cast %171 : vector<8xf32> to vector<8x1xf32>
    %cst_131 = arith.constant 3.200000e+01 : f32
    %173 = vector.broadcast %cst_131 : f32 to vector<8x1xf32>
    %174 = arith.divf %172, %173 : vector<8x1xf32>
    %175 = vector.broadcast %174 : vector<8x1xf32> to vector<8x32xf32>
    %176 = arith.subf %170, %175 : vector<8x32xf32>
    %177 = arith.mulf %176, %176 : vector<8x32xf32>
    %cst_132 = arith.constant dense<0.000000e+00> : vector<8xf32>
    %178 = vector.multi_reduction <add>, %177, %cst_132 [1] : vector<8x32xf32> to vector<8xf32>
    %179 = vector.shape_cast %178 : vector<8xf32> to vector<8x1xf32>
    %cst_133 = arith.constant 3.200000e+01 : f32
    %180 = vector.broadcast %cst_133 : f32 to vector<8x1xf32>
    %181 = arith.divf %179, %180 : vector<8x1xf32>
    %cst_134 = arith.constant 9.99999974E-6 : f32
    %182 = vector.broadcast %cst_134 : f32 to vector<8x1xf32>
    %183 = arith.addf %181, %182 : vector<8x1xf32>
    %184 = math.rsqrt %183 : vector<8x1xf32>
    %185 = vector.broadcast %184 : vector<8x1xf32> to vector<8x32xf32>
    %186 = arith.mulf %176, %185 : vector<8x32xf32>
    %c0_135 = arith.constant 0 : index
    %c0_136 = arith.constant 0 : index
    %187 = vector.load %arg13[%c0_135, %c0_136] : memref<1x32xf32, #tpu.memory_space<vmem>>, vector<1x32xf32>
    %188 = vector.broadcast %187 : vector<1x32xf32> to vector<8x32xf32>
    %189 = arith.mulf %186, %188 : vector<8x32xf32>
    %c0_137 = arith.constant 0 : index
    %c0_138 = arith.constant 0 : index
    %190 = vector.load %arg14[%c0_137, %c0_138] : memref<1x32xf32, #tpu.memory_space<vmem>>, vector<1x32xf32>
    %191 = vector.broadcast %190 : vector<1x32xf32> to vector<8x32xf32>
    %192 = arith.addf %189, %191 : vector<8x32xf32>
    %c0_139 = arith.constant 0 : index
    %c0_140 = arith.constant 0 : index
    %c0_141 = arith.constant 0 : index
    %193 = vector.load %arg15[%c0_139, %c0_140, %c0_141] : memref<1x8x32xf32, #tpu.memory_space<vmem>>, vector<1x8x32xf32>
    %194 = vector.shape_cast %193 : vector<1x8x32xf32> to vector<8x32xf32>
    %195 = vector.shape_cast %192 : vector<8x32xf32> to vector<1x8x32xf32>
    tpu.vector_store %arg15[%c0_139, %c0_140, %c0_141], %195 {strides = array<i32>} : memref<1x8x32xf32, #tpu.memory_space<vmem>>, vector<1x8x32xf32>,
    return
  }
  func.func @transform_0(%arg0: i32) -> (i32, i32, i32) {
    %c0_i32 = arith.constant 0 : i32
    %c0_i32_0 = arith.constant 0 : i32
    %c0_i32_1 = arith.constant 0 : i32
    return %arg0, %c0_i32, %c0_i32_0 : i32, i32, i32
  }
  func.func @transform_1(%arg0: i32) -> (i32, i32, i32) {
    %c0_i32 = arith.constant 0 : i32
    %c0_i32_0 = arith.constant 0 : i32
    %c0_i32_1 = arith.constant 0 : i32
    return %arg0, %c0_i32, %c0_i32_0 : i32, i32, i32
  }
  func.func @transform_2(%arg0: i32) -> (i32, i32, i32) {
    %c0_i32 = arith.constant 0 : i32
    %c0_i32_0 = arith.constant 0 : i32
    %c0_i32_1 = arith.constant 0 : i32
    return %arg0, %c0_i32, %c0_i32_0 : i32, i32, i32
  }
  func.func @transform_3(%arg0: i32) -> (i32, i32, i32) {
    %c0_i32 = arith.constant 0 : i32
    %c0_i32_0 = arith.constant 0 : i32
    %c0_i32_1 = arith.constant 0 : i32
    return %arg0, %c0_i32, %c0_i32_0 : i32, i32, i32
  }
  func.func @transform_4(%arg0: i32) -> (i32, i32, i32) {
    %c0_i32 = arith.constant 0 : i32
    %c0_i32_0 = arith.constant 0 : i32
    %c0_i32_1 = arith.constant 0 : i32
    %c0_i32_2 = arith.constant 0 : i32
    return %c0_i32, %c0_i32_0, %c0_i32_1 : i32, i32, i32
  }
  func.func @transform_5(%arg0: i32) -> (i32, i32, i32) {
    %c0_i32 = arith.constant 0 : i32
    %c0_i32_0 = arith.constant 0 : i32
    %c0_i32_1 = arith.constant 0 : i32
    %c0_i32_2 = arith.constant 0 : i32
    return %c0_i32, %c0_i32_0, %c0_i32_1 : i32, i32, i32
  }
  func.func @transform_6(%arg0: i32) -> (i32, i32, i32) {
    %c0_i32 = arith.constant 0 : i32
    %c0_i32_0 = arith.constant 0 : i32
    %c0_i32_1 = arith.constant 0 : i32
    %c0_i32_2 = arith.constant 0 : i32
    return %c0_i32, %c0_i32_0, %c0_i32_1 : i32, i32, i32
  }
  func.func @transform_7(%arg0: i32) -> (i32, i32, i32) {
    %c0_i32 = arith.constant 0 : i32
    %c0_i32_0 = arith.constant 0 : i32
    %c0_i32_1 = arith.constant 0 : i32
    %c0_i32_2 = arith.constant 0 : i32
    return %c0_i32, %c0_i32_0, %c0_i32_1 : i32, i32, i32
  }
  func.func @transform_8(%arg0: i32) -> (i32, i32, i32) {
    %c0_i32 = arith.constant 0 : i32
    %c0_i32_0 = arith.constant 0 : i32
    %c0_i32_1 = arith.constant 0 : i32
    %c0_i32_2 = arith.constant 0 : i32
    return %c0_i32, %c0_i32_0, %c0_i32_1 : i32, i32, i32
  }
  func.func @transform_9(%arg0: i32) -> (i32, i32, i32) {
    %c0_i32 = arith.constant 0 : i32
    %c0_i32_0 = arith.constant 0 : i32
    %c0_i32_1 = arith.constant 0 : i32
    %c0_i32_2 = arith.constant 0 : i32
    return %c0_i32, %c0_i32_0, %c0_i32_1 : i32, i32, i32
  }
  func.func @transform_10(%arg0: i32) -> (i32, i32, i32) {
    %c0_i32 = arith.constant 0 : i32
    %c0_i32_0 = arith.constant 0 : i32
    %c0_i32_1 = arith.constant 0 : i32
    %c0_i32_2 = arith.constant 0 : i32
    return %c0_i32, %c0_i32_0, %c0_i32_1 : i32, i32, i32
  }
  func.func @transform_11(%arg0: i32) -> (i32, i32) {
    %c0_i32 = arith.constant 0 : i32
    %c0_i32_0 = arith.constant 0 : i32
    %c0_i32_1 = arith.constant 0 : i32
    return %c0_i32, %c0_i32_0 : i32, i32
  }
  func.func @transform_12(%arg0: i32) -> (i32, i32) {
    %c0_i32 = arith.constant 0 : i32
    %c0_i32_0 = arith.constant 0 : i32
    %c0_i32_1 = arith.constant 0 : i32
    return %c0_i32, %c0_i32_0 : i32, i32
  }
  func.func @transform_13(%arg0: i32) -> (i32, i32) {
    %c0_i32 = arith.constant 0 : i32
    %c0_i32_0 = arith.constant 0 : i32
    %c0_i32_1 = arith.constant 0 : i32
    return %c0_i32, %c0_i32_0 : i32, i32
  }
  func.func @transform_14(%arg0: i32) -> (i32, i32, i32) {
    %c0_i32 = arith.constant 0 : i32
    %c0_i32_0 = arith.constant 0 : i32
    %c0_i32_1 = arith.constant 0 : i32
    return %arg0, %c0_i32, %c0_i32_0 : i32, i32, i32
  }
}

module attributes {stable_mosaic.version = 11 : i64} {
  func.func @_ln_kernel(%arg0: i32, %arg1: memref<8x32xf32, #tpu.memory_space<vmem>>, %arg2: memref<1x32xf32, #tpu.memory_space<vmem>>, %arg3: memref<1x32xf32, #tpu.memory_space<vmem>>, %arg4: memref<8x32xf32, #tpu.memory_space<vmem>>) attributes {dimension_semantics = [#tpu.dimension_semantics<parallel>], iteration_bounds = array<i64: 2>, scalar_prefetch = 0 : i64, scratch_operands = 0 : i64, tpu.core_type = #tpu.core_type<tc>, window_params = [{transform_indices = @transform_0, window_bounds = array<i64: 8, 32>}, {pipeline_mode = #tpu.pipeline_mode<synchronous>, transform_indices = @transform_1, window_bounds = array<i64: 1, 32>}, {pipeline_mode = #tpu.pipeline_mode<synchronous>, transform_indices = @transform_2, window_bounds = array<i64: 1, 32>}, {transform_indices = @transform_3, window_bounds = array<i64: 8, 32>}]} {
    %c0 = arith.constant 0 : index
    %c0_0 = arith.constant 0 : index
    %0 = vector.load %arg1[%c0, %c0_0] : memref<8x32xf32, #tpu.memory_space<vmem>>, vector<8x32xf32>
    %cst = arith.constant dense<0.000000e+00> : vector<8xf32>
    %1 = vector.multi_reduction <add>, %0, %cst [1] : vector<8x32xf32> to vector<8xf32>
    %2 = vector.shape_cast %1 : vector<8xf32> to vector<8x1xf32>
    %cst_1 = arith.constant 3.200000e+01 : f32
    %3 = vector.broadcast %cst_1 : f32 to vector<8x1xf32>
    %4 = arith.divf %2, %3 : vector<8x1xf32>
    %5 = vector.broadcast %4 : vector<8x1xf32> to vector<8x32xf32>
    %6 = arith.subf %0, %5 : vector<8x32xf32>
    %7 = arith.mulf %6, %6 : vector<8x32xf32>
    %cst_2 = arith.constant dense<0.000000e+00> : vector<8xf32>
    %8 = vector.multi_reduction <add>, %7, %cst_2 [1] : vector<8x32xf32> to vector<8xf32>
    %9 = vector.shape_cast %8 : vector<8xf32> to vector<8x1xf32>
    %cst_3 = arith.constant 3.200000e+01 : f32
    %10 = vector.broadcast %cst_3 : f32 to vector<8x1xf32>
    %11 = arith.divf %9, %10 : vector<8x1xf32>
    %cst_4 = arith.constant 9.99999974E-6 : f32
    %12 = vector.broadcast %cst_4 : f32 to vector<8x1xf32>
    %13 = arith.addf %11, %12 : vector<8x1xf32>
    %14 = math.rsqrt %13 : vector<8x1xf32>
    %15 = vector.broadcast %14 : vector<8x1xf32> to vector<8x32xf32>
    %16 = arith.mulf %6, %15 : vector<8x32xf32>
    %c0_5 = arith.constant 0 : index
    %c0_6 = arith.constant 0 : index
    %17 = vector.load %arg2[%c0_5, %c0_6] : memref<1x32xf32, #tpu.memory_space<vmem>>, vector<1x32xf32>
    %18 = vector.broadcast %17 : vector<1x32xf32> to vector<8x32xf32>
    %19 = arith.mulf %16, %18 : vector<8x32xf32>
    %c0_7 = arith.constant 0 : index
    %c0_8 = arith.constant 0 : index
    %20 = vector.load %arg3[%c0_7, %c0_8] : memref<1x32xf32, #tpu.memory_space<vmem>>, vector<1x32xf32>
    %21 = vector.broadcast %20 : vector<1x32xf32> to vector<8x32xf32>
    %22 = arith.addf %19, %21 : vector<8x32xf32>
    %c0_9 = arith.constant 0 : index
    %c0_10 = arith.constant 0 : index
    %23 = vector.load %arg4[%c0_9, %c0_10] : memref<8x32xf32, #tpu.memory_space<vmem>>, vector<8x32xf32>
    tpu.vector_store %arg4[%c0_9, %c0_10], %22 {strides = array<i32>} : memref<8x32xf32, #tpu.memory_space<vmem>>, vector<8x32xf32>,
    return
  }
  func.func @transform_0(%arg0: i32) -> (i32, i32) {
    %c0_i32 = arith.constant 0 : i32
    %c0_i32_0 = arith.constant 0 : i32
    return %arg0, %c0_i32 : i32, i32
  }
  func.func @transform_1(%arg0: i32) -> (i32, i32) {
    %c0_i32 = arith.constant 0 : i32
    %c0_i32_0 = arith.constant 0 : i32
    %c0_i32_1 = arith.constant 0 : i32
    return %c0_i32, %c0_i32_0 : i32, i32
  }
  func.func @transform_2(%arg0: i32) -> (i32, i32) {
    %c0_i32 = arith.constant 0 : i32
    %c0_i32_0 = arith.constant 0 : i32
    %c0_i32_1 = arith.constant 0 : i32
    return %c0_i32, %c0_i32_0 : i32, i32
  }
  func.func @transform_3(%arg0: i32) -> (i32, i32) {
    %c0_i32 = arith.constant 0 : i32
    %c0_i32_0 = arith.constant 0 : i32
    return %arg0, %c0_i32 : i32, i32
  }
}

module attributes {stable_mosaic.version = 11 : i64} {
  func.func @_ffn_ln_kernel(%arg0: i32, %arg1: memref<8x32xf32, #tpu.memory_space<vmem>>, %arg2: memref<32x256xf32, #tpu.memory_space<vmem>>, %arg3: memref<1x256xf32, #tpu.memory_space<vmem>>, %arg4: memref<256x32xf32, #tpu.memory_space<vmem>>, %arg5: memref<1x32xf32, #tpu.memory_space<vmem>>, %arg6: memref<1x32xf32, #tpu.memory_space<vmem>>, %arg7: memref<1x32xf32, #tpu.memory_space<vmem>>, %arg8: memref<8x32xf32, #tpu.memory_space<vmem>>) attributes {dimension_semantics = [#tpu.dimension_semantics<parallel>], iteration_bounds = array<i64: 2>, scalar_prefetch = 0 : i64, scratch_operands = 0 : i64, tpu.core_type = #tpu.core_type<tc>, window_params = [{transform_indices = @transform_0, window_bounds = array<i64: 8, 32>}, {pipeline_mode = #tpu.pipeline_mode<synchronous>, transform_indices = @transform_1, window_bounds = array<i64: 32, 256>}, {pipeline_mode = #tpu.pipeline_mode<synchronous>, transform_indices = @transform_2, window_bounds = array<i64: 1, 256>}, {pipeline_mode = #tpu.pipeline_mode<synchronous>, transform_indices = @transform_3, window_bounds = array<i64: 256, 32>}, {pipeline_mode = #tpu.pipeline_mode<synchronous>, transform_indices = @transform_4, window_bounds = array<i64: 1, 32>}, {pipeline_mode = #tpu.pipeline_mode<synchronous>, transform_indices = @transform_5, window_bounds = array<i64: 1, 32>}, {pipeline_mode = #tpu.pipeline_mode<synchronous>, transform_indices = @transform_6, window_bounds = array<i64: 1, 32>}, {transform_indices = @transform_7, window_bounds = array<i64: 8, 32>}]} {
    %c0 = arith.constant 0 : index
    %c0_0 = arith.constant 0 : index
    %0 = vector.load %arg1[%c0, %c0_0] : memref<8x32xf32, #tpu.memory_space<vmem>>, vector<8x32xf32>
    %c0_1 = arith.constant 0 : index
    %c0_2 = arith.constant 0 : index
    %1 = vector.load %arg2[%c0_1, %c0_2] : memref<32x256xf32, #tpu.memory_space<vmem>>, vector<32x256xf32>
    %cst = arith.constant dense<0.000000e+00> : vector<8x256xf32>
    %2 = tpu.matmul %0, %1, %cst {dimension_numbers = #tpu.dot_dimension_numbers<[1], [0], [0], [1], [0, 0, 1, 1], [], []>} : vector<8x32xf32>, vector<32x256xf32>, vector<8x256xf32> -> vector<8x256xf32>
    %c0_3 = arith.constant 0 : index
    %c0_4 = arith.constant 0 : index
    %3 = vector.load %arg3[%c0_3, %c0_4] : memref<1x256xf32, #tpu.memory_space<vmem>>, vector<1x256xf32>
    %4 = vector.broadcast %3 : vector<1x256xf32> to vector<8x256xf32>
    %5 = arith.addf %2, %4 : vector<8x256xf32>
    %cst_5 = arith.constant 0.000000e+00 : f32
    %6 = vector.broadcast %cst_5 : f32 to vector<8x256xf32>
    %7 = arith.maximumf %5, %6 : vector<8x256xf32>
    %c0_6 = arith.constant 0 : index
    %c0_7 = arith.constant 0 : index
    %8 = vector.load %arg4[%c0_6, %c0_7] : memref<256x32xf32, #tpu.memory_space<vmem>>, vector<256x32xf32>
    %cst_8 = arith.constant dense<0.000000e+00> : vector<8x32xf32>
    %9 = tpu.matmul %7, %8, %cst_8 {dimension_numbers = #tpu.dot_dimension_numbers<[1], [0], [0], [1], [0, 0, 1, 1], [], []>} : vector<8x256xf32>, vector<256x32xf32>, vector<8x32xf32> -> vector<8x32xf32>
    %c0_9 = arith.constant 0 : index
    %c0_10 = arith.constant 0 : index
    %10 = vector.load %arg5[%c0_9, %c0_10] : memref<1x32xf32, #tpu.memory_space<vmem>>, vector<1x32xf32>
    %11 = vector.broadcast %10 : vector<1x32xf32> to vector<8x32xf32>
    %12 = arith.addf %9, %11 : vector<8x32xf32>
    %13 = arith.addf %0, %12 : vector<8x32xf32>
    %cst_11 = arith.constant dense<0.000000e+00> : vector<8xf32>
    %14 = vector.multi_reduction <add>, %13, %cst_11 [1] : vector<8x32xf32> to vector<8xf32>
    %15 = vector.shape_cast %14 : vector<8xf32> to vector<8x1xf32>
    %cst_12 = arith.constant 3.200000e+01 : f32
    %16 = vector.broadcast %cst_12 : f32 to vector<8x1xf32>
    %17 = arith.divf %15, %16 : vector<8x1xf32>
    %18 = vector.broadcast %17 : vector<8x1xf32> to vector<8x32xf32>
    %19 = arith.subf %13, %18 : vector<8x32xf32>
    %20 = arith.mulf %19, %19 : vector<8x32xf32>
    %cst_13 = arith.constant dense<0.000000e+00> : vector<8xf32>
    %21 = vector.multi_reduction <add>, %20, %cst_13 [1] : vector<8x32xf32> to vector<8xf32>
    %22 = vector.shape_cast %21 : vector<8xf32> to vector<8x1xf32>
    %cst_14 = arith.constant 3.200000e+01 : f32
    %23 = vector.broadcast %cst_14 : f32 to vector<8x1xf32>
    %24 = arith.divf %22, %23 : vector<8x1xf32>
    %cst_15 = arith.constant 9.99999974E-6 : f32
    %25 = vector.broadcast %cst_15 : f32 to vector<8x1xf32>
    %26 = arith.addf %24, %25 : vector<8x1xf32>
    %27 = math.rsqrt %26 : vector<8x1xf32>
    %28 = vector.broadcast %27 : vector<8x1xf32> to vector<8x32xf32>
    %29 = arith.mulf %19, %28 : vector<8x32xf32>
    %c0_16 = arith.constant 0 : index
    %c0_17 = arith.constant 0 : index
    %30 = vector.load %arg6[%c0_16, %c0_17] : memref<1x32xf32, #tpu.memory_space<vmem>>, vector<1x32xf32>
    %31 = vector.broadcast %30 : vector<1x32xf32> to vector<8x32xf32>
    %32 = arith.mulf %29, %31 : vector<8x32xf32>
    %c0_18 = arith.constant 0 : index
    %c0_19 = arith.constant 0 : index
    %33 = vector.load %arg7[%c0_18, %c0_19] : memref<1x32xf32, #tpu.memory_space<vmem>>, vector<1x32xf32>
    %34 = vector.broadcast %33 : vector<1x32xf32> to vector<8x32xf32>
    %35 = arith.addf %32, %34 : vector<8x32xf32>
    %c0_20 = arith.constant 0 : index
    %c0_21 = arith.constant 0 : index
    %36 = vector.load %arg8[%c0_20, %c0_21] : memref<8x32xf32, #tpu.memory_space<vmem>>, vector<8x32xf32>
    tpu.vector_store %arg8[%c0_20, %c0_21], %35 {strides = array<i32>} : memref<8x32xf32, #tpu.memory_space<vmem>>, vector<8x32xf32>,
    return
  }
  func.func @transform_0(%arg0: i32) -> (i32, i32) {
    %c0_i32 = arith.constant 0 : i32
    %c0_i32_0 = arith.constant 0 : i32
    return %arg0, %c0_i32 : i32, i32
  }
  func.func @transform_1(%arg0: i32) -> (i32, i32) {
    %c0_i32 = arith.constant 0 : i32
    %c0_i32_0 = arith.constant 0 : i32
    %c0_i32_1 = arith.constant 0 : i32
    return %c0_i32, %c0_i32_0 : i32, i32
  }
  func.func @transform_2(%arg0: i32) -> (i32, i32) {
    %c0_i32 = arith.constant 0 : i32
    %c0_i32_0 = arith.constant 0 : i32
    %c0_i32_1 = arith.constant 0 : i32
    return %c0_i32, %c0_i32_0 : i32, i32
  }
  func.func @transform_3(%arg0: i32) -> (i32, i32) {
    %c0_i32 = arith.constant 0 : i32
    %c0_i32_0 = arith.constant 0 : i32
    %c0_i32_1 = arith.constant 0 : i32
    return %c0_i32, %c0_i32_0 : i32, i32
  }
  func.func @transform_4(%arg0: i32) -> (i32, i32) {
    %c0_i32 = arith.constant 0 : i32
    %c0_i32_0 = arith.constant 0 : i32
    %c0_i32_1 = arith.constant 0 : i32
    return %c0_i32, %c0_i32_0 : i32, i32
  }
  func.func @transform_5(%arg0: i32) -> (i32, i32) {
    %c0_i32 = arith.constant 0 : i32
    %c0_i32_0 = arith.constant 0 : i32
    %c0_i32_1 = arith.constant 0 : i32
    return %c0_i32, %c0_i32_0 : i32, i32
  }
  func.func @transform_6(%arg0: i32) -> (i32, i32) {
    %c0_i32 = arith.constant 0 : i32
    %c0_i32_0 = arith.constant 0 : i32
    %c0_i32_1 = arith.constant 0 : i32
    return %c0_i32, %c0_i32_0 : i32, i32
  }
  func.func @transform_7(%arg0: i32) -> (i32, i32) {
    %c0_i32 = arith.constant 0 : i32
    %c0_i32_0 = arith.constant 0 : i32
    return %arg0, %c0_i32 : i32, i32
  }
}

</mosaic_0001>

<llo_original>
// kernel: transformer_decoder.13
$region0: #{transformer_decoder.13}
  #allocation0 [shape = 'u32[]', space=smem, size = 0x4, offset = 0x4, fixed_abs, tag = 'smem constant byte address 0x4 - core index']
  #allocation1 [shape = 'u32[144,128]{1,0:T(1,128)}', space=vmem, size = 0x12000, scoped, tag = 'internal scratch']
  %s0 = inlined_call_operand.vmem [shape: f32[16,32], index: 0, kind: input, shape index: {}]
  %s1 = inlined_call_operand.vmem [shape: f32[1,32], index: 1, kind: input, shape index: {}]
  %s2 = inlined_call_operand.vmem [shape: f32[1,32], index: 2, kind: input, shape index: {}]
  %s3 = inlined_call_operand.hbm [shape: f32[16,32], index: 3, kind: output, shape index: {}]
  %s4 = sld [smem:[#allocation0]]
  $region45: #{transformer_decoder.13} parent=0
    _
  %s6 = ssub.s32 1, %s4
  %s7 = scalar_select 0, %s6, %s4
  $region1: #{transformer_decoder.13} parent=0
    #allocation2 [shape = 'u8[8192]{0}', space=vmem, size = 0x2000, scoped, tag = 'output window, operand 0']
    #allocation3 [shape = 's32[2]{0}', space=sflag, size = 0x8, scoped, tag = 'scoped memory for transformer_decoder.13']
    %8 = vsyncpa [#allocation3], 0
    %s9 = scalar_lea.sflag [#allocation3], 1
    %10 = vsyncpa %s9, 0
    loop: start=0, step=1, limit=4
    $region2: #{transformer_decoder.13} parent=1 // loop_pre_header
      _
    $region3: #{transformer_decoder.13} parent=1 // loop_header
      %s12 = sphi 0, %s16
      %p13 = scmp.ge.s32.totalorder %s12, 4
      %s22 = sphi 0, %s24
      %s25 = sphi 0, %s22
      %s26 = sphi 0, %s25
      %s42 = sphi 0, %s26
      %s46 = sphi 0, %s46
      %s48 = sphi 0, %s46
      %s49 = sphi 0, %s48
      %s63 = sphi 0, %s49
      %s67 = sphi 0, %s67
      %s69 = sphi 0, %s67
      %s70 = sphi 0, %s69
      %s84 = sphi 0, %s70
      %s90 = sphi 0, %s92
      %s93 = sphi 0, %s90
      %s94 = sphi 0, %s93
      %s110 = sphi 0, %s94
    $region4: #{transformer_decoder.13} parent=1 // loop_header_branch
      %15 = sbr.rel (%p13) target = $region8
    $region5: #{transformer_decoder.13} parent=1 // loop_body
      %s17 = ssub.s32 %s12, 1
      %s18 = ssub.s32 %s12, 2
      %s19 = sadd.s32 %s12, 1
      %s20 = ssub.s32 %s12, %s19
      %p21 = scmp.eq.s32.totalorder %s20, 0
      %s23 = sadd.s32 %s22, 1
      %s24 = scalar_select %p21, %s22, %s23
      %p27 = pneg %p21
      %p28 = scmp.eq.s32.totalorder %s12, 1
      %p29 = por %p27, %p28
      %p30 = scmp.ne.s32.totalorder %s22, %s25
      %p31 = scmp.eq.s32.totalorder %s12, 0
      %p32 = por %p30, %p31
      %p33 = scmp.ne.s32.totalorder %s22, %s25
      %p34 = scmp.eq.s32.totalorder %s17, 1
      %p35 = por %p33, %p34
      %p36 = scmp.ne.s32.totalorder %s25, %s26
      %p37 = scmp.eq.s32.totalorder %s17, 0
      %p38 = por %p36, %p37
      %p39 = scmp.ne.s32.totalorder %s25, %s26
      %p40 = scmp.eq.s32.totalorder %s18, 1
      %p41 = por %p39, %p40
      %p43 = scmp.ne.s32.totalorder %s26, %s42
      %p44 = scmp.eq.s32.totalorder %s18, 0
      %p45 = por %p43, %p44
      %s47 = sadd.s32 %s46, 1
      %p50 = scmp.eq.s32.totalorder %s12, 1
      %p51 = scmp.ne.s32.totalorder %s46, %s48
      %p52 = scmp.eq.s32.totalorder %s12, 0
      %p53 = por %p51, %p52
      %p54 = scmp.ne.s32.totalorder %s46, %s48
      %p55 = scmp.eq.s32.totalorder %s17, 1
      %p56 = por %p54, %p55
      %p57 = scmp.ne.s32.totalorder %s48, %s49
      %p58 = scmp.eq.s32.totalorder %s17, 0
      %p59 = por %p57, %p58
      %p60 = scmp.ne.s32.totalorder %s48, %s49
      %p61 = scmp.eq.s32.totalorder %s18, 1
      %p62 = por %p60, %p61
      %p64 = scmp.ne.s32.totalorder %s49, %s63
      %p65 = scmp.eq.s32.totalorder %s18, 0
      %p66 = por %p64, %p65
      %s68 = sadd.s32 %s67, 1
      %p71 = scmp.eq.s32.totalorder %s12, 1
      %p72 = scmp.ne.s32.totalorder %s67, %s69
      %p73 = scmp.eq.s32.totalorder %s12, 0
      %p74 = por %p72, %p73
      %p75 = scmp.ne.s32.totalorder %s67, %s69
      %p76 = scmp.eq.s32.totalorder %s17, 1
      %p77 = por %p75, %p76
      %p78 = scmp.ne.s32.totalorder %s69, %s70
      %p79 = scmp.eq.s32.totalorder %s17, 0
      %p80 = por %p78, %p79
      %p81 = scmp.ne.s32.totalorder %s69, %s70
      %p82 = scmp.eq.s32.totalorder %s18, 1
      %p83 = por %p81, %p82
      %p85 = scmp.ne.s32.totalorder %s70, %s84
      %p86 = scmp.eq.s32.totalorder %s18, 0
      %p87 = por %p85, %p86
      %s88 = ssub.s32 %s12, %s19
      %p89 = scmp.eq.s32.totalorder %s88, 0
      %s91 = sadd.s32 %s90, 1
      %s92 = scalar_select %p89, %s90, %s91
      %p95 = pneg %p89
      %p96 = scmp.eq.s32.totalorder %s12, 1
      %p97 = por %p95, %p96
      %p98 = scmp.ne.s32.totalorder %s90, %s93
      %p99 = scmp.eq.s32.totalorder %s12, 0
      %p100 = por %p98, %p99
      %p101 = scmp.ne.s32.totalorder %s90, %s93
      %p102 = scmp.eq.s32.totalorder %s17, 1
      %p103 = por %p101, %p102
      %p104 = scmp.ne.s32.totalorder %s93, %s94
      %p105 = scmp.eq.s32.totalorder %s17, 0
      %p106 = por %p104, %p105
      %p107 = scmp.ne.s32.totalorder %s93, %s94
      %p108 = scmp.eq.s32.totalorder %s18, 1
      %p109 = por %p107, %p108
      %p111 = scmp.ne.s32.totalorder %s94, %s110
      %p112 = scmp.eq.s32.totalorder %s18, 0
      %p113 = por %p111, %p112
      %p114 = scmp.le.s32.totalorder 1, %s12
      %p115 = scmp.lt.s32.totalorder %s12, 3
      %p116 = pnand %p114, %p115
      %p117 = pneg %p116
      // Predicated region
      $region9: #{transformer_decoder.13} parent=5 // pred_check
        _
      $region10: #{transformer_decoder.13} parent=5 // pred_check_branch
        %119 = sbr.rel (%p116) target = $region12
      $region11: #{transformer_decoder.13} parent=5 // pred_region
        %s120 = ssub.s32 %s12, 1
        // Predicated region
        $region13: #{transformer_decoder.13} parent=11 // pred_check
          %p121 = pneg %p59
        $region14: #{transformer_decoder.13} parent=11 // pred_check_branch
          %123 = sbr.rel (%p121) target = $region16
        $region15: #{transformer_decoder.13} parent=11 // pred_region
          _
        $region16: #{transformer_decoder.13} parent=11 // pred_fallthru
          _
        // Predicated region
        $region17: #{transformer_decoder.13} parent=11 // pred_check
          %p124 = pneg %p80
        $region18: #{transformer_decoder.13} parent=11 // pred_check_branch
          %126 = sbr.rel (%p124) target = $region20
        $region19: #{transformer_decoder.13} parent=11 // pred_region
          _
        $region20: #{transformer_decoder.13} parent=11 // pred_fallthru
          _
      $region12: #{transformer_decoder.13} parent=5 // pred_fallthru
        _
      %p127 = scmp.lt.s32.totalorder %s12, 2
      // Predicated region
      $region21: #{transformer_decoder.13} parent=5 // pred_check
        %p128 = pneg %p127
      $region22: #{transformer_decoder.13} parent=5 // pred_check_branch
        %130 = sbr.rel (%p128) target = $region24
      $region23: #{transformer_decoder.13} parent=5 // pred_region
        // Predicated region
        $region25: #{transformer_decoder.13} parent=23 // pred_check
          %p131 = pneg %p32
        $region26: #{transformer_decoder.13} parent=23 // pred_check_branch
          %133 = sbr.rel (%p131) target = $region28
        $region27: #{transformer_decoder.13} parent=23 // pred_region
          %p134 = scmp.lt.s32.totalorder %s12, 1
          %s135 = scalar_select %p134, %s12, 1
          %s136 = smul.addr %s135, 8
          %s137 = scalar_lea.vmem %s0, %s136
        $region28: #{transformer_decoder.13} parent=23 // pred_fallthru
          _
      $region24: #{transformer_decoder.13} parent=5 // pred_fallthru
        _
      %p138 = scmp.le.s32.totalorder 1, %s12
      %p139 = scmp.lt.s32.totalorder %s12, 3
      %p140 = pnand %p138, %p139
      %p141 = pneg %p140
      // Predicated region
      $region29: #{transformer_decoder.13} parent=5 // pred_check
        _
      $region30: #{transformer_decoder.13} parent=5 // pred_check_branch
        %143 = sbr.rel (%p140) target = $region32
      $region31: #{transformer_decoder.13} parent=5 // pred_region
        %s144 = ssub.s32 %s12, 1
        %p145 = scmp.lt.s32.totalorder %s17, 1
        %s146 = scalar_select %p145, %s17, 1
        %s147 = smul.addr %s146, 8
        %s148 = scalar_lea.vmem %s0, %s147
        %p149 = pneg %p38
        %p150 = pneg %p35
        %p151 = pneg %p59
        %p152 = pneg %p56
        %p153 = pneg %p80
        %p154 = pneg %p77
        %p155 = pneg %p106
        %p156 = pneg %p103
        %s157 = sand.u32 %s93, 1
        %s158 = scalar_lea.sflag [#allocation3], %s157
        %s159 = sand.u32 %s93, 1
        %s160 = smul.addr %s159, 8
        %s161 = scalar_lea.vmem [#allocation2], %s160
        %p162 = scmp.lt.s32.totalorder %s17, 1
        %s163 = scalar_select %p162, %s17, 1
        %s164 = smul.addr %s163, 8
        %s165 = scalar_lea.vmem %s0, %s164
        %v166 = vld [vmem:[%s165] sm:$0xff]
        %vm167 = vcmask 261120
        %v168 = vsel %vm167, %v166, 0.0
        %169 = vadd.xlane.f32.xlu0 %v168
        %v170 = vpop.xlane.xlu0 %169
        %v171 = vrcp.pop 32.0
        %v172 = vmul.f32 %v170, %v171
        %v173 = vsub.f32 %v166, %v172
        %v174 = vmul.f32 %v173, %v173
        %v175 = vsel %vm167, %v174, 0.0
        %176 = vadd.xlane.f32.xlu0 %v175
        %v177 = vpop.xlane.xlu0 %176
        %v178 = vmul.f32 %v177, %v171
        %v179 = vadd.f32 %v178, 1e-05
        %v180 = vrsqrt.pop %v179
        %v181 = vmul.f32 %v173, %v180
        %v182 = vld [vmem:[%s1] sm:$0x1]
        %v184 = vlaneseq
        %v185 = vshrl.u32 %v184, 7
        %v186 = vsub.s32 0, %v185
        %v187 = vrot.slane %v182, %v186
        %v189 = vmul.f32 %v181, %v187
        %v190 = vld [vmem:[%s2] sm:$0x1]
        %v192 = vlaneseq
        %v193 = vshrl.u32 %v192, 7
        %v194 = vsub.s32 0, %v193
        %v195 = vrot.slane %v190, %v194
        %v197 = vadd.f32 %v189, %v195
        %198 = vst.msk [vmem:[%s161] sm:$0xff] %vm167, %v197
        %s199 = sand.u32 %s93, 1
        %s200 = scalar_lea.sflag [#allocation3], %s199
        %s201 = sand.u32 %s93, 1
        %s202 = smul.addr %s201, 8
        %s203 = scalar_lea.vmem [#allocation2], %s202
        // Predicated region
        $region33: #{transformer_decoder.13} parent=31 // pred_check
          %p204 = pneg %p103
        $region34: #{transformer_decoder.13} parent=31 // pred_check_branch
          %206 = sbr.rel (%p204) target = $region36
        $region35: #{transformer_decoder.13} parent=31 // pred_region
          %s208 = ssub.s32 128, 128
          %209 = vsyncadd %s200, %s208
          %s210 = smul.addr %s17, 128
          %s211 = scalar_lea.hbm %s3, %s210
          %s213 = sshll.u32 %s203, 4
          %s214 = int_to_ptr.vmem [resolvable:$true] %s213
          %216 = dma.vmem_to_hbm [thread:$0]  %s214, 128, %s211, %s200
        $region36: #{transformer_decoder.13} parent=31 // pred_fallthru
          _
      $region32: #{transformer_decoder.13} parent=5 // pred_fallthru
        _
      %p217 = scmp.le.s32.totalorder 2, %s12
      // Predicated region
      $region37: #{transformer_decoder.13} parent=5 // pred_check
        %p218 = pneg %p217
      $region38: #{transformer_decoder.13} parent=5 // pred_check_branch
        %220 = sbr.rel (%p218) target = $region40
      $region39: #{transformer_decoder.13} parent=5 // pred_region
        %s221 = ssub.s32 %s12, 2
        // Predicated region
        $region41: #{transformer_decoder.13} parent=39 // pred_check
          %p222 = pneg %p109
        $region42: #{transformer_decoder.13} parent=39 // pred_check_branch
          %224 = sbr.rel (%p222) target = $region44
        $region43: #{transformer_decoder.13} parent=39 // pred_region
          %s225 = sand.u32 %s94, 1
          %s226 = scalar_lea.sflag [#allocation3], %s225
          %s227 = sand.u32 %s94, 1
          %s228 = smul.addr %s227, 8
          %s229 = scalar_lea.vmem [#allocation2], %s228
          %230 = dma.done %s226, 128
        $region44: #{transformer_decoder.13} parent=39 // pred_fallthru
          _
      $region40: #{transformer_decoder.13} parent=5 // pred_fallthru
        _
    $region6: #{transformer_decoder.13} parent=1 // loop_footer
      %s16 = sadd.s32 1, %s12
    $region7: #{transformer_decoder.13} parent=1 // loop_footer_branch
      %11 = sbr.rel target = $region3
    $region8: #{transformer_decoder.13} parent=1 // loop_exit
      _
    %231 = vsyncpa [#allocation3], 1
    %s232 = scalar_lea.sflag [#allocation3], 1
    %233 = vsyncpa %s232, 1

// kernel: transformer_decoder.9
$region0: #{transformer_decoder.9}
  #allocation0 [shape = 'u32[]', space=smem, size = 0x4, offset = 0x4, fixed_abs, tag = 'smem constant byte address 0x4 - core index']
  #allocation1 [shape = 'u32[144,128]{1,0:T(1,128)}', space=vmem, size = 0x12000, scoped, tag = 'internal scratch']
  %s0 = inlined_call_operand.vmem [shape: f32[16,32], index: 0, kind: input, shape index: {}]
  %s1 = inlined_call_operand.vmem [shape: f32[32,256], index: 1, kind: input, shape index: {}]
  %s2 = inlined_call_operand.vmem [shape: f32[1,256], index: 2, kind: input, shape index: {}]
  %s3 = inlined_call_operand.vmem [shape: f32[256,32], index: 3, kind: input, shape index: {}]
  %s4 = inlined_call_operand.vmem [shape: f32[1,32], index: 4, kind: input, shape index: {}]
  %s5 = inlined_call_operand.vmem [shape: f32[1,32], index: 5, kind: input, shape index: {}]
  %s6 = inlined_call_operand.vmem [shape: f32[1,32], index: 6, kind: input, shape index: {}]
  %s7 = inlined_call_operand.vmem [shape: f32[16,32], index: 7, kind: output, shape index: {}]
  %s8 = sld [smem:[#allocation0]]
  $region61: #{transformer_decoder.9} parent=0
    _
  %s10 = ssub.s32 1, %s8
  %s11 = scalar_select 0, %s10, %s8
  loop: start=0, step=1, limit=4
  $region2: #{transformer_decoder.9} parent=0 // loop_pre_header
    _
  $region3: #{transformer_decoder.9} parent=0 // loop_header
    %s13 = sphi 0, %s17
    %p14 = scmp.ge.s32.totalorder %s13, 4
    %s23 = sphi 0, %s25
    %s26 = sphi 0, %s23
    %s27 = sphi 0, %s26
    %s43 = sphi 0, %s27
    %s47 = sphi 0, %s47
    %s49 = sphi 0, %s47
    %s50 = sphi 0, %s49
    %s64 = sphi 0, %s50
    %s68 = sphi 0, %s68
    %s70 = sphi 0, %s68
    %s71 = sphi 0, %s70
    %s85 = sphi 0, %s71
    %s89 = sphi 0, %s89
    %s91 = sphi 0, %s89
    %s92 = sphi 0, %s91
    %s106 = sphi 0, %s92
    %s110 = sphi 0, %s110
    %s112 = sphi 0, %s110
    %s113 = sphi 0, %s112
    %s127 = sphi 0, %s113
    %s131 = sphi 0, %s131
    %s133 = sphi 0, %s131
    %s134 = sphi 0, %s133
    %s148 = sphi 0, %s134
    %s152 = sphi 0, %s152
    %s154 = sphi 0, %s152
    %s155 = sphi 0, %s154
    %s169 = sphi 0, %s155
    %s175 = sphi 0, %s177
    %s178 = sphi 0, %s175
    %s179 = sphi 0, %s178
    %s195 = sphi 0, %s179
  $region4: #{transformer_decoder.9} parent=0 // loop_header_branch
    %16 = sbr.rel (%p14) target = $region8
  $region5: #{transformer_decoder.9} parent=0 // loop_body
    %s18 = ssub.s32 %s13, 1
    %s19 = ssub.s32 %s13, 2
    %s20 = sadd.s32 %s13, 1
    %s21 = ssub.s32 %s13, %s20
    %p22 = scmp.eq.s32.totalorder %s21, 0
    %s24 = sadd.s32 %s23, 1
    %s25 = scalar_select %p22, %s23, %s24
    %p28 = pneg %p22
    %p29 = scmp.eq.s32.totalorder %s13, 1
    %p30 = por %p28, %p29
    %p31 = scmp.ne.s32.totalorder %s23, %s26
    %p32 = scmp.eq.s32.totalorder %s13, 0
    %p33 = por %p31, %p32
    %p34 = scmp.ne.s32.totalorder %s23, %s26
    %p35 = scmp.eq.s32.totalorder %s18, 1
    %p36 = por %p34, %p35
    %p37 = scmp.ne.s32.totalorder %s26, %s27
    %p38 = scmp.eq.s32.totalorder %s18, 0
    %p39 = por %p37, %p38
    %p40 = scmp.ne.s32.totalorder %s26, %s27
    %p41 = scmp.eq.s32.totalorder %s19, 1
    %p42 = por %p40, %p41
    %p44 = scmp.ne.s32.totalorder %s27, %s43
    %p45 = scmp.eq.s32.totalorder %s19, 0
    %p46 = por %p44, %p45
    %s48 = sadd.s32 %s47, 1
    %p51 = scmp.eq.s32.totalorder %s13, 1
    %p52 = scmp.ne.s32.totalorder %s47, %s49
    %p53 = scmp.eq.s32.totalorder %s13, 0
    %p54 = por %p52, %p53
    %p55 = scmp.ne.s32.totalorder %s47, %s49
    %p56 = scmp.eq.s32.totalorder %s18, 1
    %p57 = por %p55, %p56
    %p58 = scmp.ne.s32.totalorder %s49, %s50
    %p59 = scmp.eq.s32.totalorder %s18, 0
    %p60 = por %p58, %p59
    %p61 = scmp.ne.s32.totalorder %s49, %s50
    %p62 = scmp.eq.s32.totalorder %s19, 1
    %p63 = por %p61, %p62
    %p65 = scmp.ne.s32.totalorder %s50, %s64
    %p66 = scmp.eq.s32.totalorder %s19, 0
    %p67 = por %p65, %p66
    %s69 = sadd.s32 %s68, 1
    %p72 = scmp.eq.s32.totalorder %s13, 1
    %p73 = scmp.ne.s32.totalorder %s68, %s70
    %p74 = scmp.eq.s32.totalorder %s13, 0
    %p75 = por %p73, %p74
    %p76 = scmp.ne.s32.totalorder %s68, %s70
    %p77 = scmp.eq.s32.totalorder %s18, 1
    %p78 = por %p76, %p77
    %p79 = scmp.ne.s32.totalorder %s70, %s71
    %p80 = scmp.eq.s32.totalorder %s18, 0
    %p81 = por %p79, %p80
    %p82 = scmp.ne.s32.totalorder %s70, %s71
    %p83 = scmp.eq.s32.totalorder %s19, 1
    %p84 = por %p82, %p83
    %p86 = scmp.ne.s32.totalorder %s71, %s85
    %p87 = scmp.eq.s32.totalorder %s19, 0
    %p88 = por %p86, %p87
    %s90 = sadd.s32 %s89, 1
    %p93 = scmp.eq.s32.totalorder %s13, 1
    %p94 = scmp.ne.s32.totalorder %s89, %s91
    %p95 = scmp.eq.s32.totalorder %s13, 0
    %p96 = por %p94, %p95
    %p97 = scmp.ne.s32.totalorder %s89, %s91
    %p98 = scmp.eq.s32.totalorder %s18, 1
    %p99 = por %p97, %p98
    %p100 = scmp.ne.s32.totalorder %s91, %s92
    %p101 = scmp.eq.s32.totalorder %s18, 0
    %p102 = por %p100, %p101
    %p103 = scmp.ne.s32.totalorder %s91, %s92
    %p104 = scmp.eq.s32.totalorder %s19, 1
    %p105 = por %p103, %p104
    %p107 = scmp.ne.s32.totalorder %s92, %s106
    %p108 = scmp.eq.s32.totalorder %s19, 0
    %p109 = por %p107, %p108
    %s111 = sadd.s32 %s110, 1
    %p114 = scmp.eq.s32.totalorder %s13, 1
    %p115 = scmp.ne.s32.totalorder %s110, %s112
    %p116 = scmp.eq.s32.totalorder %s13, 0
    %p117 = por %p115, %p116
    %p118 = scmp.ne.s32.totalorder %s110, %s112
    %p119 = scmp.eq.s32.totalorder %s18, 1
    %p120 = por %p118, %p119
    %p121 = scmp.ne.s32.totalorder %s112, %s113
    %p122 = scmp.eq.s32.totalorder %s18, 0
    %p123 = por %p121, %p122
    %p124 = scmp.ne.s32.totalorder %s112, %s113
    %p125 = scmp.eq.s32.totalorder %s19, 1
    %p126 = por %p124, %p125
    %p128 = scmp.ne.s32.totalorder %s113, %s127
    %p129 = scmp.eq.s32.totalorder %s19, 0
    %p130 = por %p128, %p129
    %s132 = sadd.s32 %s131, 1
    %p135 = scmp.eq.s32.totalorder %s13, 1
    %p136 = scmp.ne.s32.totalorder %s131, %s133
    %p137 = scmp.eq.s32.totalorder %s13, 0
    %p138 = por %p136, %p137
    %p139 = scmp.ne.s32.totalorder %s131, %s133
    %p140 = scmp.eq.s32.totalorder %s18, 1
    %p141 = por %p139, %p140
    %p142 = scmp.ne.s32.totalorder %s133, %s134
    %p143 = scmp.eq.s32.totalorder %s18, 0
    %p144 = por %p142, %p143
    %p145 = scmp.ne.s32.totalorder %s133, %s134
    %p146 = scmp.eq.s32.totalorder %s19, 1
    %p147 = por %p145, %p146
    %p149 = scmp.ne.s32.totalorder %s134, %s148
    %p150 = scmp.eq.s32.totalorder %s19, 0
    %p151 = por %p149, %p150
    %s153 = sadd.s32 %s152, 1
    %p156 = scmp.eq.s32.totalorder %s13, 1
    %p157 = scmp.ne.s32.totalorder %s152, %s154
    %p158 = scmp.eq.s32.totalorder %s13, 0
    %p159 = por %p157, %p158
    %p160 = scmp.ne.s32.totalorder %s152, %s154
    %p161 = scmp.eq.s32.totalorder %s18, 1
    %p162 = por %p160, %p161
    %p163 = scmp.ne.s32.totalorder %s154, %s155
    %p164 = scmp.eq.s32.totalorder %s18, 0
    %p165 = por %p163, %p164
    %p166 = scmp.ne.s32.totalorder %s154, %s155
    %p167 = scmp.eq.s32.totalorder %s19, 1
    %p168 = por %p166, %p167
    %p170 = scmp.ne.s32.totalorder %s155, %s169
    %p171 = scmp.eq.s32.totalorder %s19, 0
    %p172 = por %p170, %p171
    %s173 = ssub.s32 %s13, %s20
    %p174 = scmp.eq.s32.totalorder %s173, 0
    %s176 = sadd.s32 %s175, 1
    %s177 = scalar_select %p174, %s175, %s176
    %p180 = pneg %p174
    %p181 = scmp.eq.s32.totalorder %s13, 1
    %p182 = por %p180, %p181
    %p183 = scmp.ne.s32.totalorder %s175, %s178
    %p184 = scmp.eq.s32.totalorder %s13, 0
    %p185 = por %p183, %p184
    %p186 = scmp.ne.s32.totalorder %s175, %s178
    %p187 = scmp.eq.s32.totalorder %s18, 1
    %p188 = por %p186, %p187
    %p189 = scmp.ne.s32.totalorder %s178, %s179
    %p190 = scmp.eq.s32.totalorder %s18, 0
    %p191 = por %p189, %p190
    %p192 = scmp.ne.s32.totalorder %s178, %s179
    %p193 = scmp.eq.s32.totalorder %s19, 1
    %p194 = por %p192, %p193
    %p196 = scmp.ne.s32.totalorder %s179, %s195
    %p197 = scmp.eq.s32.totalorder %s19, 0
    %p198 = por %p196, %p197
    %p199 = scmp.le.s32.totalorder 1, %s13
    %p200 = scmp.lt.s32.totalorder %s13, 3
    %p201 = pnand %p199, %p200
    %p202 = pneg %p201
    // Predicated region
    $region9: #{transformer_decoder.9} parent=5 // pred_check
      _
    $region10: #{transformer_decoder.9} parent=5 // pred_check_branch
      %204 = sbr.rel (%p201) target = $region12
    $region11: #{transformer_decoder.9} parent=5 // pred_region
      %s205 = ssub.s32 %s13, 1
      // Predicated region
      $region13: #{transformer_decoder.9} parent=11 // pred_check
        %p206 = pneg %p60
      $region14: #{transformer_decoder.9} parent=11 // pred_check_branch
        %208 = sbr.rel (%p206) target = $region16
      $region15: #{transformer_decoder.9} parent=11 // pred_region
        _
      $region16: #{transformer_decoder.9} parent=11 // pred_fallthru
        _
      // Predicated region
      $region17: #{transformer_decoder.9} parent=11 // pred_check
        %p209 = pneg %p81
      $region18: #{transformer_decoder.9} parent=11 // pred_check_branch
        %211 = sbr.rel (%p209) target = $region20
      $region19: #{transformer_decoder.9} parent=11 // pred_region
        _
      $region20: #{transformer_decoder.9} parent=11 // pred_fallthru
        _
      // Predicated region
      $region21: #{transformer_decoder.9} parent=11 // pred_check
        %p212 = pneg %p102
      $region22: #{transformer_decoder.9} parent=11 // pred_check_branch
        %214 = sbr.rel (%p212) target = $region24
      $region23: #{transformer_decoder.9} parent=11 // pred_region
        _
      $region24: #{transformer_decoder.9} parent=11 // pred_fallthru
        _
      // Predicated region
      $region25: #{transformer_decoder.9} parent=11 // pred_check
        %p215 = pneg %p123
      $region26: #{transformer_decoder.9} parent=11 // pred_check_branch
        %217 = sbr.rel (%p215) target = $region28
      $region27: #{transformer_decoder.9} parent=11 // pred_region
        _
      $region28: #{transformer_decoder.9} parent=11 // pred_fallthru
        _
      // Predicated region
      $region29: #{transformer_decoder.9} parent=11 // pred_check
        %p218 = pneg %p144
      $region30: #{transformer_decoder.9} parent=11 // pred_check_branch
        %220 = sbr.rel (%p218) target = $region32
      $region31: #{transformer_decoder.9} parent=11 // pred_region
        _
      $region32: #{transformer_decoder.9} parent=11 // pred_fallthru
        _
      // Predicated region
      $region33: #{transformer_decoder.9} parent=11 // pred_check
        %p221 = pneg %p165
      $region34: #{transformer_decoder.9} parent=11 // pred_check_branch
        %223 = sbr.rel (%p221) target = $region36
      $region35: #{transformer_decoder.9} parent=11 // pred_region
        _
      $region36: #{transformer_decoder.9} parent=11 // pred_fallthru
        _
    $region12: #{transformer_decoder.9} parent=5 // pred_fallthru
      _
    %p224 = scmp.lt.s32.totalorder %s13, 2
    // Predicated region
    $region37: #{transformer_decoder.9} parent=5 // pred_check
      %p225 = pneg %p224
    $region38: #{transformer_decoder.9} parent=5 // pred_check_branch
      %227 = sbr.rel (%p225) target = $region40
    $region39: #{transformer_decoder.9} parent=5 // pred_region
      // Predicated region
      $region41: #{transformer_decoder.9} parent=39 // pred_check
        %p228 = pneg %p33
      $region42: #{transformer_decoder.9} parent=39 // pred_check_branch
        %230 = sbr.rel (%p228) target = $region44
      $region43: #{transformer_decoder.9} parent=39 // pred_region
        %p231 = scmp.lt.s32.totalorder %s13, 1
        %s232 = scalar_select %p231, %s13, 1
        %s233 = smul.addr %s232, 8
        %s234 = scalar_lea.vmem %s0, %s233
      $region44: #{transformer_decoder.9} parent=39 // pred_fallthru
        _
    $region40: #{transformer_decoder.9} parent=5 // pred_fallthru
      _
    %p235 = scmp.le.s32.totalorder 1, %s13
    %p236 = scmp.lt.s32.totalorder %s13, 3
    %p237 = pnand %p235, %p236
    %p238 = pneg %p237
    // Predicated region
    $region45: #{transformer_decoder.9} parent=5 // pred_check
      _
    $region46: #{transformer_decoder.9} parent=5 // pred_check_branch
      %240 = sbr.rel (%p237) target = $region48
    $region47: #{transformer_decoder.9} parent=5 // pred_region
      %s241 = ssub.s32 %s13, 1
      %p242 = scmp.lt.s32.totalorder %s18, 1
      %s243 = scalar_select %p242, %s18, 1
      %s244 = smul.addr %s243, 8
      %s245 = scalar_lea.vmem %s0, %s244
      %p246 = pneg %p39
      %p247 = pneg %p36
      %p248 = pneg %p60
      %p249 = pneg %p57
      %p250 = pneg %p81
      %p251 = pneg %p78
      %p252 = pneg %p102
      %p253 = pneg %p99
      %p254 = pneg %p123
      %p255 = pneg %p120
      %p256 = pneg %p144
      %p257 = pneg %p141
      %p258 = pneg %p165
      %p259 = pneg %p162
      %p260 = pneg %p191
      %p261 = pneg %p188
      %p262 = scmp.lt.s32.totalorder %s18, 1
      %s263 = scalar_select %p262, %s18, 1
      %s264 = smul.addr %s263, 8
      %s265 = scalar_lea.vmem %s7, %s264
      %p266 = scmp.lt.s32.totalorder %s18, 1
      %s267 = scalar_select %p266, %s18, 1
      %s268 = smul.addr %s267, 8
      %s269 = scalar_lea.vmem %s0, %s268
      %p270 = scmp.lt.s32.totalorder %s18, 1
      %s271 = scalar_select %p270, %s18, 1
      %s272 = smul.addr %s271, 8
      %s273 = scalar_lea.vmem %s7, %s272
      %v274 = vld [vmem:[%s269] sm:$0xff]
      %v275 = vld [vmem:[%s1] sm:$0xff]
      %v276 = vld [vmem:[%s1 + $0x8] sm:$0xff]
      %v277 = vld [vmem:[%s1 + $0x10] sm:$0xff]
      %v278 = vld [vmem:[%s1 + $0x18] sm:$0xff]
      %v279 = vld [vmem:[%s1 + $0x20] sm:$0xff]
      %v280 = vld [vmem:[%s1 + $0x28] sm:$0xff]
      %v281 = vld [vmem:[%s1 + $0x30] sm:$0xff]
      %v282 = vld [vmem:[%s1 + $0x38] sm:$0xff]
      %v283 = vld [vmem:[%s2] sm:$0x3]
      %v285 = vlaneseq
      %v286 = vshrl.u32 %v285, 7
      %v287 = vsub.s32 0, %v286
      %v288 = vrot.slane %v283, %v287
      %v289 = vlaneseq
      %v290 = vshrl.u32 %v289, 7
      %v291 = vsub.s32 1, %v290
      %v292 = vrot.slane %v283, %v291
      %vm295 = vcmask 261120
      %v297 = vsel %vm295, %v274, 0
      %299 = vmatprep.subr.mxu0 %v276
      %300 = vmatpush1.msra.mxu0 %v275
      %301 = vmatprep.subr.mxu0 %v278
      %302 = vmatpush1.msra.mxu0 %v277
      %303 = vmatprep.subr.mxu0 %v280
      %304 = vmatpush1.msra.mxu0 %v279
      %305 = vmatprep.subr.mxu0 %v282
      %306 = vmatpush1.msra.mxu0 %v281
      %307 = vmatprep.subr.mxu0 0.0
      %308 = vmatpush1.msra.mxu0 0.0
      %309 = vmatprep.subr.mxu0 0.0
      %310 = vmatpush1.msra.mxu0 0.0
      %311 = vmatprep.subr.mxu0 0.0
      %312 = vmatpush1.msra.mxu0 0.0
      %313 = vmatprep.subr.mxu0 0.0
      %314 = vmatpush1.msra.mxu0 0.0
      %315 = vmatprep.subr.mxu0 0.0
      %316 = vmatpush1.msra.mxu0 0.0
      %317 = vmatprep.subr.mxu0 0.0
      %318 = vmatpush1.msra.mxu0 0.0
      %319 = vmatprep.subr.mxu0 0.0
      %320 = vmatpush1.msra.mxu0 0.0
      %321 = vmatprep.subr.mxu0 0.0
      %322 = vmatpush1.msra.mxu0 0.0
      %323 = vmatprep.subr.mxu0 0.0
      %324 = vmatpush1.msra.mxu0 0.0
      %325 = vmatprep.subr.mxu0 0.0
      %326 = vmatpush1.msra.mxu0 0.0
      %327 = vmatprep.subr.mxu0 0.0
      %328 = vmatpush1.msra.mxu0 0.0
      %329 = vmatprep.subr.mxu0 0.0
      %330 = vmatpush1.msra.mxu0 0.0
      %331 = vmatprep.subr.mxu0 0.0
      %332 = vmatpush1.msra.mxu0 0.0
      %333 = vmatprep.subr.mxu0 0.0
      %334 = vmatpush1.msra.mxu0 0.0
      %335 = vmatprep.subr.mxu0 0.0
      %336 = vmatpush1.msra.mxu0 0.0
      %337 = vmatprep.subr.mxu0 0.0
      %338 = vmatpush1.msra.mxu0 0.0
      %339 = vmatprep.subr.mxu0 0.0
      %340 = vmatpush1.msra.mxu0 0.0
      %341 = vmatprep.subr.mxu0 0.0
      %342 = vmatpush1.msra.mxu0 0.0
      %343 = vmatprep.subr.mxu0 0.0
      %344 = vmatpush1.msra.mxu0 0.0
      %345 = vmatprep.subr.mxu0 0.0
      %346 = vmatpush1.msra.mxu0 0.0
      %347 = vmatprep.subr.mxu0 0.0
      %348 = vmatpush1.msra.mxu0 0.0
      %349 = vmatprep.subr.mxu0 0.0
      %350 = vmatpush1.msra.mxu0 0.0
      %351 = vmatprep.subr.mxu0 0.0
      %352 = vmatpush1.msra.mxu0 0.0
      %353 = vmatprep.subr.mxu0 0.0
      %354 = vmatpush1.msra.mxu0 0.0
      %355 = vmatprep.subr.mxu0 0.0
      %356 = vmatpush1.msra.mxu0 0.0
      %357 = vmatprep.subr.mxu0 0.0
      %358 = vmatpush1.msra.mxu0 0.0
      %359 = vmatprep.subr.mxu0 0.0
      %360 = vmatpush1.msra.mxu0 0.0
      %361 = vmatprep.subr.mxu0 0.0
      %362 = vmatpush1.msra.mxu0 0.0
      %363 = vmatprep.mubr.f32.mxu0 0.0
      %364 = vmatmul.mubr.f32.gmra.mrb[0].mxu0 %v297
      %v365 = vpop.f32.mrb[0].mxu0
      %v366 = vadd.f32 %v288, %v365
      %v367 = vpop.f32.mrb[0].mxu0
      %v368 = vadd.f32 %v292, %v367
      %369 = vdwg.mxu0
      %v370 = vmax.f32 %v366, 0.0
      %v371 = vmax.f32 %v368, 0.0
      %v372 = vld [vmem:[%s3] sm:$0xff]
      %v373 = vld [vmem:[%s3 + $0x8] sm:$0xff]
      %v374 = vld [vmem:[%s3 + $0x10] sm:$0xff]
      %v375 = vld [vmem:[%s3 + $0x18] sm:$0xff]
      %v376 = vld [vmem:[%s3 + $0x20] sm:$0xff]
      %v377 = vld [vmem:[%s3 + $0x28] sm:$0xff]
      %v378 = vld [vmem:[%s3 + $0x30] sm:$0xff]
      %v379 = vld [vmem:[%s3 + $0x38] sm:$0xff]
      %v380 = vld [vmem:[%s3 + $0x40] sm:$0xff]
      %v381 = vld [vmem:[%s3 + $0x48] sm:$0xff]
      %v382 = vld [vmem:[%s3 + $0x50] sm:$0xff]
      %v383 = vld [vmem:[%s3 + $0x58] sm:$0xff]
      %v384 = vld [vmem:[%s3 + $0x60] sm:$0xff]
      %v385 = vld [vmem:[%s3 + $0x68] sm:$0xff]
      %v386 = vld [vmem:[%s3 + $0x70] sm:$0xff]
      %v387 = vld [vmem:[%s3 + $0x78] sm:$0xff]
      %v388 = vld [vmem:[%s3 + $0x80] sm:$0xff]
      %v389 = vld [vmem:[%s3 + $0x88] sm:$0xff]
      %v390 = vld [vmem:[%s3 + $0x90] sm:$0xff]
      %v391 = vld [vmem:[%s3 + $0x98] sm:$0xff]
      %v392 = vld [vmem:[%s3 + $0xa0] sm:$0xff]
      %v393 = vld [vmem:[%s3 + $0xa8] sm:$0xff]
      %v394 = vld [vmem:[%s3 + $0xb0] sm:$0xff]
      %v395 = vld [vmem:[%s3 + $0xb8] sm:$0xff]
      %v396 = vld [vmem:[%s3 + $0xc0] sm:$0xff]
      %v397 = vld [vmem:[%s3 + $0xc8] sm:$0xff]
      %v398 = vld [vmem:[%s3 + $0xd0] sm:$0xff]
      %v399 = vld [vmem:[%s3 + $0xd8] sm:$0xff]
      %v400 = vld [vmem:[%s3 + $0xe0] sm:$0xff]
      %v401 = vld [vmem:[%s3 + $0xe8] sm:$0xff]
      %v402 = vld [vmem:[%s3 + $0xf0] sm:$0xff]
      %v403 = vld [vmem:[%s3 + $0xf8] sm:$0xff]
      %v404 = vld [vmem:[%s4] sm:$0x1]
      %v406 = vlaneseq
      %v407 = vshrl.u32 %v406, 7
      %v408 = vsub.s32 0, %v407
      %v409 = vrot.slane %v404, %v408
      %411 = vmatprep.subr.mxu0 0.0
      %412 = vmatpush1.msra.mxu0 %v372
      %413 = vmatprep.subr.mxu0 0.0
      %414 = vmatpush1.msra.mxu0 %v373
      %415 = vmatprep.subr.mxu0 0.0
      %416 = vmatpush1.msra.mxu0 %v374
      %417 = vmatprep.subr.mxu0 0.0
      %418 = vmatpush1.msra.mxu0 %v375
      %419 = vmatprep.subr.mxu0 0.0
      %420 = vmatpush1.msra.mxu0 %v376
      %421 = vmatprep.subr.mxu0 0.0
      %422 = vmatpush1.msra.mxu0 %v377
      %423 = vmatprep.subr.mxu0 0.0
      %424 = vmatpush1.msra.mxu0 %v378
      %425 = vmatprep.subr.mxu0 0.0
      %426 = vmatpush1.msra.mxu0 %v379
      %427 = vmatprep.subr.mxu0 0.0
      %428 = vmatpush1.msra.mxu0 %v380
      %429 = vmatprep.subr.mxu0 0.0
      %430 = vmatpush1.msra.mxu0 %v381
      %431 = vmatprep.subr.mxu0 0.0
      %432 = vmatpush1.msra.mxu0 %v382
      %433 = vmatprep.subr.mxu0 0.0
      %434 = vmatpush1.msra.mxu0 %v383
      %435 = vmatprep.subr.mxu0 0.0
      %436 = vmatpush1.msra.mxu0 %v384
      %437 = vmatprep.subr.mxu0 0.0
      %438 = vmatpush1.msra.mxu0 %v385
      %439 = vmatprep.subr.mxu0 0.0
      %440 = vmatpush1.msra.mxu0 %v386
      %441 = vmatprep.subr.mxu0 0.0
      %442 = vmatpush1.msra.mxu0 %v387
      %443 = vmatprep.subr.mxu0 0.0
      %444 = vmatpush1.msra.mxu0 %v388
      %445 = vmatprep.subr.mxu0 0.0
      %446 = vmatpush1.msra.mxu0 %v389
      %447 = vmatprep.subr.mxu0 0.0
      %448 = vmatpush1.msra.mxu0 %v390
      %449 = vmatprep.subr.mxu0 0.0
      %450 = vmatpush1.msra.mxu0 %v391
      %451 = vmatprep.subr.mxu0 0.0
      %452 = vmatpush1.msra.mxu0 %v392
      %453 = vmatprep.subr.mxu0 0.0
      %454 = vmatpush1.msra.mxu0 %v393
      %455 = vmatprep.subr.mxu0 0.0
      %456 = vmatpush1.msra.mxu0 %v394
      %457 = vmatprep.subr.mxu0 0.0
      %458 = vmatpush1.msra.mxu0 %v395
      %459 = vmatprep.subr.mxu0 0.0
      %460 = vmatpush1.msra.mxu0 %v396
      %461 = vmatprep.subr.mxu0 0.0
      %462 = vmatpush1.msra.mxu0 %v397
      %463 = vmatprep.subr.mxu0 0.0
      %464 = vmatpush1.msra.mxu0 %v398
      %465 = vmatprep.subr.mxu0 0.0
      %466 = vmatpush1.msra.mxu0 %v399
      %467 = vmatprep.subr.mxu0 0.0
      %468 = vmatpush1.msra.mxu0 %v400
      %469 = vmatprep.subr.mxu0 0.0
      %470 = vmatpush1.msra.mxu0 %v401
      %471 = vmatprep.subr.mxu0 0.0
      %472 = vmatpush1.msra.mxu0 %v402
      %473 = vmatprep.subr.mxu0 0.0
      %474 = vmatpush1.msra.mxu0 %v403
      %475 = vmatprep.mubr.f32.mxu0 %v371
      %476 = vmatmul.mubr.f32.gmra.mrb[0].mxu0 %v370
      %v477 = vpop.f32.mrb[0].mxu0
      %v478 = vadd.f32 %v409, %v477
      %v479 = vpop.f32.mrb[0].mxu0
      %480 = vdwg.mxu0
      %v481 = vadd.f32 %v274, %v478
      %v482 = vsel %vm295, %v481, 0.0
      %483 = vadd.xlane.f32.xlu0 %v482
      %v484 = vpop.xlane.xlu0 %483
      %v485 = vrcp.pop 32.0
      %v486 = vmul.f32 %v484, %v485
      %v487 = vsub.f32 %v481, %v486
      %v488 = vmul.f32 %v487, %v487
      %v489 = vsel %vm295, %v488, 0.0
      %490 = vadd.xlane.f32.xlu0 %v489
      %v491 = vpop.xlane.xlu0 %490
      %v492 = vmul.f32 %v491, %v485
      %v493 = vadd.f32 %v492, 1e-05
      %v494 = vrsqrt.pop %v493
      %v495 = vmul.f32 %v487, %v494
      %v496 = vld [vmem:[%s5] sm:$0x1]
      %v498 = vlaneseq
      %v499 = vshrl.u32 %v498, 7
      %v500 = vsub.s32 0, %v499
      %v501 = vrot.slane %v496, %v500
      %v503 = vmul.f32 %v495, %v501
      %v504 = vld [vmem:[%s6] sm:$0x1]
      %v506 = vlaneseq
      %v507 = vshrl.u32 %v506, 7
      %v508 = vsub.s32 0, %v507
      %v509 = vrot.slane %v504, %v508
      %v511 = vadd.f32 %v503, %v509
      %512 = vst.msk [vmem:[%s273] sm:$0xff] %vm295, %v511
      %p513 = scmp.lt.s32.totalorder %s18, 1
      %s514 = scalar_select %p513, %s18, 1
      %s515 = smul.addr %s514, 8
      %s516 = scalar_lea.vmem %s7, %s515
      // Predicated region
      $region49: #{transformer_decoder.9} parent=47 // pred_check
        %p517 = pneg %p188
      $region50: #{transformer_decoder.9} parent=47 // pred_check_branch
        %519 = sbr.rel (%p517) target = $region52
      $region51: #{transformer_decoder.9} parent=47 // pred_region
        _
      $region52: #{transformer_decoder.9} parent=47 // pred_fallthru
        _
    $region48: #{transformer_decoder.9} parent=5 // pred_fallthru
      _
    %p520 = scmp.le.s32.totalorder 2, %s13
    // Predicated region
    $region53: #{transformer_decoder.9} parent=5 // pred_check
      %p521 = pneg %p520
    $region54: #{transformer_decoder.9} parent=5 // pred_check_branch
      %523 = sbr.rel (%p521) target = $region56
    $region55: #{transformer_decoder.9} parent=5 // pred_region
      %s524 = ssub.s32 %s13, 2
      // Predicated region
      $region57: #{transformer_decoder.9} parent=55 // pred_check
        %p525 = pneg %p194
      $region58: #{transformer_decoder.9} parent=55 // pred_check_branch
        %527 = sbr.rel (%p525) target = $region60
      $region59: #{transformer_decoder.9} parent=55 // pred_region
        %p528 = scmp.lt.s32.totalorder %s19, 1
        %s529 = scalar_select %p528, %s19, 1
        %s530 = smul.addr %s529, 8
        %s531 = scalar_lea.vmem %s7, %s530
      $region60: #{transformer_decoder.9} parent=55 // pred_fallthru
        _
    $region56: #{transformer_decoder.9} parent=5 // pred_fallthru
      _
  $region6: #{transformer_decoder.9} parent=0 // loop_footer
    %s17 = sadd.s32 1, %s13
  $region7: #{transformer_decoder.9} parent=0 // loop_footer_branch
    %12 = sbr.rel target = $region3
  $region8: #{transformer_decoder.9} parent=0 // loop_exit
    _

// kernel: transformer_decoder.8
$region0: #{transformer_decoder.8}
  #allocation0 [shape = 'u32[]', space=smem, size = 0x4, offset = 0x4, fixed_abs, tag = 'smem constant byte address 0x4 - core index']
  #allocation1 [shape = 'u32[144,128]{1,0:T(1,128)}', space=vmem, size = 0x12000, scoped, tag = 'internal scratch']
  %s0 = inlined_call_operand.vmem [shape: f32[2,8,32], index: 0, kind: input, shape index: {}]
  %s1 = inlined_call_operand.vmem [shape: f32[2,8,32], index: 1, kind: input, shape index: {}]
  %s2 = inlined_call_operand.vmem [shape: f32[2,16,32], index: 2, kind: input, shape index: {}]
  %s3 = inlined_call_operand.vmem [shape: f32[2,16,32], index: 3, kind: input, shape index: {}]
  %s4 = inlined_call_operand.vmem [shape: f32[4,32,8], index: 4, kind: input, shape index: {}]
  %s5 = inlined_call_operand.vmem [shape: f32[4,1,8], index: 5, kind: input, shape index: {}]
  %s6 = inlined_call_operand.vmem [shape: f32[4,32,8], index: 6, kind: input, shape index: {}]
  %s7 = inlined_call_operand.vmem [shape: f32[4,1,8], index: 7, kind: input, shape index: {}]
  %s8 = inlined_call_operand.vmem [shape: f32[4,32,8], index: 8, kind: input, shape index: {}]
  %s9 = inlined_call_operand.vmem [shape: f32[4,1,8], index: 9, kind: input, shape index: {}]
  %s10 = inlined_call_operand.vmem [shape: f32[4,8,32], index: 10, kind: input, shape index: {}]
  %s11 = inlined_call_operand.vmem [shape: f32[1,32], index: 11, kind: input, shape index: {}]
  %s12 = inlined_call_operand.vmem [shape: f32[1,32], index: 12, kind: input, shape index: {}]
  %s13 = inlined_call_operand.vmem [shape: f32[1,32], index: 13, kind: input, shape index: {}]
  %s14 = inlined_call_operand.vmem [shape: f32[2,8,32], index: 14, kind: output, shape index: {}]
  %s15 = sld [smem:[#allocation0]]
  $region89: #{transformer_decoder.8} parent=0
    _
  %s17 = ssub.s32 1, %s15
  %s18 = scalar_select 0, %s17, %s15
  loop: start=0, step=1, limit=4
  $region2: #{transformer_decoder.8} parent=0 // loop_pre_header
    _
  $region3: #{transformer_decoder.8} parent=0 // loop_header
    %s20 = sphi 0, %s24
    %p21 = scmp.ge.s32.totalorder %s20, 4
    %s30 = sphi 0, %s32
    %s33 = sphi 0, %s30
    %s34 = sphi 0, %s33
    %s50 = sphi 0, %s34
    %s56 = sphi 0, %s58
    %s59 = sphi 0, %s56
    %s60 = sphi 0, %s59
    %s76 = sphi 0, %s60
    %s82 = sphi 0, %s84
    %s85 = sphi 0, %s82
    %s86 = sphi 0, %s85
    %s102 = sphi 0, %s86
    %s108 = sphi 0, %s110
    %s111 = sphi 0, %s108
    %s112 = sphi 0, %s111
    %s128 = sphi 0, %s112
    %s132 = sphi 0, %s132
    %s134 = sphi 0, %s132
    %s135 = sphi 0, %s134
    %s149 = sphi 0, %s135
    %s153 = sphi 0, %s153
    %s155 = sphi 0, %s153
    %s156 = sphi 0, %s155
    %s170 = sphi 0, %s156
    %s174 = sphi 0, %s174
    %s176 = sphi 0, %s174
    %s177 = sphi 0, %s176
    %s191 = sphi 0, %s177
    %s195 = sphi 0, %s195
    %s197 = sphi 0, %s195
    %s198 = sphi 0, %s197
    %s212 = sphi 0, %s198
    %s216 = sphi 0, %s216
    %s218 = sphi 0, %s216
    %s219 = sphi 0, %s218
    %s233 = sphi 0, %s219
    %s237 = sphi 0, %s237
    %s239 = sphi 0, %s237
    %s240 = sphi 0, %s239
    %s254 = sphi 0, %s240
    %s258 = sphi 0, %s258
    %s260 = sphi 0, %s258
    %s261 = sphi 0, %s260
    %s275 = sphi 0, %s261
    %s279 = sphi 0, %s279
    %s281 = sphi 0, %s279
    %s282 = sphi 0, %s281
    %s296 = sphi 0, %s282
    %s300 = sphi 0, %s300
    %s302 = sphi 0, %s300
    %s303 = sphi 0, %s302
    %s317 = sphi 0, %s303
    %s321 = sphi 0, %s321
    %s323 = sphi 0, %s321
    %s324 = sphi 0, %s323
    %s338 = sphi 0, %s324
    %s344 = sphi 0, %s346
    %s347 = sphi 0, %s344
    %s348 = sphi 0, %s347
    %s364 = sphi 0, %s348
  $region4: #{transformer_decoder.8} parent=0 // loop_header_branch
    %23 = sbr.rel (%p21) target = $region8
  $region5: #{transformer_decoder.8} parent=0 // loop_body
    %s25 = ssub.s32 %s20, 1
    %s26 = ssub.s32 %s20, 2
    %s27 = sadd.s32 %s20, 1
    %s28 = ssub.s32 %s20, %s27
    %p29 = scmp.eq.s32.totalorder %s28, 0
    %s31 = sadd.s32 %s30, 1
    %s32 = scalar_select %p29, %s30, %s31
    %p35 = pneg %p29
    %p36 = scmp.eq.s32.totalorder %s20, 1
    %p37 = por %p35, %p36
    %p38 = scmp.ne.s32.totalorder %s30, %s33
    %p39 = scmp.eq.s32.totalorder %s20, 0
    %p40 = por %p38, %p39
    %p41 = scmp.ne.s32.totalorder %s30, %s33
    %p42 = scmp.eq.s32.totalorder %s25, 1
    %p43 = por %p41, %p42
    %p44 = scmp.ne.s32.totalorder %s33, %s34
    %p45 = scmp.eq.s32.totalorder %s25, 0
    %p46 = por %p44, %p45
    %p47 = scmp.ne.s32.totalorder %s33, %s34
    %p48 = scmp.eq.s32.totalorder %s26, 1
    %p49 = por %p47, %p48
    %p51 = scmp.ne.s32.totalorder %s34, %s50
    %p52 = scmp.eq.s32.totalorder %s26, 0
    %p53 = por %p51, %p52
    %s54 = ssub.s32 %s20, %s27
    %p55 = scmp.eq.s32.totalorder %s54, 0
    %s57 = sadd.s32 %s56, 1
    %s58 = scalar_select %p55, %s56, %s57
    %p61 = pneg %p55
    %p62 = scmp.eq.s32.totalorder %s20, 1
    %p63 = por %p61, %p62
    %p64 = scmp.ne.s32.totalorder %s56, %s59
    %p65 = scmp.eq.s32.totalorder %s20, 0
    %p66 = por %p64, %p65
    %p67 = scmp.ne.s32.totalorder %s56, %s59
    %p68 = scmp.eq.s32.totalorder %s25, 1
    %p69 = por %p67, %p68
    %p70 = scmp.ne.s32.totalorder %s59, %s60
    %p71 = scmp.eq.s32.totalorder %s25, 0
    %p72 = por %p70, %p71
    %p73 = scmp.ne.s32.totalorder %s59, %s60
    %p74 = scmp.eq.s32.totalorder %s26, 1
    %p75 = por %p73, %p74
    %p77 = scmp.ne.s32.totalorder %s60, %s76
    %p78 = scmp.eq.s32.totalorder %s26, 0
    %p79 = por %p77, %p78
    %s80 = ssub.s32 %s20, %s27
    %p81 = scmp.eq.s32.totalorder %s80, 0
    %s83 = sadd.s32 %s82, 1
    %s84 = scalar_select %p81, %s82, %s83
    %p87 = pneg %p81
    %p88 = scmp.eq.s32.totalorder %s20, 1
    %p89 = por %p87, %p88
    %p90 = scmp.ne.s32.totalorder %s82, %s85
    %p91 = scmp.eq.s32.totalorder %s20, 0
    %p92 = por %p90, %p91
    %p93 = scmp.ne.s32.totalorder %s82, %s85
    %p94 = scmp.eq.s32.totalorder %s25, 1
    %p95 = por %p93, %p94
    %p96 = scmp.ne.s32.totalorder %s85, %s86
    %p97 = scmp.eq.s32.totalorder %s25, 0
    %p98 = por %p96, %p97
    %p99 = scmp.ne.s32.totalorder %s85, %s86
    %p100 = scmp.eq.s32.totalorder %s26, 1
    %p101 = por %p99, %p100
    %p103 = scmp.ne.s32.totalorder %s86, %s102
    %p104 = scmp.eq.s32.totalorder %s26, 0
    %p105 = por %p103, %p104
    %s106 = ssub.s32 %s20, %s27
    %p107 = scmp.eq.s32.totalorder %s106, 0
    %s109 = sadd.s32 %s108, 1
    %s110 = scalar_select %p107, %s108, %s109
    %p113 = pneg %p107
    %p114 = scmp.eq.s32.totalorder %s20, 1
    %p115 = por %p113, %p114
    %p116 = scmp.ne.s32.totalorder %s108, %s111
    %p117 = scmp.eq.s32.totalorder %s20, 0
    %p118 = por %p116, %p117
    %p119 = scmp.ne.s32.totalorder %s108, %s111
    %p120 = scmp.eq.s32.totalorder %s25, 1
    %p121 = por %p119, %p120
    %p122 = scmp.ne.s32.totalorder %s111, %s112
    %p123 = scmp.eq.s32.totalorder %s25, 0
    %p124 = por %p122, %p123
    %p125 = scmp.ne.s32.totalorder %s111, %s112
    %p126 = scmp.eq.s32.totalorder %s26, 1
    %p127 = por %p125, %p126
    %p129 = scmp.ne.s32.totalorder %s112, %s128
    %p130 = scmp.eq.s32.totalorder %s26, 0
    %p131 = por %p129, %p130
    %s133 = sadd.s32 %s132, 1
    %p136 = scmp.eq.s32.totalorder %s20, 1
    %p137 = scmp.ne.s32.totalorder %s132, %s134
    %p138 = scmp.eq.s32.totalorder %s20, 0
    %p139 = por %p137, %p138
    %p140 = scmp.ne.s32.totalorder %s132, %s134
    %p141 = scmp.eq.s32.totalorder %s25, 1
    %p142 = por %p140, %p141
    %p143 = scmp.ne.s32.totalorder %s134, %s135
    %p144 = scmp.eq.s32.totalorder %s25, 0
    %p145 = por %p143, %p144
    %p146 = scmp.ne.s32.totalorder %s134, %s135
    %p147 = scmp.eq.s32.totalorder %s26, 1
    %p148 = por %p146, %p147
    %p150 = scmp.ne.s32.totalorder %s135, %s149
    %p151 = scmp.eq.s32.totalorder %s26, 0
    %p152 = por %p150, %p151
    %s154 = sadd.s32 %s153, 1
    %p157 = scmp.eq.s32.totalorder %s20, 1
    %p158 = scmp.ne.s32.totalorder %s153, %s155
    %p159 = scmp.eq.s32.totalorder %s20, 0
    %p160 = por %p158, %p159
    %p161 = scmp.ne.s32.totalorder %s153, %s155
    %p162 = scmp.eq.s32.totalorder %s25, 1
    %p163 = por %p161, %p162
    %p164 = scmp.ne.s32.totalorder %s155, %s156
    %p165 = scmp.eq.s32.totalorder %s25, 0
    %p166 = por %p164, %p165
    %p167 = scmp.ne.s32.totalorder %s155, %s156
    %p168 = scmp.eq.s32.totalorder %s26, 1
    %p169 = por %p167, %p168
    %p171 = scmp.ne.s32.totalorder %s156, %s170
    %p172 = scmp.eq.s32.totalorder %s26, 0
    %p173 = por %p171, %p172
    %s175 = sadd.s32 %s174, 1
    %p178 = scmp.eq.s32.totalorder %s20, 1
    %p179 = scmp.ne.s32.totalorder %s174, %s176
    %p180 = scmp.eq.s32.totalorder %s20, 0
    %p181 = por %p179, %p180
    %p182 = scmp.ne.s32.totalorder %s174, %s176
    %p183 = scmp.eq.s32.totalorder %s25, 1
    %p184 = por %p182, %p183
    %p185 = scmp.ne.s32.totalorder %s176, %s177
    %p186 = scmp.eq.s32.totalorder %s25, 0
    %p187 = por %p185, %p186
    %p188 = scmp.ne.s32.totalorder %s176, %s177
    %p189 = scmp.eq.s32.totalorder %s26, 1
    %p190 = por %p188, %p189
    %p192 = scmp.ne.s32.totalorder %s177, %s191
    %p193 = scmp.eq.s32.totalorder %s26, 0
    %p194 = por %p192, %p193
    %s196 = sadd.s32 %s195, 1
    %p199 = scmp.eq.s32.totalorder %s20, 1
    %p200 = scmp.ne.s32.totalorder %s195, %s197
    %p201 = scmp.eq.s32.totalorder %s20, 0
    %p202 = por %p200, %p201
    %p203 = scmp.ne.s32.totalorder %s195, %s197
    %p204 = scmp.eq.s32.totalorder %s25, 1
    %p205 = por %p203, %p204
    %p206 = scmp.ne.s32.totalorder %s197, %s198
    %p207 = scmp.eq.s32.totalorder %s25, 0
    %p208 = por %p206, %p207
    %p209 = scmp.ne.s32.totalorder %s197, %s198
    %p210 = scmp.eq.s32.totalorder %s26, 1
    %p211 = por %p209, %p210
    %p213 = scmp.ne.s32.totalorder %s198, %s212
    %p214 = scmp.eq.s32.totalorder %s26, 0
    %p215 = por %p213, %p214
    %s217 = sadd.s32 %s216, 1
    %p220 = scmp.eq.s32.totalorder %s20, 1
    %p221 = scmp.ne.s32.totalorder %s216, %s218
    %p222 = scmp.eq.s32.totalorder %s20, 0
    %p223 = por %p221, %p222
    %p224 = scmp.ne.s32.totalorder %s216, %s218
    %p225 = scmp.eq.s32.totalorder %s25, 1
    %p226 = por %p224, %p225
    %p227 = scmp.ne.s32.totalorder %s218, %s219
    %p228 = scmp.eq.s32.totalorder %s25, 0
    %p229 = por %p227, %p228
    %p230 = scmp.ne.s32.totalorder %s218, %s219
    %p231 = scmp.eq.s32.totalorder %s26, 1
    %p232 = por %p230, %p231
    %p234 = scmp.ne.s32.totalorder %s219, %s233
    %p235 = scmp.eq.s32.totalorder %s26, 0
    %p236 = por %p234, %p235
    %s238 = sadd.s32 %s237, 1
    %p241 = scmp.eq.s32.totalorder %s20, 1
    %p242 = scmp.ne.s32.totalorder %s237, %s239
    %p243 = scmp.eq.s32.totalorder %s20, 0
    %p244 = por %p242, %p243
    %p245 = scmp.ne.s32.totalorder %s237, %s239
    %p246 = scmp.eq.s32.totalorder %s25, 1
    %p247 = por %p245, %p246
    %p248 = scmp.ne.s32.totalorder %s239, %s240
    %p249 = scmp.eq.s32.totalorder %s25, 0
    %p250 = por %p248, %p249
    %p251 = scmp.ne.s32.totalorder %s239, %s240
    %p252 = scmp.eq.s32.totalorder %s26, 1
    %p253 = por %p251, %p252
    %p255 = scmp.ne.s32.totalorder %s240, %s254
    %p256 = scmp.eq.s32.totalorder %s26, 0
    %p257 = por %p255, %p256
    %s259 = sadd.s32 %s258, 1
    %p262 = scmp.eq.s32.totalorder %s20, 1
    %p263 = scmp.ne.s32.totalorder %s258, %s260
    %p264 = scmp.eq.s32.totalorder %s20, 0
    %p265 = por %p263, %p264
    %p266 = scmp.ne.s32.totalorder %s258, %s260
    %p267 = scmp.eq.s32.totalorder %s25, 1
    %p268 = por %p266, %p267
    %p269 = scmp.ne.s32.totalorder %s260, %s261
    %p270 = scmp.eq.s32.totalorder %s25, 0
    %p271 = por %p269, %p270
    %p272 = scmp.ne.s32.totalorder %s260, %s261
    %p273 = scmp.eq.s32.totalorder %s26, 1
    %p274 = por %p272, %p273
    %p276 = scmp.ne.s32.totalorder %s261, %s275
    %p277 = scmp.eq.s32.totalorder %s26, 0
    %p278 = por %p276, %p277
    %s280 = sadd.s32 %s279, 1
    %p283 = scmp.eq.s32.totalorder %s20, 1
    %p284 = scmp.ne.s32.totalorder %s279, %s281
    %p285 = scmp.eq.s32.totalorder %s20, 0
    %p286 = por %p284, %p285
    %p287 = scmp.ne.s32.totalorder %s279, %s281
    %p288 = scmp.eq.s32.totalorder %s25, 1
    %p289 = por %p287, %p288
    %p290 = scmp.ne.s32.totalorder %s281, %s282
    %p291 = scmp.eq.s32.totalorder %s25, 0
    %p292 = por %p290, %p291
    %p293 = scmp.ne.s32.totalorder %s281, %s282
    %p294 = scmp.eq.s32.totalorder %s26, 1
    %p295 = por %p293, %p294
    %p297 = scmp.ne.s32.totalorder %s282, %s296
    %p298 = scmp.eq.s32.totalorder %s26, 0
    %p299 = por %p297, %p298
    %s301 = sadd.s32 %s300, 1
    %p304 = scmp.eq.s32.totalorder %s20, 1
    %p305 = scmp.ne.s32.totalorder %s300, %s302
    %p306 = scmp.eq.s32.totalorder %s20, 0
    %p307 = por %p305, %p306
    %p308 = scmp.ne.s32.totalorder %s300, %s302
    %p309 = scmp.eq.s32.totalorder %s25, 1
    %p310 = por %p308, %p309
    %p311 = scmp.ne.s32.totalorder %s302, %s303
    %p312 = scmp.eq.s32.totalorder %s25, 0
    %p313 = por %p311, %p312
    %p314 = scmp.ne.s32.totalorder %s302, %s303
    %p315 = scmp.eq.s32.totalorder %s26, 1
    %p316 = por %p314, %p315
    %p318 = scmp.ne.s32.totalorder %s303, %s317
    %p319 = scmp.eq.s32.totalorder %s26, 0
    %p320 = por %p318, %p319
    %s322 = sadd.s32 %s321, 1
    %p325 = scmp.eq.s32.totalorder %s20, 1
    %p326 = scmp.ne.s32.totalorder %s321, %s323
    %p327 = scmp.eq.s32.totalorder %s20, 0
    %p328 = por %p326, %p327
    %p329 = scmp.ne.s32.totalorder %s321, %s323
    %p330 = scmp.eq.s32.totalorder %s25, 1
    %p331 = por %p329, %p330
    %p332 = scmp.ne.s32.totalorder %s323, %s324
    %p333 = scmp.eq.s32.totalorder %s25, 0
    %p334 = por %p332, %p333
    %p335 = scmp.ne.s32.totalorder %s323, %s324
    %p336 = scmp.eq.s32.totalorder %s26, 1
    %p337 = por %p335, %p336
    %p339 = scmp.ne.s32.totalorder %s324, %s338
    %p340 = scmp.eq.s32.totalorder %s26, 0
    %p341 = por %p339, %p340
    %s342 = ssub.s32 %s20, %s27
    %p343 = scmp.eq.s32.totalorder %s342, 0
    %s345 = sadd.s32 %s344, 1
    %s346 = scalar_select %p343, %s344, %s345
    %p349 = pneg %p343
    %p350 = scmp.eq.s32.totalorder %s20, 1
    %p351 = por %p349, %p350
    %p352 = scmp.ne.s32.totalorder %s344, %s347
    %p353 = scmp.eq.s32.totalorder %s20, 0
    %p354 = por %p352, %p353
    %p355 = scmp.ne.s32.totalorder %s344, %s347
    %p356 = scmp.eq.s32.totalorder %s25, 1
    %p357 = por %p355, %p356
    %p358 = scmp.ne.s32.totalorder %s347, %s348
    %p359 = scmp.eq.s32.totalorder %s25, 0
    %p360 = por %p358, %p359
    %p361 = scmp.ne.s32.totalorder %s347, %s348
    %p362 = scmp.eq.s32.totalorder %s26, 1
    %p363 = por %p361, %p362
    %p365 = scmp.ne.s32.totalorder %s348, %s364
    %p366 = scmp.eq.s32.totalorder %s26, 0
    %p367 = por %p365, %p366
    %p368 = scmp.le.s32.totalorder 1, %s20
    %p369 = scmp.lt.s32.totalorder %s20, 3
    %p370 = pnand %p368, %p369
    %p371 = pneg %p370
    // Predicated region
    $region9: #{transformer_decoder.8} parent=5 // pred_check
      _
    $region10: #{transformer_decoder.8} parent=5 // pred_check_branch
      %373 = sbr.rel (%p370) target = $region12
    $region11: #{transformer_decoder.8} parent=5 // pred_region
      %s374 = ssub.s32 %s20, 1
      // Predicated region
      $region13: #{transformer_decoder.8} parent=11 // pred_check
        %p375 = pneg %p145
      $region14: #{transformer_decoder.8} parent=11 // pred_check_branch
        %377 = sbr.rel (%p375) target = $region16
      $region15: #{transformer_decoder.8} parent=11 // pred_region
        _
      $region16: #{transformer_decoder.8} parent=11 // pred_fallthru
        _
      // Predicated region
      $region17: #{transformer_decoder.8} parent=11 // pred_check
        %p378 = pneg %p166
      $region18: #{transformer_decoder.8} parent=11 // pred_check_branch
        %380 = sbr.rel (%p378) target = $region20
      $region19: #{transformer_decoder.8} parent=11 // pred_region
        _
      $region20: #{transformer_decoder.8} parent=11 // pred_fallthru
        _
      // Predicated region
      $region21: #{transformer_decoder.8} parent=11 // pred_check
        %p381 = pneg %p187
      $region22: #{transformer_decoder.8} parent=11 // pred_check_branch
        %383 = sbr.rel (%p381) target = $region24
      $region23: #{transformer_decoder.8} parent=11 // pred_region
        _
      $region24: #{transformer_decoder.8} parent=11 // pred_fallthru
        _
      // Predicated region
      $region25: #{transformer_decoder.8} parent=11 // pred_check
        %p384 = pneg %p208
      $region26: #{transformer_decoder.8} parent=11 // pred_check_branch
        %386 = sbr.rel (%p384) target = $region28
      $region27: #{transformer_decoder.8} parent=11 // pred_region
        _
      $region28: #{transformer_decoder.8} parent=11 // pred_fallthru
        _
      // Predicated region
      $region29: #{transformer_decoder.8} parent=11 // pred_check
        %p387 = pneg %p229
      $region30: #{transformer_decoder.8} parent=11 // pred_check_branch
        %389 = sbr.rel (%p387) target = $region32
      $region31: #{transformer_decoder.8} parent=11 // pred_region
        _
      $region32: #{transformer_decoder.8} parent=11 // pred_fallthru
        _
      // Predicated region
      $region33: #{transformer_decoder.8} parent=11 // pred_check
        %p390 = pneg %p250
      $region34: #{transformer_decoder.8} parent=11 // pred_check_branch
        %392 = sbr.rel (%p390) target = $region36
      $region35: #{transformer_decoder.8} parent=11 // pred_region
        _
      $region36: #{transformer_decoder.8} parent=11 // pred_fallthru
        _
      // Predicated region
      $region37: #{transformer_decoder.8} parent=11 // pred_check
        %p393 = pneg %p271
      $region38: #{transformer_decoder.8} parent=11 // pred_check_branch
        %395 = sbr.rel (%p393) target = $region40
      $region39: #{transformer_decoder.8} parent=11 // pred_region
        _
      $region40: #{transformer_decoder.8} parent=11 // pred_fallthru
        _
      // Predicated region
      $region41: #{transformer_decoder.8} parent=11 // pred_check
        %p396 = pneg %p292
      $region42: #{transformer_decoder.8} parent=11 // pred_check_branch
        %398 = sbr.rel (%p396) target = $region44
      $region43: #{transformer_decoder.8} parent=11 // pred_region
        _
      $region44: #{transformer_decoder.8} parent=11 // pred_fallthru
        _
      // Predicated region
      $region45: #{transformer_decoder.8} parent=11 // pred_check
        %p399 = pneg %p313
      $region46: #{transformer_decoder.8} parent=11 // pred_check_branch
        %401 = sbr.rel (%p399) target = $region48
      $region47: #{transformer_decoder.8} parent=11 // pred_region
        _
      $region48: #{transformer_decoder.8} parent=11 // pred_fallthru
        _
      // Predicated region
      $region49: #{transformer_decoder.8} parent=11 // pred_check
        %p402 = pneg %p334
      $region50: #{transformer_decoder.8} parent=11 // pred_check_branch
        %404 = sbr.rel (%p402) target = $region52
      $region51: #{transformer_decoder.8} parent=11 // pred_region
        _
      $region52: #{transformer_decoder.8} parent=11 // pred_fallthru
        _
    $region12: #{transformer_decoder.8} parent=5 // pred_fallthru
      _
    %p405 = scmp.lt.s32.totalorder %s20, 2
    // Predicated region
    $region53: #{transformer_decoder.8} parent=5 // pred_check
      %p406 = pneg %p405
    $region54: #{transformer_decoder.8} parent=5 // pred_check_branch
      %408 = sbr.rel (%p406) target = $region56
    $region55: #{transformer_decoder.8} parent=5 // pred_region
      // Predicated region
      $region57: #{transformer_decoder.8} parent=55 // pred_check
        %p409 = pneg %p40
      $region58: #{transformer_decoder.8} parent=55 // pred_check_branch
        %411 = sbr.rel (%p409) target = $region60
      $region59: #{transformer_decoder.8} parent=55 // pred_region
        %p412 = scmp.lt.s32.totalorder %s20, 1
        %s413 = scalar_select %p412, %s20, 1
        %s414 = smul.addr %s413, 8
        %s415 = scalar_lea.vmem %s0, %s414
      $region60: #{transformer_decoder.8} parent=55 // pred_fallthru
        _
      // Predicated region
      $region61: #{transformer_decoder.8} parent=55 // pred_check
        %p416 = pneg %p66
      $region62: #{transformer_decoder.8} parent=55 // pred_check_branch
        %418 = sbr.rel (%p416) target = $region64
      $region63: #{transformer_decoder.8} parent=55 // pred_region
        %p419 = scmp.lt.s32.totalorder %s20, 1
        %s420 = scalar_select %p419, %s20, 1
        %s421 = smul.addr %s420, 8
        %s422 = scalar_lea.vmem %s1, %s421
      $region64: #{transformer_decoder.8} parent=55 // pred_fallthru
        _
      // Predicated region
      $region65: #{transformer_decoder.8} parent=55 // pred_check
        %p423 = pneg %p92
      $region66: #{transformer_decoder.8} parent=55 // pred_check_branch
        %425 = sbr.rel (%p423) target = $region68
      $region67: #{transformer_decoder.8} parent=55 // pred_region
        %p426 = scmp.lt.s32.totalorder %s20, 1
        %s427 = scalar_select %p426, %s20, 1
        %s428 = smul.addr %s427, 2
        %s429 = smul.addr %s428, 8
        %s430 = scalar_lea.vmem %s2, %s429
      $region68: #{transformer_decoder.8} parent=55 // pred_fallthru
        _
      // Predicated region
      $region69: #{transformer_decoder.8} parent=55 // pred_check
        %p431 = pneg %p118
      $region70: #{transformer_decoder.8} parent=55 // pred_check_branch
        %433 = sbr.rel (%p431) target = $region72
      $region71: #{transformer_decoder.8} parent=55 // pred_region
        %p434 = scmp.lt.s32.totalorder %s20, 1
        %s435 = scalar_select %p434, %s20, 1
        %s436 = smul.addr %s435, 2
        %s437 = smul.addr %s436, 8
        %s438 = scalar_lea.vmem %s3, %s437
      $region72: #{transformer_decoder.8} parent=55 // pred_fallthru
        _
    $region56: #{transformer_decoder.8} parent=5 // pred_fallthru
      _
    %p439 = scmp.le.s32.totalorder 1, %s20
    %p440 = scmp.lt.s32.totalorder %s20, 3
    %p441 = pnand %p439, %p440
    %p442 = pneg %p441
    // Predicated region
    $region73: #{transformer_decoder.8} parent=5 // pred_check
      _
    $region74: #{transformer_decoder.8} parent=5 // pred_check_branch
      %444 = sbr.rel (%p441) target = $region76
    $region75: #{transformer_decoder.8} parent=5 // pred_region
      %s445 = ssub.s32 %s20, 1
      %p446 = scmp.lt.s32.totalorder %s25, 1
      %s447 = scalar_select %p446, %s25, 1
      %s448 = smul.addr %s447, 8
      %s449 = scalar_lea.vmem %s0, %s448
      %p450 = pneg %p46
      %p451 = pneg %p43
      %p452 = scmp.lt.s32.totalorder %s25, 1
      %s453 = scalar_select %p452, %s25, 1
      %s454 = smul.addr %s453, 8
      %s455 = scalar_lea.vmem %s1, %s454
      %p456 = pneg %p72
      %p457 = pneg %p69
      %p458 = scmp.lt.s32.totalorder %s25, 1
      %s459 = scalar_select %p458, %s25, 1
      %s460 = smul.addr %s459, 2
      %s461 = smul.addr %s460, 8
      %s462 = scalar_lea.vmem %s2, %s461
      %p463 = pneg %p98
      %p464 = pneg %p95
      %p465 = scmp.lt.s32.totalorder %s25, 1
      %s466 = scalar_select %p465, %s25, 1
      %s467 = smul.addr %s466, 2
      %s468 = smul.addr %s467, 8
      %s469 = scalar_lea.vmem %s3, %s468
      %p470 = pneg %p124
      %p471 = pneg %p121
      %p472 = pneg %p145
      %p473 = pneg %p142
      %p474 = pneg %p166
      %p475 = pneg %p163
      %p476 = pneg %p187
      %p477 = pneg %p184
      %p478 = pneg %p208
      %p479 = pneg %p205
      %p480 = pneg %p229
      %p481 = pneg %p226
      %p482 = pneg %p250
      %p483 = pneg %p247
      %p484 = pneg %p271
      %p485 = pneg %p268
      %p486 = pneg %p292
      %p487 = pneg %p289
      %p488 = pneg %p313
      %p489 = pneg %p310
      %p490 = pneg %p334
      %p491 = pneg %p331
      %p492 = pneg %p360
      %p493 = pneg %p357
      %p494 = scmp.lt.s32.totalorder %s25, 1
      %s495 = scalar_select %p494, %s25, 1
      %s496 = smul.addr %s495, 8
      %s497 = scalar_lea.vmem %s14, %s496
      %p498 = scmp.lt.s32.totalorder %s25, 1
      %s499 = scalar_select %p498, %s25, 1
      %s500 = smul.addr %s499, 8
      %s501 = scalar_lea.vmem %s0, %s500
      %p502 = scmp.lt.s32.totalorder %s25, 1
      %s503 = scalar_select %p502, %s25, 1
      %s504 = smul.addr %s503, 8
      %s505 = scalar_lea.vmem %s1, %s504
      %p506 = scmp.lt.s32.totalorder %s25, 1
      %s507 = scalar_select %p506, %s25, 1
      %s508 = smul.addr %s507, 2
      %s509 = smul.addr %s508, 8
      %s510 = scalar_lea.vmem %s2, %s509
      %p511 = scmp.lt.s32.totalorder %s25, 1
      %s512 = scalar_select %p511, %s25, 1
      %s513 = smul.addr %s512, 2
      %s514 = smul.addr %s513, 8
      %s515 = scalar_lea.vmem %s3, %s514
      %p516 = scmp.lt.s32.totalorder %s25, 1
      %s517 = scalar_select %p516, %s25, 1
      %s518 = smul.addr %s517, 8
      %s519 = scalar_lea.vmem %s14, %s518
      %v520 = vld [vmem:[%s501] sm:$0xff]
      %v521 = vld [vmem:[%s505] sm:$0xff]
      %v522 = vadd.f32 %v520, %v521
      %v523 = vld [vmem:[%s510] sm:$0xff]
      %v524 = vld [vmem:[%s510 + $0x8] sm:$0xff]
      %v525 = vld [vmem:[%s515] sm:$0xff]
      %v526 = vld [vmem:[%s515 + $0x8] sm:$0xff]
      %v527 = vadd.f32 %v523, %v525
      %v528 = vadd.f32 %v524, %v526
      %v529 = vld [vmem:[%s4] sm:$0xff]
      %v530 = vld [vmem:[%s4 + $0x8] sm:$0xff]
      %v531 = vld [vmem:[%s4 + $0x10] sm:$0xff]
      %v532 = vld [vmem:[%s4 + $0x18] sm:$0xff]
      %v533 = vld [vmem:[%s5] sm:$0x1]
      %v535 = vlaneseq
      %v536 = vshrl.u32 %v535, 7
      %v537 = vsub.s32 0, %v536
      %v538 = vrot.slane %v533, %v537
      %vm540 = vcmask 261120
      %v542 = vsel %vm540, %v522, 0
      %544 = vmatprep.subr.mxu0 0.0
      %545 = vmatpush1.msra.mxu0 %v529
      %546 = vmatprep.subr.mxu0 0.0
      %547 = vmatpush1.msra.mxu0 %v530
      %548 = vmatprep.subr.mxu0 0.0
      %549 = vmatpush1.msra.mxu0 %v531
      %550 = vmatprep.subr.mxu0 0.0
      %551 = vmatpush1.msra.mxu0 %v532
      %552 = vmatprep.subr.mxu0 0.0
      %553 = vmatpush1.msra.mxu0 0.0
      %554 = vmatprep.subr.mxu0 0.0
      %555 = vmatpush1.msra.mxu0 0.0
      %556 = vmatprep.subr.mxu0 0.0
      %557 = vmatpush1.msra.mxu0 0.0
      %558 = vmatprep.subr.mxu0 0.0
      %559 = vmatpush1.msra.mxu0 0.0
      %560 = vmatprep.subr.mxu0 0.0
      %561 = vmatpush1.msra.mxu0 0.0
      %562 = vmatprep.subr.mxu0 0.0
      %563 = vmatpush1.msra.mxu0 0.0
      %564 = vmatprep.subr.mxu0 0.0
      %565 = vmatpush1.msra.mxu0 0.0
      %566 = vmatprep.subr.mxu0 0.0
      %567 = vmatpush1.msra.mxu0 0.0
      %568 = vmatprep.subr.mxu0 0.0
      %569 = vmatpush1.msra.mxu0 0.0
      %570 = vmatprep.subr.mxu0 0.0
      %571 = vmatpush1.msra.mxu0 0.0
      %572 = vmatprep.subr.mxu0 0.0
      %573 = vmatpush1.msra.mxu0 0.0
      %574 = vmatprep.subr.mxu0 0.0
      %575 = vmatpush1.msra.mxu0 0.0
      %576 = vmatprep.subr.mxu0 0.0
      %577 = vmatpush1.msra.mxu0 0.0
      %578 = vmatprep.subr.mxu0 0.0
      %579 = vmatpush1.msra.mxu0 0.0
      %580 = vmatprep.subr.mxu0 0.0
      %581 = vmatpush1.msra.mxu0 0.0
      %582 = vmatprep.subr.mxu0 0.0
      %583 = vmatpush1.msra.mxu0 0.0
      %584 = vmatprep.subr.mxu0 0.0
      %585 = vmatpush1.msra.mxu0 0.0
      %586 = vmatprep.subr.mxu0 0.0
      %587 = vmatpush1.msra.mxu0 0.0
      %588 = vmatprep.subr.mxu0 0.0
      %589 = vmatpush1.msra.mxu0 0.0
      %590 = vmatprep.subr.mxu0 0.0
      %591 = vmatpush1.msra.mxu0 0.0
      %592 = vmatprep.subr.mxu0 0.0
      %593 = vmatpush1.msra.mxu0 0.0
      %594 = vmatprep.subr.mxu0 0.0
      %595 = vmatpush1.msra.mxu0 0.0
      %596 = vmatprep.subr.mxu0 0.0
      %597 = vmatpush1.msra.mxu0 0.0
      %598 = vmatprep.subr.mxu0 0.0
      %599 = vmatpush1.msra.mxu0 0.0
      %600 = vmatprep.subr.mxu0 0.0
      %601 = vmatpush1.msra.mxu0 0.0
      %602 = vmatprep.subr.mxu0 0.0
      %603 = vmatpush1.msra.mxu0 0.0
      %604 = vmatprep.subr.mxu0 0.0
      %605 = vmatpush1.msra.mxu0 0.0
      %606 = vmatprep.subr.mxu0 0.0
      %607 = vmatpush1.msra.mxu0 0.0
      %608 = vmatprep.mubr.f32.mxu0 0.0
      %609 = vmatmul.mubr.f32.gmra.mrb[0].mxu0 %v542
      %v610 = vpop.f32.mrb[0].mxu0
      %v611 = vadd.f32 %v538, %v610
      %v612 = vpop.f32.mrb[0].mxu0
      %613 = vdwg.mxu0
      %v614 = vld [vmem:[%s6] sm:$0xff]
      %v615 = vld [vmem:[%s6 + $0x8] sm:$0xff]
      %v616 = vld [vmem:[%s6 + $0x10] sm:$0xff]
      %v617 = vld [vmem:[%s6 + $0x18] sm:$0xff]
      %v618 = vld [vmem:[%s7] sm:$0x1]
      %v620 = vlaneseq
      %v621 = vshrl.u32 %v620, 7
      %v622 = vsub.s32 0, %v621
      %v623 = vrot.slane %v618, %v622
      %v626 = vsel %vm540, %v527, 0
      %v629 = vsel %vm540, %v528, 0
      %631 = vmatprep.subr.mxu0 0.0
      %632 = vmatpush1.msra.mxu0 %v614
      %633 = vmatprep.subr.mxu0 0.0
      %634 = vmatpush1.msra.mxu0 %v615
      %635 = vmatprep.subr.mxu0 0.0
      %636 = vmatpush1.msra.mxu0 %v616
      %637 = vmatprep.subr.mxu0 0.0
      %638 = vmatpush1.msra.mxu0 %v617
      %639 = vmatprep.subr.mxu0 0.0
      %640 = vmatpush1.msra.mxu0 0.0
      %641 = vmatprep.subr.mxu0 0.0
      %642 = vmatpush1.msra.mxu0 0.0
      %643 = vmatprep.subr.mxu0 0.0
      %644 = vmatpush1.msra.mxu0 0.0
      %645 = vmatprep.subr.mxu0 0.0
      %646 = vmatpush1.msra.mxu0 0.0
      %647 = vmatprep.subr.mxu0 0.0
      %648 = vmatpush1.msra.mxu0 0.0
      %649 = vmatprep.subr.mxu0 0.0
      %650 = vmatpush1.msra.mxu0 0.0
      %651 = vmatprep.subr.mxu0 0.0
      %652 = vmatpush1.msra.mxu0 0.0
      %653 = vmatprep.subr.mxu0 0.0
      %654 = vmatpush1.msra.mxu0 0.0
      %655 = vmatprep.subr.mxu0 0.0
      %656 = vmatpush1.msra.mxu0 0.0
      %657 = vmatprep.subr.mxu0 0.0
      %658 = vmatpush1.msra.mxu0 0.0
      %659 = vmatprep.subr.mxu0 0.0
      %660 = vmatpush1.msra.mxu0 0.0
      %661 = vmatprep.subr.mxu0 0.0
      %662 = vmatpush1.msra.mxu0 0.0
      %663 = vmatprep.subr.mxu0 0.0
      %664 = vmatpush1.msra.mxu0 0.0
      %665 = vmatprep.subr.mxu0 0.0
      %666 = vmatpush1.msra.mxu0 0.0
      %667 = vmatprep.subr.mxu0 0.0
      %668 = vmatpush1.msra.mxu0 0.0
      %669 = vmatprep.subr.mxu0 0.0
      %670 = vmatpush1.msra.mxu0 0.0
      %671 = vmatprep.subr.mxu0 0.0
      %672 = vmatpush1.msra.mxu0 0.0
      %673 = vmatprep.subr.mxu0 0.0
      %674 = vmatpush1.msra.mxu0 0.0
      %675 = vmatprep.subr.mxu0 0.0
      %676 = vmatpush1.msra.mxu0 0.0
      %677 = vmatprep.subr.mxu0 0.0
      %678 = vmatpush1.msra.mxu0 0.0
      %679 = vmatprep.subr.mxu0 0.0
      %680 = vmatpush1.msra.mxu0 0.0
      %681 = vmatprep.subr.mxu0 0.0
      %682 = vmatpush1.msra.mxu0 0.0
      %683 = vmatprep.subr.mxu0 0.0
      %684 = vmatpush1.msra.mxu0 0.0
      %685 = vmatprep.subr.mxu0 0.0
      %686 = vmatpush1.msra.mxu0 0.0
      %687 = vmatprep.subr.mxu0 0.0
      %688 = vmatpush1.msra.mxu0 0.0
      %689 = vmatprep.subr.mxu0 0.0
      %690 = vmatpush1.msra.mxu0 0.0
      %691 = vmatprep.subr.mxu0 0.0
      %692 = vmatpush1.msra.mxu0 0.0
      %693 = vmatprep.subr.mxu0 0.0
      %694 = vmatpush1.msra.mxu0 0.0
      %695 = vmatprep.mubr.f32.mxu0 0.0
      %696 = vmatmul.mubr.f32.gmra.mrb[0].mxu0 %v626
      %v697 = vpop.f32.mrb[0].mxu0
      %v698 = vadd.f32 %v623, %v697
      %v699 = vpop.f32.mrb[0].mxu0
      %700 = vmatprep.mubr.f32.mxu0 0.0
      %701 = vmatmul.mubr.f32.gmra.mrb[0].mxu0 %v629
      %v702 = vpop.f32.mrb[0].mxu0
      %v703 = vadd.f32 %v623, %v702
      %v704 = vpop.f32.mrb[0].mxu0
      %705 = vdwg.mxu0
      %v706 = vld [vmem:[%s8] sm:$0xff]
      %v707 = vld [vmem:[%s8 + $0x8] sm:$0xff]
      %v708 = vld [vmem:[%s8 + $0x10] sm:$0xff]
      %v709 = vld [vmem:[%s8 + $0x18] sm:$0xff]
      %v710 = vld [vmem:[%s9] sm:$0x1]
      %v712 = vlaneseq
      %v713 = vshrl.u32 %v712, 7
      %v714 = vsub.s32 0, %v713
      %v715 = vrot.slane %v710, %v714
      %v718 = vsel %vm540, %v523, 0
      %v721 = vsel %vm540, %v524, 0
      %723 = vmatprep.subr.mxu0 0.0
      %724 = vmatpush1.msra.mxu0 %v706
      %725 = vmatprep.subr.mxu0 0.0
      %726 = vmatpush1.msra.mxu0 %v707
      %727 = vmatprep.subr.mxu0 0.0
      %728 = vmatpush1.msra.mxu0 %v708
      %729 = vmatprep.subr.mxu0 0.0
      %730 = vmatpush1.msra.mxu0 %v709
      %731 = vmatprep.subr.mxu0 0.0
      %732 = vmatpush1.msra.mxu0 0.0
      %733 = vmatprep.subr.mxu0 0.0
      %734 = vmatpush1.msra.mxu0 0.0
      %735 = vmatprep.subr.mxu0 0.0
      %736 = vmatpush1.msra.mxu0 0.0
      %737 = vmatprep.subr.mxu0 0.0
      %738 = vmatpush1.msra.mxu0 0.0
      %739 = vmatprep.subr.mxu0 0.0
      %740 = vmatpush1.msra.mxu0 0.0
      %741 = vmatprep.subr.mxu0 0.0
      %742 = vmatpush1.msra.mxu0 0.0
      %743 = vmatprep.subr.mxu0 0.0
      %744 = vmatpush1.msra.mxu0 0.0
      %745 = vmatprep.subr.mxu0 0.0
      %746 = vmatpush1.msra.mxu0 0.0
      %747 = vmatprep.subr.mxu0 0.0
      %748 = vmatpush1.msra.mxu0 0.0
      %749 = vmatprep.subr.mxu0 0.0
      %750 = vmatpush1.msra.mxu0 0.0
      %751 = vmatprep.subr.mxu0 0.0
      %752 = vmatpush1.msra.mxu0 0.0
      %753 = vmatprep.subr.mxu0 0.0
      %754 = vmatpush1.msra.mxu0 0.0
      %755 = vmatprep.subr.mxu0 0.0
      %756 = vmatpush1.msra.mxu0 0.0
      %757 = vmatprep.subr.mxu0 0.0
      %758 = vmatpush1.msra.mxu0 0.0
      %759 = vmatprep.subr.mxu0 0.0
      %760 = vmatpush1.msra.mxu0 0.0
      %761 = vmatprep.subr.mxu0 0.0
      %762 = vmatpush1.msra.mxu0 0.0
      %763 = vmatprep.subr.mxu0 0.0
      %764 = vmatpush1.msra.mxu0 0.0
      %765 = vmatprep.subr.mxu0 0.0
      %766 = vmatpush1.msra.mxu0 0.0
      %767 = vmatprep.subr.mxu0 0.0
      %768 = vmatpush1.msra.mxu0 0.0
      %769 = vmatprep.subr.mxu0 0.0
      %770 = vmatpush1.msra.mxu0 0.0
      %771 = vmatprep.subr.mxu0 0.0
      %772 = vmatpush1.msra.mxu0 0.0
      %773 = vmatprep.subr.mxu0 0.0
      %774 = vmatpush1.msra.mxu0 0.0
      %775 = vmatprep.subr.mxu0 0.0
      %776 = vmatpush1.msra.mxu0 0.0
      %777 = vmatprep.subr.mxu0 0.0
      %778 = vmatpush1.msra.mxu0 0.0
      %779 = vmatprep.subr.mxu0 0.0
      %780 = vmatpush1.msra.mxu0 0.0
      %781 = vmatprep.subr.mxu0 0.0
      %782 = vmatpush1.msra.mxu0 0.0
      %783 = vmatprep.subr.mxu0 0.0
      %784 = vmatpush1.msra.mxu0 0.0
      %785 = vmatprep.subr.mxu0 0.0
      %786 = vmatpush1.msra.mxu0 0.0
      %787 = vmatprep.mubr.f32.mxu0 0.0
      %788 = vmatmul.mubr.f32.gmra.mrb[0].mxu0 %v718
      %v789 = vpop.f32.mrb[0].mxu0
      %v790 = vadd.f32 %v715, %v789
      %v791 = vpop.f32.mrb[0].mxu0
      %792 = vmatprep.mubr.f32.mxu0 0.0
      %793 = vmatmul.mubr.f32.gmra.mrb[0].mxu0 %v721
      %v794 = vpop.f32.mrb[0].mxu0
      %v795 = vadd.f32 %v715, %v794
      %v796 = vpop.f32.mrb[0].mxu0
      %797 = vdwg.mxu0
      %vm798 = vcmask 64512
      %v800 = vsel %vm798, %v611, 0
      %v803 = vsel %vm798, %v698, 0
      %v806 = vsel %vm798, %v703, 0
      %808 = vmatprep.subr.mxu0 0.0
      %809 = vmatpush1.xpose.msra.mxu0 %v803
      %810 = vmatprep.subr.mxu0 0.0
      %811 = vmatpush1.xpose.msra.mxu0 %v806
      %812 = vmatprep.subr.mxu0 0.0
      %813 = vmatpush1.xpose.msra.mxu0 0.0
      %814 = vmatprep.subr.mxu0 0.0
      %815 = vmatpush1.xpose.msra.mxu0 0.0
      %816 = vmatprep.subr.mxu0 0.0
      %817 = vmatpush1.xpose.msra.mxu0 0.0
      %818 = vmatprep.subr.mxu0 0.0
      %819 = vmatpush1.xpose.msra.mxu0 0.0
      %820 = vmatprep.subr.mxu0 0.0
      %821 = vmatpush1.xpose.msra.mxu0 0.0
      %822 = vmatprep.subr.mxu0 0.0
      %823 = vmatpush1.xpose.msra.mxu0 0.0
      %824 = vmatprep.subr.mxu0 0.0
      %825 = vmatpush1.xpose.msra.mxu0 0.0
      %826 = vmatprep.subr.mxu0 0.0
      %827 = vmatpush1.xpose.msra.mxu0 0.0
      %828 = vmatprep.subr.mxu0 0.0
      %829 = vmatpush1.xpose.msra.mxu0 0.0
      %830 = vmatprep.subr.mxu0 0.0
      %831 = vmatpush1.xpose.msra.mxu0 0.0
      %832 = vmatprep.subr.mxu0 0.0
      %833 = vmatpush1.xpose.msra.mxu0 0.0
      %834 = vmatprep.subr.mxu0 0.0
      %835 = vmatpush1.xpose.msra.mxu0 0.0
      %836 = vmatprep.subr.mxu0 0.0
      %837 = vmatpush1.xpose.msra.mxu0 0.0
      %838 = vmatprep.subr.mxu0 0.0
      %839 = vmatpush1.xpose.msra.mxu0 0.0
      %840 = vmatprep.subr.mxu0 0.0
      %841 = vmatpush1.xpose.msra.mxu0 0.0
      %842 = vmatprep.subr.mxu0 0.0
      %843 = vmatpush1.xpose.msra.mxu0 0.0
      %844 = vmatprep.subr.mxu0 0.0
      %845 = vmatpush1.xpose.msra.mxu0 0.0
      %846 = vmatprep.subr.mxu0 0.0
      %847 = vmatpush1.xpose.msra.mxu0 0.0
      %848 = vmatprep.subr.mxu0 0.0
      %849 = vmatpush1.xpose.msra.mxu0 0.0
      %850 = vmatprep.subr.mxu0 0.0
      %851 = vmatpush1.xpose.msra.mxu0 0.0
      %852 = vmatprep.subr.mxu0 0.0
      %853 = vmatpush1.xpose.msra.mxu0 0.0
      %854 = vmatprep.subr.mxu0 0.0
      %855 = vmatpush1.xpose.msra.mxu0 0.0
      %856 = vmatprep.subr.mxu0 0.0
      %857 = vmatpush1.xpose.msra.mxu0 0.0
      %858 = vmatprep.subr.mxu0 0.0
      %859 = vmatpush1.xpose.msra.mxu0 0.0
      %860 = vmatprep.subr.mxu0 0.0
      %861 = vmatpush1.xpose.msra.mxu0 0.0
      %862 = vmatprep.subr.mxu0 0.0
      %863 = vmatpush1.xpose.msra.mxu0 0.0
      %864 = vmatprep.subr.mxu0 0.0
      %865 = vmatpush1.xpose.msra.mxu0 0.0
      %866 = vmatprep.subr.mxu0 0.0
      %867 = vmatpush1.xpose.msra.mxu0 0.0
      %868 = vmatprep.subr.mxu0 0.0
      %869 = vmatpush1.xpose.msra.mxu0 0.0
      %870 = vmatprep.subr.mxu0 0.0
      %871 = vmatpush1.xpose.msra.mxu0 0.0
      %872 = vmatprep.mubr.f32.mxu0 0.0
      %873 = vmatmul.mubr.f32.gmra.mrb[0].mxu0 %v800
      %v874 = vpop.f32.mrb[0].mxu0
      %v875 = vadd.f32 0.0, %v874
      %v876 = vpop.f32.mrb[0].mxu0
      %877 = vdwg.mxu0
      %v878 = vmul.f32 %v875, 0.35355338
      %vm879 = vcmask 130048
      %v880 = vsel %vm879, %v878, -inf
      %881 = vmax.xlane.f32.xlu0 %v880
      %v882 = vpop.xlane.xlu0 %881
      %v883 = vsub.f32 %v878, %v882
      %v884 = vmul.f32 %v883, 1.442695
      %v885 = vpow.pop %v884
      %v886 = vsel %vm879, %v885, 0.0
      %887 = vadd.xlane.f32.xlu0 %v886
      %v888 = vpop.xlane.xlu0 %887
      %v889 = vrcp.pop %v888
      %v890 = vmul.f32 %v885, %v889
      %v892 = vsel %vm879, %v890, 0
      %894 = vmatprep.subr.mxu0 0.0
      %895 = vmatpush1.msra.mxu0 %v790
      %896 = vmatprep.subr.mxu0 0.0
      %897 = vmatpush1.msra.mxu0 %v795
      %898 = vmatprep.subr.mxu0 0.0
      %899 = vmatpush1.msra.mxu0 0.0
      %900 = vmatprep.subr.mxu0 0.0
      %901 = vmatpush1.msra.mxu0 0.0
      %902 = vmatprep.subr.mxu0 0.0
      %903 = vmatpush1.msra.mxu0 0.0
      %904 = vmatprep.subr.mxu0 0.0
      %905 = vmatpush1.msra.mxu0 0.0
      %906 = vmatprep.subr.mxu0 0.0
      %907 = vmatpush1.msra.mxu0 0.0
      %908 = vmatprep.subr.mxu0 0.0
      %909 = vmatpush1.msra.mxu0 0.0
      %910 = vmatprep.subr.mxu0 0.0
      %911 = vmatpush1.msra.mxu0 0.0
      %912 = vmatprep.subr.mxu0 0.0
      %913 = vmatpush1.msra.mxu0 0.0
      %914 = vmatprep.subr.mxu0 0.0
      %915 = vmatpush1.msra.mxu0 0.0
      %916 = vmatprep.subr.mxu0 0.0
      %917 = vmatpush1.msra.mxu0 0.0
      %918 = vmatprep.subr.mxu0 0.0
      %919 = vmatpush1.msra.mxu0 0.0
      %920 = vmatprep.subr.mxu0 0.0
      %921 = vmatpush1.msra.mxu0 0.0
      %922 = vmatprep.subr.mxu0 0.0
      %923 = vmatpush1.msra.mxu0 0.0
      %924 = vmatprep.subr.mxu0 0.0
      %925 = vmatpush1.msra.mxu0 0.0
      %926 = vmatprep.subr.mxu0 0.0
      %927 = vmatpush1.msra.mxu0 0.0
      %928 = vmatprep.subr.mxu0 0.0
      %929 = vmatpush1.msra.mxu0 0.0
      %930 = vmatprep.subr.mxu0 0.0
      %931 = vmatpush1.msra.mxu0 0.0
      %932 = vmatprep.subr.mxu0 0.0
      %933 = vmatpush1.msra.mxu0 0.0
      %934 = vmatprep.subr.mxu0 0.0
      %935 = vmatpush1.msra.mxu0 0.0
      %936 = vmatprep.subr.mxu0 0.0
      %937 = vmatpush1.msra.mxu0 0.0
      %938 = vmatprep.subr.mxu0 0.0
      %939 = vmatpush1.msra.mxu0 0.0
      %940 = vmatprep.subr.mxu0 0.0
      %941 = vmatpush1.msra.mxu0 0.0
      %942 = vmatprep.subr.mxu0 0.0
      %943 = vmatpush1.msra.mxu0 0.0
      %944 = vmatprep.subr.mxu0 0.0
      %945 = vmatpush1.msra.mxu0 0.0
      %946 = vmatprep.subr.mxu0 0.0
      %947 = vmatpush1.msra.mxu0 0.0
      %948 = vmatprep.subr.mxu0 0.0
      %949 = vmatpush1.msra.mxu0 0.0
      %950 = vmatprep.subr.mxu0 0.0
      %951 = vmatpush1.msra.mxu0 0.0
      %952 = vmatprep.subr.mxu0 0.0
      %953 = vmatpush1.msra.mxu0 0.0
      %954 = vmatprep.subr.mxu0 0.0
      %955 = vmatpush1.msra.mxu0 0.0
      %956 = vmatprep.subr.mxu0 0.0
      %957 = vmatpush1.msra.mxu0 0.0
      %958 = vmatprep.mubr.f32.mxu0 0.0
      %959 = vmatmul.mubr.f32.gmra.mrb[0].mxu0 %v892
      %v960 = vpop.f32.mrb[0].mxu0
      %v961 = vadd.f32 0.0, %v960
      %v962 = vpop.f32.mrb[0].mxu0
      %963 = vdwg.mxu0
      %v964 = vld [vmem:[%s10] sm:$0xff]
      %s965 = scalar_lea.vmem %s4, 32
      %v966 = vld [vmem:[%s965] sm:$0xff]
      %v967 = vld [vmem:[%s965 + $0x8] sm:$0xff]
      %v968 = vld [vmem:[%s965 + $0x10] sm:$0xff]
      %v969 = vld [vmem:[%s965 + $0x18] sm:$0xff]
      %s970 = scalar_lea.vmem %s5, 1
      %v971 = vld [vmem:[%s970] sm:$0x1]
      %v973 = vlaneseq
      %v974 = vshrl.u32 %v973, 7
      %v975 = vsub.s32 0, %v974
      %v976 = vrot.slane %v971, %v975
      %978 = vmatprep.subr.mxu0 0.0
      %979 = vmatpush1.msra.mxu0 %v966
      %980 = vmatprep.subr.mxu0 0.0
      %981 = vmatpush1.msra.mxu0 %v967
      %982 = vmatprep.subr.mxu0 0.0
      %983 = vmatpush1.msra.mxu0 %v968
      %984 = vmatprep.subr.mxu0 0.0
      %985 = vmatpush1.msra.mxu0 %v969
      %986 = vmatprep.subr.mxu0 0.0
      %987 = vmatpush1.msra.mxu0 0.0
      %988 = vmatprep.subr.mxu0 0.0
      %989 = vmatpush1.msra.mxu0 0.0
      %990 = vmatprep.subr.mxu0 0.0
      %991 = vmatpush1.msra.mxu0 0.0
      %992 = vmatprep.subr.mxu0 0.0
      %993 = vmatpush1.msra.mxu0 0.0
      %994 = vmatprep.subr.mxu0 0.0
      %995 = vmatpush1.msra.mxu0 0.0
      %996 = vmatprep.subr.mxu0 0.0
      %997 = vmatpush1.msra.mxu0 0.0
      %998 = vmatprep.subr.mxu0 0.0
      %999 = vmatpush1.msra.mxu0 0.0
      %1000 = vmatprep.subr.mxu0 0.0
      %1001 = vmatpush1.msra.mxu0 0.0
      %1002 = vmatprep.subr.mxu0 0.0
      %1003 = vmatpush1.msra.mxu0 0.0
      %1004 = vmatprep.subr.mxu0 0.0
      %1005 = vmatpush1.msra.mxu0 0.0
      %1006 = vmatprep.subr.mxu0 0.0
      %1007 = vmatpush1.msra.mxu0 0.0
      %1008 = vmatprep.subr.mxu0 0.0
      %1009 = vmatpush1.msra.mxu0 0.0
      %1010 = vmatprep.subr.mxu0 0.0
      %1011 = vmatpush1.msra.mxu0 0.0
      %1012 = vmatprep.subr.mxu0 0.0
      %1013 = vmatpush1.msra.mxu0 0.0
      %1014 = vmatprep.subr.mxu0 0.0
      %1015 = vmatpush1.msra.mxu0 0.0
      %1016 = vmatprep.subr.mxu0 0.0
      %1017 = vmatpush1.msra.mxu0 0.0
      %1018 = vmatprep.subr.mxu0 0.0
      %1019 = vmatpush1.msra.mxu0 0.0
      %1020 = vmatprep.subr.mxu0 0.0
      %1021 = vmatpush1.msra.mxu0 0.0
      %1022 = vmatprep.subr.mxu0 0.0
      %1023 = vmatpush1.msra.mxu0 0.0
      %1024 = vmatprep.subr.mxu0 0.0
      %1025 = vmatpush1.msra.mxu0 0.0
      %1026 = vmatprep.subr.mxu0 0.0
      %1027 = vmatpush1.msra.mxu0 0.0
      %1028 = vmatprep.subr.mxu0 0.0
      %1029 = vmatpush1.msra.mxu0 0.0
      %1030 = vmatprep.subr.mxu0 0.0
      %1031 = vmatpush1.msra.mxu0 0.0
      %1032 = vmatprep.subr.mxu0 0.0
      %1033 = vmatpush1.msra.mxu0 0.0
      %1034 = vmatprep.subr.mxu0 0.0
      %1035 = vmatpush1.msra.mxu0 0.0
      %1036 = vmatprep.subr.mxu0 0.0
      %1037 = vmatpush1.msra.mxu0 0.0
      %1038 = vmatprep.subr.mxu0 0.0
      %1039 = vmatpush1.msra.mxu0 0.0
      %1040 = vmatprep.subr.mxu0 0.0
      %1041 = vmatpush1.msra.mxu0 0.0
      %1042 = vmatprep.mubr.f32.mxu0 0.0
      %1043 = vmatmul.mubr.f32.gmra.mrb[0].mxu0 %v542
      %v1044 = vpop.f32.mrb[0].mxu0
      %v1045 = vadd.f32 %v976, %v1044
      %v1046 = vpop.f32.mrb[0].mxu0
      %1047 = vdwg.mxu0
      %s1048 = scalar_lea.vmem %s6, 32
      %v1049 = vld [vmem:[%s1048] sm:$0xff]
      %v1050 = vld [vmem:[%s1048 + $0x8] sm:$0xff]
      %v1051 = vld [vmem:[%s1048 + $0x10] sm:$0xff]
      %v1052 = vld [vmem:[%s1048 + $0x18] sm:$0xff]
      %s1053 = scalar_lea.vmem %s7, 1
      %v1054 = vld [vmem:[%s1053] sm:$0x1]
      %v1056 = vlaneseq
      %v1057 = vshrl.u32 %v1056, 7
      %v1058 = vsub.s32 0, %v1057
      %v1059 = vrot.slane %v1054, %v1058
      %1061 = vmatprep.subr.mxu0 0.0
      %1062 = vmatpush1.msra.mxu0 %v1049
      %1063 = vmatprep.subr.mxu0 0.0
      %1064 = vmatpush1.msra.mxu0 %v1050
      %1065 = vmatprep.subr.mxu0 0.0
      %1066 = vmatpush1.msra.mxu0 %v1051
      %1067 = vmatprep.subr.mxu0 0.0
      %1068 = vmatpush1.msra.mxu0 %v1052
      %1069 = vmatprep.subr.mxu0 0.0
      %1070 = vmatpush1.msra.mxu0 0.0
      %1071 = vmatprep.subr.mxu0 0.0
      %1072 = vmatpush1.msra.mxu0 0.0
      %1073 = vmatprep.subr.mxu0 0.0
      %1074 = vmatpush1.msra.mxu0 0.0
      %1075 = vmatprep.subr.mxu0 0.0
      %1076 = vmatpush1.msra.mxu0 0.0
      %1077 = vmatprep.subr.mxu0 0.0
      %1078 = vmatpush1.msra.mxu0 0.0
      %1079 = vmatprep.subr.mxu0 0.0
      %1080 = vmatpush1.msra.mxu0 0.0
      %1081 = vmatprep.subr.mxu0 0.0
      %1082 = vmatpush1.msra.mxu0 0.0
      %1083 = vmatprep.subr.mxu0 0.0
      %1084 = vmatpush1.msra.mxu0 0.0
      %1085 = vmatprep.subr.mxu0 0.0
      %1086 = vmatpush1.msra.mxu0 0.0
      %1087 = vmatprep.subr.mxu0 0.0
      %1088 = vmatpush1.msra.mxu0 0.0
      %1089 = vmatprep.subr.mxu0 0.0
      %1090 = vmatpush1.msra.mxu0 0.0
      %1091 = vmatprep.subr.mxu0 0.0
      %1092 = vmatpush1.msra.mxu0 0.0
      %1093 = vmatprep.subr.mxu0 0.0
      %1094 = vmatpush1.msra.mxu0 0.0
      %1095 = vmatprep.subr.mxu0 0.0
      %1096 = vmatpush1.msra.mxu0 0.0
      %1097 = vmatprep.subr.mxu0 0.0
      %1098 = vmatpush1.msra.mxu0 0.0
      %1099 = vmatprep.subr.mxu0 0.0
      %1100 = vmatpush1.msra.mxu0 0.0
      %1101 = vmatprep.subr.mxu0 0.0
      %1102 = vmatpush1.msra.mxu0 0.0
      %1103 = vmatprep.subr.mxu0 0.0
      %1104 = vmatpush1.msra.mxu0 0.0
      %1105 = vmatprep.subr.mxu0 0.0
      %1106 = vmatpush1.msra.mxu0 0.0
      %1107 = vmatprep.subr.mxu0 0.0
      %1108 = vmatpush1.msra.mxu0 0.0
      %1109 = vmatprep.subr.mxu0 0.0
      %1110 = vmatpush1.msra.mxu0 0.0
      %1111 = vmatprep.subr.mxu0 0.0
      %1112 = vmatpush1.msra.mxu0 0.0
      %1113 = vmatprep.subr.mxu0 0.0
      %1114 = vmatpush1.msra.mxu0 0.0
      %1115 = vmatprep.subr.mxu0 0.0
      %1116 = vmatpush1.msra.mxu0 0.0
      %1117 = vmatprep.subr.mxu0 0.0
      %1118 = vmatpush1.msra.mxu0 0.0
      %1119 = vmatprep.subr.mxu0 0.0
      %1120 = vmatpush1.msra.mxu0 0.0
      %1121 = vmatprep.subr.mxu0 0.0
      %1122 = vmatpush1.msra.mxu0 0.0
      %1123 = vmatprep.subr.mxu0 0.0
      %1124 = vmatpush1.msra.mxu0 0.0
      %1125 = vmatprep.mubr.f32.mxu0 0.0
      %1126 = vmatmul.mubr.f32.gmra.mrb[0].mxu0 %v626
      %v1127 = vpop.f32.mrb[0].mxu0
      %v1128 = vadd.f32 %v1059, %v1127
      %v1129 = vpop.f32.mrb[0].mxu0
      %1130 = vmatprep.mubr.f32.mxu0 0.0
      %1131 = vmatmul.mubr.f32.gmra.mrb[0].mxu0 %v629
      %v1132 = vpop.f32.mrb[0].mxu0
      %v1133 = vadd.f32 %v1059, %v1132
      %v1134 = vpop.f32.mrb[0].mxu0
      %1135 = vdwg.mxu0
      %s1136 = scalar_lea.vmem %s8, 32
      %v1137 = vld [vmem:[%s1136] sm:$0xff]
      %v1138 = vld [vmem:[%s1136 + $0x8] sm:$0xff]
      %v1139 = vld [vmem:[%s1136 + $0x10] sm:$0xff]
      %v1140 = vld [vmem:[%s1136 + $0x18] sm:$0xff]
      %s1141 = scalar_lea.vmem %s9, 1
      %v1142 = vld [vmem:[%s1141] sm:$0x1]
      %v1144 = vlaneseq
      %v1145 = vshrl.u32 %v1144, 7
      %v1146 = vsub.s32 0, %v1145
      %v1147 = vrot.slane %v1142, %v1146
      %1149 = vmatprep.subr.mxu0 0.0
      %1150 = vmatpush1.msra.mxu0 %v1137
      %1151 = vmatprep.subr.mxu0 0.0
      %1152 = vmatpush1.msra.mxu0 %v1138
      %1153 = vmatprep.subr.mxu0 0.0
      %1154 = vmatpush1.msra.mxu0 %v1139
      %1155 = vmatprep.subr.mxu0 0.0
      %1156 = vmatpush1.msra.mxu0 %v1140
      %1157 = vmatprep.subr.mxu0 0.0
      %1158 = vmatpush1.msra.mxu0 0.0
      %1159 = vmatprep.subr.mxu0 0.0
      %1160 = vmatpush1.msra.mxu0 0.0
      %1161 = vmatprep.subr.mxu0 0.0
      %1162 = vmatpush1.msra.mxu0 0.0
      %1163 = vmatprep.subr.mxu0 0.0
      %1164 = vmatpush1.msra.mxu0 0.0
      %1165 = vmatprep.subr.mxu0 0.0
      %1166 = vmatpush1.msra.mxu0 0.0
      %1167 = vmatprep.subr.mxu0 0.0
      %1168 = vmatpush1.msra.mxu0 0.0
      %1169 = vmatprep.subr.mxu0 0.0
      %1170 = vmatpush1.msra.mxu0 0.0
      %1171 = vmatprep.subr.mxu0 0.0
      %1172 = vmatpush1.msra.mxu0 0.0
      %1173 = vmatprep.subr.mxu0 0.0
      %1174 = vmatpush1.msra.mxu0 0.0
      %1175 = vmatprep.subr.mxu0 0.0
      %1176 = vmatpush1.msra.mxu0 0.0
      %1177 = vmatprep.subr.mxu0 0.0
      %1178 = vmatpush1.msra.mxu0 0.0
      %1179 = vmatprep.subr.mxu0 0.0
      %1180 = vmatpush1.msra.mxu0 0.0
      %1181 = vmatprep.subr.mxu0 0.0
      %1182 = vmatpush1.msra.mxu0 0.0
      %1183 = vmatprep.subr.mxu0 0.0
      %1184 = vmatpush1.msra.mxu0 0.0
      %1185 = vmatprep.subr.mxu0 0.0
      %1186 = vmatpush1.msra.mxu0 0.0
      %1187 = vmatprep.subr.mxu0 0.0
      %1188 = vmatpush1.msra.mxu0 0.0
      %1189 = vmatprep.subr.mxu0 0.0
      %1190 = vmatpush1.msra.mxu0 0.0
      %1191 = vmatprep.subr.mxu0 0.0
      %1192 = vmatpush1.msra.mxu0 0.0
      %1193 = vmatprep.subr.mxu0 0.0
      %1194 = vmatpush1.msra.mxu0 0.0
      %1195 = vmatprep.subr.mxu0 0.0
      %1196 = vmatpush1.msra.mxu0 0.0
      %1197 = vmatprep.subr.mxu0 0.0
      %1198 = vmatpush1.msra.mxu0 0.0
      %1199 = vmatprep.subr.mxu0 0.0
      %1200 = vmatpush1.msra.mxu0 0.0
      %1201 = vmatprep.subr.mxu0 0.0
      %1202 = vmatpush1.msra.mxu0 0.0
      %1203 = vmatprep.subr.mxu0 0.0
      %1204 = vmatpush1.msra.mxu0 0.0
      %1205 = vmatprep.subr.mxu0 0.0
      %1206 = vmatpush1.msra.mxu0 0.0
      %1207 = vmatprep.subr.mxu0 0.0
      %1208 = vmatpush1.msra.mxu0 0.0
      %1209 = vmatprep.subr.mxu0 0.0
      %1210 = vmatpush1.msra.mxu0 0.0
      %1211 = vmatprep.subr.mxu0 0.0
      %1212 = vmatpush1.msra.mxu0 0.0
      %1213 = vmatprep.mubr.f32.mxu0 0.0
      %1214 = vmatmul.mubr.f32.gmra.mrb[0].mxu0 %v718
      %v1215 = vpop.f32.mrb[0].mxu0
      %v1216 = vadd.f32 %v1147, %v1215
      %v1217 = vpop.f32.mrb[0].mxu0
      %1218 = vmatprep.mubr.f32.mxu0 0.0
      %1219 = vmatmul.mubr.f32.gmra.mrb[0].mxu0 %v721
      %v1220 = vpop.f32.mrb[0].mxu0
      %v1221 = vadd.f32 %v1147, %v1220
      %v1222 = vpop.f32.mrb[0].mxu0
      %1223 = vdwg.mxu0
      %v1225 = vsel %vm798, %v1045, 0
      %v1228 = vsel %vm798, %v1128, 0
      %v1231 = vsel %vm798, %v1133, 0
      %1233 = vmatprep.subr.mxu0 0.0
      %1234 = vmatpush1.xpose.msra.mxu0 %v1228
      %1235 = vmatprep.subr.mxu0 0.0
      %1236 = vmatpush1.xpose.msra.mxu0 %v1231
      %1237 = vmatprep.subr.mxu0 0.0
      %1238 = vmatpush1.xpose.msra.mxu0 0.0
      %1239 = vmatprep.subr.mxu0 0.0
      %1240 = vmatpush1.xpose.msra.mxu0 0.0
      %1241 = vmatprep.subr.mxu0 0.0
      %1242 = vmatpush1.xpose.msra.mxu0 0.0
      %1243 = vmatprep.subr.mxu0 0.0
      %1244 = vmatpush1.xpose.msra.mxu0 0.0
      %1245 = vmatprep.subr.mxu0 0.0
      %1246 = vmatpush1.xpose.msra.mxu0 0.0
      %1247 = vmatprep.subr.mxu0 0.0
      %1248 = vmatpush1.xpose.msra.mxu0 0.0
      %1249 = vmatprep.subr.mxu0 0.0
      %1250 = vmatpush1.xpose.msra.mxu0 0.0
      %1251 = vmatprep.subr.mxu0 0.0
      %1252 = vmatpush1.xpose.msra.mxu0 0.0
      %1253 = vmatprep.subr.mxu0 0.0
      %1254 = vmatpush1.xpose.msra.mxu0 0.0
      %1255 = vmatprep.subr.mxu0 0.0
      %1256 = vmatpush1.xpose.msra.mxu0 0.0
      %1257 = vmatprep.subr.mxu0 0.0
      %1258 = vmatpush1.xpose.msra.mxu0 0.0
      %1259 = vmatprep.subr.mxu0 0.0
      %1260 = vmatpush1.xpose.msra.mxu0 0.0
      %1261 = vmatprep.subr.mxu0 0.0
      %1262 = vmatpush1.xpose.msra.mxu0 0.0
      %1263 = vmatprep.subr.mxu0 0.0
      %1264 = vmatpush1.xpose.msra.mxu0 0.0
      %1265 = vmatprep.subr.mxu0 0.0
      %1266 = vmatpush1.xpose.msra.mxu0 0.0
      %1267 = vmatprep.subr.mxu0 0.0
      %1268 = vmatpush1.xpose.msra.mxu0 0.0
      %1269 = vmatprep.subr.mxu0 0.0
      %1270 = vmatpush1.xpose.msra.mxu0 0.0
      %1271 = vmatprep.subr.mxu0 0.0
      %1272 = vmatpush1.xpose.msra.mxu0 0.0
      %1273 = vmatprep.subr.mxu0 0.0
      %1274 = vmatpush1.xpose.msra.mxu0 0.0
      %1275 = vmatprep.subr.mxu0 0.0
      %1276 = vmatpush1.xpose.msra.mxu0 0.0
      %1277 = vmatprep.subr.mxu0 0.0
      %1278 = vmatpush1.xpose.msra.mxu0 0.0
      %1279 = vmatprep.subr.mxu0 0.0
      %1280 = vmatpush1.xpose.msra.mxu0 0.0
      %1281 = vmatprep.subr.mxu0 0.0
      %1282 = vmatpush1.xpose.msra.mxu0 0.0
      %1283 = vmatprep.subr.mxu0 0.0
      %1284 = vmatpush1.xpose.msra.mxu0 0.0
      %1285 = vmatprep.subr.mxu0 0.0
      %1286 = vmatpush1.xpose.msra.mxu0 0.0
      %1287 = vmatprep.subr.mxu0 0.0
      %1288 = vmatpush1.xpose.msra.mxu0 0.0
      %1289 = vmatprep.subr.mxu0 0.0
      %1290 = vmatpush1.xpose.msra.mxu0 0.0
      %1291 = vmatprep.subr.mxu0 0.0
      %1292 = vmatpush1.xpose.msra.mxu0 0.0
      %1293 = vmatprep.subr.mxu0 0.0
      %1294 = vmatpush1.xpose.msra.mxu0 0.0
      %1295 = vmatprep.subr.mxu0 0.0
      %1296 = vmatpush1.xpose.msra.mxu0 0.0
      %1297 = vmatprep.mubr.f32.mxu0 0.0
      %1298 = vmatmul.mubr.f32.gmra.mrb[0].mxu0 %v1225
      %v1299 = vpop.f32.mrb[0].mxu0
      %v1300 = vadd.f32 0.0, %v1299
      %v1301 = vpop.f32.mrb[0].mxu0
      %1302 = vdwg.mxu0
      %v1303 = vmul.f32 %v1300, 0.35355338
      %v1304 = vsel %vm879, %v1303, -inf
      %1305 = vmax.xlane.f32.xlu0 %v1304
      %v1306 = vpop.xlane.xlu0 %1305
      %v1307 = vsub.f32 %v1303, %v1306
      %v1308 = vmul.f32 %v1307, 1.442695
      %v1309 = vpow.pop %v1308
      %v1310 = vsel %vm879, %v1309, 0.0
      %1311 = vadd.xlane.f32.xlu0 %v1310
      %v1312 = vpop.xlane.xlu0 %1311
      %v1313 = vrcp.pop %v1312
      %v1314 = vmul.f32 %v1309, %v1313
      %v1316 = vsel %vm879, %v1314, 0
      %1318 = vmatprep.subr.mxu0 0.0
      %1319 = vmatpush1.msra.mxu0 %v1216
      %1320 = vmatprep.subr.mxu0 0.0
      %1321 = vmatpush1.msra.mxu0 %v1221
      %1322 = vmatprep.subr.mxu0 0.0
      %1323 = vmatpush1.msra.mxu0 0.0
      %1324 = vmatprep.subr.mxu0 0.0
      %1325 = vmatpush1.msra.mxu0 0.0
      %1326 = vmatprep.subr.mxu0 0.0
      %1327 = vmatpush1.msra.mxu0 0.0
      %1328 = vmatprep.subr.mxu0 0.0
      %1329 = vmatpush1.msra.mxu0 0.0
      %1330 = vmatprep.subr.mxu0 0.0
      %1331 = vmatpush1.msra.mxu0 0.0
      %1332 = vmatprep.subr.mxu0 0.0
      %1333 = vmatpush1.msra.mxu0 0.0
      %1334 = vmatprep.subr.mxu0 0.0
      %1335 = vmatpush1.msra.mxu0 0.0
      %1336 = vmatprep.subr.mxu0 0.0
      %1337 = vmatpush1.msra.mxu0 0.0
      %1338 = vmatprep.subr.mxu0 0.0
      %1339 = vmatpush1.msra.mxu0 0.0
      %1340 = vmatprep.subr.mxu0 0.0
      %1341 = vmatpush1.msra.mxu0 0.0
      %1342 = vmatprep.subr.mxu0 0.0
      %1343 = vmatpush1.msra.mxu0 0.0
      %1344 = vmatprep.subr.mxu0 0.0
      %1345 = vmatpush1.msra.mxu0 0.0
      %1346 = vmatprep.subr.mxu0 0.0
      %1347 = vmatpush1.msra.mxu0 0.0
      %1348 = vmatprep.subr.mxu0 0.0
      %1349 = vmatpush1.msra.mxu0 0.0
      %1350 = vmatprep.subr.mxu0 0.0
      %1351 = vmatpush1.msra.mxu0 0.0
      %1352 = vmatprep.subr.mxu0 0.0
      %1353 = vmatpush1.msra.mxu0 0.0
      %1354 = vmatprep.subr.mxu0 0.0
      %1355 = vmatpush1.msra.mxu0 0.0
      %1356 = vmatprep.subr.mxu0 0.0
      %1357 = vmatpush1.msra.mxu0 0.0
      %1358 = vmatprep.subr.mxu0 0.0
      %1359 = vmatpush1.msra.mxu0 0.0
      %1360 = vmatprep.subr.mxu0 0.0
      %1361 = vmatpush1.msra.mxu0 0.0
      %1362 = vmatprep.subr.mxu0 0.0
      %1363 = vmatpush1.msra.mxu0 0.0
      %1364 = vmatprep.subr.mxu0 0.0
      %1365 = vmatpush1.msra.mxu0 0.0
      %1366 = vmatprep.subr.mxu0 0.0
      %1367 = vmatpush1.msra.mxu0 0.0
      %1368 = vmatprep.subr.mxu0 0.0
      %1369 = vmatpush1.msra.mxu0 0.0
      %1370 = vmatprep.subr.mxu0 0.0
      %1371 = vmatpush1.msra.mxu0 0.0
      %1372 = vmatprep.subr.mxu0 0.0
      %1373 = vmatpush1.msra.mxu0 0.0
      %1374 = vmatprep.subr.mxu0 0.0
      %1375 = vmatpush1.msra.mxu0 0.0
      %1376 = vmatprep.subr.mxu0 0.0
      %1377 = vmatpush1.msra.mxu0 0.0
      %1378 = vmatprep.subr.mxu0 0.0
      %1379 = vmatpush1.msra.mxu0 0.0
      %1380 = vmatprep.subr.mxu0 0.0
      %1381 = vmatpush1.msra.mxu0 0.0
      %1382 = vmatprep.mubr.f32.mxu0 0.0
      %1383 = vmatmul.mubr.f32.gmra.mrb[0].mxu0 %v1316
      %v1384 = vpop.f32.mrb[0].mxu0
      %v1385 = vadd.f32 0.0, %v1384
      %v1386 = vpop.f32.mrb[0].mxu0
      %1387 = vdwg.mxu0
      %s1388 = scalar_lea.vmem %s10, 8
      %v1389 = vld [vmem:[%s1388] sm:$0xff]
      %v1391 = vsel %vm798, %v1385, 0
      %1393 = vmatprep.subr.mxu0 0.0
      %1394 = vmatpush1.msra.mxu0 %v1389
      %1395 = vmatprep.subr.mxu0 0.0
      %1396 = vmatpush1.msra.mxu0 0.0
      %1397 = vmatprep.subr.mxu0 0.0
      %1398 = vmatpush1.msra.mxu0 0.0
      %1399 = vmatprep.subr.mxu0 0.0
      %1400 = vmatpush1.msra.mxu0 0.0
      %1401 = vmatprep.subr.mxu0 0.0
      %1402 = vmatpush1.msra.mxu0 0.0
      %1403 = vmatprep.subr.mxu0 0.0
      %1404 = vmatpush1.msra.mxu0 0.0
      %1405 = vmatprep.subr.mxu0 0.0
      %1406 = vmatpush1.msra.mxu0 0.0
      %1407 = vmatprep.subr.mxu0 0.0
      %1408 = vmatpush1.msra.mxu0 0.0
      %1409 = vmatprep.subr.mxu0 0.0
      %1410 = vmatpush1.msra.mxu0 0.0
      %1411 = vmatprep.subr.mxu0 0.0
      %1412 = vmatpush1.msra.mxu0 0.0
      %1413 = vmatprep.subr.mxu0 0.0
      %1414 = vmatpush1.msra.mxu0 0.0
      %1415 = vmatprep.subr.mxu0 0.0
      %1416 = vmatpush1.msra.mxu0 0.0
      %1417 = vmatprep.subr.mxu0 0.0
      %1418 = vmatpush1.msra.mxu0 0.0
      %1419 = vmatprep.subr.mxu0 0.0
      %1420 = vmatpush1.msra.mxu0 0.0
      %1421 = vmatprep.subr.mxu0 0.0
      %1422 = vmatpush1.msra.mxu0 0.0
      %1423 = vmatprep.subr.mxu0 0.0
      %1424 = vmatpush1.msra.mxu0 0.0
      %1425 = vmatprep.subr.mxu0 0.0
      %1426 = vmatpush1.msra.mxu0 0.0
      %1427 = vmatprep.subr.mxu0 0.0
      %1428 = vmatpush1.msra.mxu0 0.0
      %1429 = vmatprep.subr.mxu0 0.0
      %1430 = vmatpush1.msra.mxu0 0.0
      %1431 = vmatprep.subr.mxu0 0.0
      %1432 = vmatpush1.msra.mxu0 0.0
      %1433 = vmatprep.subr.mxu0 0.0
      %1434 = vmatpush1.msra.mxu0 0.0
      %1435 = vmatprep.subr.mxu0 0.0
      %1436 = vmatpush1.msra.mxu0 0.0
      %1437 = vmatprep.subr.mxu0 0.0
      %1438 = vmatpush1.msra.mxu0 0.0
      %1439 = vmatprep.subr.mxu0 0.0
      %1440 = vmatpush1.msra.mxu0 0.0
      %1441 = vmatprep.subr.mxu0 0.0
      %1442 = vmatpush1.msra.mxu0 0.0
      %1443 = vmatprep.subr.mxu0 0.0
      %1444 = vmatpush1.msra.mxu0 0.0
      %1445 = vmatprep.subr.mxu0 0.0
      %1446 = vmatpush1.msra.mxu0 0.0
      %1447 = vmatprep.subr.mxu0 0.0
      %1448 = vmatpush1.msra.mxu0 0.0
      %1449 = vmatprep.subr.mxu0 0.0
      %1450 = vmatpush1.msra.mxu0 0.0
      %1451 = vmatprep.subr.mxu0 0.0
      %1452 = vmatpush1.msra.mxu0 0.0
      %1453 = vmatprep.subr.mxu0 0.0
      %1454 = vmatpush1.msra.mxu0 0.0
      %1455 = vmatprep.subr.mxu0 0.0
      %1456 = vmatpush1.msra.mxu0 0.0
      %1457 = vmatprep.mubr.f32.mxu0 0.0
      %1458 = vmatmul.mubr.f32.gmra.mrb[0].mxu0 %v1391
      %v1459 = vpop.f32.mrb[0].mxu0
      %v1460 = vadd.f32 0.0, %v1459
      %v1461 = vpop.f32.mrb[0].mxu0
      %1462 = vdwg.mxu0
      %v1464 = vsel %vm798, %v961, 0
      %1466 = vmatprep.subr.mxu0 0.0
      %1467 = vmatpush1.msra.mxu0 %v964
      %1468 = vmatprep.subr.mxu0 0.0
      %1469 = vmatpush1.msra.mxu0 0.0
      %1470 = vmatprep.subr.mxu0 0.0
      %1471 = vmatpush1.msra.mxu0 0.0
      %1472 = vmatprep.subr.mxu0 0.0
      %1473 = vmatpush1.msra.mxu0 0.0
      %1474 = vmatprep.subr.mxu0 0.0
      %1475 = vmatpush1.msra.mxu0 0.0
      %1476 = vmatprep.subr.mxu0 0.0
      %1477 = vmatpush1.msra.mxu0 0.0
      %1478 = vmatprep.subr.mxu0 0.0
      %1479 = vmatpush1.msra.mxu0 0.0
      %1480 = vmatprep.subr.mxu0 0.0
      %1481 = vmatpush1.msra.mxu0 0.0
      %1482 = vmatprep.subr.mxu0 0.0
      %1483 = vmatpush1.msra.mxu0 0.0
      %1484 = vmatprep.subr.mxu0 0.0
      %1485 = vmatpush1.msra.mxu0 0.0
      %1486 = vmatprep.subr.mxu0 0.0
      %1487 = vmatpush1.msra.mxu0 0.0
      %1488 = vmatprep.subr.mxu0 0.0
      %1489 = vmatpush1.msra.mxu0 0.0
      %1490 = vmatprep.subr.mxu0 0.0
      %1491 = vmatpush1.msra.mxu0 0.0
      %1492 = vmatprep.subr.mxu0 0.0
      %1493 = vmatpush1.msra.mxu0 0.0
      %1494 = vmatprep.subr.mxu0 0.0
      %1495 = vmatpush1.msra.mxu0 0.0
      %1496 = vmatprep.subr.mxu0 0.0
      %1497 = vmatpush1.msra.mxu0 0.0
      %1498 = vmatprep.subr.mxu0 0.0
      %1499 = vmatpush1.msra.mxu0 0.0
      %1500 = vmatprep.subr.mxu0 0.0
      %1501 = vmatpush1.msra.mxu0 0.0
      %1502 = vmatprep.subr.mxu0 0.0
      %1503 = vmatpush1.msra.mxu0 0.0
      %1504 = vmatprep.subr.mxu0 0.0
      %1505 = vmatpush1.msra.mxu0 0.0
      %1506 = vmatprep.subr.mxu0 0.0
      %1507 = vmatpush1.msra.mxu0 0.0
      %1508 = vmatprep.subr.mxu0 0.0
      %1509 = vmatpush1.msra.mxu0 0.0
      %1510 = vmatprep.subr.mxu0 0.0
      %1511 = vmatpush1.msra.mxu0 0.0
      %1512 = vmatprep.subr.mxu0 0.0
      %1513 = vmatpush1.msra.mxu0 0.0
      %1514 = vmatprep.subr.mxu0 0.0
      %1515 = vmatpush1.msra.mxu0 0.0
      %1516 = vmatprep.subr.mxu0 0.0
      %1517 = vmatpush1.msra.mxu0 0.0
      %1518 = vmatprep.subr.mxu0 0.0
      %1519 = vmatpush1.msra.mxu0 0.0
      %1520 = vmatprep.subr.mxu0 0.0
      %1521 = vmatpush1.msra.mxu0 0.0
      %1522 = vmatprep.subr.mxu0 0.0
      %1523 = vmatpush1.msra.mxu0 0.0
      %1524 = vmatprep.subr.mxu0 0.0
      %1525 = vmatpush1.msra.mxu0 0.0
      %1526 = vmatprep.subr.mxu0 0.0
      %1527 = vmatpush1.msra.mxu0 0.0
      %1528 = vmatprep.subr.mxu0 0.0
      %1529 = vmatpush1.msra.mxu0 0.0
      %1530 = vmatprep.mubr.f32.mxu0 0.0
      %1531 = vmatmul.mubr.f32.gmra.mrb[0].mxu0 %v1464
      %v1532 = vpop.f32.mrb[0].mxu0
      %v1533 = vadd.f32 %v1460, %v1532
      %v1534 = vpop.f32.mrb[0].mxu0
      %1535 = vdwg.mxu0
      %s1536 = scalar_lea.vmem %s4, 64
      %v1537 = vld [vmem:[%s1536] sm:$0xff]
      %v1538 = vld [vmem:[%s1536 + $0x8] sm:$0xff]
      %v1539 = vld [vmem:[%s1536 + $0x10] sm:$0xff]
      %v1540 = vld [vmem:[%s1536 + $0x18] sm:$0xff]
      %s1541 = scalar_lea.vmem %s5, 2
      %v1542 = vld [vmem:[%s1541] sm:$0x1]
      %v1544 = vlaneseq
      %v1545 = vshrl.u32 %v1544, 7
      %v1546 = vsub.s32 0, %v1545
      %v1547 = vrot.slane %v1542, %v1546
      %1549 = vmatprep.subr.mxu0 0.0
      %1550 = vmatpush1.msra.mxu0 %v1537
      %1551 = vmatprep.subr.mxu0 0.0
      %1552 = vmatpush1.msra.mxu0 %v1538
      %1553 = vmatprep.subr.mxu0 0.0
      %1554 = vmatpush1.msra.mxu0 %v1539
      %1555 = vmatprep.subr.mxu0 0.0
      %1556 = vmatpush1.msra.mxu0 %v1540
      %1557 = vmatprep.subr.mxu0 0.0
      %1558 = vmatpush1.msra.mxu0 0.0
      %1559 = vmatprep.subr.mxu0 0.0
      %1560 = vmatpush1.msra.mxu0 0.0
      %1561 = vmatprep.subr.mxu0 0.0
      %1562 = vmatpush1.msra.mxu0 0.0
      %1563 = vmatprep.subr.mxu0 0.0
      %1564 = vmatpush1.msra.mxu0 0.0
      %1565 = vmatprep.subr.mxu0 0.0
      %1566 = vmatpush1.msra.mxu0 0.0
      %1567 = vmatprep.subr.mxu0 0.0
      %1568 = vmatpush1.msra.mxu0 0.0
      %1569 = vmatprep.subr.mxu0 0.0
      %1570 = vmatpush1.msra.mxu0 0.0
      %1571 = vmatprep.subr.mxu0 0.0
      %1572 = vmatpush1.msra.mxu0 0.0
      %1573 = vmatprep.subr.mxu0 0.0
      %1574 = vmatpush1.msra.mxu0 0.0
      %1575 = vmatprep.subr.mxu0 0.0
      %1576 = vmatpush1.msra.mxu0 0.0
      %1577 = vmatprep.subr.mxu0 0.0
      %1578 = vmatpush1.msra.mxu0 0.0
      %1579 = vmatprep.subr.mxu0 0.0
      %1580 = vmatpush1.msra.mxu0 0.0
      %1581 = vmatprep.subr.mxu0 0.0
      %1582 = vmatpush1.msra.mxu0 0.0
      %1583 = vmatprep.subr.mxu0 0.0
      %1584 = vmatpush1.msra.mxu0 0.0
      %1585 = vmatprep.subr.mxu0 0.0
      %1586 = vmatpush1.msra.mxu0 0.0
      %1587 = vmatprep.subr.mxu0 0.0
      %1588 = vmatpush1.msra.mxu0 0.0
      %1589 = vmatprep.subr.mxu0 0.0
      %1590 = vmatpush1.msra.mxu0 0.0
      %1591 = vmatprep.subr.mxu0 0.0
      %1592 = vmatpush1.msra.mxu0 0.0
      %1593 = vmatprep.subr.mxu0 0.0
      %1594 = vmatpush1.msra.mxu0 0.0
      %1595 = vmatprep.subr.mxu0 0.0
      %1596 = vmatpush1.msra.mxu0 0.0
      %1597 = vmatprep.subr.mxu0 0.0
      %1598 = vmatpush1.msra.mxu0 0.0
      %1599 = vmatprep.subr.mxu0 0.0
      %1600 = vmatpush1.msra.mxu0 0.0
      %1601 = vmatprep.subr.mxu0 0.0
      %1602 = vmatpush1.msra.mxu0 0.0
      %1603 = vmatprep.subr.mxu0 0.0
      %1604 = vmatpush1.msra.mxu0 0.0
      %1605 = vmatprep.subr.mxu0 0.0
      %1606 = vmatpush1.msra.mxu0 0.0
      %1607 = vmatprep.subr.mxu0 0.0
      %1608 = vmatpush1.msra.mxu0 0.0
      %1609 = vmatprep.subr.mxu0 0.0
      %1610 = vmatpush1.msra.mxu0 0.0
      %1611 = vmatprep.subr.mxu0 0.0
      %1612 = vmatpush1.msra.mxu0 0.0
      %1613 = vmatprep.mubr.f32.mxu0 0.0
      %1614 = vmatmul.mubr.f32.gmra.mrb[0].mxu0 %v542
      %v1615 = vpop.f32.mrb[0].mxu0
      %v1616 = vadd.f32 %v1547, %v1615
      %v1617 = vpop.f32.mrb[0].mxu0
      %1618 = vdwg.mxu0
      %s1619 = scalar_lea.vmem %s6, 64
      %v1620 = vld [vmem:[%s1619] sm:$0xff]
      %v1621 = vld [vmem:[%s1619 + $0x8] sm:$0xff]
      %v1622 = vld [vmem:[%s1619 + $0x10] sm:$0xff]
      %v1623 = vld [vmem:[%s1619 + $0x18] sm:$0xff]
      %s1624 = scalar_lea.vmem %s7, 2
      %v1625 = vld [vmem:[%s1624] sm:$0x1]
      %v1627 = vlaneseq
      %v1628 = vshrl.u32 %v1627, 7
      %v1629 = vsub.s32 0, %v1628
      %v1630 = vrot.slane %v1625, %v1629
      %1632 = vmatprep.subr.mxu0 0.0
      %1633 = vmatpush1.msra.mxu0 %v1620
      %1634 = vmatprep.subr.mxu0 0.0
      %1635 = vmatpush1.msra.mxu0 %v1621
      %1636 = vmatprep.subr.mxu0 0.0
      %1637 = vmatpush1.msra.mxu0 %v1622
      %1638 = vmatprep.subr.mxu0 0.0
      %1639 = vmatpush1.msra.mxu0 %v1623
      %1640 = vmatprep.subr.mxu0 0.0
      %1641 = vmatpush1.msra.mxu0 0.0
      %1642 = vmatprep.subr.mxu0 0.0
      %1643 = vmatpush1.msra.mxu0 0.0
      %1644 = vmatprep.subr.mxu0 0.0
      %1645 = vmatpush1.msra.mxu0 0.0
      %1646 = vmatprep.subr.mxu0 0.0
      %1647 = vmatpush1.msra.mxu0 0.0
      %1648 = vmatprep.subr.mxu0 0.0
      %1649 = vmatpush1.msra.mxu0 0.0
      %1650 = vmatprep.subr.mxu0 0.0
      %1651 = vmatpush1.msra.mxu0 0.0
      %1652 = vmatprep.subr.mxu0 0.0
      %1653 = vmatpush1.msra.mxu0 0.0
      %1654 = vmatprep.subr.mxu0 0.0
      %1655 = vmatpush1.msra.mxu0 0.0
      %1656 = vmatprep.subr.mxu0 0.0
      %1657 = vmatpush1.msra.mxu0 0.0
      %1658 = vmatprep.subr.mxu0 0.0
      %1659 = vmatpush1.msra.mxu0 0.0
      %1660 = vmatprep.subr.mxu0 0.0
      %1661 = vmatpush1.msra.mxu0 0.0
      %1662 = vmatprep.subr.mxu0 0.0
      %1663 = vmatpush1.msra.mxu0 0.0
      %1664 = vmatprep.subr.mxu0 0.0
      %1665 = vmatpush1.msra.mxu0 0.0
      %1666 = vmatprep.subr.mxu0 0.0
      %1667 = vmatpush1.msra.mxu0 0.0
      %1668 = vmatprep.subr.mxu0 0.0
      %1669 = vmatpush1.msra.mxu0 0.0
      %1670 = vmatprep.subr.mxu0 0.0
      %1671 = vmatpush1.msra.mxu0 0.0
      %1672 = vmatprep.subr.mxu0 0.0
      %1673 = vmatpush1.msra.mxu0 0.0
      %1674 = vmatprep.subr.mxu0 0.0
      %1675 = vmatpush1.msra.mxu0 0.0
      %1676 = vmatprep.subr.mxu0 0.0
      %1677 = vmatpush1.msra.mxu0 0.0
      %1678 = vmatprep.subr.mxu0 0.0
      %1679 = vmatpush1.msra.mxu0 0.0
      %1680 = vmatprep.subr.mxu0 0.0
      %1681 = vmatpush1.msra.mxu0 0.0
      %1682 = vmatprep.subr.mxu0 0.0
      %1683 = vmatpush1.msra.mxu0 0.0
      %1684 = vmatprep.subr.mxu0 0.0
      %1685 = vmatpush1.msra.mxu0 0.0
      %1686 = vmatprep.subr.mxu0 0.0
      %1687 = vmatpush1.msra.mxu0 0.0
      %1688 = vmatprep.subr.mxu0 0.0
      %1689 = vmatpush1.msra.mxu0 0.0
      %1690 = vmatprep.subr.mxu0 0.0
      %1691 = vmatpush1.msra.mxu0 0.0
      %1692 = vmatprep.subr.mxu0 0.0
      %1693 = vmatpush1.msra.mxu0 0.0
      %1694 = vmatprep.subr.mxu0 0.0
      %1695 = vmatpush1.msra.mxu0 0.0
      %1696 = vmatprep.mubr.f32.mxu0 0.0
      %1697 = vmatmul.mubr.f32.gmra.mrb[0].mxu0 %v626
      %v1698 = vpop.f32.mrb[0].mxu0
      %v1699 = vadd.f32 %v1630, %v1698
      %v1700 = vpop.f32.mrb[0].mxu0
      %1701 = vmatprep.mubr.f32.mxu0 0.0
      %1702 = vmatmul.mubr.f32.gmra.mrb[0].mxu0 %v629
      %v1703 = vpop.f32.mrb[0].mxu0
      %v1704 = vadd.f32 %v1630, %v1703
      %v1705 = vpop.f32.mrb[0].mxu0
      %1706 = vdwg.mxu0
      %s1707 = scalar_lea.vmem %s8, 64
      %v1708 = vld [vmem:[%s1707] sm:$0xff]
      %v1709 = vld [vmem:[%s1707 + $0x8] sm:$0xff]
      %v1710 = vld [vmem:[%s1707 + $0x10] sm:$0xff]
      %v1711 = vld [vmem:[%s1707 + $0x18] sm:$0xff]
      %s1712 = scalar_lea.vmem %s9, 2
      %v1713 = vld [vmem:[%s1712] sm:$0x1]
      %v1715 = vlaneseq
      %v1716 = vshrl.u32 %v1715, 7
      %v1717 = vsub.s32 0, %v1716
      %v1718 = vrot.slane %v1713, %v1717
      %1720 = vmatprep.subr.mxu0 0.0
      %1721 = vmatpush1.msra.mxu0 %v1708
      %1722 = vmatprep.subr.mxu0 0.0
      %1723 = vmatpush1.msra.mxu0 %v1709
      %1724 = vmatprep.subr.mxu0 0.0
      %1725 = vmatpush1.msra.mxu0 %v1710
      %1726 = vmatprep.subr.mxu0 0.0
      %1727 = vmatpush1.msra.mxu0 %v1711
      %1728 = vmatprep.subr.mxu0 0.0
      %1729 = vmatpush1.msra.mxu0 0.0
      %1730 = vmatprep.subr.mxu0 0.0
      %1731 = vmatpush1.msra.mxu0 0.0
      %1732 = vmatprep.subr.mxu0 0.0
      %1733 = vmatpush1.msra.mxu0 0.0
      %1734 = vmatprep.subr.mxu0 0.0
      %1735 = vmatpush1.msra.mxu0 0.0
      %1736 = vmatprep.subr.mxu0 0.0
      %1737 = vmatpush1.msra.mxu0 0.0
      %1738 = vmatprep.subr.mxu0 0.0
      %1739 = vmatpush1.msra.mxu0 0.0
      %1740 = vmatprep.subr.mxu0 0.0
      %1741 = vmatpush1.msra.mxu0 0.0
      %1742 = vmatprep.subr.mxu0 0.0
      %1743 = vmatpush1.msra.mxu0 0.0
      %1744 = vmatprep.subr.mxu0 0.0
      %1745 = vmatpush1.msra.mxu0 0.0
      %1746 = vmatprep.subr.mxu0 0.0
      %1747 = vmatpush1.msra.mxu0 0.0
      %1748 = vmatprep.subr.mxu0 0.0
      %1749 = vmatpush1.msra.mxu0 0.0
      %1750 = vmatprep.subr.mxu0 0.0
      %1751 = vmatpush1.msra.mxu0 0.0
      %1752 = vmatprep.subr.mxu0 0.0
      %1753 = vmatpush1.msra.mxu0 0.0
      %1754 = vmatprep.subr.mxu0 0.0
      %1755 = vmatpush1.msra.mxu0 0.0
      %1756 = vmatprep.subr.mxu0 0.0
      %1757 = vmatpush1.msra.mxu0 0.0
      %1758 = vmatprep.subr.mxu0 0.0
      %1759 = vmatpush1.msra.mxu0 0.0
      %1760 = vmatprep.subr.mxu0 0.0
      %1761 = vmatpush1.msra.mxu0 0.0
      %1762 = vmatprep.subr.mxu0 0.0
      %1763 = vmatpush1.msra.mxu0 0.0
      %1764 = vmatprep.subr.mxu0 0.0
      %1765 = vmatpush1.msra.mxu0 0.0
      %1766 = vmatprep.subr.mxu0 0.0
      %1767 = vmatpush1.msra.mxu0 0.0
      %1768 = vmatprep.subr.mxu0 0.0
      %1769 = vmatpush1.msra.mxu0 0.0
      %1770 = vmatprep.subr.mxu0 0.0
      %1771 = vmatpush1.msra.mxu0 0.0
      %1772 = vmatprep.subr.mxu0 0.0
      %1773 = vmatpush1.msra.mxu0 0.0
      %1774 = vmatprep.subr.mxu0 0.0
      %1775 = vmatpush1.msra.mxu0 0.0
      %1776 = vmatprep.subr.mxu0 0.0
      %1777 = vmatpush1.msra.mxu0 0.0
      %1778 = vmatprep.subr.mxu0 0.0
      %1779 = vmatpush1.msra.mxu0 0.0
      %1780 = vmatprep.subr.mxu0 0.0
      %1781 = vmatpush1.msra.mxu0 0.0
      %1782 = vmatprep.subr.mxu0 0.0
      %1783 = vmatpush1.msra.mxu0 0.0
      %1784 = vmatprep.mubr.f32.mxu0 0.0
      %1785 = vmatmul.mubr.f32.gmra.mrb[0].mxu0 %v718
      %v1786 = vpop.f32.mrb[0].mxu0
      %v1787 = vadd.f32 %v1718, %v1786
      %v1788 = vpop.f32.mrb[0].mxu0
      %1789 = vmatprep.mubr.f32.mxu0 0.0
      %1790 = vmatmul.mubr.f32.gmra.mrb[0].mxu0 %v721
      %v1791 = vpop.f32.mrb[0].mxu0
      %v1792 = vadd.f32 %v1718, %v1791
      %v1793 = vpop.f32.mrb[0].mxu0
      %1794 = vdwg.mxu0
      %v1796 = vsel %vm798, %v1616, 0
      %v1799 = vsel %vm798, %v1699, 0
      %v1802 = vsel %vm798, %v1704, 0
      %1804 = vmatprep.subr.mxu0 0.0
      %1805 = vmatpush1.xpose.msra.mxu0 %v1799
      %1806 = vmatprep.subr.mxu0 0.0
      %1807 = vmatpush1.xpose.msra.mxu0 %v1802
      %1808 = vmatprep.subr.mxu0 0.0
      %1809 = vmatpush1.xpose.msra.mxu0 0.0
      %1810 = vmatprep.subr.mxu0 0.0
      %1811 = vmatpush1.xpose.msra.mxu0 0.0
      %1812 = vmatprep.subr.mxu0 0.0
      %1813 = vmatpush1.xpose.msra.mxu0 0.0
      %1814 = vmatprep.subr.mxu0 0.0
      %1815 = vmatpush1.xpose.msra.mxu0 0.0
      %1816 = vmatprep.subr.mxu0 0.0
      %1817 = vmatpush1.xpose.msra.mxu0 0.0
      %1818 = vmatprep.subr.mxu0 0.0
      %1819 = vmatpush1.xpose.msra.mxu0 0.0
      %1820 = vmatprep.subr.mxu0 0.0
      %1821 = vmatpush1.xpose.msra.mxu0 0.0
      %1822 = vmatprep.subr.mxu0 0.0
      %1823 = vmatpush1.xpose.msra.mxu0 0.0
      %1824 = vmatprep.subr.mxu0 0.0
      %1825 = vmatpush1.xpose.msra.mxu0 0.0
      %1826 = vmatprep.subr.mxu0 0.0
      %1827 = vmatpush1.xpose.msra.mxu0 0.0
      %1828 = vmatprep.subr.mxu0 0.0
      %1829 = vmatpush1.xpose.msra.mxu0 0.0
      %1830 = vmatprep.subr.mxu0 0.0
      %1831 = vmatpush1.xpose.msra.mxu0 0.0
      %1832 = vmatprep.subr.mxu0 0.0
      %1833 = vmatpush1.xpose.msra.mxu0 0.0
      %1834 = vmatprep.subr.mxu0 0.0
      %1835 = vmatpush1.xpose.msra.mxu0 0.0
      %1836 = vmatprep.subr.mxu0 0.0
      %1837 = vmatpush1.xpose.msra.mxu0 0.0
      %1838 = vmatprep.subr.mxu0 0.0
      %1839 = vmatpush1.xpose.msra.mxu0 0.0
      %1840 = vmatprep.subr.mxu0 0.0
      %1841 = vmatpush1.xpose.msra.mxu0 0.0
      %1842 = vmatprep.subr.mxu0 0.0
      %1843 = vmatpush1.xpose.msra.mxu0 0.0
      %1844 = vmatprep.subr.mxu0 0.0
      %1845 = vmatpush1.xpose.msra.mxu0 0.0
      %1846 = vmatprep.subr.mxu0 0.0
      %1847 = vmatpush1.xpose.msra.mxu0 0.0
      %1848 = vmatprep.subr.mxu0 0.0
      %1849 = vmatpush1.xpose.msra.mxu0 0.0
      %1850 = vmatprep.subr.mxu0 0.0
      %1851 = vmatpush1.xpose.msra.mxu0 0.0
      %1852 = vmatprep.subr.mxu0 0.0
      %1853 = vmatpush1.xpose.msra.mxu0 0.0
      %1854 = vmatprep.subr.mxu0 0.0
      %1855 = vmatpush1.xpose.msra.mxu0 0.0
      %1856 = vmatprep.subr.mxu0 0.0
      %1857 = vmatpush1.xpose.msra.mxu0 0.0
      %1858 = vmatprep.subr.mxu0 0.0
      %1859 = vmatpush1.xpose.msra.mxu0 0.0
      %1860 = vmatprep.subr.mxu0 0.0
      %1861 = vmatpush1.xpose.msra.mxu0 0.0
      %1862 = vmatprep.subr.mxu0 0.0
      %1863 = vmatpush1.xpose.msra.mxu0 0.0
      %1864 = vmatprep.subr.mxu0 0.0
      %1865 = vmatpush1.xpose.msra.mxu0 0.0
      %1866 = vmatprep.subr.mxu0 0.0
      %1867 = vmatpush1.xpose.msra.mxu0 0.0
      %1868 = vmatprep.mubr.f32.mxu0 0.0
      %1869 = vmatmul.mubr.f32.gmra.mrb[0].mxu0 %v1796
      %v1870 = vpop.f32.mrb[0].mxu0
      %v1871 = vadd.f32 0.0, %v1870
      %v1872 = vpop.f32.mrb[0].mxu0
      %1873 = vdwg.mxu0
      %v1874 = vmul.f32 %v1871, 0.35355338
      %v1875 = vsel %vm879, %v1874, -inf
      %1876 = vmax.xlane.f32.xlu0 %v1875
      %v1877 = vpop.xlane.xlu0 %1876
      %v1878 = vsub.f32 %v1874, %v1877
      %v1879 = vmul.f32 %v1878, 1.442695
      %v1880 = vpow.pop %v1879
      %v1881 = vsel %vm879, %v1880, 0.0
      %1882 = vadd.xlane.f32.xlu0 %v1881
      %v1883 = vpop.xlane.xlu0 %1882
      %v1884 = vrcp.pop %v1883
      %v1885 = vmul.f32 %v1880, %v1884
      %v1887 = vsel %vm879, %v1885, 0
      %1889 = vmatprep.subr.mxu0 0.0
      %1890 = vmatpush1.msra.mxu0 %v1787
      %1891 = vmatprep.subr.mxu0 0.0
      %1892 = vmatpush1.msra.mxu0 %v1792
      %1893 = vmatprep.subr.mxu0 0.0
      %1894 = vmatpush1.msra.mxu0 0.0
      %1895 = vmatprep.subr.mxu0 0.0
      %1896 = vmatpush1.msra.mxu0 0.0
      %1897 = vmatprep.subr.mxu0 0.0
      %1898 = vmatpush1.msra.mxu0 0.0
      %1899 = vmatprep.subr.mxu0 0.0
      %1900 = vmatpush1.msra.mxu0 0.0
      %1901 = vmatprep.subr.mxu0 0.0
      %1902 = vmatpush1.msra.mxu0 0.0
      %1903 = vmatprep.subr.mxu0 0.0
      %1904 = vmatpush1.msra.mxu0 0.0
      %1905 = vmatprep.subr.mxu0 0.0
      %1906 = vmatpush1.msra.mxu0 0.0
      %1907 = vmatprep.subr.mxu0 0.0
      %1908 = vmatpush1.msra.mxu0 0.0
      %1909 = vmatprep.subr.mxu0 0.0
      %1910 = vmatpush1.msra.mxu0 0.0
      %1911 = vmatprep.subr.mxu0 0.0
      %1912 = vmatpush1.msra.mxu0 0.0
      %1913 = vmatprep.subr.mxu0 0.0
      %1914 = vmatpush1.msra.mxu0 0.0
      %1915 = vmatprep.subr.mxu0 0.0
      %1916 = vmatpush1.msra.mxu0 0.0
      %1917 = vmatprep.subr.mxu0 0.0
      %1918 = vmatpush1.msra.mxu0 0.0
      %1919 = vmatprep.subr.mxu0 0.0
      %1920 = vmatpush1.msra.mxu0 0.0
      %1921 = vmatprep.subr.mxu0 0.0
      %1922 = vmatpush1.msra.mxu0 0.0
      %1923 = vmatprep.subr.mxu0 0.0
      %1924 = vmatpush1.msra.mxu0 0.0
      %1925 = vmatprep.subr.mxu0 0.0
      %1926 = vmatpush1.msra.mxu0 0.0
      %1927 = vmatprep.subr.mxu0 0.0
      %1928 = vmatpush1.msra.mxu0 0.0
      %1929 = vmatprep.subr.mxu0 0.0
      %1930 = vmatpush1.msra.mxu0 0.0
      %1931 = vmatprep.subr.mxu0 0.0
      %1932 = vmatpush1.msra.mxu0 0.0
      %1933 = vmatprep.subr.mxu0 0.0
      %1934 = vmatpush1.msra.mxu0 0.0
      %1935 = vmatprep.subr.mxu0 0.0
      %1936 = vmatpush1.msra.mxu0 0.0
      %1937 = vmatprep.subr.mxu0 0.0
      %1938 = vmatpush1.msra.mxu0 0.0
      %1939 = vmatprep.subr.mxu0 0.0
      %1940 = vmatpush1.msra.mxu0 0.0
      %1941 = vmatprep.subr.mxu0 0.0
      %1942 = vmatpush1.msra.mxu0 0.0
      %1943 = vmatprep.subr.mxu0 0.0
      %1944 = vmatpush1.msra.mxu0 0.0
      %1945 = vmatprep.subr.mxu0 0.0
      %1946 = vmatpush1.msra.mxu0 0.0
      %1947 = vmatprep.subr.mxu0 0.0
      %1948 = vmatpush1.msra.mxu0 0.0
      %1949 = vmatprep.subr.mxu0 0.0
      %1950 = vmatpush1.msra.mxu0 0.0
      %1951 = vmatprep.subr.mxu0 0.0
      %1952 = vmatpush1.msra.mxu0 0.0
      %1953 = vmatprep.mubr.f32.mxu0 0.0
      %1954 = vmatmul.mubr.f32.gmra.mrb[0].mxu0 %v1887
      %v1955 = vpop.f32.mrb[0].mxu0
      %v1956 = vadd.f32 0.0, %v1955
      %v1957 = vpop.f32.mrb[0].mxu0
      %1958 = vdwg.mxu0
      %s1959 = scalar_lea.vmem %s10, 16
      %v1960 = vld [vmem:[%s1959] sm:$0xff]
      %v1962 = vsel %vm798, %v1956, 0
      %1964 = vmatprep.subr.mxu0 0.0
      %1965 = vmatpush1.msra.mxu0 %v1960
      %1966 = vmatprep.subr.mxu0 0.0
      %1967 = vmatpush1.msra.mxu0 0.0
      %1968 = vmatprep.subr.mxu0 0.0
      %1969 = vmatpush1.msra.mxu0 0.0
      %1970 = vmatprep.subr.mxu0 0.0
      %1971 = vmatpush1.msra.mxu0 0.0
      %1972 = vmatprep.subr.mxu0 0.0
      %1973 = vmatpush1.msra.mxu0 0.0
      %1974 = vmatprep.subr.mxu0 0.0
      %1975 = vmatpush1.msra.mxu0 0.0
      %1976 = vmatprep.subr.mxu0 0.0
      %1977 = vmatpush1.msra.mxu0 0.0
      %1978 = vmatprep.subr.mxu0 0.0
      %1979 = vmatpush1.msra.mxu0 0.0
      %1980 = vmatprep.subr.mxu0 0.0
      %1981 = vmatpush1.msra.mxu0 0.0
      %1982 = vmatprep.subr.mxu0 0.0
      %1983 = vmatpush1.msra.mxu0 0.0
      %1984 = vmatprep.subr.mxu0 0.0
      %1985 = vmatpush1.msra.mxu0 0.0
      %1986 = vmatprep.subr.mxu0 0.0
      %1987 = vmatpush1.msra.mxu0 0.0
      %1988 = vmatprep.subr.mxu0 0.0
      %1989 = vmatpush1.msra.mxu0 0.0
      %1990 = vmatprep.subr.mxu0 0.0
      %1991 = vmatpush1.msra.mxu0 0.0
      %1992 = vmatprep.subr.mxu0 0.0
      %1993 = vmatpush1.msra.mxu0 0.0
      %1994 = vmatprep.subr.mxu0 0.0
      %1995 = vmatpush1.msra.mxu0 0.0
      %1996 = vmatprep.subr.mxu0 0.0
      %1997 = vmatpush1.msra.mxu0 0.0
      %1998 = vmatprep.subr.mxu0 0.0
      %1999 = vmatpush1.msra.mxu0 0.0
      %2000 = vmatprep.subr.mxu0 0.0
      %2001 = vmatpush1.msra.mxu0 0.0
      %2002 = vmatprep.subr.mxu0 0.0
      %2003 = vmatpush1.msra.mxu0 0.0
      %2004 = vmatprep.subr.mxu0 0.0
      %2005 = vmatpush1.msra.mxu0 0.0
      %2006 = vmatprep.subr.mxu0 0.0
      %2007 = vmatpush1.msra.mxu0 0.0
      %2008 = vmatprep.subr.mxu0 0.0
      %2009 = vmatpush1.msra.mxu0 0.0
      %2010 = vmatprep.subr.mxu0 0.0
      %2011 = vmatpush1.msra.mxu0 0.0
      %2012 = vmatprep.subr.mxu0 0.0
      %2013 = vmatpush1.msra.mxu0 0.0
      %2014 = vmatprep.subr.mxu0 0.0
      %2015 = vmatpush1.msra.mxu0 0.0
      %2016 = vmatprep.subr.mxu0 0.0
      %2017 = vmatpush1.msra.mxu0 0.0
      %2018 = vmatprep.subr.mxu0 0.0
      %2019 = vmatpush1.msra.mxu0 0.0
      %2020 = vmatprep.subr.mxu0 0.0
      %2021 = vmatpush1.msra.mxu0 0.0
      %2022 = vmatprep.subr.mxu0 0.0
      %2023 = vmatpush1.msra.mxu0 0.0
      %2024 = vmatprep.subr.mxu0 0.0
      %2025 = vmatpush1.msra.mxu0 0.0
      %2026 = vmatprep.subr.mxu0 0.0
      %2027 = vmatpush1.msra.mxu0 0.0
      %2028 = vmatprep.mubr.f32.mxu0 0.0
      %2029 = vmatmul.mubr.f32.gmra.mrb[0].mxu0 %v1962
      %v2030 = vpop.f32.mrb[0].mxu0
      %v2031 = vadd.f32 0.0, %v2030
      %v2032 = vpop.f32.mrb[0].mxu0
      %2033 = vdwg.mxu0
      %v2034 = vadd.f32 %v1533, %v2031
      %s2035 = scalar_lea.vmem %s4, 96
      %v2036 = vld [vmem:[%s2035] sm:$0xff]
      %v2037 = vld [vmem:[%s2035 + $0x8] sm:$0xff]
      %v2038 = vld [vmem:[%s2035 + $0x10] sm:$0xff]
      %v2039 = vld [vmem:[%s2035 + $0x18] sm:$0xff]
      %s2040 = scalar_lea.vmem %s5, 3
      %v2041 = vld [vmem:[%s2040] sm:$0x1]
      %v2043 = vlaneseq
      %v2044 = vshrl.u32 %v2043, 7
      %v2045 = vsub.s32 0, %v2044
      %v2046 = vrot.slane %v2041, %v2045
      %2048 = vmatprep.subr.mxu0 0.0
      %2049 = vmatpush1.msra.mxu0 %v2036
      %2050 = vmatprep.subr.mxu0 0.0
      %2051 = vmatpush1.msra.mxu0 %v2037
      %2052 = vmatprep.subr.mxu0 0.0
      %2053 = vmatpush1.msra.mxu0 %v2038
      %2054 = vmatprep.subr.mxu0 0.0
      %2055 = vmatpush1.msra.mxu0 %v2039
      %2056 = vmatprep.subr.mxu0 0.0
      %2057 = vmatpush1.msra.mxu0 0.0
      %2058 = vmatprep.subr.mxu0 0.0
      %2059 = vmatpush1.msra.mxu0 0.0
      %2060 = vmatprep.subr.mxu0 0.0
      %2061 = vmatpush1.msra.mxu0 0.0
      %2062 = vmatprep.subr.mxu0 0.0
      %2063 = vmatpush1.msra.mxu0 0.0
      %2064 = vmatprep.subr.mxu0 0.0
      %2065 = vmatpush1.msra.mxu0 0.0
      %2066 = vmatprep.subr.mxu0 0.0
      %2067 = vmatpush1.msra.mxu0 0.0
      %2068 = vmatprep.subr.mxu0 0.0
      %2069 = vmatpush1.msra.mxu0 0.0
      %2070 = vmatprep.subr.mxu0 0.0
      %2071 = vmatpush1.msra.mxu0 0.0
      %2072 = vmatprep.subr.mxu0 0.0
      %2073 = vmatpush1.msra.mxu0 0.0
      %2074 = vmatprep.subr.mxu0 0.0
      %2075 = vmatpush1.msra.mxu0 0.0
      %2076 = vmatprep.subr.mxu0 0.0
      %2077 = vmatpush1.msra.mxu0 0.0
      %2078 = vmatprep.subr.mxu0 0.0
      %2079 = vmatpush1.msra.mxu0 0.0
      %2080 = vmatprep.subr.mxu0 0.0
      %2081 = vmatpush1.msra.mxu0 0.0
      %2082 = vmatprep.subr.mxu0 0.0
      %2083 = vmatpush1.msra.mxu0 0.0
      %2084 = vmatprep.subr.mxu0 0.0
      %2085 = vmatpush1.msra.mxu0 0.0
      %2086 = vmatprep.subr.mxu0 0.0
      %2087 = vmatpush1.msra.mxu0 0.0
      %2088 = vmatprep.subr.mxu0 0.0
      %2089 = vmatpush1.msra.mxu0 0.0
      %2090 = vmatprep.subr.mxu0 0.0
      %2091 = vmatpush1.msra.mxu0 0.0
      %2092 = vmatprep.subr.mxu0 0.0
      %2093 = vmatpush1.msra.mxu0 0.0
      %2094 = vmatprep.subr.mxu0 0.0
      %2095 = vmatpush1.msra.mxu0 0.0
      %2096 = vmatprep.subr.mxu0 0.0
      %2097 = vmatpush1.msra.mxu0 0.0
      %2098 = vmatprep.subr.mxu0 0.0
      %2099 = vmatpush1.msra.mxu0 0.0
      %2100 = vmatprep.subr.mxu0 0.0
      %2101 = vmatpush1.msra.mxu0 0.0
      %2102 = vmatprep.subr.mxu0 0.0
      %2103 = vmatpush1.msra.mxu0 0.0
      %2104 = vmatprep.subr.mxu0 0.0
      %2105 = vmatpush1.msra.mxu0 0.0
      %2106 = vmatprep.subr.mxu0 0.0
      %2107 = vmatpush1.msra.mxu0 0.0
      %2108 = vmatprep.subr.mxu0 0.0
      %2109 = vmatpush1.msra.mxu0 0.0
      %2110 = vmatprep.subr.mxu0 0.0
      %2111 = vmatpush1.msra.mxu0 0.0
      %2112 = vmatprep.mubr.f32.mxu0 0.0
      %2113 = vmatmul.mubr.f32.gmra.mrb[0].mxu0 %v542
      %v2114 = vpop.f32.mrb[0].mxu0
      %v2115 = vadd.f32 %v2046, %v2114
      %v2116 = vpop.f32.mrb[0].mxu0
      %2117 = vdwg.mxu0
      %s2118 = scalar_lea.vmem %s6, 96
      %v2119 = vld [vmem:[%s2118] sm:$0xff]
      %v2120 = vld [vmem:[%s2118 + $0x8] sm:$0xff]
      %v2121 = vld [vmem:[%s2118 + $0x10] sm:$0xff]
      %v2122 = vld [vmem:[%s2118 + $0x18] sm:$0xff]
      %s2123 = scalar_lea.vmem %s7, 3
      %v2124 = vld [vmem:[%s2123] sm:$0x1]
      %v2126 = vlaneseq
      %v2127 = vshrl.u32 %v2126, 7
      %v2128 = vsub.s32 0, %v2127
      %v2129 = vrot.slane %v2124, %v2128
      %2131 = vmatprep.subr.mxu0 0.0
      %2132 = vmatpush1.msra.mxu0 %v2119
      %2133 = vmatprep.subr.mxu0 0.0
      %2134 = vmatpush1.msra.mxu0 %v2120
      %2135 = vmatprep.subr.mxu0 0.0
      %2136 = vmatpush1.msra.mxu0 %v2121
      %2137 = vmatprep.subr.mxu0 0.0
      %2138 = vmatpush1.msra.mxu0 %v2122
      %2139 = vmatprep.subr.mxu0 0.0
      %2140 = vmatpush1.msra.mxu0 0.0
      %2141 = vmatprep.subr.mxu0 0.0
      %2142 = vmatpush1.msra.mxu0 0.0
      %2143 = vmatprep.subr.mxu0 0.0
      %2144 = vmatpush1.msra.mxu0 0.0
      %2145 = vmatprep.subr.mxu0 0.0
      %2146 = vmatpush1.msra.mxu0 0.0
      %2147 = vmatprep.subr.mxu0 0.0
      %2148 = vmatpush1.msra.mxu0 0.0
      %2149 = vmatprep.subr.mxu0 0.0
      %2150 = vmatpush1.msra.mxu0 0.0
      %2151 = vmatprep.subr.mxu0 0.0
      %2152 = vmatpush1.msra.mxu0 0.0
      %2153 = vmatprep.subr.mxu0 0.0
      %2154 = vmatpush1.msra.mxu0 0.0
      %2155 = vmatprep.subr.mxu0 0.0
      %2156 = vmatpush1.msra.mxu0 0.0
      %2157 = vmatprep.subr.mxu0 0.0
      %2158 = vmatpush1.msra.mxu0 0.0
      %2159 = vmatprep.subr.mxu0 0.0
      %2160 = vmatpush1.msra.mxu0 0.0
      %2161 = vmatprep.subr.mxu0 0.0
      %2162 = vmatpush1.msra.mxu0 0.0
      %2163 = vmatprep.subr.mxu0 0.0
      %2164 = vmatpush1.msra.mxu0 0.0
      %2165 = vmatprep.subr.mxu0 0.0
      %2166 = vmatpush1.msra.mxu0 0.0
      %2167 = vmatprep.subr.mxu0 0.0
      %2168 = vmatpush1.msra.mxu0 0.0
      %2169 = vmatprep.subr.mxu0 0.0
      %2170 = vmatpush1.msra.mxu0 0.0
      %2171 = vmatprep.subr.mxu0 0.0
      %2172 = vmatpush1.msra.mxu0 0.0
      %2173 = vmatprep.subr.mxu0 0.0
      %2174 = vmatpush1.msra.mxu0 0.0
      %2175 = vmatprep.subr.mxu0 0.0
      %2176 = vmatpush1.msra.mxu0 0.0
      %2177 = vmatprep.subr.mxu0 0.0
      %2178 = vmatpush1.msra.mxu0 0.0
      %2179 = vmatprep.subr.mxu0 0.0
      %2180 = vmatpush1.msra.mxu0 0.0
      %2181 = vmatprep.subr.mxu0 0.0
      %2182 = vmatpush1.msra.mxu0 0.0
      %2183 = vmatprep.subr.mxu0 0.0
      %2184 = vmatpush1.msra.mxu0 0.0
      %2185 = vmatprep.subr.mxu0 0.0
      %2186 = vmatpush1.msra.mxu0 0.0
      %2187 = vmatprep.subr.mxu0 0.0
      %2188 = vmatpush1.msra.mxu0 0.0
      %2189 = vmatprep.subr.mxu0 0.0
      %2190 = vmatpush1.msra.mxu0 0.0
      %2191 = vmatprep.subr.mxu0 0.0
      %2192 = vmatpush1.msra.mxu0 0.0
      %2193 = vmatprep.subr.mxu0 0.0
      %2194 = vmatpush1.msra.mxu0 0.0
      %2195 = vmatprep.mubr.f32.mxu0 0.0
      %2196 = vmatmul.mubr.f32.gmra.mrb[0].mxu0 %v626
      %v2197 = vpop.f32.mrb[0].mxu0
      %v2198 = vadd.f32 %v2129, %v2197
      %v2199 = vpop.f32.mrb[0].mxu0
      %2200 = vmatprep.mubr.f32.mxu0 0.0
      %2201 = vmatmul.mubr.f32.gmra.mrb[0].mxu0 %v629
      %v2202 = vpop.f32.mrb[0].mxu0
      %v2203 = vadd.f32 %v2129, %v2202
      %v2204 = vpop.f32.mrb[0].mxu0
      %2205 = vdwg.mxu0
      %s2206 = scalar_lea.vmem %s8, 96
      %v2207 = vld [vmem:[%s2206] sm:$0xff]
      %v2208 = vld [vmem:[%s2206 + $0x8] sm:$0xff]
      %v2209 = vld [vmem:[%s2206 + $0x10] sm:$0xff]
      %v2210 = vld [vmem:[%s2206 + $0x18] sm:$0xff]
      %s2211 = scalar_lea.vmem %s9, 3
      %v2212 = vld [vmem:[%s2211] sm:$0x1]
      %v2214 = vlaneseq
      %v2215 = vshrl.u32 %v2214, 7
      %v2216 = vsub.s32 0, %v2215
      %v2217 = vrot.slane %v2212, %v2216
      %2219 = vmatprep.subr.mxu0 0.0
      %2220 = vmatpush1.msra.mxu0 %v2207
      %2221 = vmatprep.subr.mxu0 0.0
      %2222 = vmatpush1.msra.mxu0 %v2208
      %2223 = vmatprep.subr.mxu0 0.0
      %2224 = vmatpush1.msra.mxu0 %v2209
      %2225 = vmatprep.subr.mxu0 0.0
      %2226 = vmatpush1.msra.mxu0 %v2210
      %2227 = vmatprep.subr.mxu0 0.0
      %2228 = vmatpush1.msra.mxu0 0.0
      %2229 = vmatprep.subr.mxu0 0.0
      %2230 = vmatpush1.msra.mxu0 0.0
      %2231 = vmatprep.subr.mxu0 0.0
      %2232 = vmatpush1.msra.mxu0 0.0
      %2233 = vmatprep.subr.mxu0 0.0
      %2234 = vmatpush1.msra.mxu0 0.0
      %2235 = vmatprep.subr.mxu0 0.0
      %2236 = vmatpush1.msra.mxu0 0.0
      %2237 = vmatprep.subr.mxu0 0.0
      %2238 = vmatpush1.msra.mxu0 0.0
      %2239 = vmatprep.subr.mxu0 0.0
      %2240 = vmatpush1.msra.mxu0 0.0
      %2241 = vmatprep.subr.mxu0 0.0
      %2242 = vmatpush1.msra.mxu0 0.0
      %2243 = vmatprep.subr.mxu0 0.0
      %2244 = vmatpush1.msra.mxu0 0.0
      %2245 = vmatprep.subr.mxu0 0.0
      %2246 = vmatpush1.msra.mxu0 0.0
      %2247 = vmatprep.subr.mxu0 0.0
      %2248 = vmatpush1.msra.mxu0 0.0
      %2249 = vmatprep.subr.mxu0 0.0
      %2250 = vmatpush1.msra.mxu0 0.0
      %2251 = vmatprep.subr.mxu0 0.0
      %2252 = vmatpush1.msra.mxu0 0.0
      %2253 = vmatprep.subr.mxu0 0.0
      %2254 = vmatpush1.msra.mxu0 0.0
      %2255 = vmatprep.subr.mxu0 0.0
      %2256 = vmatpush1.msra.mxu0 0.0
      %2257 = vmatprep.subr.mxu0 0.0
      %2258 = vmatpush1.msra.mxu0 0.0
      %2259 = vmatprep.subr.mxu0 0.0
      %2260 = vmatpush1.msra.mxu0 0.0
      %2261 = vmatprep.subr.mxu0 0.0
      %2262 = vmatpush1.msra.mxu0 0.0
      %2263 = vmatprep.subr.mxu0 0.0
      %2264 = vmatpush1.msra.mxu0 0.0
      %2265 = vmatprep.subr.mxu0 0.0
      %2266 = vmatpush1.msra.mxu0 0.0
      %2267 = vmatprep.subr.mxu0 0.0
      %2268 = vmatpush1.msra.mxu0 0.0
      %2269 = vmatprep.subr.mxu0 0.0
      %2270 = vmatpush1.msra.mxu0 0.0
      %2271 = vmatprep.subr.mxu0 0.0
      %2272 = vmatpush1.msra.mxu0 0.0
      %2273 = vmatprep.subr.mxu0 0.0
      %2274 = vmatpush1.msra.mxu0 0.0
      %2275 = vmatprep.subr.mxu0 0.0
      %2276 = vmatpush1.msra.mxu0 0.0
      %2277 = vmatprep.subr.mxu0 0.0
      %2278 = vmatpush1.msra.mxu0 0.0
      %2279 = vmatprep.subr.mxu0 0.0
      %2280 = vmatpush1.msra.mxu0 0.0
      %2281 = vmatprep.subr.mxu0 0.0
      %2282 = vmatpush1.msra.mxu0 0.0
      %2283 = vmatprep.mubr.f32.mxu0 0.0
      %2284 = vmatmul.mubr.f32.gmra.mrb[0].mxu0 %v718
      %v2285 = vpop.f32.mrb[0].mxu0
      %v2286 = vadd.f32 %v2217, %v2285
      %v2287 = vpop.f32.mrb[0].mxu0
      %2288 = vmatprep.mubr.f32.mxu0 0.0
      %2289 = vmatmul.mubr.f32.gmra.mrb[0].mxu0 %v721
      %v2290 = vpop.f32.mrb[0].mxu0
      %v2291 = vadd.f32 %v2217, %v2290
      %v2292 = vpop.f32.mrb[0].mxu0
      %2293 = vdwg.mxu0
      %v2295 = vsel %vm798, %v2115, 0
      %v2298 = vsel %vm798, %v2198, 0
      %v2301 = vsel %vm798, %v2203, 0
      %2303 = vmatprep.subr.mxu0 0.0
      %2304 = vmatpush1.xpose.msra.mxu0 %v2298
      %2305 = vmatprep.subr.mxu0 0.0
      %2306 = vmatpush1.xpose.msra.mxu0 %v2301
      %2307 = vmatprep.subr.mxu0 0.0
      %2308 = vmatpush1.xpose.msra.mxu0 0.0
      %2309 = vmatprep.subr.mxu0 0.0
      %2310 = vmatpush1.xpose.msra.mxu0 0.0
      %2311 = vmatprep.subr.mxu0 0.0
      %2312 = vmatpush1.xpose.msra.mxu0 0.0
      %2313 = vmatprep.subr.mxu0 0.0
      %2314 = vmatpush1.xpose.msra.mxu0 0.0
      %2315 = vmatprep.subr.mxu0 0.0
      %2316 = vmatpush1.xpose.msra.mxu0 0.0
      %2317 = vmatprep.subr.mxu0 0.0
      %2318 = vmatpush1.xpose.msra.mxu0 0.0
      %2319 = vmatprep.subr.mxu0 0.0
      %2320 = vmatpush1.xpose.msra.mxu0 0.0
      %2321 = vmatprep.subr.mxu0 0.0
      %2322 = vmatpush1.xpose.msra.mxu0 0.0
      %2323 = vmatprep.subr.mxu0 0.0
      %2324 = vmatpush1.xpose.msra.mxu0 0.0
      %2325 = vmatprep.subr.mxu0 0.0
      %2326 = vmatpush1.xpose.msra.mxu0 0.0
      %2327 = vmatprep.subr.mxu0 0.0
      %2328 = vmatpush1.xpose.msra.mxu0 0.0
      %2329 = vmatprep.subr.mxu0 0.0
      %2330 = vmatpush1.xpose.msra.mxu0 0.0
      %2331 = vmatprep.subr.mxu0 0.0
      %2332 = vmatpush1.xpose.msra.mxu0 0.0
      %2333 = vmatprep.subr.mxu0 0.0
      %2334 = vmatpush1.xpose.msra.mxu0 0.0
      %2335 = vmatprep.subr.mxu0 0.0
      %2336 = vmatpush1.xpose.msra.mxu0 0.0
      %2337 = vmatprep.subr.mxu0 0.0
      %2338 = vmatpush1.xpose.msra.mxu0 0.0
      %2339 = vmatprep.subr.mxu0 0.0
      %2340 = vmatpush1.xpose.msra.mxu0 0.0
      %2341 = vmatprep.subr.mxu0 0.0
      %2342 = vmatpush1.xpose.msra.mxu0 0.0
      %2343 = vmatprep.subr.mxu0 0.0
      %2344 = vmatpush1.xpose.msra.mxu0 0.0
      %2345 = vmatprep.subr.mxu0 0.0
      %2346 = vmatpush1.xpose.msra.mxu0 0.0
      %2347 = vmatprep.subr.mxu0 0.0
      %2348 = vmatpush1.xpose.msra.mxu0 0.0
      %2349 = vmatprep.subr.mxu0 0.0
      %2350 = vmatpush1.xpose.msra.mxu0 0.0
      %2351 = vmatprep.subr.mxu0 0.0
      %2352 = vmatpush1.xpose.msra.mxu0 0.0
      %2353 = vmatprep.subr.mxu0 0.0
      %2354 = vmatpush1.xpose.msra.mxu0 0.0
      %2355 = vmatprep.subr.mxu0 0.0
      %2356 = vmatpush1.xpose.msra.mxu0 0.0
      %2357 = vmatprep.subr.mxu0 0.0
      %2358 = vmatpush1.xpose.msra.mxu0 0.0
      %2359 = vmatprep.subr.mxu0 0.0
      %2360 = vmatpush1.xpose.msra.mxu0 0.0
      %2361 = vmatprep.subr.mxu0 0.0
      %2362 = vmatpush1.xpose.msra.mxu0 0.0
      %2363 = vmatprep.subr.mxu0 0.0
      %2364 = vmatpush1.xpose.msra.mxu0 0.0
      %2365 = vmatprep.subr.mxu0 0.0
      %2366 = vmatpush1.xpose.msra.mxu0 0.0
      %2367 = vmatprep.mubr.f32.mxu0 0.0
      %2368 = vmatmul.mubr.f32.gmra.mrb[0].mxu0 %v2295
      %v2369 = vpop.f32.mrb[0].mxu0
      %v2370 = vadd.f32 0.0, %v2369
      %v2371 = vpop.f32.mrb[0].mxu0
      %2372 = vdwg.mxu0
      %v2373 = vmul.f32 %v2370, 0.35355338
      %v2374 = vsel %vm879, %v2373, -inf
      %2375 = vmax.xlane.f32.xlu0 %v2374
      %v2376 = vpop.xlane.xlu0 %2375
      %v2377 = vsub.f32 %v2373, %v2376
      %v2378 = vmul.f32 %v2377, 1.442695
      %v2379 = vpow.pop %v2378
      %v2380 = vsel %vm879, %v2379, 0.0
      %2381 = vadd.xlane.f32.xlu0 %v2380
      %v2382 = vpop.xlane.xlu0 %2381
      %v2383 = vrcp.pop %v2382
      %v2384 = vmul.f32 %v2379, %v2383
      %v2386 = vsel %vm879, %v2384, 0
      %2388 = vmatprep.subr.mxu0 0.0
      %2389 = vmatpush1.msra.mxu0 %v2286
      %2390 = vmatprep.subr.mxu0 0.0
      %2391 = vmatpush1.msra.mxu0 %v2291
      %2392 = vmatprep.subr.mxu0 0.0
      %2393 = vmatpush1.msra.mxu0 0.0
      %2394 = vmatprep.subr.mxu0 0.0
      %2395 = vmatpush1.msra.mxu0 0.0
      %2396 = vmatprep.subr.mxu0 0.0
      %2397 = vmatpush1.msra.mxu0 0.0
      %2398 = vmatprep.subr.mxu0 0.0
      %2399 = vmatpush1.msra.mxu0 0.0
      %2400 = vmatprep.subr.mxu0 0.0
      %2401 = vmatpush1.msra.mxu0 0.0
      %2402 = vmatprep.subr.mxu0 0.0
      %2403 = vmatpush1.msra.mxu0 0.0
      %2404 = vmatprep.subr.mxu0 0.0
      %2405 = vmatpush1.msra.mxu0 0.0
      %2406 = vmatprep.subr.mxu0 0.0
      %2407 = vmatpush1.msra.mxu0 0.0
      %2408 = vmatprep.subr.mxu0 0.0
      %2409 = vmatpush1.msra.mxu0 0.0
      %2410 = vmatprep.subr.mxu0 0.0
      %2411 = vmatpush1.msra.mxu0 0.0
      %2412 = vmatprep.subr.mxu0 0.0
      %2413 = vmatpush1.msra.mxu0 0.0
      %2414 = vmatprep.subr.mxu0 0.0
      %2415 = vmatpush1.msra.mxu0 0.0
      %2416 = vmatprep.subr.mxu0 0.0
      %2417 = vmatpush1.msra.mxu0 0.0
      %2418 = vmatprep.subr.mxu0 0.0
      %2419 = vmatpush1.msra.mxu0 0.0
      %2420 = vmatprep.subr.mxu0 0.0
      %2421 = vmatpush1.msra.mxu0 0.0
      %2422 = vmatprep.subr.mxu0 0.0
      %2423 = vmatpush1.msra.mxu0 0.0
      %2424 = vmatprep.subr.mxu0 0.0
      %2425 = vmatpush1.msra.mxu0 0.0
      %2426 = vmatprep.subr.mxu0 0.0
      %2427 = vmatpush1.msra.mxu0 0.0
      %2428 = vmatprep.subr.mxu0 0.0
      %2429 = vmatpush1.msra.mxu0 0.0
      %2430 = vmatprep.subr.mxu0 0.0
      %2431 = vmatpush1.msra.mxu0 0.0
      %2432 = vmatprep.subr.mxu0 0.0
      %2433 = vmatpush1.msra.mxu0 0.0
      %2434 = vmatprep.subr.mxu0 0.0
      %2435 = vmatpush1.msra.mxu0 0.0
      %2436 = vmatprep.subr.mxu0 0.0
      %2437 = vmatpush1.msra.mxu0 0.0
      %2438 = vmatprep.subr.mxu0 0.0
      %2439 = vmatpush1.msra.mxu0 0.0
      %2440 = vmatprep.subr.mxu0 0.0
      %2441 = vmatpush1.msra.mxu0 0.0
      %2442 = vmatprep.subr.mxu0 0.0
      %2443 = vmatpush1.msra.mxu0 0.0
      %2444 = vmatprep.subr.mxu0 0.0
      %2445 = vmatpush1.msra.mxu0 0.0
      %2446 = vmatprep.subr.mxu0 0.0
      %2447 = vmatpush1.msra.mxu0 0.0
      %2448 = vmatprep.subr.mxu0 0.0
      %2449 = vmatpush1.msra.mxu0 0.0
      %2450 = vmatprep.subr.mxu0 0.0
      %2451 = vmatpush1.msra.mxu0 0.0
      %2452 = vmatprep.mubr.f32.mxu0 0.0
      %2453 = vmatmul.mubr.f32.gmra.mrb[0].mxu0 %v2386
      %v2454 = vpop.f32.mrb[0].mxu0
      %v2455 = vadd.f32 0.0, %v2454
      %v2456 = vpop.f32.mrb[0].mxu0
      %2457 = vdwg.mxu0
      %s2458 = scalar_lea.vmem %s10, 24
      %v2459 = vld [vmem:[%s2458] sm:$0xff]
      %v2461 = vsel %vm798, %v2455, 0
      %2463 = vmatprep.subr.mxu0 0.0
      %2464 = vmatpush1.msra.mxu0 %v2459
      %2465 = vmatprep.subr.mxu0 0.0
      %2466 = vmatpush1.msra.mxu0 0.0
      %2467 = vmatprep.subr.mxu0 0.0
      %2468 = vmatpush1.msra.mxu0 0.0
      %2469 = vmatprep.subr.mxu0 0.0
      %2470 = vmatpush1.msra.mxu0 0.0
      %2471 = vmatprep.subr.mxu0 0.0
      %2472 = vmatpush1.msra.mxu0 0.0
      %2473 = vmatprep.subr.mxu0 0.0
      %2474 = vmatpush1.msra.mxu0 0.0
      %2475 = vmatprep.subr.mxu0 0.0
      %2476 = vmatpush1.msra.mxu0 0.0
      %2477 = vmatprep.subr.mxu0 0.0
      %2478 = vmatpush1.msra.mxu0 0.0
      %2479 = vmatprep.subr.mxu0 0.0
      %2480 = vmatpush1.msra.mxu0 0.0
      %2481 = vmatprep.subr.mxu0 0.0
      %2482 = vmatpush1.msra.mxu0 0.0
      %2483 = vmatprep.subr.mxu0 0.0
      %2484 = vmatpush1.msra.mxu0 0.0
      %2485 = vmatprep.subr.mxu0 0.0
      %2486 = vmatpush1.msra.mxu0 0.0
      %2487 = vmatprep.subr.mxu0 0.0
      %2488 = vmatpush1.msra.mxu0 0.0
      %2489 = vmatprep.subr.mxu0 0.0
      %2490 = vmatpush1.msra.mxu0 0.0
      %2491 = vmatprep.subr.mxu0 0.0
      %2492 = vmatpush1.msra.mxu0 0.0
      %2493 = vmatprep.subr.mxu0 0.0
      %2494 = vmatpush1.msra.mxu0 0.0
      %2495 = vmatprep.subr.mxu0 0.0
      %2496 = vmatpush1.msra.mxu0 0.0
      %2497 = vmatprep.subr.mxu0 0.0
      %2498 = vmatpush1.msra.mxu0 0.0
      %2499 = vmatprep.subr.mxu0 0.0
      %2500 = vmatpush1.msra.mxu0 0.0
      %2501 = vmatprep.subr.mxu0 0.0
      %2502 = vmatpush1.msra.mxu0 0.0
      %2503 = vmatprep.subr.mxu0 0.0
      %2504 = vmatpush1.msra.mxu0 0.0
      %2505 = vmatprep.subr.mxu0 0.0
      %2506 = vmatpush1.msra.mxu0 0.0
      %2507 = vmatprep.subr.mxu0 0.0
      %2508 = vmatpush1.msra.mxu0 0.0
      %2509 = vmatprep.subr.mxu0 0.0
      %2510 = vmatpush1.msra.mxu0 0.0
      %2511 = vmatprep.subr.mxu0 0.0
      %2512 = vmatpush1.msra.mxu0 0.0
      %2513 = vmatprep.subr.mxu0 0.0
      %2514 = vmatpush1.msra.mxu0 0.0
      %2515 = vmatprep.subr.mxu0 0.0
      %2516 = vmatpush1.msra.mxu0 0.0
      %2517 = vmatprep.subr.mxu0 0.0
      %2518 = vmatpush1.msra.mxu0 0.0
      %2519 = vmatprep.subr.mxu0 0.0
      %2520 = vmatpush1.msra.mxu0 0.0
      %2521 = vmatprep.subr.mxu0 0.0
      %2522 = vmatpush1.msra.mxu0 0.0
      %2523 = vmatprep.subr.mxu0 0.0
      %2524 = vmatpush1.msra.mxu0 0.0
      %2525 = vmatprep.subr.mxu0 0.0
      %2526 = vmatpush1.msra.mxu0 0.0
      %2527 = vmatprep.mubr.f32.mxu0 0.0
      %2528 = vmatmul.mubr.f32.gmra.mrb[0].mxu0 %v2461
      %v2529 = vpop.f32.mrb[0].mxu0
      %v2530 = vadd.f32 0.0, %v2529
      %v2531 = vpop.f32.mrb[0].mxu0
      %2532 = vdwg.mxu0
      %v2533 = vadd.f32 %v2034, %v2530
      %v2534 = vld [vmem:[%s11] sm:$0x1]
      %v2536 = vlaneseq
      %v2537 = vshrl.u32 %v2536, 7
      %v2538 = vsub.s32 0, %v2537
      %v2539 = vrot.slane %v2534, %v2538
      %v2541 = vadd.f32 %v2533, %v2539
      %v2542 = vadd.f32 %v2541, %v520
      %v2543 = vsel %vm540, %v2542, 0.0
      %2544 = vadd.xlane.f32.xlu0 %v2543
      %v2545 = vpop.xlane.xlu0 %2544
      %v2546 = vrcp.pop 32.0
      %v2547 = vmul.f32 %v2545, %v2546
      %v2548 = vsub.f32 %v2542, %v2547
      %v2549 = vmul.f32 %v2548, %v2548
      %v2550 = vsel %vm540, %v2549, 0.0
      %2551 = vadd.xlane.f32.xlu0 %v2550
      %v2552 = vpop.xlane.xlu0 %2551
      %v2553 = vmul.f32 %v2552, %v2546
      %v2554 = vadd.f32 %v2553, 1e-05
      %v2555 = vrsqrt.pop %v2554
      %v2556 = vmul.f32 %v2548, %v2555
      %v2557 = vld [vmem:[%s12] sm:$0x1]
      %v2559 = vlaneseq
      %v2560 = vshrl.u32 %v2559, 7
      %v2561 = vsub.s32 0, %v2560
      %v2562 = vrot.slane %v2557, %v2561
      %v2564 = vmul.f32 %v2556, %v2562
      %v2565 = vld [vmem:[%s13] sm:$0x1]
      %v2567 = vlaneseq
      %v2568 = vshrl.u32 %v2567, 7
      %v2569 = vsub.s32 0, %v2568
      %v2570 = vrot.slane %v2565, %v2569
      %v2572 = vadd.f32 %v2564, %v2570
      %2573 = vst.msk [vmem:[%s519] sm:$0xff] %vm540, %v2572
      %p2574 = scmp.lt.s32.totalorder %s25, 1
      %s2575 = scalar_select %p2574, %s25, 1
      %s2576 = smul.addr %s2575, 8
      %s2577 = scalar_lea.vmem %s14, %s2576
      // Predicated region
      $region77: #{transformer_decoder.8} parent=75 // pred_check
        %p2578 = pneg %p357
      $region78: #{transformer_decoder.8} parent=75 // pred_check_branch
        %2580 = sbr.rel (%p2578) target = $region80
      $region79: #{transformer_decoder.8} parent=75 // pred_region
        _
      $region80: #{transformer_decoder.8} parent=75 // pred_fallthru
        _
    $region76: #{transformer_decoder.8} parent=5 // pred_fallthru
      _
    %p2581 = scmp.le.s32.totalorder 2, %s20
    // Predicated region
    $region81: #{transformer_decoder.8} parent=5 // pred_check
      %p2582 = pneg %p2581
    $region82: #{transformer_decoder.8} parent=5 // pred_check_branch
      %2584 = sbr.rel (%p2582) target = $region84
    $region83: #{transformer_decoder.8} parent=5 // pred_region
      %s2585 = ssub.s32 %s20, 2
      // Predicated region
      $region85: #{transformer_decoder.8} parent=83 // pred_check
        %p2586 = pneg %p363
      $region86: #{transformer_decoder.8} parent=83 // pred_check_branch
        %2588 = sbr.rel (%p2586) target = $region88
      $region87: #{transformer_decoder.8} parent=83 // pred_region
        %p2589 = scmp.lt.s32.totalorder %s26, 1
        %s2590 = scalar_select %p2589, %s26, 1
        %s2591 = smul.addr %s2590, 8
        %s2592 = scalar_lea.vmem %s14, %s2591
      $region88: #{transformer_decoder.8} parent=83 // pred_fallthru
        _
    $region84: #{transformer_decoder.8} parent=5 // pred_fallthru
      _
  $region6: #{transformer_decoder.8} parent=0 // loop_footer
    %s24 = sadd.s32 1, %s20
  $region7: #{transformer_decoder.8} parent=0 // loop_footer_branch
    %19 = sbr.rel target = $region3
  $region8: #{transformer_decoder.8} parent=0 // loop_exit
    _

// kernel: transformer_decoder.7
$region0: #{transformer_decoder.7}
  #allocation0 [shape = 'u32[]', space=smem, size = 0x4, offset = 0x4, fixed_abs, tag = 'smem constant byte address 0x4 - core index']
  #allocation1 [shape = 'u32[144,128]{1,0:T(1,128)}', space=vmem, size = 0x12000, scoped, tag = 'internal scratch']
  %s0 = inlined_call_operand.vmem [shape: f32[2,8,32], index: 0, kind: input, shape index: {}, may-alias: {0,2}]
  %s1 = inlined_call_operand.vmem [shape: f32[2,8,32], index: 1, kind: input, shape index: {}, may-alias: {1,3}]
  %s2 = inlined_call_operand.vmem [shape: f32[2,8,32], index: 2, kind: input, shape index: {}, may-alias: {0,2}]
  %s3 = inlined_call_operand.vmem [shape: f32[2,8,32], index: 3, kind: input, shape index: {}, may-alias: {1,3}]
  %s4 = inlined_call_operand.vmem [shape: f32[4,32,8], index: 4, kind: input, shape index: {}]
  %s5 = inlined_call_operand.vmem [shape: f32[4,1,8], index: 5, kind: input, shape index: {}]
  %s6 = inlined_call_operand.vmem [shape: f32[4,32,8], index: 6, kind: input, shape index: {}]
  %s7 = inlined_call_operand.vmem [shape: f32[4,1,8], index: 7, kind: input, shape index: {}]
  %s8 = inlined_call_operand.vmem [shape: f32[4,32,8], index: 8, kind: input, shape index: {}]
  %s9 = inlined_call_operand.vmem [shape: f32[4,1,8], index: 9, kind: input, shape index: {}]
  %s10 = inlined_call_operand.vmem [shape: f32[4,8,32], index: 10, kind: input, shape index: {}]
  %s11 = inlined_call_operand.vmem [shape: f32[1,32], index: 11, kind: input, shape index: {}]
  %s12 = inlined_call_operand.vmem [shape: f32[1,32], index: 12, kind: input, shape index: {}]
  %s13 = inlined_call_operand.vmem [shape: f32[1,32], index: 13, kind: input, shape index: {}]
  %s14 = inlined_call_operand.vmem [shape: f32[2,8,32], index: 14, kind: output, shape index: {}]
  %s15 = sld [smem:[#allocation0]]
  $region89: #{transformer_decoder.7} parent=0
    _
  %s17 = ssub.s32 1, %s15
  %s18 = scalar_select 0, %s17, %s15
  loop: start=0, step=1, limit=4
  $region2: #{transformer_decoder.7} parent=0 // loop_pre_header
    _
  $region3: #{transformer_decoder.7} parent=0 // loop_header
    %s20 = sphi 0, %s24
    %p21 = scmp.ge.s32.totalorder %s20, 4
    %s30 = sphi 0, %s32
    %s33 = sphi 0, %s30
    %s34 = sphi 0, %s33
    %s50 = sphi 0, %s34
    %s56 = sphi 0, %s58
    %s59 = sphi 0, %s56
    %s60 = sphi 0, %s59
    %s76 = sphi 0, %s60
    %s82 = sphi 0, %s84
    %s85 = sphi 0, %s82
    %s86 = sphi 0, %s85
    %s102 = sphi 0, %s86
    %s108 = sphi 0, %s110
    %s111 = sphi 0, %s108
    %s112 = sphi 0, %s111
    %s128 = sphi 0, %s112
    %s132 = sphi 0, %s132
    %s134 = sphi 0, %s132
    %s135 = sphi 0, %s134
    %s149 = sphi 0, %s135
    %s153 = sphi 0, %s153
    %s155 = sphi 0, %s153
    %s156 = sphi 0, %s155
    %s170 = sphi 0, %s156
    %s174 = sphi 0, %s174
    %s176 = sphi 0, %s174
    %s177 = sphi 0, %s176
    %s191 = sphi 0, %s177
    %s195 = sphi 0, %s195
    %s197 = sphi 0, %s195
    %s198 = sphi 0, %s197
    %s212 = sphi 0, %s198
    %s216 = sphi 0, %s216
    %s218 = sphi 0, %s216
    %s219 = sphi 0, %s218
    %s233 = sphi 0, %s219
    %s237 = sphi 0, %s237
    %s239 = sphi 0, %s237
    %s240 = sphi 0, %s239
    %s254 = sphi 0, %s240
    %s258 = sphi 0, %s258
    %s260 = sphi 0, %s258
    %s261 = sphi 0, %s260
    %s275 = sphi 0, %s261
    %s279 = sphi 0, %s279
    %s281 = sphi 0, %s279
    %s282 = sphi 0, %s281
    %s296 = sphi 0, %s282
    %s300 = sphi 0, %s300
    %s302 = sphi 0, %s300
    %s303 = sphi 0, %s302
    %s317 = sphi 0, %s303
    %s321 = sphi 0, %s321
    %s323 = sphi 0, %s321
    %s324 = sphi 0, %s323
    %s338 = sphi 0, %s324
    %s344 = sphi 0, %s346
    %s347 = sphi 0, %s344
    %s348 = sphi 0, %s347
    %s364 = sphi 0, %s348
  $region4: #{transformer_decoder.7} parent=0 // loop_header_branch
    %23 = sbr.rel (%p21) target = $region8
  $region5: #{transformer_decoder.7} parent=0 // loop_body
    %s25 = ssub.s32 %s20, 1
    %s26 = ssub.s32 %s20, 2
    %s27 = sadd.s32 %s20, 1
    %s28 = ssub.s32 %s20, %s27
    %p29 = scmp.eq.s32.totalorder %s28, 0
    %s31 = sadd.s32 %s30, 1
    %s32 = scalar_select %p29, %s30, %s31
    %p35 = pneg %p29
    %p36 = scmp.eq.s32.totalorder %s20, 1
    %p37 = por %p35, %p36
    %p38 = scmp.ne.s32.totalorder %s30, %s33
    %p39 = scmp.eq.s32.totalorder %s20, 0
    %p40 = por %p38, %p39
    %p41 = scmp.ne.s32.totalorder %s30, %s33
    %p42 = scmp.eq.s32.totalorder %s25, 1
    %p43 = por %p41, %p42
    %p44 = scmp.ne.s32.totalorder %s33, %s34
    %p45 = scmp.eq.s32.totalorder %s25, 0
    %p46 = por %p44, %p45
    %p47 = scmp.ne.s32.totalorder %s33, %s34
    %p48 = scmp.eq.s32.totalorder %s26, 1
    %p49 = por %p47, %p48
    %p51 = scmp.ne.s32.totalorder %s34, %s50
    %p52 = scmp.eq.s32.totalorder %s26, 0
    %p53 = por %p51, %p52
    %s54 = ssub.s32 %s20, %s27
    %p55 = scmp.eq.s32.totalorder %s54, 0
    %s57 = sadd.s32 %s56, 1
    %s58 = scalar_select %p55, %s56, %s57
    %p61 = pneg %p55
    %p62 = scmp.eq.s32.totalorder %s20, 1
    %p63 = por %p61, %p62
    %p64 = scmp.ne.s32.totalorder %s56, %s59
    %p65 = scmp.eq.s32.totalorder %s20, 0
    %p66 = por %p64, %p65
    %p67 = scmp.ne.s32.totalorder %s56, %s59
    %p68 = scmp.eq.s32.totalorder %s25, 1
    %p69 = por %p67, %p68
    %p70 = scmp.ne.s32.totalorder %s59, %s60
    %p71 = scmp.eq.s32.totalorder %s25, 0
    %p72 = por %p70, %p71
    %p73 = scmp.ne.s32.totalorder %s59, %s60
    %p74 = scmp.eq.s32.totalorder %s26, 1
    %p75 = por %p73, %p74
    %p77 = scmp.ne.s32.totalorder %s60, %s76
    %p78 = scmp.eq.s32.totalorder %s26, 0
    %p79 = por %p77, %p78
    %s80 = ssub.s32 %s20, %s27
    %p81 = scmp.eq.s32.totalorder %s80, 0
    %s83 = sadd.s32 %s82, 1
    %s84 = scalar_select %p81, %s82, %s83
    %p87 = pneg %p81
    %p88 = scmp.eq.s32.totalorder %s20, 1
    %p89 = por %p87, %p88
    %p90 = scmp.ne.s32.totalorder %s82, %s85
    %p91 = scmp.eq.s32.totalorder %s20, 0
    %p92 = por %p90, %p91
    %p93 = scmp.ne.s32.totalorder %s82, %s85
    %p94 = scmp.eq.s32.totalorder %s25, 1
    %p95 = por %p93, %p94
    %p96 = scmp.ne.s32.totalorder %s85, %s86
    %p97 = scmp.eq.s32.totalorder %s25, 0
    %p98 = por %p96, %p97
    %p99 = scmp.ne.s32.totalorder %s85, %s86
    %p100 = scmp.eq.s32.totalorder %s26, 1
    %p101 = por %p99, %p100
    %p103 = scmp.ne.s32.totalorder %s86, %s102
    %p104 = scmp.eq.s32.totalorder %s26, 0
    %p105 = por %p103, %p104
    %s106 = ssub.s32 %s20, %s27
    %p107 = scmp.eq.s32.totalorder %s106, 0
    %s109 = sadd.s32 %s108, 1
    %s110 = scalar_select %p107, %s108, %s109
    %p113 = pneg %p107
    %p114 = scmp.eq.s32.totalorder %s20, 1
    %p115 = por %p113, %p114
    %p116 = scmp.ne.s32.totalorder %s108, %s111
    %p117 = scmp.eq.s32.totalorder %s20, 0
    %p118 = por %p116, %p117
    %p119 = scmp.ne.s32.totalorder %s108, %s111
    %p120 = scmp.eq.s32.totalorder %s25, 1
    %p121 = por %p119, %p120
    %p122 = scmp.ne.s32.totalorder %s111, %s112
    %p123 = scmp.eq.s32.totalorder %s25, 0
    %p124 = por %p122, %p123
    %p125 = scmp.ne.s32.totalorder %s111, %s112
    %p126 = scmp.eq.s32.totalorder %s26, 1
    %p127 = por %p125, %p126
    %p129 = scmp.ne.s32.totalorder %s112, %s128
    %p130 = scmp.eq.s32.totalorder %s26, 0
    %p131 = por %p129, %p130
    %s133 = sadd.s32 %s132, 1
    %p136 = scmp.eq.s32.totalorder %s20, 1
    %p137 = scmp.ne.s32.totalorder %s132, %s134
    %p138 = scmp.eq.s32.totalorder %s20, 0
    %p139 = por %p137, %p138
    %p140 = scmp.ne.s32.totalorder %s132, %s134
    %p141 = scmp.eq.s32.totalorder %s25, 1
    %p142 = por %p140, %p141
    %p143 = scmp.ne.s32.totalorder %s134, %s135
    %p144 = scmp.eq.s32.totalorder %s25, 0
    %p145 = por %p143, %p144
    %p146 = scmp.ne.s32.totalorder %s134, %s135
    %p147 = scmp.eq.s32.totalorder %s26, 1
    %p148 = por %p146, %p147
    %p150 = scmp.ne.s32.totalorder %s135, %s149
    %p151 = scmp.eq.s32.totalorder %s26, 0
    %p152 = por %p150, %p151
    %s154 = sadd.s32 %s153, 1
    %p157 = scmp.eq.s32.totalorder %s20, 1
    %p158 = scmp.ne.s32.totalorder %s153, %s155
    %p159 = scmp.eq.s32.totalorder %s20, 0
    %p160 = por %p158, %p159
    %p161 = scmp.ne.s32.totalorder %s153, %s155
    %p162 = scmp.eq.s32.totalorder %s25, 1
    %p163 = por %p161, %p162
    %p164 = scmp.ne.s32.totalorder %s155, %s156
    %p165 = scmp.eq.s32.totalorder %s25, 0
    %p166 = por %p164, %p165
    %p167 = scmp.ne.s32.totalorder %s155, %s156
    %p168 = scmp.eq.s32.totalorder %s26, 1
    %p169 = por %p167, %p168
    %p171 = scmp.ne.s32.totalorder %s156, %s170
    %p172 = scmp.eq.s32.totalorder %s26, 0
    %p173 = por %p171, %p172
    %s175 = sadd.s32 %s174, 1
    %p178 = scmp.eq.s32.totalorder %s20, 1
    %p179 = scmp.ne.s32.totalorder %s174, %s176
    %p180 = scmp.eq.s32.totalorder %s20, 0
    %p181 = por %p179, %p180
    %p182 = scmp.ne.s32.totalorder %s174, %s176
    %p183 = scmp.eq.s32.totalorder %s25, 1
    %p184 = por %p182, %p183
    %p185 = scmp.ne.s32.totalorder %s176, %s177
    %p186 = scmp.eq.s32.totalorder %s25, 0
    %p187 = por %p185, %p186
    %p188 = scmp.ne.s32.totalorder %s176, %s177
    %p189 = scmp.eq.s32.totalorder %s26, 1
    %p190 = por %p188, %p189
    %p192 = scmp.ne.s32.totalorder %s177, %s191
    %p193 = scmp.eq.s32.totalorder %s26, 0
    %p194 = por %p192, %p193
    %s196 = sadd.s32 %s195, 1
    %p199 = scmp.eq.s32.totalorder %s20, 1
    %p200 = scmp.ne.s32.totalorder %s195, %s197
    %p201 = scmp.eq.s32.totalorder %s20, 0
    %p202 = por %p200, %p201
    %p203 = scmp.ne.s32.totalorder %s195, %s197
    %p204 = scmp.eq.s32.totalorder %s25, 1
    %p205 = por %p203, %p204
    %p206 = scmp.ne.s32.totalorder %s197, %s198
    %p207 = scmp.eq.s32.totalorder %s25, 0
    %p208 = por %p206, %p207
    %p209 = scmp.ne.s32.totalorder %s197, %s198
    %p210 = scmp.eq.s32.totalorder %s26, 1
    %p211 = por %p209, %p210
    %p213 = scmp.ne.s32.totalorder %s198, %s212
    %p214 = scmp.eq.s32.totalorder %s26, 0
    %p215 = por %p213, %p214
    %s217 = sadd.s32 %s216, 1
    %p220 = scmp.eq.s32.totalorder %s20, 1
    %p221 = scmp.ne.s32.totalorder %s216, %s218
    %p222 = scmp.eq.s32.totalorder %s20, 0
    %p223 = por %p221, %p222
    %p224 = scmp.ne.s32.totalorder %s216, %s218
    %p225 = scmp.eq.s32.totalorder %s25, 1
    %p226 = por %p224, %p225
    %p227 = scmp.ne.s32.totalorder %s218, %s219
    %p228 = scmp.eq.s32.totalorder %s25, 0
    %p229 = por %p227, %p228
    %p230 = scmp.ne.s32.totalorder %s218, %s219
    %p231 = scmp.eq.s32.totalorder %s26, 1
    %p232 = por %p230, %p231
    %p234 = scmp.ne.s32.totalorder %s219, %s233
    %p235 = scmp.eq.s32.totalorder %s26, 0
    %p236 = por %p234, %p235
    %s238 = sadd.s32 %s237, 1
    %p241 = scmp.eq.s32.totalorder %s20, 1
    %p242 = scmp.ne.s32.totalorder %s237, %s239
    %p243 = scmp.eq.s32.totalorder %s20, 0
    %p244 = por %p242, %p243
    %p245 = scmp.ne.s32.totalorder %s237, %s239
    %p246 = scmp.eq.s32.totalorder %s25, 1
    %p247 = por %p245, %p246
    %p248 = scmp.ne.s32.totalorder %s239, %s240
    %p249 = scmp.eq.s32.totalorder %s25, 0
    %p250 = por %p248, %p249
    %p251 = scmp.ne.s32.totalorder %s239, %s240
    %p252 = scmp.eq.s32.totalorder %s26, 1
    %p253 = por %p251, %p252
    %p255 = scmp.ne.s32.totalorder %s240, %s254
    %p256 = scmp.eq.s32.totalorder %s26, 0
    %p257 = por %p255, %p256
    %s259 = sadd.s32 %s258, 1
    %p262 = scmp.eq.s32.totalorder %s20, 1
    %p263 = scmp.ne.s32.totalorder %s258, %s260
    %p264 = scmp.eq.s32.totalorder %s20, 0
    %p265 = por %p263, %p264
    %p266 = scmp.ne.s32.totalorder %s258, %s260
    %p267 = scmp.eq.s32.totalorder %s25, 1
    %p268 = por %p266, %p267
    %p269 = scmp.ne.s32.totalorder %s260, %s261
    %p270 = scmp.eq.s32.totalorder %s25, 0
    %p271 = por %p269, %p270
    %p272 = scmp.ne.s32.totalorder %s260, %s261
    %p273 = scmp.eq.s32.totalorder %s26, 1
    %p274 = por %p272, %p273
    %p276 = scmp.ne.s32.totalorder %s261, %s275
    %p277 = scmp.eq.s32.totalorder %s26, 0
    %p278 = por %p276, %p277
    %s280 = sadd.s32 %s279, 1
    %p283 = scmp.eq.s32.totalorder %s20, 1
    %p284 = scmp.ne.s32.totalorder %s279, %s281
    %p285 = scmp.eq.s32.totalorder %s20, 0
    %p286 = por %p284, %p285
    %p287 = scmp.ne.s32.totalorder %s279, %s281
    %p288 = scmp.eq.s32.totalorder %s25, 1
    %p289 = por %p287, %p288
    %p290 = scmp.ne.s32.totalorder %s281, %s282
    %p291 = scmp.eq.s32.totalorder %s25, 0
    %p292 = por %p290, %p291
    %p293 = scmp.ne.s32.totalorder %s281, %s282
    %p294 = scmp.eq.s32.totalorder %s26, 1
    %p295 = por %p293, %p294
    %p297 = scmp.ne.s32.totalorder %s282, %s296
    %p298 = scmp.eq.s32.totalorder %s26, 0
    %p299 = por %p297, %p298
    %s301 = sadd.s32 %s300, 1
    %p304 = scmp.eq.s32.totalorder %s20, 1
    %p305 = scmp.ne.s32.totalorder %s300, %s302
    %p306 = scmp.eq.s32.totalorder %s20, 0
    %p307 = por %p305, %p306
    %p308 = scmp.ne.s32.totalorder %s300, %s302
    %p309 = scmp.eq.s32.totalorder %s25, 1
    %p310 = por %p308, %p309
    %p311 = scmp.ne.s32.totalorder %s302, %s303
    %p312 = scmp.eq.s32.totalorder %s25, 0
    %p313 = por %p311, %p312
    %p314 = scmp.ne.s32.totalorder %s302, %s303
    %p315 = scmp.eq.s32.totalorder %s26, 1
    %p316 = por %p314, %p315
    %p318 = scmp.ne.s32.totalorder %s303, %s317
    %p319 = scmp.eq.s32.totalorder %s26, 0
    %p320 = por %p318, %p319
    %s322 = sadd.s32 %s321, 1
    %p325 = scmp.eq.s32.totalorder %s20, 1
    %p326 = scmp.ne.s32.totalorder %s321, %s323
    %p327 = scmp.eq.s32.totalorder %s20, 0
    %p328 = por %p326, %p327
    %p329 = scmp.ne.s32.totalorder %s321, %s323
    %p330 = scmp.eq.s32.totalorder %s25, 1
    %p331 = por %p329, %p330
    %p332 = scmp.ne.s32.totalorder %s323, %s324
    %p333 = scmp.eq.s32.totalorder %s25, 0
    %p334 = por %p332, %p333
    %p335 = scmp.ne.s32.totalorder %s323, %s324
    %p336 = scmp.eq.s32.totalorder %s26, 1
    %p337 = por %p335, %p336
    %p339 = scmp.ne.s32.totalorder %s324, %s338
    %p340 = scmp.eq.s32.totalorder %s26, 0
    %p341 = por %p339, %p340
    %s342 = ssub.s32 %s20, %s27
    %p343 = scmp.eq.s32.totalorder %s342, 0
    %s345 = sadd.s32 %s344, 1
    %s346 = scalar_select %p343, %s344, %s345
    %p349 = pneg %p343
    %p350 = scmp.eq.s32.totalorder %s20, 1
    %p351 = por %p349, %p350
    %p352 = scmp.ne.s32.totalorder %s344, %s347
    %p353 = scmp.eq.s32.totalorder %s20, 0
    %p354 = por %p352, %p353
    %p355 = scmp.ne.s32.totalorder %s344, %s347
    %p356 = scmp.eq.s32.totalorder %s25, 1
    %p357 = por %p355, %p356
    %p358 = scmp.ne.s32.totalorder %s347, %s348
    %p359 = scmp.eq.s32.totalorder %s25, 0
    %p360 = por %p358, %p359
    %p361 = scmp.ne.s32.totalorder %s347, %s348
    %p362 = scmp.eq.s32.totalorder %s26, 1
    %p363 = por %p361, %p362
    %p365 = scmp.ne.s32.totalorder %s348, %s364
    %p366 = scmp.eq.s32.totalorder %s26, 0
    %p367 = por %p365, %p366
    %p368 = scmp.le.s32.totalorder 1, %s20
    %p369 = scmp.lt.s32.totalorder %s20, 3
    %p370 = pnand %p368, %p369
    %p371 = pneg %p370
    // Predicated region
    $region9: #{transformer_decoder.7} parent=5 // pred_check
      _
    $region10: #{transformer_decoder.7} parent=5 // pred_check_branch
      %373 = sbr.rel (%p370) target = $region12
    $region11: #{transformer_decoder.7} parent=5 // pred_region
      %s374 = ssub.s32 %s20, 1
      // Predicated region
      $region13: #{transformer_decoder.7} parent=11 // pred_check
        %p375 = pneg %p145
      $region14: #{transformer_decoder.7} parent=11 // pred_check_branch
        %377 = sbr.rel (%p375) target = $region16
      $region15: #{transformer_decoder.7} parent=11 // pred_region
        _
      $region16: #{transformer_decoder.7} parent=11 // pred_fallthru
        _
      // Predicated region
      $region17: #{transformer_decoder.7} parent=11 // pred_check
        %p378 = pneg %p166
      $region18: #{transformer_decoder.7} parent=11 // pred_check_branch
        %380 = sbr.rel (%p378) target = $region20
      $region19: #{transformer_decoder.7} parent=11 // pred_region
        _
      $region20: #{transformer_decoder.7} parent=11 // pred_fallthru
        _
      // Predicated region
      $region21: #{transformer_decoder.7} parent=11 // pred_check
        %p381 = pneg %p187
      $region22: #{transformer_decoder.7} parent=11 // pred_check_branch
        %383 = sbr.rel (%p381) target = $region24
      $region23: #{transformer_decoder.7} parent=11 // pred_region
        _
      $region24: #{transformer_decoder.7} parent=11 // pred_fallthru
        _
      // Predicated region
      $region25: #{transformer_decoder.7} parent=11 // pred_check
        %p384 = pneg %p208
      $region26: #{transformer_decoder.7} parent=11 // pred_check_branch
        %386 = sbr.rel (%p384) target = $region28
      $region27: #{transformer_decoder.7} parent=11 // pred_region
        _
      $region28: #{transformer_decoder.7} parent=11 // pred_fallthru
        _
      // Predicated region
      $region29: #{transformer_decoder.7} parent=11 // pred_check
        %p387 = pneg %p229
      $region30: #{transformer_decoder.7} parent=11 // pred_check_branch
        %389 = sbr.rel (%p387) target = $region32
      $region31: #{transformer_decoder.7} parent=11 // pred_region
        _
      $region32: #{transformer_decoder.7} parent=11 // pred_fallthru
        _
      // Predicated region
      $region33: #{transformer_decoder.7} parent=11 // pred_check
        %p390 = pneg %p250
      $region34: #{transformer_decoder.7} parent=11 // pred_check_branch
        %392 = sbr.rel (%p390) target = $region36
      $region35: #{transformer_decoder.7} parent=11 // pred_region
        _
      $region36: #{transformer_decoder.7} parent=11 // pred_fallthru
        _
      // Predicated region
      $region37: #{transformer_decoder.7} parent=11 // pred_check
        %p393 = pneg %p271
      $region38: #{transformer_decoder.7} parent=11 // pred_check_branch
        %395 = sbr.rel (%p393) target = $region40
      $region39: #{transformer_decoder.7} parent=11 // pred_region
        _
      $region40: #{transformer_decoder.7} parent=11 // pred_fallthru
        _
      // Predicated region
      $region41: #{transformer_decoder.7} parent=11 // pred_check
        %p396 = pneg %p292
      $region42: #{transformer_decoder.7} parent=11 // pred_check_branch
        %398 = sbr.rel (%p396) target = $region44
      $region43: #{transformer_decoder.7} parent=11 // pred_region
        _
      $region44: #{transformer_decoder.7} parent=11 // pred_fallthru
        _
      // Predicated region
      $region45: #{transformer_decoder.7} parent=11 // pred_check
        %p399 = pneg %p313
      $region46: #{transformer_decoder.7} parent=11 // pred_check_branch
        %401 = sbr.rel (%p399) target = $region48
      $region47: #{transformer_decoder.7} parent=11 // pred_region
        _
      $region48: #{transformer_decoder.7} parent=11 // pred_fallthru
        _
      // Predicated region
      $region49: #{transformer_decoder.7} parent=11 // pred_check
        %p402 = pneg %p334
      $region50: #{transformer_decoder.7} parent=11 // pred_check_branch
        %404 = sbr.rel (%p402) target = $region52
      $region51: #{transformer_decoder.7} parent=11 // pred_region
        _
      $region52: #{transformer_decoder.7} parent=11 // pred_fallthru
        _
    $region12: #{transformer_decoder.7} parent=5 // pred_fallthru
      _
    %p405 = scmp.lt.s32.totalorder %s20, 2
    // Predicated region
    $region53: #{transformer_decoder.7} parent=5 // pred_check
      %p406 = pneg %p405
    $region54: #{transformer_decoder.7} parent=5 // pred_check_branch
      %408 = sbr.rel (%p406) target = $region56
    $region55: #{transformer_decoder.7} parent=5 // pred_region
      // Predicated region
      $region57: #{transformer_decoder.7} parent=55 // pred_check
        %p409 = pneg %p40
      $region58: #{transformer_decoder.7} parent=55 // pred_check_branch
        %411 = sbr.rel (%p409) target = $region60
      $region59: #{transformer_decoder.7} parent=55 // pred_region
        %p412 = scmp.lt.s32.totalorder %s20, 1
        %s413 = scalar_select %p412, %s20, 1
        %s414 = smul.addr %s413, 8
        %s415 = scalar_lea.vmem %s0, %s414
      $region60: #{transformer_decoder.7} parent=55 // pred_fallthru
        _
      // Predicated region
      $region61: #{transformer_decoder.7} parent=55 // pred_check
        %p416 = pneg %p66
      $region62: #{transformer_decoder.7} parent=55 // pred_check_branch
        %418 = sbr.rel (%p416) target = $region64
      $region63: #{transformer_decoder.7} parent=55 // pred_region
        %p419 = scmp.lt.s32.totalorder %s20, 1
        %s420 = scalar_select %p419, %s20, 1
        %s421 = smul.addr %s420, 8
        %s422 = scalar_lea.vmem %s1, %s421
      $region64: #{transformer_decoder.7} parent=55 // pred_fallthru
        _
      // Predicated region
      $region65: #{transformer_decoder.7} parent=55 // pred_check
        %p423 = pneg %p92
      $region66: #{transformer_decoder.7} parent=55 // pred_check_branch
        %425 = sbr.rel (%p423) target = $region68
      $region67: #{transformer_decoder.7} parent=55 // pred_region
        %p426 = scmp.lt.s32.totalorder %s20, 1
        %s427 = scalar_select %p426, %s20, 1
        %s428 = smul.addr %s427, 8
        %s429 = scalar_lea.vmem %s2, %s428
      $region68: #{transformer_decoder.7} parent=55 // pred_fallthru
        _
      // Predicated region
      $region69: #{transformer_decoder.7} parent=55 // pred_check
        %p430 = pneg %p118
      $region70: #{transformer_decoder.7} parent=55 // pred_check_branch
        %432 = sbr.rel (%p430) target = $region72
      $region71: #{transformer_decoder.7} parent=55 // pred_region
        %p433 = scmp.lt.s32.totalorder %s20, 1
        %s434 = scalar_select %p433, %s20, 1
        %s435 = smul.addr %s434, 8
        %s436 = scalar_lea.vmem %s3, %s435
      $region72: #{transformer_decoder.7} parent=55 // pred_fallthru
        _
    $region56: #{transformer_decoder.7} parent=5 // pred_fallthru
      _
    %p437 = scmp.le.s32.totalorder 1, %s20
    %p438 = scmp.lt.s32.totalorder %s20, 3
    %p439 = pnand %p437, %p438
    %p440 = pneg %p439
    // Predicated region
    $region73: #{transformer_decoder.7} parent=5 // pred_check
      _
    $region74: #{transformer_decoder.7} parent=5 // pred_check_branch
      %442 = sbr.rel (%p439) target = $region76
    $region75: #{transformer_decoder.7} parent=5 // pred_region
      %s443 = ssub.s32 %s20, 1
      %p444 = scmp.lt.s32.totalorder %s25, 1
      %s445 = scalar_select %p444, %s25, 1
      %s446 = smul.addr %s445, 8
      %s447 = scalar_lea.vmem %s0, %s446
      %p448 = pneg %p46
      %p449 = pneg %p43
      %p450 = scmp.lt.s32.totalorder %s25, 1
      %s451 = scalar_select %p450, %s25, 1
      %s452 = smul.addr %s451, 8
      %s453 = scalar_lea.vmem %s1, %s452
      %p454 = pneg %p72
      %p455 = pneg %p69
      %p456 = scmp.lt.s32.totalorder %s25, 1
      %s457 = scalar_select %p456, %s25, 1
      %s458 = smul.addr %s457, 8
      %s459 = scalar_lea.vmem %s2, %s458
      %p460 = pneg %p98
      %p461 = pneg %p95
      %p462 = scmp.lt.s32.totalorder %s25, 1
      %s463 = scalar_select %p462, %s25, 1
      %s464 = smul.addr %s463, 8
      %s465 = scalar_lea.vmem %s3, %s464
      %p466 = pneg %p124
      %p467 = pneg %p121
      %p468 = pneg %p145
      %p469 = pneg %p142
      %p470 = pneg %p166
      %p471 = pneg %p163
      %p472 = pneg %p187
      %p473 = pneg %p184
      %p474 = pneg %p208
      %p475 = pneg %p205
      %p476 = pneg %p229
      %p477 = pneg %p226
      %p478 = pneg %p250
      %p479 = pneg %p247
      %p480 = pneg %p271
      %p481 = pneg %p268
      %p482 = pneg %p292
      %p483 = pneg %p289
      %p484 = pneg %p313
      %p485 = pneg %p310
      %p486 = pneg %p334
      %p487 = pneg %p331
      %p488 = pneg %p360
      %p489 = pneg %p357
      %p490 = scmp.lt.s32.totalorder %s25, 1
      %s491 = scalar_select %p490, %s25, 1
      %s492 = smul.addr %s491, 8
      %s493 = scalar_lea.vmem %s14, %s492
      %p494 = scmp.lt.s32.totalorder %s25, 1
      %s495 = scalar_select %p494, %s25, 1
      %s496 = smul.addr %s495, 8
      %s497 = scalar_lea.vmem %s0, %s496
      %p498 = scmp.lt.s32.totalorder %s25, 1
      %s499 = scalar_select %p498, %s25, 1
      %s500 = smul.addr %s499, 8
      %s501 = scalar_lea.vmem %s1, %s500
      %p502 = scmp.lt.s32.totalorder %s25, 1
      %s503 = scalar_select %p502, %s25, 1
      %s504 = smul.addr %s503, 8
      %s505 = scalar_lea.vmem %s2, %s504
      %p506 = scmp.lt.s32.totalorder %s25, 1
      %s507 = scalar_select %p506, %s25, 1
      %s508 = smul.addr %s507, 8
      %s509 = scalar_lea.vmem %s3, %s508
      %p510 = scmp.lt.s32.totalorder %s25, 1
      %s511 = scalar_select %p510, %s25, 1
      %s512 = smul.addr %s511, 8
      %s513 = scalar_lea.vmem %s14, %s512
      %v514 = vld [vmem:[%s497] sm:$0xff]
      %v515 = vld [vmem:[%s501] sm:$0xff]
      %v516 = vadd.f32 %v514, %v515
      %v517 = vld [vmem:[%s505] sm:$0xff]
      %v518 = vld [vmem:[%s509] sm:$0xff]
      %v519 = vadd.f32 %v517, %v518
      %v520 = vld [vmem:[%s4] sm:$0xff]
      %v521 = vld [vmem:[%s4 + $0x8] sm:$0xff]
      %v522 = vld [vmem:[%s4 + $0x10] sm:$0xff]
      %v523 = vld [vmem:[%s4 + $0x18] sm:$0xff]
      %v524 = vld [vmem:[%s5] sm:$0x1]
      %v526 = vlaneseq
      %v527 = vshrl.u32 %v526, 7
      %v528 = vsub.s32 0, %v527
      %v529 = vrot.slane %v524, %v528
      %vm531 = vcmask 261120
      %v533 = vsel %vm531, %v516, 0
      %535 = vmatprep.subr.mxu0 0.0
      %536 = vmatpush1.msra.mxu0 %v520
      %537 = vmatprep.subr.mxu0 0.0
      %538 = vmatpush1.msra.mxu0 %v521
      %539 = vmatprep.subr.mxu0 0.0
      %540 = vmatpush1.msra.mxu0 %v522
      %541 = vmatprep.subr.mxu0 0.0
      %542 = vmatpush1.msra.mxu0 %v523
      %543 = vmatprep.subr.mxu0 0.0
      %544 = vmatpush1.msra.mxu0 0.0
      %545 = vmatprep.subr.mxu0 0.0
      %546 = vmatpush1.msra.mxu0 0.0
      %547 = vmatprep.subr.mxu0 0.0
      %548 = vmatpush1.msra.mxu0 0.0
      %549 = vmatprep.subr.mxu0 0.0
      %550 = vmatpush1.msra.mxu0 0.0
      %551 = vmatprep.subr.mxu0 0.0
      %552 = vmatpush1.msra.mxu0 0.0
      %553 = vmatprep.subr.mxu0 0.0
      %554 = vmatpush1.msra.mxu0 0.0
      %555 = vmatprep.subr.mxu0 0.0
      %556 = vmatpush1.msra.mxu0 0.0
      %557 = vmatprep.subr.mxu0 0.0
      %558 = vmatpush1.msra.mxu0 0.0
      %559 = vmatprep.subr.mxu0 0.0
      %560 = vmatpush1.msra.mxu0 0.0
      %561 = vmatprep.subr.mxu0 0.0
      %562 = vmatpush1.msra.mxu0 0.0
      %563 = vmatprep.subr.mxu0 0.0
      %564 = vmatpush1.msra.mxu0 0.0
      %565 = vmatprep.subr.mxu0 0.0
      %566 = vmatpush1.msra.mxu0 0.0
      %567 = vmatprep.subr.mxu0 0.0
      %568 = vmatpush1.msra.mxu0 0.0
      %569 = vmatprep.subr.mxu0 0.0
      %570 = vmatpush1.msra.mxu0 0.0
      %571 = vmatprep.subr.mxu0 0.0
      %572 = vmatpush1.msra.mxu0 0.0
      %573 = vmatprep.subr.mxu0 0.0
      %574 = vmatpush1.msra.mxu0 0.0
      %575 = vmatprep.subr.mxu0 0.0
      %576 = vmatpush1.msra.mxu0 0.0
      %577 = vmatprep.subr.mxu0 0.0
      %578 = vmatpush1.msra.mxu0 0.0
      %579 = vmatprep.subr.mxu0 0.0
      %580 = vmatpush1.msra.mxu0 0.0
      %581 = vmatprep.subr.mxu0 0.0
      %582 = vmatpush1.msra.mxu0 0.0
      %583 = vmatprep.subr.mxu0 0.0
      %584 = vmatpush1.msra.mxu0 0.0
      %585 = vmatprep.subr.mxu0 0.0
      %586 = vmatpush1.msra.mxu0 0.0
      %587 = vmatprep.subr.mxu0 0.0
      %588 = vmatpush1.msra.mxu0 0.0
      %589 = vmatprep.subr.mxu0 0.0
      %590 = vmatpush1.msra.mxu0 0.0
      %591 = vmatprep.subr.mxu0 0.0
      %592 = vmatpush1.msra.mxu0 0.0
      %593 = vmatprep.subr.mxu0 0.0
      %594 = vmatpush1.msra.mxu0 0.0
      %595 = vmatprep.subr.mxu0 0.0
      %596 = vmatpush1.msra.mxu0 0.0
      %597 = vmatprep.subr.mxu0 0.0
      %598 = vmatpush1.msra.mxu0 0.0
      %599 = vmatprep.mubr.f32.mxu0 0.0
      %600 = vmatmul.mubr.f32.gmra.mrb[0].mxu0 %v533
      %v601 = vpop.f32.mrb[0].mxu0
      %v602 = vadd.f32 %v529, %v601
      %v603 = vpop.f32.mrb[0].mxu0
      %604 = vdwg.mxu0
      %v605 = vld [vmem:[%s6] sm:$0xff]
      %v606 = vld [vmem:[%s6 + $0x8] sm:$0xff]
      %v607 = vld [vmem:[%s6 + $0x10] sm:$0xff]
      %v608 = vld [vmem:[%s6 + $0x18] sm:$0xff]
      %v609 = vld [vmem:[%s7] sm:$0x1]
      %v611 = vlaneseq
      %v612 = vshrl.u32 %v611, 7
      %v613 = vsub.s32 0, %v612
      %v614 = vrot.slane %v609, %v613
      %v617 = vsel %vm531, %v519, 0
      %619 = vmatprep.subr.mxu0 0.0
      %620 = vmatpush1.msra.mxu0 %v605
      %621 = vmatprep.subr.mxu0 0.0
      %622 = vmatpush1.msra.mxu0 %v606
      %623 = vmatprep.subr.mxu0 0.0
      %624 = vmatpush1.msra.mxu0 %v607
      %625 = vmatprep.subr.mxu0 0.0
      %626 = vmatpush1.msra.mxu0 %v608
      %627 = vmatprep.subr.mxu0 0.0
      %628 = vmatpush1.msra.mxu0 0.0
      %629 = vmatprep.subr.mxu0 0.0
      %630 = vmatpush1.msra.mxu0 0.0
      %631 = vmatprep.subr.mxu0 0.0
      %632 = vmatpush1.msra.mxu0 0.0
      %633 = vmatprep.subr.mxu0 0.0
      %634 = vmatpush1.msra.mxu0 0.0
      %635 = vmatprep.subr.mxu0 0.0
      %636 = vmatpush1.msra.mxu0 0.0
      %637 = vmatprep.subr.mxu0 0.0
      %638 = vmatpush1.msra.mxu0 0.0
      %639 = vmatprep.subr.mxu0 0.0
      %640 = vmatpush1.msra.mxu0 0.0
      %641 = vmatprep.subr.mxu0 0.0
      %642 = vmatpush1.msra.mxu0 0.0
      %643 = vmatprep.subr.mxu0 0.0
      %644 = vmatpush1.msra.mxu0 0.0
      %645 = vmatprep.subr.mxu0 0.0
      %646 = vmatpush1.msra.mxu0 0.0
      %647 = vmatprep.subr.mxu0 0.0
      %648 = vmatpush1.msra.mxu0 0.0
      %649 = vmatprep.subr.mxu0 0.0
      %650 = vmatpush1.msra.mxu0 0.0
      %651 = vmatprep.subr.mxu0 0.0
      %652 = vmatpush1.msra.mxu0 0.0
      %653 = vmatprep.subr.mxu0 0.0
      %654 = vmatpush1.msra.mxu0 0.0
      %655 = vmatprep.subr.mxu0 0.0
      %656 = vmatpush1.msra.mxu0 0.0
      %657 = vmatprep.subr.mxu0 0.0
      %658 = vmatpush1.msra.mxu0 0.0
      %659 = vmatprep.subr.mxu0 0.0
      %660 = vmatpush1.msra.mxu0 0.0
      %661 = vmatprep.subr.mxu0 0.0
      %662 = vmatpush1.msra.mxu0 0.0
      %663 = vmatprep.subr.mxu0 0.0
      %664 = vmatpush1.msra.mxu0 0.0
      %665 = vmatprep.subr.mxu0 0.0
      %666 = vmatpush1.msra.mxu0 0.0
      %667 = vmatprep.subr.mxu0 0.0
      %668 = vmatpush1.msra.mxu0 0.0
      %669 = vmatprep.subr.mxu0 0.0
      %670 = vmatpush1.msra.mxu0 0.0
      %671 = vmatprep.subr.mxu0 0.0
      %672 = vmatpush1.msra.mxu0 0.0
      %673 = vmatprep.subr.mxu0 0.0
      %674 = vmatpush1.msra.mxu0 0.0
      %675 = vmatprep.subr.mxu0 0.0
      %676 = vmatpush1.msra.mxu0 0.0
      %677 = vmatprep.subr.mxu0 0.0
      %678 = vmatpush1.msra.mxu0 0.0
      %679 = vmatprep.subr.mxu0 0.0
      %680 = vmatpush1.msra.mxu0 0.0
      %681 = vmatprep.subr.mxu0 0.0
      %682 = vmatpush1.msra.mxu0 0.0
      %683 = vmatprep.mubr.f32.mxu0 0.0
      %684 = vmatmul.mubr.f32.gmra.mrb[0].mxu0 %v617
      %v685 = vpop.f32.mrb[0].mxu0
      %v686 = vadd.f32 %v614, %v685
      %v687 = vpop.f32.mrb[0].mxu0
      %688 = vdwg.mxu0
      %v689 = vld [vmem:[%s8] sm:$0xff]
      %v690 = vld [vmem:[%s8 + $0x8] sm:$0xff]
      %v691 = vld [vmem:[%s8 + $0x10] sm:$0xff]
      %v692 = vld [vmem:[%s8 + $0x18] sm:$0xff]
      %v693 = vld [vmem:[%s9] sm:$0x1]
      %v695 = vlaneseq
      %v696 = vshrl.u32 %v695, 7
      %v697 = vsub.s32 0, %v696
      %v698 = vrot.slane %v693, %v697
      %700 = vmatprep.subr.mxu0 0.0
      %701 = vmatpush1.msra.mxu0 %v689
      %702 = vmatprep.subr.mxu0 0.0
      %703 = vmatpush1.msra.mxu0 %v690
      %704 = vmatprep.subr.mxu0 0.0
      %705 = vmatpush1.msra.mxu0 %v691
      %706 = vmatprep.subr.mxu0 0.0
      %707 = vmatpush1.msra.mxu0 %v692
      %708 = vmatprep.subr.mxu0 0.0
      %709 = vmatpush1.msra.mxu0 0.0
      %710 = vmatprep.subr.mxu0 0.0
      %711 = vmatpush1.msra.mxu0 0.0
      %712 = vmatprep.subr.mxu0 0.0
      %713 = vmatpush1.msra.mxu0 0.0
      %714 = vmatprep.subr.mxu0 0.0
      %715 = vmatpush1.msra.mxu0 0.0
      %716 = vmatprep.subr.mxu0 0.0
      %717 = vmatpush1.msra.mxu0 0.0
      %718 = vmatprep.subr.mxu0 0.0
      %719 = vmatpush1.msra.mxu0 0.0
      %720 = vmatprep.subr.mxu0 0.0
      %721 = vmatpush1.msra.mxu0 0.0
      %722 = vmatprep.subr.mxu0 0.0
      %723 = vmatpush1.msra.mxu0 0.0
      %724 = vmatprep.subr.mxu0 0.0
      %725 = vmatpush1.msra.mxu0 0.0
      %726 = vmatprep.subr.mxu0 0.0
      %727 = vmatpush1.msra.mxu0 0.0
      %728 = vmatprep.subr.mxu0 0.0
      %729 = vmatpush1.msra.mxu0 0.0
      %730 = vmatprep.subr.mxu0 0.0
      %731 = vmatpush1.msra.mxu0 0.0
      %732 = vmatprep.subr.mxu0 0.0
      %733 = vmatpush1.msra.mxu0 0.0
      %734 = vmatprep.subr.mxu0 0.0
      %735 = vmatpush1.msra.mxu0 0.0
      %736 = vmatprep.subr.mxu0 0.0
      %737 = vmatpush1.msra.mxu0 0.0
      %738 = vmatprep.subr.mxu0 0.0
      %739 = vmatpush1.msra.mxu0 0.0
      %740 = vmatprep.subr.mxu0 0.0
      %741 = vmatpush1.msra.mxu0 0.0
      %742 = vmatprep.subr.mxu0 0.0
      %743 = vmatpush1.msra.mxu0 0.0
      %744 = vmatprep.subr.mxu0 0.0
      %745 = vmatpush1.msra.mxu0 0.0
      %746 = vmatprep.subr.mxu0 0.0
      %747 = vmatpush1.msra.mxu0 0.0
      %748 = vmatprep.subr.mxu0 0.0
      %749 = vmatpush1.msra.mxu0 0.0
      %750 = vmatprep.subr.mxu0 0.0
      %751 = vmatpush1.msra.mxu0 0.0
      %752 = vmatprep.subr.mxu0 0.0
      %753 = vmatpush1.msra.mxu0 0.0
      %754 = vmatprep.subr.mxu0 0.0
      %755 = vmatpush1.msra.mxu0 0.0
      %756 = vmatprep.subr.mxu0 0.0
      %757 = vmatpush1.msra.mxu0 0.0
      %758 = vmatprep.subr.mxu0 0.0
      %759 = vmatpush1.msra.mxu0 0.0
      %760 = vmatprep.subr.mxu0 0.0
      %761 = vmatpush1.msra.mxu0 0.0
      %762 = vmatprep.subr.mxu0 0.0
      %763 = vmatpush1.msra.mxu0 0.0
      %764 = vmatprep.mubr.f32.mxu0 0.0
      %765 = vmatmul.mubr.f32.gmra.mrb[0].mxu0 %v617
      %v766 = vpop.f32.mrb[0].mxu0
      %v767 = vadd.f32 %v698, %v766
      %v768 = vpop.f32.mrb[0].mxu0
      %769 = vdwg.mxu0
      %vm770 = vcmask 64512
      %v772 = vsel %vm770, %v602, 0
      %v775 = vsel %vm770, %v686, 0
      %777 = vmatprep.subr.mxu0 0.0
      %778 = vmatpush1.xpose.msra.mxu0 %v775
      %779 = vmatprep.subr.mxu0 0.0
      %780 = vmatpush1.xpose.msra.mxu0 0.0
      %781 = vmatprep.subr.mxu0 0.0
      %782 = vmatpush1.xpose.msra.mxu0 0.0
      %783 = vmatprep.subr.mxu0 0.0
      %784 = vmatpush1.xpose.msra.mxu0 0.0
      %785 = vmatprep.subr.mxu0 0.0
      %786 = vmatpush1.xpose.msra.mxu0 0.0
      %787 = vmatprep.subr.mxu0 0.0
      %788 = vmatpush1.xpose.msra.mxu0 0.0
      %789 = vmatprep.subr.mxu0 0.0
      %790 = vmatpush1.xpose.msra.mxu0 0.0
      %791 = vmatprep.subr.mxu0 0.0
      %792 = vmatpush1.xpose.msra.mxu0 0.0
      %793 = vmatprep.subr.mxu0 0.0
      %794 = vmatpush1.xpose.msra.mxu0 0.0
      %795 = vmatprep.subr.mxu0 0.0
      %796 = vmatpush1.xpose.msra.mxu0 0.0
      %797 = vmatprep.subr.mxu0 0.0
      %798 = vmatpush1.xpose.msra.mxu0 0.0
      %799 = vmatprep.subr.mxu0 0.0
      %800 = vmatpush1.xpose.msra.mxu0 0.0
      %801 = vmatprep.subr.mxu0 0.0
      %802 = vmatpush1.xpose.msra.mxu0 0.0
      %803 = vmatprep.subr.mxu0 0.0
      %804 = vmatpush1.xpose.msra.mxu0 0.0
      %805 = vmatprep.subr.mxu0 0.0
      %806 = vmatpush1.xpose.msra.mxu0 0.0
      %807 = vmatprep.subr.mxu0 0.0
      %808 = vmatpush1.xpose.msra.mxu0 0.0
      %809 = vmatprep.subr.mxu0 0.0
      %810 = vmatpush1.xpose.msra.mxu0 0.0
      %811 = vmatprep.subr.mxu0 0.0
      %812 = vmatpush1.xpose.msra.mxu0 0.0
      %813 = vmatprep.subr.mxu0 0.0
      %814 = vmatpush1.xpose.msra.mxu0 0.0
      %815 = vmatprep.subr.mxu0 0.0
      %816 = vmatpush1.xpose.msra.mxu0 0.0
      %817 = vmatprep.subr.mxu0 0.0
      %818 = vmatpush1.xpose.msra.mxu0 0.0
      %819 = vmatprep.subr.mxu0 0.0
      %820 = vmatpush1.xpose.msra.mxu0 0.0
      %821 = vmatprep.subr.mxu0 0.0
      %822 = vmatpush1.xpose.msra.mxu0 0.0
      %823 = vmatprep.subr.mxu0 0.0
      %824 = vmatpush1.xpose.msra.mxu0 0.0
      %825 = vmatprep.subr.mxu0 0.0
      %826 = vmatpush1.xpose.msra.mxu0 0.0
      %827 = vmatprep.subr.mxu0 0.0
      %828 = vmatpush1.xpose.msra.mxu0 0.0
      %829 = vmatprep.subr.mxu0 0.0
      %830 = vmatpush1.xpose.msra.mxu0 0.0
      %831 = vmatprep.subr.mxu0 0.0
      %832 = vmatpush1.xpose.msra.mxu0 0.0
      %833 = vmatprep.subr.mxu0 0.0
      %834 = vmatpush1.xpose.msra.mxu0 0.0
      %835 = vmatprep.subr.mxu0 0.0
      %836 = vmatpush1.xpose.msra.mxu0 0.0
      %837 = vmatprep.subr.mxu0 0.0
      %838 = vmatpush1.xpose.msra.mxu0 0.0
      %839 = vmatprep.subr.mxu0 0.0
      %840 = vmatpush1.xpose.msra.mxu0 0.0
      %841 = vmatprep.mubr.f32.mxu0 0.0
      %842 = vmatmul.mubr.f32.gmra.mrb[0].mxu0 %v772
      %v843 = vpop.f32.mrb[0].mxu0
      %v844 = vadd.f32 0.0, %v843
      %v845 = vpop.f32.mrb[0].mxu0
      %846 = vdwg.mxu0
      %v847 = vmul.f32 %v844, 0.35355338
      %v848 = vsel %vm770, %v847, -inf
      %849 = vmax.xlane.f32.xlu0 %v848
      %v850 = vpop.xlane.xlu0 %849
      %v851 = vsub.f32 %v847, %v850
      %v852 = vmul.f32 %v851, 1.442695
      %v853 = vpow.pop %v852
      %v854 = vsel %vm770, %v853, 0.0
      %855 = vadd.xlane.f32.xlu0 %v854
      %v856 = vpop.xlane.xlu0 %855
      %v857 = vrcp.pop %v856
      %v858 = vmul.f32 %v853, %v857
      %v860 = vsel %vm770, %v858, 0
      %862 = vmatprep.subr.mxu0 0.0
      %863 = vmatpush1.msra.mxu0 %v767
      %864 = vmatprep.subr.mxu0 0.0
      %865 = vmatpush1.msra.mxu0 0.0
      %866 = vmatprep.subr.mxu0 0.0
      %867 = vmatpush1.msra.mxu0 0.0
      %868 = vmatprep.subr.mxu0 0.0
      %869 = vmatpush1.msra.mxu0 0.0
      %870 = vmatprep.subr.mxu0 0.0
      %871 = vmatpush1.msra.mxu0 0.0
      %872 = vmatprep.subr.mxu0 0.0
      %873 = vmatpush1.msra.mxu0 0.0
      %874 = vmatprep.subr.mxu0 0.0
      %875 = vmatpush1.msra.mxu0 0.0
      %876 = vmatprep.subr.mxu0 0.0
      %877 = vmatpush1.msra.mxu0 0.0
      %878 = vmatprep.subr.mxu0 0.0
      %879 = vmatpush1.msra.mxu0 0.0
      %880 = vmatprep.subr.mxu0 0.0
      %881 = vmatpush1.msra.mxu0 0.0
      %882 = vmatprep.subr.mxu0 0.0
      %883 = vmatpush1.msra.mxu0 0.0
      %884 = vmatprep.subr.mxu0 0.0
      %885 = vmatpush1.msra.mxu0 0.0
      %886 = vmatprep.subr.mxu0 0.0
      %887 = vmatpush1.msra.mxu0 0.0
      %888 = vmatprep.subr.mxu0 0.0
      %889 = vmatpush1.msra.mxu0 0.0
      %890 = vmatprep.subr.mxu0 0.0
      %891 = vmatpush1.msra.mxu0 0.0
      %892 = vmatprep.subr.mxu0 0.0
      %893 = vmatpush1.msra.mxu0 0.0
      %894 = vmatprep.subr.mxu0 0.0
      %895 = vmatpush1.msra.mxu0 0.0
      %896 = vmatprep.subr.mxu0 0.0
      %897 = vmatpush1.msra.mxu0 0.0
      %898 = vmatprep.subr.mxu0 0.0
      %899 = vmatpush1.msra.mxu0 0.0
      %900 = vmatprep.subr.mxu0 0.0
      %901 = vmatpush1.msra.mxu0 0.0
      %902 = vmatprep.subr.mxu0 0.0
      %903 = vmatpush1.msra.mxu0 0.0
      %904 = vmatprep.subr.mxu0 0.0
      %905 = vmatpush1.msra.mxu0 0.0
      %906 = vmatprep.subr.mxu0 0.0
      %907 = vmatpush1.msra.mxu0 0.0
      %908 = vmatprep.subr.mxu0 0.0
      %909 = vmatpush1.msra.mxu0 0.0
      %910 = vmatprep.subr.mxu0 0.0
      %911 = vmatpush1.msra.mxu0 0.0
      %912 = vmatprep.subr.mxu0 0.0
      %913 = vmatpush1.msra.mxu0 0.0
      %914 = vmatprep.subr.mxu0 0.0
      %915 = vmatpush1.msra.mxu0 0.0
      %916 = vmatprep.subr.mxu0 0.0
      %917 = vmatpush1.msra.mxu0 0.0
      %918 = vmatprep.subr.mxu0 0.0
      %919 = vmatpush1.msra.mxu0 0.0
      %920 = vmatprep.subr.mxu0 0.0
      %921 = vmatpush1.msra.mxu0 0.0
      %922 = vmatprep.subr.mxu0 0.0
      %923 = vmatpush1.msra.mxu0 0.0
      %924 = vmatprep.subr.mxu0 0.0
      %925 = vmatpush1.msra.mxu0 0.0
      %926 = vmatprep.mubr.f32.mxu0 0.0
      %927 = vmatmul.mubr.f32.gmra.mrb[0].mxu0 %v860
      %v928 = vpop.f32.mrb[0].mxu0
      %v929 = vadd.f32 0.0, %v928
      %v930 = vpop.f32.mrb[0].mxu0
      %931 = vdwg.mxu0
      %v932 = vld [vmem:[%s10] sm:$0xff]
      %s933 = scalar_lea.vmem %s4, 32
      %v934 = vld [vmem:[%s933] sm:$0xff]
      %v935 = vld [vmem:[%s933 + $0x8] sm:$0xff]
      %v936 = vld [vmem:[%s933 + $0x10] sm:$0xff]
      %v937 = vld [vmem:[%s933 + $0x18] sm:$0xff]
      %s938 = scalar_lea.vmem %s5, 1
      %v939 = vld [vmem:[%s938] sm:$0x1]
      %v941 = vlaneseq
      %v942 = vshrl.u32 %v941, 7
      %v943 = vsub.s32 0, %v942
      %v944 = vrot.slane %v939, %v943
      %946 = vmatprep.subr.mxu0 0.0
      %947 = vmatpush1.msra.mxu0 %v934
      %948 = vmatprep.subr.mxu0 0.0
      %949 = vmatpush1.msra.mxu0 %v935
      %950 = vmatprep.subr.mxu0 0.0
      %951 = vmatpush1.msra.mxu0 %v936
      %952 = vmatprep.subr.mxu0 0.0
      %953 = vmatpush1.msra.mxu0 %v937
      %954 = vmatprep.subr.mxu0 0.0
      %955 = vmatpush1.msra.mxu0 0.0
      %956 = vmatprep.subr.mxu0 0.0
      %957 = vmatpush1.msra.mxu0 0.0
      %958 = vmatprep.subr.mxu0 0.0
      %959 = vmatpush1.msra.mxu0 0.0
      %960 = vmatprep.subr.mxu0 0.0
      %961 = vmatpush1.msra.mxu0 0.0
      %962 = vmatprep.subr.mxu0 0.0
      %963 = vmatpush1.msra.mxu0 0.0
      %964 = vmatprep.subr.mxu0 0.0
      %965 = vmatpush1.msra.mxu0 0.0
      %966 = vmatprep.subr.mxu0 0.0
      %967 = vmatpush1.msra.mxu0 0.0
      %968 = vmatprep.subr.mxu0 0.0
      %969 = vmatpush1.msra.mxu0 0.0
      %970 = vmatprep.subr.mxu0 0.0
      %971 = vmatpush1.msra.mxu0 0.0
      %972 = vmatprep.subr.mxu0 0.0
      %973 = vmatpush1.msra.mxu0 0.0
      %974 = vmatprep.subr.mxu0 0.0
      %975 = vmatpush1.msra.mxu0 0.0
      %976 = vmatprep.subr.mxu0 0.0
      %977 = vmatpush1.msra.mxu0 0.0
      %978 = vmatprep.subr.mxu0 0.0
      %979 = vmatpush1.msra.mxu0 0.0
      %980 = vmatprep.subr.mxu0 0.0
      %981 = vmatpush1.msra.mxu0 0.0
      %982 = vmatprep.subr.mxu0 0.0
      %983 = vmatpush1.msra.mxu0 0.0
      %984 = vmatprep.subr.mxu0 0.0
      %985 = vmatpush1.msra.mxu0 0.0
      %986 = vmatprep.subr.mxu0 0.0
      %987 = vmatpush1.msra.mxu0 0.0
      %988 = vmatprep.subr.mxu0 0.0
      %989 = vmatpush1.msra.mxu0 0.0
      %990 = vmatprep.subr.mxu0 0.0
      %991 = vmatpush1.msra.mxu0 0.0
      %992 = vmatprep.subr.mxu0 0.0
      %993 = vmatpush1.msra.mxu0 0.0
      %994 = vmatprep.subr.mxu0 0.0
      %995 = vmatpush1.msra.mxu0 0.0
      %996 = vmatprep.subr.mxu0 0.0
      %997 = vmatpush1.msra.mxu0 0.0
      %998 = vmatprep.subr.mxu0 0.0
      %999 = vmatpush1.msra.mxu0 0.0
      %1000 = vmatprep.subr.mxu0 0.0
      %1001 = vmatpush1.msra.mxu0 0.0
      %1002 = vmatprep.subr.mxu0 0.0
      %1003 = vmatpush1.msra.mxu0 0.0
      %1004 = vmatprep.subr.mxu0 0.0
      %1005 = vmatpush1.msra.mxu0 0.0
      %1006 = vmatprep.subr.mxu0 0.0
      %1007 = vmatpush1.msra.mxu0 0.0
      %1008 = vmatprep.subr.mxu0 0.0
      %1009 = vmatpush1.msra.mxu0 0.0
      %1010 = vmatprep.mubr.f32.mxu0 0.0
      %1011 = vmatmul.mubr.f32.gmra.mrb[0].mxu0 %v533
      %v1012 = vpop.f32.mrb[0].mxu0
      %v1013 = vadd.f32 %v944, %v1012
      %v1014 = vpop.f32.mrb[0].mxu0
      %1015 = vdwg.mxu0
      %s1016 = scalar_lea.vmem %s6, 32
      %v1017 = vld [vmem:[%s1016] sm:$0xff]
      %v1018 = vld [vmem:[%s1016 + $0x8] sm:$0xff]
      %v1019 = vld [vmem:[%s1016 + $0x10] sm:$0xff]
      %v1020 = vld [vmem:[%s1016 + $0x18] sm:$0xff]
      %s1021 = scalar_lea.vmem %s7, 1
      %v1022 = vld [vmem:[%s1021] sm:$0x1]
      %v1024 = vlaneseq
      %v1025 = vshrl.u32 %v1024, 7
      %v1026 = vsub.s32 0, %v1025
      %v1027 = vrot.slane %v1022, %v1026
      %1029 = vmatprep.subr.mxu0 0.0
      %1030 = vmatpush1.msra.mxu0 %v1017
      %1031 = vmatprep.subr.mxu0 0.0
      %1032 = vmatpush1.msra.mxu0 %v1018
      %1033 = vmatprep.subr.mxu0 0.0
      %1034 = vmatpush1.msra.mxu0 %v1019
      %1035 = vmatprep.subr.mxu0 0.0
      %1036 = vmatpush1.msra.mxu0 %v1020
      %1037 = vmatprep.subr.mxu0 0.0
      %1038 = vmatpush1.msra.mxu0 0.0
      %1039 = vmatprep.subr.mxu0 0.0
      %1040 = vmatpush1.msra.mxu0 0.0
      %1041 = vmatprep.subr.mxu0 0.0
      %1042 = vmatpush1.msra.mxu0 0.0
      %1043 = vmatprep.subr.mxu0 0.0
      %1044 = vmatpush1.msra.mxu0 0.0
      %1045 = vmatprep.subr.mxu0 0.0
      %1046 = vmatpush1.msra.mxu0 0.0
      %1047 = vmatprep.subr.mxu0 0.0
      %1048 = vmatpush1.msra.mxu0 0.0
      %1049 = vmatprep.subr.mxu0 0.0
      %1050 = vmatpush1.msra.mxu0 0.0
      %1051 = vmatprep.subr.mxu0 0.0
      %1052 = vmatpush1.msra.mxu0 0.0
      %1053 = vmatprep.subr.mxu0 0.0
      %1054 = vmatpush1.msra.mxu0 0.0
      %1055 = vmatprep.subr.mxu0 0.0
      %1056 = vmatpush1.msra.mxu0 0.0
      %1057 = vmatprep.subr.mxu0 0.0
      %1058 = vmatpush1.msra.mxu0 0.0
      %1059 = vmatprep.subr.mxu0 0.0
      %1060 = vmatpush1.msra.mxu0 0.0
      %1061 = vmatprep.subr.mxu0 0.0
      %1062 = vmatpush1.msra.mxu0 0.0
      %1063 = vmatprep.subr.mxu0 0.0
      %1064 = vmatpush1.msra.mxu0 0.0
      %1065 = vmatprep.subr.mxu0 0.0
      %1066 = vmatpush1.msra.mxu0 0.0
      %1067 = vmatprep.subr.mxu0 0.0
      %1068 = vmatpush1.msra.mxu0 0.0
      %1069 = vmatprep.subr.mxu0 0.0
      %1070 = vmatpush1.msra.mxu0 0.0
      %1071 = vmatprep.subr.mxu0 0.0
      %1072 = vmatpush1.msra.mxu0 0.0
      %1073 = vmatprep.subr.mxu0 0.0
      %1074 = vmatpush1.msra.mxu0 0.0
      %1075 = vmatprep.subr.mxu0 0.0
      %1076 = vmatpush1.msra.mxu0 0.0
      %1077 = vmatprep.subr.mxu0 0.0
      %1078 = vmatpush1.msra.mxu0 0.0
      %1079 = vmatprep.subr.mxu0 0.0
      %1080 = vmatpush1.msra.mxu0 0.0
      %1081 = vmatprep.subr.mxu0 0.0
      %1082 = vmatpush1.msra.mxu0 0.0
      %1083 = vmatprep.subr.mxu0 0.0
      %1084 = vmatpush1.msra.mxu0 0.0
      %1085 = vmatprep.subr.mxu0 0.0
      %1086 = vmatpush1.msra.mxu0 0.0
      %1087 = vmatprep.subr.mxu0 0.0
      %1088 = vmatpush1.msra.mxu0 0.0
      %1089 = vmatprep.subr.mxu0 0.0
      %1090 = vmatpush1.msra.mxu0 0.0
      %1091 = vmatprep.subr.mxu0 0.0
      %1092 = vmatpush1.msra.mxu0 0.0
      %1093 = vmatprep.mubr.f32.mxu0 0.0
      %1094 = vmatmul.mubr.f32.gmra.mrb[0].mxu0 %v617
      %v1095 = vpop.f32.mrb[0].mxu0
      %v1096 = vadd.f32 %v1027, %v1095
      %v1097 = vpop.f32.mrb[0].mxu0
      %1098 = vdwg.mxu0
      %s1099 = scalar_lea.vmem %s8, 32
      %v1100 = vld [vmem:[%s1099] sm:$0xff]
      %v1101 = vld [vmem:[%s1099 + $0x8] sm:$0xff]
      %v1102 = vld [vmem:[%s1099 + $0x10] sm:$0xff]
      %v1103 = vld [vmem:[%s1099 + $0x18] sm:$0xff]
      %s1104 = scalar_lea.vmem %s9, 1
      %v1105 = vld [vmem:[%s1104] sm:$0x1]
      %v1107 = vlaneseq
      %v1108 = vshrl.u32 %v1107, 7
      %v1109 = vsub.s32 0, %v1108
      %v1110 = vrot.slane %v1105, %v1109
      %1112 = vmatprep.subr.mxu0 0.0
      %1113 = vmatpush1.msra.mxu0 %v1100
      %1114 = vmatprep.subr.mxu0 0.0
      %1115 = vmatpush1.msra.mxu0 %v1101
      %1116 = vmatprep.subr.mxu0 0.0
      %1117 = vmatpush1.msra.mxu0 %v1102
      %1118 = vmatprep.subr.mxu0 0.0
      %1119 = vmatpush1.msra.mxu0 %v1103
      %1120 = vmatprep.subr.mxu0 0.0
      %1121 = vmatpush1.msra.mxu0 0.0
      %1122 = vmatprep.subr.mxu0 0.0
      %1123 = vmatpush1.msra.mxu0 0.0
      %1124 = vmatprep.subr.mxu0 0.0
      %1125 = vmatpush1.msra.mxu0 0.0
      %1126 = vmatprep.subr.mxu0 0.0
      %1127 = vmatpush1.msra.mxu0 0.0
      %1128 = vmatprep.subr.mxu0 0.0
      %1129 = vmatpush1.msra.mxu0 0.0
      %1130 = vmatprep.subr.mxu0 0.0
      %1131 = vmatpush1.msra.mxu0 0.0
      %1132 = vmatprep.subr.mxu0 0.0
      %1133 = vmatpush1.msra.mxu0 0.0
      %1134 = vmatprep.subr.mxu0 0.0
      %1135 = vmatpush1.msra.mxu0 0.0
      %1136 = vmatprep.subr.mxu0 0.0
      %1137 = vmatpush1.msra.mxu0 0.0
      %1138 = vmatprep.subr.mxu0 0.0
      %1139 = vmatpush1.msra.mxu0 0.0
      %1140 = vmatprep.subr.mxu0 0.0
      %1141 = vmatpush1.msra.mxu0 0.0
      %1142 = vmatprep.subr.mxu0 0.0
      %1143 = vmatpush1.msra.mxu0 0.0
      %1144 = vmatprep.subr.mxu0 0.0
      %1145 = vmatpush1.msra.mxu0 0.0
      %1146 = vmatprep.subr.mxu0 0.0
      %1147 = vmatpush1.msra.mxu0 0.0
      %1148 = vmatprep.subr.mxu0 0.0
      %1149 = vmatpush1.msra.mxu0 0.0
      %1150 = vmatprep.subr.mxu0 0.0
      %1151 = vmatpush1.msra.mxu0 0.0
      %1152 = vmatprep.subr.mxu0 0.0
      %1153 = vmatpush1.msra.mxu0 0.0
      %1154 = vmatprep.subr.mxu0 0.0
      %1155 = vmatpush1.msra.mxu0 0.0
      %1156 = vmatprep.subr.mxu0 0.0
      %1157 = vmatpush1.msra.mxu0 0.0
      %1158 = vmatprep.subr.mxu0 0.0
      %1159 = vmatpush1.msra.mxu0 0.0
      %1160 = vmatprep.subr.mxu0 0.0
      %1161 = vmatpush1.msra.mxu0 0.0
      %1162 = vmatprep.subr.mxu0 0.0
      %1163 = vmatpush1.msra.mxu0 0.0
      %1164 = vmatprep.subr.mxu0 0.0
      %1165 = vmatpush1.msra.mxu0 0.0
      %1166 = vmatprep.subr.mxu0 0.0
      %1167 = vmatpush1.msra.mxu0 0.0
      %1168 = vmatprep.subr.mxu0 0.0
      %1169 = vmatpush1.msra.mxu0 0.0
      %1170 = vmatprep.subr.mxu0 0.0
      %1171 = vmatpush1.msra.mxu0 0.0
      %1172 = vmatprep.subr.mxu0 0.0
      %1173 = vmatpush1.msra.mxu0 0.0
      %1174 = vmatprep.subr.mxu0 0.0
      %1175 = vmatpush1.msra.mxu0 0.0
      %1176 = vmatprep.mubr.f32.mxu0 0.0
      %1177 = vmatmul.mubr.f32.gmra.mrb[0].mxu0 %v617
      %v1178 = vpop.f32.mrb[0].mxu0
      %v1179 = vadd.f32 %v1110, %v1178
      %v1180 = vpop.f32.mrb[0].mxu0
      %1181 = vdwg.mxu0
      %v1183 = vsel %vm770, %v1013, 0
      %v1186 = vsel %vm770, %v1096, 0
      %1188 = vmatprep.subr.mxu0 0.0
      %1189 = vmatpush1.xpose.msra.mxu0 %v1186
      %1190 = vmatprep.subr.mxu0 0.0
      %1191 = vmatpush1.xpose.msra.mxu0 0.0
      %1192 = vmatprep.subr.mxu0 0.0
      %1193 = vmatpush1.xpose.msra.mxu0 0.0
      %1194 = vmatprep.subr.mxu0 0.0
      %1195 = vmatpush1.xpose.msra.mxu0 0.0
      %1196 = vmatprep.subr.mxu0 0.0
      %1197 = vmatpush1.xpose.msra.mxu0 0.0
      %1198 = vmatprep.subr.mxu0 0.0
      %1199 = vmatpush1.xpose.msra.mxu0 0.0
      %1200 = vmatprep.subr.mxu0 0.0
      %1201 = vmatpush1.xpose.msra.mxu0 0.0
      %1202 = vmatprep.subr.mxu0 0.0
      %1203 = vmatpush1.xpose.msra.mxu0 0.0
      %1204 = vmatprep.subr.mxu0 0.0
      %1205 = vmatpush1.xpose.msra.mxu0 0.0
      %1206 = vmatprep.subr.mxu0 0.0
      %1207 = vmatpush1.xpose.msra.mxu0 0.0
      %1208 = vmatprep.subr.mxu0 0.0
      %1209 = vmatpush1.xpose.msra.mxu0 0.0
      %1210 = vmatprep.subr.mxu0 0.0
      %1211 = vmatpush1.xpose.msra.mxu0 0.0
      %1212 = vmatprep.subr.mxu0 0.0
      %1213 = vmatpush1.xpose.msra.mxu0 0.0
      %1214 = vmatprep.subr.mxu0 0.0
      %1215 = vmatpush1.xpose.msra.mxu0 0.0
      %1216 = vmatprep.subr.mxu0 0.0
      %1217 = vmatpush1.xpose.msra.mxu0 0.0
      %1218 = vmatprep.subr.mxu0 0.0
      %1219 = vmatpush1.xpose.msra.mxu0 0.0
      %1220 = vmatprep.subr.mxu0 0.0
      %1221 = vmatpush1.xpose.msra.mxu0 0.0
      %1222 = vmatprep.subr.mxu0 0.0
      %1223 = vmatpush1.xpose.msra.mxu0 0.0
      %1224 = vmatprep.subr.mxu0 0.0
      %1225 = vmatpush1.xpose.msra.mxu0 0.0
      %1226 = vmatprep.subr.mxu0 0.0
      %1227 = vmatpush1.xpose.msra.mxu0 0.0
      %1228 = vmatprep.subr.mxu0 0.0
      %1229 = vmatpush1.xpose.msra.mxu0 0.0
      %1230 = vmatprep.subr.mxu0 0.0
      %1231 = vmatpush1.xpose.msra.mxu0 0.0
      %1232 = vmatprep.subr.mxu0 0.0
      %1233 = vmatpush1.xpose.msra.mxu0 0.0
      %1234 = vmatprep.subr.mxu0 0.0
      %1235 = vmatpush1.xpose.msra.mxu0 0.0
      %1236 = vmatprep.subr.mxu0 0.0
      %1237 = vmatpush1.xpose.msra.mxu0 0.0
      %1238 = vmatprep.subr.mxu0 0.0
      %1239 = vmatpush1.xpose.msra.mxu0 0.0
      %1240 = vmatprep.subr.mxu0 0.0
      %1241 = vmatpush1.xpose.msra.mxu0 0.0
      %1242 = vmatprep.subr.mxu0 0.0
      %1243 = vmatpush1.xpose.msra.mxu0 0.0
      %1244 = vmatprep.subr.mxu0 0.0
      %1245 = vmatpush1.xpose.msra.mxu0 0.0
      %1246 = vmatprep.subr.mxu0 0.0
      %1247 = vmatpush1.xpose.msra.mxu0 0.0
      %1248 = vmatprep.subr.mxu0 0.0
      %1249 = vmatpush1.xpose.msra.mxu0 0.0
      %1250 = vmatprep.subr.mxu0 0.0
      %1251 = vmatpush1.xpose.msra.mxu0 0.0
      %1252 = vmatprep.mubr.f32.mxu0 0.0
      %1253 = vmatmul.mubr.f32.gmra.mrb[0].mxu0 %v1183
      %v1254 = vpop.f32.mrb[0].mxu0
      %v1255 = vadd.f32 0.0, %v1254
      %v1256 = vpop.f32.mrb[0].mxu0
      %1257 = vdwg.mxu0
      %v1258 = vmul.f32 %v1255, 0.35355338
      %v1259 = vsel %vm770, %v1258, -inf
      %1260 = vmax.xlane.f32.xlu0 %v1259
      %v1261 = vpop.xlane.xlu0 %1260
      %v1262 = vsub.f32 %v1258, %v1261
      %v1263 = vmul.f32 %v1262, 1.442695
      %v1264 = vpow.pop %v1263
      %v1265 = vsel %vm770, %v1264, 0.0
      %1266 = vadd.xlane.f32.xlu0 %v1265
      %v1267 = vpop.xlane.xlu0 %1266
      %v1268 = vrcp.pop %v1267
      %v1269 = vmul.f32 %v1264, %v1268
      %v1271 = vsel %vm770, %v1269, 0
      %1273 = vmatprep.subr.mxu0 0.0
      %1274 = vmatpush1.msra.mxu0 %v1179
      %1275 = vmatprep.subr.mxu0 0.0
      %1276 = vmatpush1.msra.mxu0 0.0
      %1277 = vmatprep.subr.mxu0 0.0
      %1278 = vmatpush1.msra.mxu0 0.0
      %1279 = vmatprep.subr.mxu0 0.0
      %1280 = vmatpush1.msra.mxu0 0.0
      %1281 = vmatprep.subr.mxu0 0.0
      %1282 = vmatpush1.msra.mxu0 0.0
      %1283 = vmatprep.subr.mxu0 0.0
      %1284 = vmatpush1.msra.mxu0 0.0
      %1285 = vmatprep.subr.mxu0 0.0
      %1286 = vmatpush1.msra.mxu0 0.0
      %1287 = vmatprep.subr.mxu0 0.0
      %1288 = vmatpush1.msra.mxu0 0.0
      %1289 = vmatprep.subr.mxu0 0.0
      %1290 = vmatpush1.msra.mxu0 0.0
      %1291 = vmatprep.subr.mxu0 0.0
      %1292 = vmatpush1.msra.mxu0 0.0
      %1293 = vmatprep.subr.mxu0 0.0
      %1294 = vmatpush1.msra.mxu0 0.0
      %1295 = vmatprep.subr.mxu0 0.0
      %1296 = vmatpush1.msra.mxu0 0.0
      %1297 = vmatprep.subr.mxu0 0.0
      %1298 = vmatpush1.msra.mxu0 0.0
      %1299 = vmatprep.subr.mxu0 0.0
      %1300 = vmatpush1.msra.mxu0 0.0
      %1301 = vmatprep.subr.mxu0 0.0
      %1302 = vmatpush1.msra.mxu0 0.0
      %1303 = vmatprep.subr.mxu0 0.0
      %1304 = vmatpush1.msra.mxu0 0.0
      %1305 = vmatprep.subr.mxu0 0.0
      %1306 = vmatpush1.msra.mxu0 0.0
      %1307 = vmatprep.subr.mxu0 0.0
      %1308 = vmatpush1.msra.mxu0 0.0
      %1309 = vmatprep.subr.mxu0 0.0
      %1310 = vmatpush1.msra.mxu0 0.0
      %1311 = vmatprep.subr.mxu0 0.0
      %1312 = vmatpush1.msra.mxu0 0.0
      %1313 = vmatprep.subr.mxu0 0.0
      %1314 = vmatpush1.msra.mxu0 0.0
      %1315 = vmatprep.subr.mxu0 0.0
      %1316 = vmatpush1.msra.mxu0 0.0
      %1317 = vmatprep.subr.mxu0 0.0
      %1318 = vmatpush1.msra.mxu0 0.0
      %1319 = vmatprep.subr.mxu0 0.0
      %1320 = vmatpush1.msra.mxu0 0.0
      %1321 = vmatprep.subr.mxu0 0.0
      %1322 = vmatpush1.msra.mxu0 0.0
      %1323 = vmatprep.subr.mxu0 0.0
      %1324 = vmatpush1.msra.mxu0 0.0
      %1325 = vmatprep.subr.mxu0 0.0
      %1326 = vmatpush1.msra.mxu0 0.0
      %1327 = vmatprep.subr.mxu0 0.0
      %1328 = vmatpush1.msra.mxu0 0.0
      %1329 = vmatprep.subr.mxu0 0.0
      %1330 = vmatpush1.msra.mxu0 0.0
      %1331 = vmatprep.subr.mxu0 0.0
      %1332 = vmatpush1.msra.mxu0 0.0
      %1333 = vmatprep.subr.mxu0 0.0
      %1334 = vmatpush1.msra.mxu0 0.0
      %1335 = vmatprep.subr.mxu0 0.0
      %1336 = vmatpush1.msra.mxu0 0.0
      %1337 = vmatprep.mubr.f32.mxu0 0.0
      %1338 = vmatmul.mubr.f32.gmra.mrb[0].mxu0 %v1271
      %v1339 = vpop.f32.mrb[0].mxu0
      %v1340 = vadd.f32 0.0, %v1339
      %v1341 = vpop.f32.mrb[0].mxu0
      %1342 = vdwg.mxu0
      %s1343 = scalar_lea.vmem %s10, 8
      %v1344 = vld [vmem:[%s1343] sm:$0xff]
      %v1346 = vsel %vm770, %v1340, 0
      %1348 = vmatprep.subr.mxu0 0.0
      %1349 = vmatpush1.msra.mxu0 %v1344
      %1350 = vmatprep.subr.mxu0 0.0
      %1351 = vmatpush1.msra.mxu0 0.0
      %1352 = vmatprep.subr.mxu0 0.0
      %1353 = vmatpush1.msra.mxu0 0.0
      %1354 = vmatprep.subr.mxu0 0.0
      %1355 = vmatpush1.msra.mxu0 0.0
      %1356 = vmatprep.subr.mxu0 0.0
      %1357 = vmatpush1.msra.mxu0 0.0
      %1358 = vmatprep.subr.mxu0 0.0
      %1359 = vmatpush1.msra.mxu0 0.0
      %1360 = vmatprep.subr.mxu0 0.0
      %1361 = vmatpush1.msra.mxu0 0.0
      %1362 = vmatprep.subr.mxu0 0.0
      %1363 = vmatpush1.msra.mxu0 0.0
      %1364 = vmatprep.subr.mxu0 0.0
      %1365 = vmatpush1.msra.mxu0 0.0
      %1366 = vmatprep.subr.mxu0 0.0
      %1367 = vmatpush1.msra.mxu0 0.0
      %1368 = vmatprep.subr.mxu0 0.0
      %1369 = vmatpush1.msra.mxu0 0.0
      %1370 = vmatprep.subr.mxu0 0.0
      %1371 = vmatpush1.msra.mxu0 0.0
      %1372 = vmatprep.subr.mxu0 0.0
      %1373 = vmatpush1.msra.mxu0 0.0
      %1374 = vmatprep.subr.mxu0 0.0
      %1375 = vmatpush1.msra.mxu0 0.0
      %1376 = vmatprep.subr.mxu0 0.0
      %1377 = vmatpush1.msra.mxu0 0.0
      %1378 = vmatprep.subr.mxu0 0.0
      %1379 = vmatpush1.msra.mxu0 0.0
      %1380 = vmatprep.subr.mxu0 0.0
      %1381 = vmatpush1.msra.mxu0 0.0
      %1382 = vmatprep.subr.mxu0 0.0
      %1383 = vmatpush1.msra.mxu0 0.0
      %1384 = vmatprep.subr.mxu0 0.0
      %1385 = vmatpush1.msra.mxu0 0.0
      %1386 = vmatprep.subr.mxu0 0.0
      %1387 = vmatpush1.msra.mxu0 0.0
      %1388 = vmatprep.subr.mxu0 0.0
      %1389 = vmatpush1.msra.mxu0 0.0
      %1390 = vmatprep.subr.mxu0 0.0
      %1391 = vmatpush1.msra.mxu0 0.0
      %1392 = vmatprep.subr.mxu0 0.0
      %1393 = vmatpush1.msra.mxu0 0.0
      %1394 = vmatprep.subr.mxu0 0.0
      %1395 = vmatpush1.msra.mxu0 0.0
      %1396 = vmatprep.subr.mxu0 0.0
      %1397 = vmatpush1.msra.mxu0 0.0
      %1398 = vmatprep.subr.mxu0 0.0
      %1399 = vmatpush1.msra.mxu0 0.0
      %1400 = vmatprep.subr.mxu0 0.0
      %1401 = vmatpush1.msra.mxu0 0.0
      %1402 = vmatprep.subr.mxu0 0.0
      %1403 = vmatpush1.msra.mxu0 0.0
      %1404 = vmatprep.subr.mxu0 0.0
      %1405 = vmatpush1.msra.mxu0 0.0
      %1406 = vmatprep.subr.mxu0 0.0
      %1407 = vmatpush1.msra.mxu0 0.0
      %1408 = vmatprep.subr.mxu0 0.0
      %1409 = vmatpush1.msra.mxu0 0.0
      %1410 = vmatprep.subr.mxu0 0.0
      %1411 = vmatpush1.msra.mxu0 0.0
      %1412 = vmatprep.mubr.f32.mxu0 0.0
      %1413 = vmatmul.mubr.f32.gmra.mrb[0].mxu0 %v1346
      %v1414 = vpop.f32.mrb[0].mxu0
      %v1415 = vadd.f32 0.0, %v1414
      %v1416 = vpop.f32.mrb[0].mxu0
      %1417 = vdwg.mxu0
      %v1419 = vsel %vm770, %v929, 0
      %1421 = vmatprep.subr.mxu0 0.0
      %1422 = vmatpush1.msra.mxu0 %v932
      %1423 = vmatprep.subr.mxu0 0.0
      %1424 = vmatpush1.msra.mxu0 0.0
      %1425 = vmatprep.subr.mxu0 0.0
      %1426 = vmatpush1.msra.mxu0 0.0
      %1427 = vmatprep.subr.mxu0 0.0
      %1428 = vmatpush1.msra.mxu0 0.0
      %1429 = vmatprep.subr.mxu0 0.0
      %1430 = vmatpush1.msra.mxu0 0.0
      %1431 = vmatprep.subr.mxu0 0.0
      %1432 = vmatpush1.msra.mxu0 0.0
      %1433 = vmatprep.subr.mxu0 0.0
      %1434 = vmatpush1.msra.mxu0 0.0
      %1435 = vmatprep.subr.mxu0 0.0
      %1436 = vmatpush1.msra.mxu0 0.0
      %1437 = vmatprep.subr.mxu0 0.0
      %1438 = vmatpush1.msra.mxu0 0.0
      %1439 = vmatprep.subr.mxu0 0.0
      %1440 = vmatpush1.msra.mxu0 0.0
      %1441 = vmatprep.subr.mxu0 0.0
      %1442 = vmatpush1.msra.mxu0 0.0
      %1443 = vmatprep.subr.mxu0 0.0
      %1444 = vmatpush1.msra.mxu0 0.0
      %1445 = vmatprep.subr.mxu0 0.0
      %1446 = vmatpush1.msra.mxu0 0.0
      %1447 = vmatprep.subr.mxu0 0.0
      %1448 = vmatpush1.msra.mxu0 0.0
      %1449 = vmatprep.subr.mxu0 0.0
      %1450 = vmatpush1.msra.mxu0 0.0
      %1451 = vmatprep.subr.mxu0 0.0
      %1452 = vmatpush1.msra.mxu0 0.0
      %1453 = vmatprep.subr.mxu0 0.0
      %1454 = vmatpush1.msra.mxu0 0.0
      %1455 = vmatprep.subr.mxu0 0.0
      %1456 = vmatpush1.msra.mxu0 0.0
      %1457 = vmatprep.subr.mxu0 0.0
      %1458 = vmatpush1.msra.mxu0 0.0
      %1459 = vmatprep.subr.mxu0 0.0
      %1460 = vmatpush1.msra.mxu0 0.0
      %1461 = vmatprep.subr.mxu0 0.0
      %1462 = vmatpush1.msra.mxu0 0.0
      %1463 = vmatprep.subr.mxu0 0.0
      %1464 = vmatpush1.msra.mxu0 0.0
      %1465 = vmatprep.subr.mxu0 0.0
      %1466 = vmatpush1.msra.mxu0 0.0
      %1467 = vmatprep.subr.mxu0 0.0
      %1468 = vmatpush1.msra.mxu0 0.0
      %1469 = vmatprep.subr.mxu0 0.0
      %1470 = vmatpush1.msra.mxu0 0.0
      %1471 = vmatprep.subr.mxu0 0.0
      %1472 = vmatpush1.msra.mxu0 0.0
      %1473 = vmatprep.subr.mxu0 0.0
      %1474 = vmatpush1.msra.mxu0 0.0
      %1475 = vmatprep.subr.mxu0 0.0
      %1476 = vmatpush1.msra.mxu0 0.0
      %1477 = vmatprep.subr.mxu0 0.0
      %1478 = vmatpush1.msra.mxu0 0.0
      %1479 = vmatprep.subr.mxu0 0.0
      %1480 = vmatpush1.msra.mxu0 0.0
      %1481 = vmatprep.subr.mxu0 0.0
      %1482 = vmatpush1.msra.mxu0 0.0
      %1483 = vmatprep.subr.mxu0 0.0
      %1484 = vmatpush1.msra.mxu0 0.0
      %1485 = vmatprep.mubr.f32.mxu0 0.0
      %1486 = vmatmul.mubr.f32.gmra.mrb[0].mxu0 %v1419
      %v1487 = vpop.f32.mrb[0].mxu0
      %v1488 = vadd.f32 %v1415, %v1487
      %v1489 = vpop.f32.mrb[0].mxu0
      %1490 = vdwg.mxu0
      %s1491 = scalar_lea.vmem %s4, 64
      %v1492 = vld [vmem:[%s1491] sm:$0xff]
      %v1493 = vld [vmem:[%s1491 + $0x8] sm:$0xff]
      %v1494 = vld [vmem:[%s1491 + $0x10] sm:$0xff]
      %v1495 = vld [vmem:[%s1491 + $0x18] sm:$0xff]
      %s1496 = scalar_lea.vmem %s5, 2
      %v1497 = vld [vmem:[%s1496] sm:$0x1]
      %v1499 = vlaneseq
      %v1500 = vshrl.u32 %v1499, 7
      %v1501 = vsub.s32 0, %v1500
      %v1502 = vrot.slane %v1497, %v1501
      %1504 = vmatprep.subr.mxu0 0.0
      %1505 = vmatpush1.msra.mxu0 %v1492
      %1506 = vmatprep.subr.mxu0 0.0
      %1507 = vmatpush1.msra.mxu0 %v1493
      %1508 = vmatprep.subr.mxu0 0.0
      %1509 = vmatpush1.msra.mxu0 %v1494
      %1510 = vmatprep.subr.mxu0 0.0
      %1511 = vmatpush1.msra.mxu0 %v1495
      %1512 = vmatprep.subr.mxu0 0.0
      %1513 = vmatpush1.msra.mxu0 0.0
      %1514 = vmatprep.subr.mxu0 0.0
      %1515 = vmatpush1.msra.mxu0 0.0
      %1516 = vmatprep.subr.mxu0 0.0
      %1517 = vmatpush1.msra.mxu0 0.0
      %1518 = vmatprep.subr.mxu0 0.0
      %1519 = vmatpush1.msra.mxu0 0.0
      %1520 = vmatprep.subr.mxu0 0.0
      %1521 = vmatpush1.msra.mxu0 0.0
      %1522 = vmatprep.subr.mxu0 0.0
      %1523 = vmatpush1.msra.mxu0 0.0
      %1524 = vmatprep.subr.mxu0 0.0
      %1525 = vmatpush1.msra.mxu0 0.0
      %1526 = vmatprep.subr.mxu0 0.0
      %1527 = vmatpush1.msra.mxu0 0.0
      %1528 = vmatprep.subr.mxu0 0.0
      %1529 = vmatpush1.msra.mxu0 0.0
      %1530 = vmatprep.subr.mxu0 0.0
      %1531 = vmatpush1.msra.mxu0 0.0
      %1532 = vmatprep.subr.mxu0 0.0
      %1533 = vmatpush1.msra.mxu0 0.0
      %1534 = vmatprep.subr.mxu0 0.0
      %1535 = vmatpush1.msra.mxu0 0.0
      %1536 = vmatprep.subr.mxu0 0.0
      %1537 = vmatpush1.msra.mxu0 0.0
      %1538 = vmatprep.subr.mxu0 0.0
      %1539 = vmatpush1.msra.mxu0 0.0
      %1540 = vmatprep.subr.mxu0 0.0
      %1541 = vmatpush1.msra.mxu0 0.0
      %1542 = vmatprep.subr.mxu0 0.0
      %1543 = vmatpush1.msra.mxu0 0.0
      %1544 = vmatprep.subr.mxu0 0.0
      %1545 = vmatpush1.msra.mxu0 0.0
      %1546 = vmatprep.subr.mxu0 0.0
      %1547 = vmatpush1.msra.mxu0 0.0
      %1548 = vmatprep.subr.mxu0 0.0
      %1549 = vmatpush1.msra.mxu0 0.0
      %1550 = vmatprep.subr.mxu0 0.0
      %1551 = vmatpush1.msra.mxu0 0.0
      %1552 = vmatprep.subr.mxu0 0.0
      %1553 = vmatpush1.msra.mxu0 0.0
      %1554 = vmatprep.subr.mxu0 0.0
      %1555 = vmatpush1.msra.mxu0 0.0
      %1556 = vmatprep.subr.mxu0 0.0
      %1557 = vmatpush1.msra.mxu0 0.0
      %1558 = vmatprep.subr.mxu0 0.0
      %1559 = vmatpush1.msra.mxu0 0.0
      %1560 = vmatprep.subr.mxu0 0.0
      %1561 = vmatpush1.msra.mxu0 0.0
      %1562 = vmatprep.subr.mxu0 0.0
      %1563 = vmatpush1.msra.mxu0 0.0
      %1564 = vmatprep.subr.mxu0 0.0
      %1565 = vmatpush1.msra.mxu0 0.0
      %1566 = vmatprep.subr.mxu0 0.0
      %1567 = vmatpush1.msra.mxu0 0.0
      %1568 = vmatprep.mubr.f32.mxu0 0.0
      %1569 = vmatmul.mubr.f32.gmra.mrb[0].mxu0 %v533
      %v1570 = vpop.f32.mrb[0].mxu0
      %v1571 = vadd.f32 %v1502, %v1570
      %v1572 = vpop.f32.mrb[0].mxu0
      %1573 = vdwg.mxu0
      %s1574 = scalar_lea.vmem %s6, 64
      %v1575 = vld [vmem:[%s1574] sm:$0xff]
      %v1576 = vld [vmem:[%s1574 + $0x8] sm:$0xff]
      %v1577 = vld [vmem:[%s1574 + $0x10] sm:$0xff]
      %v1578 = vld [vmem:[%s1574 + $0x18] sm:$0xff]
      %s1579 = scalar_lea.vmem %s7, 2
      %v1580 = vld [vmem:[%s1579] sm:$0x1]
      %v1582 = vlaneseq
      %v1583 = vshrl.u32 %v1582, 7
      %v1584 = vsub.s32 0, %v1583
      %v1585 = vrot.slane %v1580, %v1584
      %1587 = vmatprep.subr.mxu0 0.0
      %1588 = vmatpush1.msra.mxu0 %v1575
      %1589 = vmatprep.subr.mxu0 0.0
      %1590 = vmatpush1.msra.mxu0 %v1576
      %1591 = vmatprep.subr.mxu0 0.0
      %1592 = vmatpush1.msra.mxu0 %v1577
      %1593 = vmatprep.subr.mxu0 0.0
      %1594 = vmatpush1.msra.mxu0 %v1578
      %1595 = vmatprep.subr.mxu0 0.0
      %1596 = vmatpush1.msra.mxu0 0.0
      %1597 = vmatprep.subr.mxu0 0.0
      %1598 = vmatpush1.msra.mxu0 0.0
      %1599 = vmatprep.subr.mxu0 0.0
      %1600 = vmatpush1.msra.mxu0 0.0
      %1601 = vmatprep.subr.mxu0 0.0
      %1602 = vmatpush1.msra.mxu0 0.0
      %1603 = vmatprep.subr.mxu0 0.0
      %1604 = vmatpush1.msra.mxu0 0.0
      %1605 = vmatprep.subr.mxu0 0.0
      %1606 = vmatpush1.msra.mxu0 0.0
      %1607 = vmatprep.subr.mxu0 0.0
      %1608 = vmatpush1.msra.mxu0 0.0
      %1609 = vmatprep.subr.mxu0 0.0
      %1610 = vmatpush1.msra.mxu0 0.0
      %1611 = vmatprep.subr.mxu0 0.0
      %1612 = vmatpush1.msra.mxu0 0.0
      %1613 = vmatprep.subr.mxu0 0.0
      %1614 = vmatpush1.msra.mxu0 0.0
      %1615 = vmatprep.subr.mxu0 0.0
      %1616 = vmatpush1.msra.mxu0 0.0
      %1617 = vmatprep.subr.mxu0 0.0
      %1618 = vmatpush1.msra.mxu0 0.0
      %1619 = vmatprep.subr.mxu0 0.0
      %1620 = vmatpush1.msra.mxu0 0.0
      %1621 = vmatprep.subr.mxu0 0.0
      %1622 = vmatpush1.msra.mxu0 0.0
      %1623 = vmatprep.subr.mxu0 0.0
      %1624 = vmatpush1.msra.mxu0 0.0
      %1625 = vmatprep.subr.mxu0 0.0
      %1626 = vmatpush1.msra.mxu0 0.0
      %1627 = vmatprep.subr.mxu0 0.0
      %1628 = vmatpush1.msra.mxu0 0.0
      %1629 = vmatprep.subr.mxu0 0.0
      %1630 = vmatpush1.msra.mxu0 0.0
      %1631 = vmatprep.subr.mxu0 0.0
      %1632 = vmatpush1.msra.mxu0 0.0
      %1633 = vmatprep.subr.mxu0 0.0
      %1634 = vmatpush1.msra.mxu0 0.0
      %1635 = vmatprep.subr.mxu0 0.0
      %1636 = vmatpush1.msra.mxu0 0.0
      %1637 = vmatprep.subr.mxu0 0.0
      %1638 = vmatpush1.msra.mxu0 0.0
      %1639 = vmatprep.subr.mxu0 0.0
      %1640 = vmatpush1.msra.mxu0 0.0
      %1641 = vmatprep.subr.mxu0 0.0
      %1642 = vmatpush1.msra.mxu0 0.0
      %1643 = vmatprep.subr.mxu0 0.0
      %1644 = vmatpush1.msra.mxu0 0.0
      %1645 = vmatprep.subr.mxu0 0.0
      %1646 = vmatpush1.msra.mxu0 0.0
      %1647 = vmatprep.subr.mxu0 0.0
      %1648 = vmatpush1.msra.mxu0 0.0
      %1649 = vmatprep.subr.mxu0 0.0
      %1650 = vmatpush1.msra.mxu0 0.0
      %1651 = vmatprep.mubr.f32.mxu0 0.0
      %1652 = vmatmul.mubr.f32.gmra.mrb[0].mxu0 %v617
      %v1653 = vpop.f32.mrb[0].mxu0
      %v1654 = vadd.f32 %v1585, %v1653
      %v1655 = vpop.f32.mrb[0].mxu0
      %1656 = vdwg.mxu0
      %s1657 = scalar_lea.vmem %s8, 64
      %v1658 = vld [vmem:[%s1657] sm:$0xff]
      %v1659 = vld [vmem:[%s1657 + $0x8] sm:$0xff]
      %v1660 = vld [vmem:[%s1657 + $0x10] sm:$0xff]
      %v1661 = vld [vmem:[%s1657 + $0x18] sm:$0xff]
      %s1662 = scalar_lea.vmem %s9, 2
      %v1663 = vld [vmem:[%s1662] sm:$0x1]
      %v1665 = vlaneseq
      %v1666 = vshrl.u32 %v1665, 7
      %v1667 = vsub.s32 0, %v1666
      %v1668 = vrot.slane %v1663, %v1667
      %1670 = vmatprep.subr.mxu0 0.0
      %1671 = vmatpush1.msra.mxu0 %v1658
      %1672 = vmatprep.subr.mxu0 0.0
      %1673 = vmatpush1.msra.mxu0 %v1659
      %1674 = vmatprep.subr.mxu0 0.0
      %1675 = vmatpush1.msra.mxu0 %v1660
      %1676 = vmatprep.subr.mxu0 0.0
      %1677 = vmatpush1.msra.mxu0 %v1661
      %1678 = vmatprep.subr.mxu0 0.0
      %1679 = vmatpush1.msra.mxu0 0.0
      %1680 = vmatprep.subr.mxu0 0.0
      %1681 = vmatpush1.msra.mxu0 0.0
      %1682 = vmatprep.subr.mxu0 0.0
      %1683 = vmatpush1.msra.mxu0 0.0
      %1684 = vmatprep.subr.mxu0 0.0
      %1685 = vmatpush1.msra.mxu0 0.0
      %1686 = vmatprep.subr.mxu0 0.0
      %1687 = vmatpush1.msra.mxu0 0.0
      %1688 = vmatprep.subr.mxu0 0.0
      %1689 = vmatpush1.msra.mxu0 0.0
      %1690 = vmatprep.subr.mxu0 0.0
      %1691 = vmatpush1.msra.mxu0 0.0
      %1692 = vmatprep.subr.mxu0 0.0
      %1693 = vmatpush1.msra.mxu0 0.0
      %1694 = vmatprep.subr.mxu0 0.0
      %1695 = vmatpush1.msra.mxu0 0.0
      %1696 = vmatprep.subr.mxu0 0.0
      %1697 = vmatpush1.msra.mxu0 0.0
      %1698 = vmatprep.subr.mxu0 0.0
      %1699 = vmatpush1.msra.mxu0 0.0
      %1700 = vmatprep.subr.mxu0 0.0
      %1701 = vmatpush1.msra.mxu0 0.0
      %1702 = vmatprep.subr.mxu0 0.0
      %1703 = vmatpush1.msra.mxu0 0.0
      %1704 = vmatprep.subr.mxu0 0.0
      %1705 = vmatpush1.msra.mxu0 0.0
      %1706 = vmatprep.subr.mxu0 0.0
      %1707 = vmatpush1.msra.mxu0 0.0
      %1708 = vmatprep.subr.mxu0 0.0
      %1709 = vmatpush1.msra.mxu0 0.0
      %1710 = vmatprep.subr.mxu0 0.0
      %1711 = vmatpush1.msra.mxu0 0.0
      %1712 = vmatprep.subr.mxu0 0.0
      %1713 = vmatpush1.msra.mxu0 0.0
      %1714 = vmatprep.subr.mxu0 0.0
      %1715 = vmatpush1.msra.mxu0 0.0
      %1716 = vmatprep.subr.mxu0 0.0
      %1717 = vmatpush1.msra.mxu0 0.0
      %1718 = vmatprep.subr.mxu0 0.0
      %1719 = vmatpush1.msra.mxu0 0.0
      %1720 = vmatprep.subr.mxu0 0.0
      %1721 = vmatpush1.msra.mxu0 0.0
      %1722 = vmatprep.subr.mxu0 0.0
      %1723 = vmatpush1.msra.mxu0 0.0
      %1724 = vmatprep.subr.mxu0 0.0
      %1725 = vmatpush1.msra.mxu0 0.0
      %1726 = vmatprep.subr.mxu0 0.0
      %1727 = vmatpush1.msra.mxu0 0.0
      %1728 = vmatprep.subr.mxu0 0.0
      %1729 = vmatpush1.msra.mxu0 0.0
      %1730 = vmatprep.subr.mxu0 0.0
      %1731 = vmatpush1.msra.mxu0 0.0
      %1732 = vmatprep.subr.mxu0 0.0
      %1733 = vmatpush1.msra.mxu0 0.0
      %1734 = vmatprep.mubr.f32.mxu0 0.0
      %1735 = vmatmul.mubr.f32.gmra.mrb[0].mxu0 %v617
      %v1736 = vpop.f32.mrb[0].mxu0
      %v1737 = vadd.f32 %v1668, %v1736
      %v1738 = vpop.f32.mrb[0].mxu0
      %1739 = vdwg.mxu0
      %v1741 = vsel %vm770, %v1571, 0
      %v1744 = vsel %vm770, %v1654, 0
      %1746 = vmatprep.subr.mxu0 0.0
      %1747 = vmatpush1.xpose.msra.mxu0 %v1744
      %1748 = vmatprep.subr.mxu0 0.0
      %1749 = vmatpush1.xpose.msra.mxu0 0.0
      %1750 = vmatprep.subr.mxu0 0.0
      %1751 = vmatpush1.xpose.msra.mxu0 0.0
      %1752 = vmatprep.subr.mxu0 0.0
      %1753 = vmatpush1.xpose.msra.mxu0 0.0
      %1754 = vmatprep.subr.mxu0 0.0
      %1755 = vmatpush1.xpose.msra.mxu0 0.0
      %1756 = vmatprep.subr.mxu0 0.0
      %1757 = vmatpush1.xpose.msra.mxu0 0.0
      %1758 = vmatprep.subr.mxu0 0.0
      %1759 = vmatpush1.xpose.msra.mxu0 0.0
      %1760 = vmatprep.subr.mxu0 0.0
      %1761 = vmatpush1.xpose.msra.mxu0 0.0
      %1762 = vmatprep.subr.mxu0 0.0
      %1763 = vmatpush1.xpose.msra.mxu0 0.0
      %1764 = vmatprep.subr.mxu0 0.0
      %1765 = vmatpush1.xpose.msra.mxu0 0.0
      %1766 = vmatprep.subr.mxu0 0.0
      %1767 = vmatpush1.xpose.msra.mxu0 0.0
      %1768 = vmatprep.subr.mxu0 0.0
      %1769 = vmatpush1.xpose.msra.mxu0 0.0
      %1770 = vmatprep.subr.mxu0 0.0
      %1771 = vmatpush1.xpose.msra.mxu0 0.0
      %1772 = vmatprep.subr.mxu0 0.0
      %1773 = vmatpush1.xpose.msra.mxu0 0.0
      %1774 = vmatprep.subr.mxu0 0.0
      %1775 = vmatpush1.xpose.msra.mxu0 0.0
      %1776 = vmatprep.subr.mxu0 0.0
      %1777 = vmatpush1.xpose.msra.mxu0 0.0
      %1778 = vmatprep.subr.mxu0 0.0
      %1779 = vmatpush1.xpose.msra.mxu0 0.0
      %1780 = vmatprep.subr.mxu0 0.0
      %1781 = vmatpush1.xpose.msra.mxu0 0.0
      %1782 = vmatprep.subr.mxu0 0.0
      %1783 = vmatpush1.xpose.msra.mxu0 0.0
      %1784 = vmatprep.subr.mxu0 0.0
      %1785 = vmatpush1.xpose.msra.mxu0 0.0
      %1786 = vmatprep.subr.mxu0 0.0
      %1787 = vmatpush1.xpose.msra.mxu0 0.0
      %1788 = vmatprep.subr.mxu0 0.0
      %1789 = vmatpush1.xpose.msra.mxu0 0.0
      %1790 = vmatprep.subr.mxu0 0.0
      %1791 = vmatpush1.xpose.msra.mxu0 0.0
      %1792 = vmatprep.subr.mxu0 0.0
      %1793 = vmatpush1.xpose.msra.mxu0 0.0
      %1794 = vmatprep.subr.mxu0 0.0
      %1795 = vmatpush1.xpose.msra.mxu0 0.0
      %1796 = vmatprep.subr.mxu0 0.0
      %1797 = vmatpush1.xpose.msra.mxu0 0.0
      %1798 = vmatprep.subr.mxu0 0.0
      %1799 = vmatpush1.xpose.msra.mxu0 0.0
      %1800 = vmatprep.subr.mxu0 0.0
      %1801 = vmatpush1.xpose.msra.mxu0 0.0
      %1802 = vmatprep.subr.mxu0 0.0
      %1803 = vmatpush1.xpose.msra.mxu0 0.0
      %1804 = vmatprep.subr.mxu0 0.0
      %1805 = vmatpush1.xpose.msra.mxu0 0.0
      %1806 = vmatprep.subr.mxu0 0.0
      %1807 = vmatpush1.xpose.msra.mxu0 0.0
      %1808 = vmatprep.subr.mxu0 0.0
      %1809 = vmatpush1.xpose.msra.mxu0 0.0
      %1810 = vmatprep.mubr.f32.mxu0 0.0
      %1811 = vmatmul.mubr.f32.gmra.mrb[0].mxu0 %v1741
      %v1812 = vpop.f32.mrb[0].mxu0
      %v1813 = vadd.f32 0.0, %v1812
      %v1814 = vpop.f32.mrb[0].mxu0
      %1815 = vdwg.mxu0
      %v1816 = vmul.f32 %v1813, 0.35355338
      %v1817 = vsel %vm770, %v1816, -inf
      %1818 = vmax.xlane.f32.xlu0 %v1817
      %v1819 = vpop.xlane.xlu0 %1818
      %v1820 = vsub.f32 %v1816, %v1819
      %v1821 = vmul.f32 %v1820, 1.442695
      %v1822 = vpow.pop %v1821
      %v1823 = vsel %vm770, %v1822, 0.0
      %1824 = vadd.xlane.f32.xlu0 %v1823
      %v1825 = vpop.xlane.xlu0 %1824
      %v1826 = vrcp.pop %v1825
      %v1827 = vmul.f32 %v1822, %v1826
      %v1829 = vsel %vm770, %v1827, 0
      %1831 = vmatprep.subr.mxu0 0.0
      %1832 = vmatpush1.msra.mxu0 %v1737
      %1833 = vmatprep.subr.mxu0 0.0
      %1834 = vmatpush1.msra.mxu0 0.0
      %1835 = vmatprep.subr.mxu0 0.0
      %1836 = vmatpush1.msra.mxu0 0.0
      %1837 = vmatprep.subr.mxu0 0.0
      %1838 = vmatpush1.msra.mxu0 0.0
      %1839 = vmatprep.subr.mxu0 0.0
      %1840 = vmatpush1.msra.mxu0 0.0
      %1841 = vmatprep.subr.mxu0 0.0
      %1842 = vmatpush1.msra.mxu0 0.0
      %1843 = vmatprep.subr.mxu0 0.0
      %1844 = vmatpush1.msra.mxu0 0.0
      %1845 = vmatprep.subr.mxu0 0.0
      %1846 = vmatpush1.msra.mxu0 0.0
      %1847 = vmatprep.subr.mxu0 0.0
      %1848 = vmatpush1.msra.mxu0 0.0
      %1849 = vmatprep.subr.mxu0 0.0
      %1850 = vmatpush1.msra.mxu0 0.0
      %1851 = vmatprep.subr.mxu0 0.0
      %1852 = vmatpush1.msra.mxu0 0.0
      %1853 = vmatprep.subr.mxu0 0.0
      %1854 = vmatpush1.msra.mxu0 0.0
      %1855 = vmatprep.subr.mxu0 0.0
      %1856 = vmatpush1.msra.mxu0 0.0
      %1857 = vmatprep.subr.mxu0 0.0
      %1858 = vmatpush1.msra.mxu0 0.0
      %1859 = vmatprep.subr.mxu0 0.0
      %1860 = vmatpush1.msra.mxu0 0.0
      %1861 = vmatprep.subr.mxu0 0.0
      %1862 = vmatpush1.msra.mxu0 0.0
      %1863 = vmatprep.subr.mxu0 0.0
      %1864 = vmatpush1.msra.mxu0 0.0
      %1865 = vmatprep.subr.mxu0 0.0
      %1866 = vmatpush1.msra.mxu0 0.0
      %1867 = vmatprep.subr.mxu0 0.0
      %1868 = vmatpush1.msra.mxu0 0.0
      %1869 = vmatprep.subr.mxu0 0.0
      %1870 = vmatpush1.msra.mxu0 0.0
      %1871 = vmatprep.subr.mxu0 0.0
      %1872 = vmatpush1.msra.mxu0 0.0
      %1873 = vmatprep.subr.mxu0 0.0
      %1874 = vmatpush1.msra.mxu0 0.0
      %1875 = vmatprep.subr.mxu0 0.0
      %1876 = vmatpush1.msra.mxu0 0.0
      %1877 = vmatprep.subr.mxu0 0.0
      %1878 = vmatpush1.msra.mxu0 0.0
      %1879 = vmatprep.subr.mxu0 0.0
      %1880 = vmatpush1.msra.mxu0 0.0
      %1881 = vmatprep.subr.mxu0 0.0
      %1882 = vmatpush1.msra.mxu0 0.0
      %1883 = vmatprep.subr.mxu0 0.0
      %1884 = vmatpush1.msra.mxu0 0.0
      %1885 = vmatprep.subr.mxu0 0.0
      %1886 = vmatpush1.msra.mxu0 0.0
      %1887 = vmatprep.subr.mxu0 0.0
      %1888 = vmatpush1.msra.mxu0 0.0
      %1889 = vmatprep.subr.mxu0 0.0
      %1890 = vmatpush1.msra.mxu0 0.0
      %1891 = vmatprep.subr.mxu0 0.0
      %1892 = vmatpush1.msra.mxu0 0.0
      %1893 = vmatprep.subr.mxu0 0.0
      %1894 = vmatpush1.msra.mxu0 0.0
      %1895 = vmatprep.mubr.f32.mxu0 0.0
      %1896 = vmatmul.mubr.f32.gmra.mrb[0].mxu0 %v1829
      %v1897 = vpop.f32.mrb[0].mxu0
      %v1898 = vadd.f32 0.0, %v1897
      %v1899 = vpop.f32.mrb[0].mxu0
      %1900 = vdwg.mxu0
      %s1901 = scalar_lea.vmem %s10, 16
      %v1902 = vld [vmem:[%s1901] sm:$0xff]
      %v1904 = vsel %vm770, %v1898, 0
      %1906 = vmatprep.subr.mxu0 0.0
      %1907 = vmatpush1.msra.mxu0 %v1902
      %1908 = vmatprep.subr.mxu0 0.0
      %1909 = vmatpush1.msra.mxu0 0.0
      %1910 = vmatprep.subr.mxu0 0.0
      %1911 = vmatpush1.msra.mxu0 0.0
      %1912 = vmatprep.subr.mxu0 0.0
      %1913 = vmatpush1.msra.mxu0 0.0
      %1914 = vmatprep.subr.mxu0 0.0
      %1915 = vmatpush1.msra.mxu0 0.0
      %1916 = vmatprep.subr.mxu0 0.0
      %1917 = vmatpush1.msra.mxu0 0.0
      %1918 = vmatprep.subr.mxu0 0.0
      %1919 = vmatpush1.msra.mxu0 0.0
      %1920 = vmatprep.subr.mxu0 0.0
      %1921 = vmatpush1.msra.mxu0 0.0
      %1922 = vmatprep.subr.mxu0 0.0
      %1923 = vmatpush1.msra.mxu0 0.0
      %1924 = vmatprep.subr.mxu0 0.0
      %1925 = vmatpush1.msra.mxu0 0.0
      %1926 = vmatprep.subr.mxu0 0.0
      %1927 = vmatpush1.msra.mxu0 0.0
      %1928 = vmatprep.subr.mxu0 0.0
      %1929 = vmatpush1.msra.mxu0 0.0
      %1930 = vmatprep.subr.mxu0 0.0
      %1931 = vmatpush1.msra.mxu0 0.0
      %1932 = vmatprep.subr.mxu0 0.0
      %1933 = vmatpush1.msra.mxu0 0.0
      %1934 = vmatprep.subr.mxu0 0.0
      %1935 = vmatpush1.msra.mxu0 0.0
      %1936 = vmatprep.subr.mxu0 0.0
      %1937 = vmatpush1.msra.mxu0 0.0
      %1938 = vmatprep.subr.mxu0 0.0
      %1939 = vmatpush1.msra.mxu0 0.0
      %1940 = vmatprep.subr.mxu0 0.0
      %1941 = vmatpush1.msra.mxu0 0.0
      %1942 = vmatprep.subr.mxu0 0.0
      %1943 = vmatpush1.msra.mxu0 0.0
      %1944 = vmatprep.subr.mxu0 0.0
      %1945 = vmatpush1.msra.mxu0 0.0
      %1946 = vmatprep.subr.mxu0 0.0
      %1947 = vmatpush1.msra.mxu0 0.0
      %1948 = vmatprep.subr.mxu0 0.0
      %1949 = vmatpush1.msra.mxu0 0.0
      %1950 = vmatprep.subr.mxu0 0.0
      %1951 = vmatpush1.msra.mxu0 0.0
      %1952 = vmatprep.subr.mxu0 0.0
      %1953 = vmatpush1.msra.mxu0 0.0
      %1954 = vmatprep.subr.mxu0 0.0
      %1955 = vmatpush1.msra.mxu0 0.0
      %1956 = vmatprep.subr.mxu0 0.0
      %1957 = vmatpush1.msra.mxu0 0.0
      %1958 = vmatprep.subr.mxu0 0.0
      %1959 = vmatpush1.msra.mxu0 0.0
      %1960 = vmatprep.subr.mxu0 0.0
      %1961 = vmatpush1.msra.mxu0 0.0
      %1962 = vmatprep.subr.mxu0 0.0
      %1963 = vmatpush1.msra.mxu0 0.0
      %1964 = vmatprep.subr.mxu0 0.0
      %1965 = vmatpush1.msra.mxu0 0.0
      %1966 = vmatprep.subr.mxu0 0.0
      %1967 = vmatpush1.msra.mxu0 0.0
      %1968 = vmatprep.subr.mxu0 0.0
      %1969 = vmatpush1.msra.mxu0 0.0
      %1970 = vmatprep.mubr.f32.mxu0 0.0
      %1971 = vmatmul.mubr.f32.gmra.mrb[0].mxu0 %v1904
      %v1972 = vpop.f32.mrb[0].mxu0
      %v1973 = vadd.f32 0.0, %v1972
      %v1974 = vpop.f32.mrb[0].mxu0
      %1975 = vdwg.mxu0
      %v1976 = vadd.f32 %v1488, %v1973
      %s1977 = scalar_lea.vmem %s4, 96
      %v1978 = vld [vmem:[%s1977] sm:$0xff]
      %v1979 = vld [vmem:[%s1977 + $0x8] sm:$0xff]
      %v1980 = vld [vmem:[%s1977 + $0x10] sm:$0xff]
      %v1981 = vld [vmem:[%s1977 + $0x18] sm:$0xff]
      %s1982 = scalar_lea.vmem %s5, 3
      %v1983 = vld [vmem:[%s1982] sm:$0x1]
      %v1985 = vlaneseq
      %v1986 = vshrl.u32 %v1985, 7
      %v1987 = vsub.s32 0, %v1986
      %v1988 = vrot.slane %v1983, %v1987
      %1990 = vmatprep.subr.mxu0 0.0
      %1991 = vmatpush1.msra.mxu0 %v1978
      %1992 = vmatprep.subr.mxu0 0.0
      %1993 = vmatpush1.msra.mxu0 %v1979
      %1994 = vmatprep.subr.mxu0 0.0
      %1995 = vmatpush1.msra.mxu0 %v1980
      %1996 = vmatprep.subr.mxu0 0.0
      %1997 = vmatpush1.msra.mxu0 %v1981
      %1998 = vmatprep.subr.mxu0 0.0
      %1999 = vmatpush1.msra.mxu0 0.0
      %2000 = vmatprep.subr.mxu0 0.0
      %2001 = vmatpush1.msra.mxu0 0.0
      %2002 = vmatprep.subr.mxu0 0.0
      %2003 = vmatpush1.msra.mxu0 0.0
      %2004 = vmatprep.subr.mxu0 0.0
      %2005 = vmatpush1.msra.mxu0 0.0
      %2006 = vmatprep.subr.mxu0 0.0
      %2007 = vmatpush1.msra.mxu0 0.0
      %2008 = vmatprep.subr.mxu0 0.0
      %2009 = vmatpush1.msra.mxu0 0.0
      %2010 = vmatprep.subr.mxu0 0.0
      %2011 = vmatpush1.msra.mxu0 0.0
      %2012 = vmatprep.subr.mxu0 0.0
      %2013 = vmatpush1.msra.mxu0 0.0
      %2014 = vmatprep.subr.mxu0 0.0
      %2015 = vmatpush1.msra.mxu0 0.0
      %2016 = vmatprep.subr.mxu0 0.0
      %2017 = vmatpush1.msra.mxu0 0.0
      %2018 = vmatprep.subr.mxu0 0.0
      %2019 = vmatpush1.msra.mxu0 0.0
      %2020 = vmatprep.subr.mxu0 0.0
      %2021 = vmatpush1.msra.mxu0 0.0
      %2022 = vmatprep.subr.mxu0 0.0
      %2023 = vmatpush1.msra.mxu0 0.0
      %2024 = vmatprep.subr.mxu0 0.0
      %2025 = vmatpush1.msra.mxu0 0.0
      %2026 = vmatprep.subr.mxu0 0.0
      %2027 = vmatpush1.msra.mxu0 0.0
      %2028 = vmatprep.subr.mxu0 0.0
      %2029 = vmatpush1.msra.mxu0 0.0
      %2030 = vmatprep.subr.mxu0 0.0
      %2031 = vmatpush1.msra.mxu0 0.0
      %2032 = vmatprep.subr.mxu0 0.0
      %2033 = vmatpush1.msra.mxu0 0.0
      %2034 = vmatprep.subr.mxu0 0.0
      %2035 = vmatpush1.msra.mxu0 0.0
      %2036 = vmatprep.subr.mxu0 0.0
      %2037 = vmatpush1.msra.mxu0 0.0
      %2038 = vmatprep.subr.mxu0 0.0
      %2039 = vmatpush1.msra.mxu0 0.0
      %2040 = vmatprep.subr.mxu0 0.0
      %2041 = vmatpush1.msra.mxu0 0.0
      %2042 = vmatprep.subr.mxu0 0.0
      %2043 = vmatpush1.msra.mxu0 0.0
      %2044 = vmatprep.subr.mxu0 0.0
      %2045 = vmatpush1.msra.mxu0 0.0
      %2046 = vmatprep.subr.mxu0 0.0
      %2047 = vmatpush1.msra.mxu0 0.0
      %2048 = vmatprep.subr.mxu0 0.0
      %2049 = vmatpush1.msra.mxu0 0.0
      %2050 = vmatprep.subr.mxu0 0.0
      %2051 = vmatpush1.msra.mxu0 0.0
      %2052 = vmatprep.subr.mxu0 0.0
      %2053 = vmatpush1.msra.mxu0 0.0
      %2054 = vmatprep.mubr.f32.mxu0 0.0
      %2055 = vmatmul.mubr.f32.gmra.mrb[0].mxu0 %v533
      %v2056 = vpop.f32.mrb[0].mxu0
      %v2057 = vadd.f32 %v1988, %v2056
      %v2058 = vpop.f32.mrb[0].mxu0
      %2059 = vdwg.mxu0
      %s2060 = scalar_lea.vmem %s6, 96
      %v2061 = vld [vmem:[%s2060] sm:$0xff]
      %v2062 = vld [vmem:[%s2060 + $0x8] sm:$0xff]
      %v2063 = vld [vmem:[%s2060 + $0x10] sm:$0xff]
      %v2064 = vld [vmem:[%s2060 + $0x18] sm:$0xff]
      %s2065 = scalar_lea.vmem %s7, 3
      %v2066 = vld [vmem:[%s2065] sm:$0x1]
      %v2068 = vlaneseq
      %v2069 = vshrl.u32 %v2068, 7
      %v2070 = vsub.s32 0, %v2069
      %v2071 = vrot.slane %v2066, %v2070
      %2073 = vmatprep.subr.mxu0 0.0
      %2074 = vmatpush1.msra.mxu0 %v2061
      %2075 = vmatprep.subr.mxu0 0.0
      %2076 = vmatpush1.msra.mxu0 %v2062
      %2077 = vmatprep.subr.mxu0 0.0
      %2078 = vmatpush1.msra.mxu0 %v2063
      %2079 = vmatprep.subr.mxu0 0.0
      %2080 = vmatpush1.msra.mxu0 %v2064
      %2081 = vmatprep.subr.mxu0 0.0
      %2082 = vmatpush1.msra.mxu0 0.0
      %2083 = vmatprep.subr.mxu0 0.0
      %2084 = vmatpush1.msra.mxu0 0.0
      %2085 = vmatprep.subr.mxu0 0.0
      %2086 = vmatpush1.msra.mxu0 0.0
      %2087 = vmatprep.subr.mxu0 0.0
      %2088 = vmatpush1.msra.mxu0 0.0
      %2089 = vmatprep.subr.mxu0 0.0
      %2090 = vmatpush1.msra.mxu0 0.0
      %2091 = vmatprep.subr.mxu0 0.0
      %2092 = vmatpush1.msra.mxu0 0.0
      %2093 = vmatprep.subr.mxu0 0.0
      %2094 = vmatpush1.msra.mxu0 0.0
      %2095 = vmatprep.subr.mxu0 0.0
      %2096 = vmatpush1.msra.mxu0 0.0
      %2097 = vmatprep.subr.mxu0 0.0
      %2098 = vmatpush1.msra.mxu0 0.0
      %2099 = vmatprep.subr.mxu0 0.0
      %2100 = vmatpush1.msra.mxu0 0.0
      %2101 = vmatprep.subr.mxu0 0.0
      %2102 = vmatpush1.msra.mxu0 0.0
      %2103 = vmatprep.subr.mxu0 0.0
      %2104 = vmatpush1.msra.mxu0 0.0
      %2105 = vmatprep.subr.mxu0 0.0
      %2106 = vmatpush1.msra.mxu0 0.0
      %2107 = vmatprep.subr.mxu0 0.0
      %2108 = vmatpush1.msra.mxu0 0.0
      %2109 = vmatprep.subr.mxu0 0.0
      %2110 = vmatpush1.msra.mxu0 0.0
      %2111 = vmatprep.subr.mxu0 0.0
      %2112 = vmatpush1.msra.mxu0 0.0
      %2113 = vmatprep.subr.mxu0 0.0
      %2114 = vmatpush1.msra.mxu0 0.0
      %2115 = vmatprep.subr.mxu0 0.0
      %2116 = vmatpush1.msra.mxu0 0.0
      %2117 = vmatprep.subr.mxu0 0.0
      %2118 = vmatpush1.msra.mxu0 0.0
      %2119 = vmatprep.subr.mxu0 0.0
      %2120 = vmatpush1.msra.mxu0 0.0
      %2121 = vmatprep.subr.mxu0 0.0
      %2122 = vmatpush1.msra.mxu0 0.0
      %2123 = vmatprep.subr.mxu0 0.0
      %2124 = vmatpush1.msra.mxu0 0.0
      %2125 = vmatprep.subr.mxu0 0.0
      %2126 = vmatpush1.msra.mxu0 0.0
      %2127 = vmatprep.subr.mxu0 0.0
      %2128 = vmatpush1.msra.mxu0 0.0
      %2129 = vmatprep.subr.mxu0 0.0
      %2130 = vmatpush1.msra.mxu0 0.0
      %2131 = vmatprep.subr.mxu0 0.0
      %2132 = vmatpush1.msra.mxu0 0.0
      %2133 = vmatprep.subr.mxu0 0.0
      %2134 = vmatpush1.msra.mxu0 0.0
      %2135 = vmatprep.subr.mxu0 0.0
      %2136 = vmatpush1.msra.mxu0 0.0
      %2137 = vmatprep.mubr.f32.mxu0 0.0
      %2138 = vmatmul.mubr.f32.gmra.mrb[0].mxu0 %v617
      %v2139 = vpop.f32.mrb[0].mxu0
      %v2140 = vadd.f32 %v2071, %v2139
      %v2141 = vpop.f32.mrb[0].mxu0
      %2142 = vdwg.mxu0
      %s2143 = scalar_lea.vmem %s8, 96
      %v2144 = vld [vmem:[%s2143] sm:$0xff]
      %v2145 = vld [vmem:[%s2143 + $0x8] sm:$0xff]
      %v2146 = vld [vmem:[%s2143 + $0x10] sm:$0xff]
      %v2147 = vld [vmem:[%s2143 + $0x18] sm:$0xff]
      %s2148 = scalar_lea.vmem %s9, 3
      %v2149 = vld [vmem:[%s2148] sm:$0x1]
      %v2151 = vlaneseq
      %v2152 = vshrl.u32 %v2151, 7
      %v2153 = vsub.s32 0, %v2152
      %v2154 = vrot.slane %v2149, %v2153
      %2156 = vmatprep.subr.mxu0 0.0
      %2157 = vmatpush1.msra.mxu0 %v2144
      %2158 = vmatprep.subr.mxu0 0.0
      %2159 = vmatpush1.msra.mxu0 %v2145
      %2160 = vmatprep.subr.mxu0 0.0
      %2161 = vmatpush1.msra.mxu0 %v2146
      %2162 = vmatprep.subr.mxu0 0.0
      %2163 = vmatpush1.msra.mxu0 %v2147
      %2164 = vmatprep.subr.mxu0 0.0
      %2165 = vmatpush1.msra.mxu0 0.0
      %2166 = vmatprep.subr.mxu0 0.0
      %2167 = vmatpush1.msra.mxu0 0.0
      %2168 = vmatprep.subr.mxu0 0.0
      %2169 = vmatpush1.msra.mxu0 0.0
      %2170 = vmatprep.subr.mxu0 0.0
      %2171 = vmatpush1.msra.mxu0 0.0
      %2172 = vmatprep.subr.mxu0 0.0
      %2173 = vmatpush1.msra.mxu0 0.0
      %2174 = vmatprep.subr.mxu0 0.0
      %2175 = vmatpush1.msra.mxu0 0.0
      %2176 = vmatprep.subr.mxu0 0.0
      %2177 = vmatpush1.msra.mxu0 0.0
      %2178 = vmatprep.subr.mxu0 0.0
      %2179 = vmatpush1.msra.mxu0 0.0
      %2180 = vmatprep.subr.mxu0 0.0
      %2181 = vmatpush1.msra.mxu0 0.0
      %2182 = vmatprep.subr.mxu0 0.0
      %2183 = vmatpush1.msra.mxu0 0.0
      %2184 = vmatprep.subr.mxu0 0.0
      %2185 = vmatpush1.msra.mxu0 0.0
      %2186 = vmatprep.subr.mxu0 0.0
      %2187 = vmatpush1.msra.mxu0 0.0
      %2188 = vmatprep.subr.mxu0 0.0
      %2189 = vmatpush1.msra.mxu0 0.0
      %2190 = vmatprep.subr.mxu0 0.0
      %2191 = vmatpush1.msra.mxu0 0.0
      %2192 = vmatprep.subr.mxu0 0.0
      %2193 = vmatpush1.msra.mxu0 0.0
      %2194 = vmatprep.subr.mxu0 0.0
      %2195 = vmatpush1.msra.mxu0 0.0
      %2196 = vmatprep.subr.mxu0 0.0
      %2197 = vmatpush1.msra.mxu0 0.0
      %2198 = vmatprep.subr.mxu0 0.0
      %2199 = vmatpush1.msra.mxu0 0.0
      %2200 = vmatprep.subr.mxu0 0.0
      %2201 = vmatpush1.msra.mxu0 0.0
      %2202 = vmatprep.subr.mxu0 0.0
      %2203 = vmatpush1.msra.mxu0 0.0
      %2204 = vmatprep.subr.mxu0 0.0
      %2205 = vmatpush1.msra.mxu0 0.0
      %2206 = vmatprep.subr.mxu0 0.0
      %2207 = vmatpush1.msra.mxu0 0.0
      %2208 = vmatprep.subr.mxu0 0.0
      %2209 = vmatpush1.msra.mxu0 0.0
      %2210 = vmatprep.subr.mxu0 0.0
      %2211 = vmatpush1.msra.mxu0 0.0
      %2212 = vmatprep.subr.mxu0 0.0
      %2213 = vmatpush1.msra.mxu0 0.0
      %2214 = vmatprep.subr.mxu0 0.0
      %2215 = vmatpush1.msra.mxu0 0.0
      %2216 = vmatprep.subr.mxu0 0.0
      %2217 = vmatpush1.msra.mxu0 0.0
      %2218 = vmatprep.subr.mxu0 0.0
      %2219 = vmatpush1.msra.mxu0 0.0
      %2220 = vmatprep.mubr.f32.mxu0 0.0
      %2221 = vmatmul.mubr.f32.gmra.mrb[0].mxu0 %v617
      %v2222 = vpop.f32.mrb[0].mxu0
      %v2223 = vadd.f32 %v2154, %v2222
      %v2224 = vpop.f32.mrb[0].mxu0
      %2225 = vdwg.mxu0
      %v2227 = vsel %vm770, %v2057, 0
      %v2230 = vsel %vm770, %v2140, 0
      %2232 = vmatprep.subr.mxu0 0.0
      %2233 = vmatpush1.xpose.msra.mxu0 %v2230
      %2234 = vmatprep.subr.mxu0 0.0
      %2235 = vmatpush1.xpose.msra.mxu0 0.0
      %2236 = vmatprep.subr.mxu0 0.0
      %2237 = vmatpush1.xpose.msra.mxu0 0.0
      %2238 = vmatprep.subr.mxu0 0.0
      %2239 = vmatpush1.xpose.msra.mxu0 0.0
      %2240 = vmatprep.subr.mxu0 0.0
      %2241 = vmatpush1.xpose.msra.mxu0 0.0
      %2242 = vmatprep.subr.mxu0 0.0
      %2243 = vmatpush1.xpose.msra.mxu0 0.0
      %2244 = vmatprep.subr.mxu0 0.0
      %2245 = vmatpush1.xpose.msra.mxu0 0.0
      %2246 = vmatprep.subr.mxu0 0.0
      %2247 = vmatpush1.xpose.msra.mxu0 0.0
      %2248 = vmatprep.subr.mxu0 0.0
      %2249 = vmatpush1.xpose.msra.mxu0 0.0
      %2250 = vmatprep.subr.mxu0 0.0
      %2251 = vmatpush1.xpose.msra.mxu0 0.0
      %2252 = vmatprep.subr.mxu0 0.0
      %2253 = vmatpush1.xpose.msra.mxu0 0.0
      %2254 = vmatprep.subr.mxu0 0.0
      %2255 = vmatpush1.xpose.msra.mxu0 0.0
      %2256 = vmatprep.subr.mxu0 0.0
      %2257 = vmatpush1.xpose.msra.mxu0 0.0
      %2258 = vmatprep.subr.mxu0 0.0
      %2259 = vmatpush1.xpose.msra.mxu0 0.0
      %2260 = vmatprep.subr.mxu0 0.0
      %2261 = vmatpush1.xpose.msra.mxu0 0.0
      %2262 = vmatprep.subr.mxu0 0.0
      %2263 = vmatpush1.xpose.msra.mxu0 0.0
      %2264 = vmatprep.subr.mxu0 0.0
      %2265 = vmatpush1.xpose.msra.mxu0 0.0
      %2266 = vmatprep.subr.mxu0 0.0
      %2267 = vmatpush1.xpose.msra.mxu0 0.0
      %2268 = vmatprep.subr.mxu0 0.0
      %2269 = vmatpush1.xpose.msra.mxu0 0.0
      %2270 = vmatprep.subr.mxu0 0.0
      %2271 = vmatpush1.xpose.msra.mxu0 0.0
      %2272 = vmatprep.subr.mxu0 0.0
      %2273 = vmatpush1.xpose.msra.mxu0 0.0
      %2274 = vmatprep.subr.mxu0 0.0
      %2275 = vmatpush1.xpose.msra.mxu0 0.0
      %2276 = vmatprep.subr.mxu0 0.0
      %2277 = vmatpush1.xpose.msra.mxu0 0.0
      %2278 = vmatprep.subr.mxu0 0.0
      %2279 = vmatpush1.xpose.msra.mxu0 0.0
      %2280 = vmatprep.subr.mxu0 0.0
      %2281 = vmatpush1.xpose.msra.mxu0 0.0
      %2282 = vmatprep.subr.mxu0 0.0
      %2283 = vmatpush1.xpose.msra.mxu0 0.0
      %2284 = vmatprep.subr.mxu0 0.0
      %2285 = vmatpush1.xpose.msra.mxu0 0.0
      %2286 = vmatprep.subr.mxu0 0.0
      %2287 = vmatpush1.xpose.msra.mxu0 0.0
      %2288 = vmatprep.subr.mxu0 0.0
      %2289 = vmatpush1.xpose.msra.mxu0 0.0
      %2290 = vmatprep.subr.mxu0 0.0
      %2291 = vmatpush1.xpose.msra.mxu0 0.0
      %2292 = vmatprep.subr.mxu0 0.0
      %2293 = vmatpush1.xpose.msra.mxu0 0.0
      %2294 = vmatprep.subr.mxu0 0.0
      %2295 = vmatpush1.xpose.msra.mxu0 0.0
      %2296 = vmatprep.mubr.f32.mxu0 0.0
      %2297 = vmatmul.mubr.f32.gmra.mrb[0].mxu0 %v2227
      %v2298 = vpop.f32.mrb[0].mxu0
      %v2299 = vadd.f32 0.0, %v2298
      %v2300 = vpop.f32.mrb[0].mxu0
      %2301 = vdwg.mxu0
      %v2302 = vmul.f32 %v2299, 0.35355338
      %v2303 = vsel %vm770, %v2302, -inf
      %2304 = vmax.xlane.f32.xlu0 %v2303
      %v2305 = vpop.xlane.xlu0 %2304
      %v2306 = vsub.f32 %v2302, %v2305
      %v2307 = vmul.f32 %v2306, 1.442695
      %v2308 = vpow.pop %v2307
      %v2309 = vsel %vm770, %v2308, 0.0
      %2310 = vadd.xlane.f32.xlu0 %v2309
      %v2311 = vpop.xlane.xlu0 %2310
      %v2312 = vrcp.pop %v2311
      %v2313 = vmul.f32 %v2308, %v2312
      %v2315 = vsel %vm770, %v2313, 0
      %2317 = vmatprep.subr.mxu0 0.0
      %2318 = vmatpush1.msra.mxu0 %v2223
      %2319 = vmatprep.subr.mxu0 0.0
      %2320 = vmatpush1.msra.mxu0 0.0
      %2321 = vmatprep.subr.mxu0 0.0
      %2322 = vmatpush1.msra.mxu0 0.0
      %2323 = vmatprep.subr.mxu0 0.0
      %2324 = vmatpush1.msra.mxu0 0.0
      %2325 = vmatprep.subr.mxu0 0.0
      %2326 = vmatpush1.msra.mxu0 0.0
      %2327 = vmatprep.subr.mxu0 0.0
      %2328 = vmatpush1.msra.mxu0 0.0
      %2329 = vmatprep.subr.mxu0 0.0
      %2330 = vmatpush1.msra.mxu0 0.0
      %2331 = vmatprep.subr.mxu0 0.0
      %2332 = vmatpush1.msra.mxu0 0.0
      %2333 = vmatprep.subr.mxu0 0.0
      %2334 = vmatpush1.msra.mxu0 0.0
      %2335 = vmatprep.subr.mxu0 0.0
      %2336 = vmatpush1.msra.mxu0 0.0
      %2337 = vmatprep.subr.mxu0 0.0
      %2338 = vmatpush1.msra.mxu0 0.0
      %2339 = vmatprep.subr.mxu0 0.0
      %2340 = vmatpush1.msra.mxu0 0.0
      %2341 = vmatprep.subr.mxu0 0.0
      %2342 = vmatpush1.msra.mxu0 0.0
      %2343 = vmatprep.subr.mxu0 0.0
      %2344 = vmatpush1.msra.mxu0 0.0
      %2345 = vmatprep.subr.mxu0 0.0
      %2346 = vmatpush1.msra.mxu0 0.0
      %2347 = vmatprep.subr.mxu0 0.0
      %2348 = vmatpush1.msra.mxu0 0.0
      %2349 = vmatprep.subr.mxu0 0.0
      %2350 = vmatpush1.msra.mxu0 0.0
      %2351 = vmatprep.subr.mxu0 0.0
      %2352 = vmatpush1.msra.mxu0 0.0
      %2353 = vmatprep.subr.mxu0 0.0
      %2354 = vmatpush1.msra.mxu0 0.0
      %2355 = vmatprep.subr.mxu0 0.0
      %2356 = vmatpush1.msra.mxu0 0.0
      %2357 = vmatprep.subr.mxu0 0.0
      %2358 = vmatpush1.msra.mxu0 0.0
      %2359 = vmatprep.subr.mxu0 0.0
      %2360 = vmatpush1.msra.mxu0 0.0
      %2361 = vmatprep.subr.mxu0 0.0
      %2362 = vmatpush1.msra.mxu0 0.0
      %2363 = vmatprep.subr.mxu0 0.0
      %2364 = vmatpush1.msra.mxu0 0.0
      %2365 = vmatprep.subr.mxu0 0.0
      %2366 = vmatpush1.msra.mxu0 0.0
      %2367 = vmatprep.subr.mxu0 0.0
      %2368 = vmatpush1.msra.mxu0 0.0
      %2369 = vmatprep.subr.mxu0 0.0
      %2370 = vmatpush1.msra.mxu0 0.0
      %2371 = vmatprep.subr.mxu0 0.0
      %2372 = vmatpush1.msra.mxu0 0.0
      %2373 = vmatprep.subr.mxu0 0.0
      %2374 = vmatpush1.msra.mxu0 0.0
      %2375 = vmatprep.subr.mxu0 0.0
      %2376 = vmatpush1.msra.mxu0 0.0
      %2377 = vmatprep.subr.mxu0 0.0
      %2378 = vmatpush1.msra.mxu0 0.0
      %2379 = vmatprep.subr.mxu0 0.0
      %2380 = vmatpush1.msra.mxu0 0.0
      %2381 = vmatprep.mubr.f32.mxu0 0.0
      %2382 = vmatmul.mubr.f32.gmra.mrb[0].mxu0 %v2315
      %v2383 = vpop.f32.mrb[0].mxu0
      %v2384 = vadd.f32 0.0, %v2383
      %v2385 = vpop.f32.mrb[0].mxu0
      %2386 = vdwg.mxu0
      %s2387 = scalar_lea.vmem %s10, 24
      %v2388 = vld [vmem:[%s2387] sm:$0xff]
      %v2390 = vsel %vm770, %v2384, 0
      %2392 = vmatprep.subr.mxu0 0.0
      %2393 = vmatpush1.msra.mxu0 %v2388
      %2394 = vmatprep.subr.mxu0 0.0
      %2395 = vmatpush1.msra.mxu0 0.0
      %2396 = vmatprep.subr.mxu0 0.0
      %2397 = vmatpush1.msra.mxu0 0.0
      %2398 = vmatprep.subr.mxu0 0.0
      %2399 = vmatpush1.msra.mxu0 0.0
      %2400 = vmatprep.subr.mxu0 0.0
      %2401 = vmatpush1.msra.mxu0 0.0
      %2402 = vmatprep.subr.mxu0 0.0
      %2403 = vmatpush1.msra.mxu0 0.0
      %2404 = vmatprep.subr.mxu0 0.0
      %2405 = vmatpush1.msra.mxu0 0.0
      %2406 = vmatprep.subr.mxu0 0.0
      %2407 = vmatpush1.msra.mxu0 0.0
      %2408 = vmatprep.subr.mxu0 0.0
      %2409 = vmatpush1.msra.mxu0 0.0
      %2410 = vmatprep.subr.mxu0 0.0
      %2411 = vmatpush1.msra.mxu0 0.0
      %2412 = vmatprep.subr.mxu0 0.0
      %2413 = vmatpush1.msra.mxu0 0.0
      %2414 = vmatprep.subr.mxu0 0.0
      %2415 = vmatpush1.msra.mxu0 0.0
      %2416 = vmatprep.subr.mxu0 0.0
      %2417 = vmatpush1.msra.mxu0 0.0
      %2418 = vmatprep.subr.mxu0 0.0
      %2419 = vmatpush1.msra.mxu0 0.0
      %2420 = vmatprep.subr.mxu0 0.0
      %2421 = vmatpush1.msra.mxu0 0.0
      %2422 = vmatprep.subr.mxu0 0.0
      %2423 = vmatpush1.msra.mxu0 0.0
      %2424 = vmatprep.subr.mxu0 0.0
      %2425 = vmatpush1.msra.mxu0 0.0
      %2426 = vmatprep.subr.mxu0 0.0
      %2427 = vmatpush1.msra.mxu0 0.0
      %2428 = vmatprep.subr.mxu0 0.0
      %2429 = vmatpush1.msra.mxu0 0.0
      %2430 = vmatprep.subr.mxu0 0.0
      %2431 = vmatpush1.msra.mxu0 0.0
      %2432 = vmatprep.subr.mxu0 0.0
      %2433 = vmatpush1.msra.mxu0 0.0
      %2434 = vmatprep.subr.mxu0 0.0
      %2435 = vmatpush1.msra.mxu0 0.0
      %2436 = vmatprep.subr.mxu0 0.0
      %2437 = vmatpush1.msra.mxu0 0.0
      %2438 = vmatprep.subr.mxu0 0.0
      %2439 = vmatpush1.msra.mxu0 0.0
      %2440 = vmatprep.subr.mxu0 0.0
      %2441 = vmatpush1.msra.mxu0 0.0
      %2442 = vmatprep.subr.mxu0 0.0
      %2443 = vmatpush1.msra.mxu0 0.0
      %2444 = vmatprep.subr.mxu0 0.0
      %2445 = vmatpush1.msra.mxu0 0.0
      %2446 = vmatprep.subr.mxu0 0.0
      %2447 = vmatpush1.msra.mxu0 0.0
      %2448 = vmatprep.subr.mxu0 0.0
      %2449 = vmatpush1.msra.mxu0 0.0
      %2450 = vmatprep.subr.mxu0 0.0
      %2451 = vmatpush1.msra.mxu0 0.0
      %2452 = vmatprep.subr.mxu0 0.0
      %2453 = vmatpush1.msra.mxu0 0.0
      %2454 = vmatprep.subr.mxu0 0.0
      %2455 = vmatpush1.msra.mxu0 0.0
      %2456 = vmatprep.mubr.f32.mxu0 0.0
      %2457 = vmatmul.mubr.f32.gmra.mrb[0].mxu0 %v2390
      %v2458 = vpop.f32.mrb[0].mxu0
      %v2459 = vadd.f32 0.0, %v2458
      %v2460 = vpop.f32.mrb[0].mxu0
      %2461 = vdwg.mxu0
      %v2462 = vadd.f32 %v1976, %v2459
      %v2463 = vld [vmem:[%s11] sm:$0x1]
      %v2465 = vlaneseq
      %v2466 = vshrl.u32 %v2465, 7
      %v2467 = vsub.s32 0, %v2466
      %v2468 = vrot.slane %v2463, %v2467
      %v2470 = vadd.f32 %v2462, %v2468
      %v2471 = vadd.f32 %v2470, %v514
      %v2472 = vsel %vm531, %v2471, 0.0
      %2473 = vadd.xlane.f32.xlu0 %v2472
      %v2474 = vpop.xlane.xlu0 %2473
      %v2475 = vrcp.pop 32.0
      %v2476 = vmul.f32 %v2474, %v2475
      %v2477 = vsub.f32 %v2471, %v2476
      %v2478 = vmul.f32 %v2477, %v2477
      %v2479 = vsel %vm531, %v2478, 0.0
      %2480 = vadd.xlane.f32.xlu0 %v2479
      %v2481 = vpop.xlane.xlu0 %2480
      %v2482 = vmul.f32 %v2481, %v2475
      %v2483 = vadd.f32 %v2482, 1e-05
      %v2484 = vrsqrt.pop %v2483
      %v2485 = vmul.f32 %v2477, %v2484
      %v2486 = vld [vmem:[%s12] sm:$0x1]
      %v2488 = vlaneseq
      %v2489 = vshrl.u32 %v2488, 7
      %v2490 = vsub.s32 0, %v2489
      %v2491 = vrot.slane %v2486, %v2490
      %v2493 = vmul.f32 %v2485, %v2491
      %v2494 = vld [vmem:[%s13] sm:$0x1]
      %v2496 = vlaneseq
      %v2497 = vshrl.u32 %v2496, 7
      %v2498 = vsub.s32 0, %v2497
      %v2499 = vrot.slane %v2494, %v2498
      %v2501 = vadd.f32 %v2493, %v2499
      %2502 = vst.msk [vmem:[%s513] sm:$0xff] %vm531, %v2501
      %p2503 = scmp.lt.s32.totalorder %s25, 1
      %s2504 = scalar_select %p2503, %s25, 1
      %s2505 = smul.addr %s2504, 8
      %s2506 = scalar_lea.vmem %s14, %s2505
      // Predicated region
      $region77: #{transformer_decoder.7} parent=75 // pred_check
        %p2507 = pneg %p357
      $region78: #{transformer_decoder.7} parent=75 // pred_check_branch
        %2509 = sbr.rel (%p2507) target = $region80
      $region79: #{transformer_decoder.7} parent=75 // pred_region
        _
      $region80: #{transformer_decoder.7} parent=75 // pred_fallthru
        _
    $region76: #{transformer_decoder.7} parent=5 // pred_fallthru
      _
    %p2510 = scmp.le.s32.totalorder 2, %s20
    // Predicated region
    $region81: #{transformer_decoder.7} parent=5 // pred_check
      %p2511 = pneg %p2510
    $region82: #{transformer_decoder.7} parent=5 // pred_check_branch
      %2513 = sbr.rel (%p2511) target = $region84
    $region83: #{transformer_decoder.7} parent=5 // pred_region
      %s2514 = ssub.s32 %s20, 2
      // Predicated region
      $region85: #{transformer_decoder.7} parent=83 // pred_check
        %p2515 = pneg %p363
      $region86: #{transformer_decoder.7} parent=83 // pred_check_branch
        %2517 = sbr.rel (%p2515) target = $region88
      $region87: #{transformer_decoder.7} parent=83 // pred_region
        %p2518 = scmp.lt.s32.totalorder %s26, 1
        %s2519 = scalar_select %p2518, %s26, 1
        %s2520 = smul.addr %s2519, 8
        %s2521 = scalar_lea.vmem %s14, %s2520
      $region88: #{transformer_decoder.7} parent=83 // pred_fallthru
        _
    $region84: #{transformer_decoder.7} parent=5 // pred_fallthru
      _
  $region6: #{transformer_decoder.7} parent=0 // loop_footer
    %s24 = sadd.s32 1, %s20
  $region7: #{transformer_decoder.7} parent=0 // loop_footer_branch
    %19 = sbr.rel target = $region3
  $region8: #{transformer_decoder.7} parent=0 // loop_exit
    _

</llo_original>
